<compile_context>
chip_gen: v7x
topology: tpu7x:2x2x1
jax: 0.10.0
libtpu: 0.0.40
codegen_flags: <defaults>
</compile_context>

<pallas_src>
import jax
import jax.numpy as jnp
import numpy as np
from jax.experimental import pallas as pl
from jax.experimental.pallas import tpu as pltpu


def _upsampling_concat_kernel(xup_ref, xskip_ref, w1s_ref, w1u_ref, b1_ref,
                              w2_ref, b2_ref, o_ref):
    """One batch element per grid step.

    xup_ref:   (1, H, W, Cup)      tensor to be bilinearly upsampled x2
    xskip_ref: (1, 2H, 2W, Cskip)  skip tensor (concatenated in front)
    w1s_ref:   (9, Cskip, Cm)      conv1 taps acting on skip channels (BN1 scale folded)
    w1u_ref:   (9, Cup,   Cm)      conv1 taps acting on upsampled channels (BN1 scale folded)
    b1_ref:    (1, Cm)             folded BN1 shift
    w2_ref:    (9, Cm, Cout)       conv2 taps (BN2 scale folded)
    b2_ref:    (1, Cout)           folded BN2 shift
    o_ref:     (1, 2H, 2W, Cout)   output (NHWC, already interleaved)
    """
    x = xup_ref[0]                          # (H, W, Cup)
    skip = xskip_ref[0]                     # (2H, 2W, Cskip)
    H, W, Cup = x.shape
    H2, W2, Cskip = skip.shape
    Cm = b1_ref.shape[-1]
    Cout = b2_ref.shape[-1]
    npix = H2 * W2
    f32 = jnp.float32

    # ---- bilinear x2 upsample (align_corners=False), interleaved directly ----
    # out[2i]   = 0.25*x[i-1] + 0.75*x[i]   (edge clamped)
    # out[2i+1] = 0.75*x[i]   + 0.25*x[i+1] (edge clamped)
    x_m = jnp.concatenate([x[:1], x[:-1]], axis=0)          # x[i-1] clamped
    x_p = jnp.concatenate([x[1:], x[-1:]], axis=0)          # x[i+1] clamped
    r_even = 0.25 * x_m + 0.75 * x
    r_odd = 0.75 * x + 0.25 * x_p
    rows = jnp.concatenate([r_even[:, None], r_odd[:, None]], axis=1)
    rows = rows.reshape(H2, W, Cup)                          # row-interleaved

    c_m = jnp.concatenate([rows[:, :1], rows[:, :-1]], axis=1)
    c_p = jnp.concatenate([rows[:, 1:], rows[:, -1:]], axis=1)
    c_even = 0.25 * c_m + 0.75 * rows
    c_odd = 0.75 * rows + 0.25 * c_p
    up = jnp.concatenate([c_even[:, :, None], c_odd[:, :, None]], axis=2)
    up = up.reshape(H2, W2, Cup)                             # (2H, 2W, Cup)

    # ---- zero-padded spatial shift for one 3x3 / pad=1 conv tap ----
    def shift(t, dh, dw):
        if dh == -1:
            t = jnp.concatenate([jnp.zeros_like(t[:1]), t[:-1]], axis=0)
        elif dh == 1:
            t = jnp.concatenate([t[1:], jnp.zeros_like(t[:1])], axis=0)
        if dw == -1:
            t = jnp.concatenate([jnp.zeros_like(t[:, :1]), t[:, :-1]], axis=1)
        elif dw == 1:
            t = jnp.concatenate([t[:, 1:], jnp.zeros_like(t[:, :1])], axis=1)
        return t

    # ---- conv1 (3x3, pad=1) over cat([skip, up], C) as a split contraction ----
    acc1 = jnp.zeros((npix, Cm), f32)
    k = 0
    for dh in (-1, 0, 1):
        for dw in (-1, 0, 1):
            acc1 += jnp.dot(shift(skip, dh, dw).reshape(npix, Cskip), w1s_ref[k],
                            preferred_element_type=f32)
            acc1 += jnp.dot(shift(up, dh, dw).reshape(npix, Cup), w1u_ref[k],
                            preferred_element_type=f32)
            k += 1
    h = jnp.maximum(acc1 + b1_ref[...], 0.0).reshape(H2, W2, Cm)   # BN1 folded + ReLU

    # ---- conv2 (3x3, pad=1) + folded BN2 + ReLU ----
    acc2 = jnp.zeros((npix, Cout), f32)
    k = 0
    for dh in (-1, 0, 1):
        for dw in (-1, 0, 1):
            acc2 += jnp.dot(shift(h, dh, dw).reshape(npix, Cm), w2_ref[k],
                            preferred_element_type=f32)
            k += 1
    y = jnp.maximum(acc2 + b2_ref[...], 0.0)
    o_ref[0] = y.reshape(H2, W2, Cout)


def _fold_bn(w, gamma, beta, mean, var, eps):
    """Fold eval-mode BN into conv weight (scale) + per-channel shift."""
    scale = gamma / jnp.sqrt(var + eps)
    w_f = (w * scale[:, None, None, None]).astype(jnp.float32)     # (O, I, 3, 3)
    shift = (beta - mean * scale).astype(jnp.float32)
    return w_f, shift


@jax.jit
def upsampling_concat_forward(x_to_upsample, x_skip,
                              w1, g1, b1, m1, v1,
                              w2, g2, b2, m2, v2,
                              eps=1e-5):
    """Pallas equivalent of UpsamplingConcat.forward (all tensors NCHW)."""
    N, Cup, H, W = x_to_upsample.shape
    _, Cskip, H2, W2 = x_skip.shape
    Cm, Cin = w1.shape[0], w1.shape[1]
    Cout = w2.shape[0]
    assert H2 == 2 * H and W2 == 2 * W and Cin == Cskip + Cup

    xu = jnp.transpose(x_to_upsample, (0, 2, 3, 1)).astype(jnp.float32)   # (N,H,W,Cup)
    xs = jnp.transpose(x_skip, (0, 2, 3, 1)).astype(jnp.float32)          # (N,2H,2W,Cskip)

    w1f, sh1 = _fold_bn(w1, g1, b1, m1, v1, eps)
    w2f, sh2 = _fold_bn(w2, g2, b2, m2, v2, eps)
    # per-tap matmul matrices (tap index k = kh*3 + kw), conv1 split at the concat boundary
    w1s = jnp.transpose(w1f[:, :Cskip], (2, 3, 1, 0)).reshape(9, Cskip, Cm)
    w1u = jnp.transpose(w1f[:, Cskip:], (2, 3, 1, 0)).reshape(9, Cup, Cm)
    w2m = jnp.transpose(w2f, (2, 3, 1, 0)).reshape(9, Cm, Cout)
    sh1 = sh1.reshape(1, Cm)
    sh2 = sh2.reshape(1, Cout)

    out_nhwc = pl.pallas_call(
        _upsampling_concat_kernel,
        out_shape=jax.ShapeDtypeStruct((N, H2, W2, Cout), jnp.float32),
        grid_spec=pltpu.PrefetchScalarGridSpec(
            num_scalar_prefetch=0,
            grid=(N,),
            in_specs=[
                pl.BlockSpec((1, H, W, Cup), lambda n: (n, 0, 0, 0)),
                pl.BlockSpec((1, H2, W2, Cskip), lambda n: (n, 0, 0, 0)),
                pl.BlockSpec((9, Cskip, Cm), lambda n: (0, 0, 0)),
                pl.BlockSpec((9, Cup, Cm), lambda n: (0, 0, 0)),
                pl.BlockSpec((1, Cm), lambda n: (0, 0)),
                pl.BlockSpec((9, Cm, Cout), lambda n: (0, 0, 0)),
                pl.BlockSpec((1, Cout), lambda n: (0, 0)),
            ],
            out_specs=pl.BlockSpec((1, H2, W2, Cout), lambda n: (n, 0, 0, 0)),
        ),
        compiler_params=pltpu.CompilerParams(dimension_semantics=("parallel",)),
    )(xu, xs, w1s, w1u, sh1, w2m, sh2)

    return jnp.transpose(out_nhwc, (0, 3, 1, 2))    # back to NCHW


# ---------------------------- pure-JAX reference ----------------------------
def _ref_forward(x_to_upsample, x_skip, w1, g1, b1, m1, v1, w2, g2, b2, m2, v2,
                 eps=1e-5):
    xu = jnp.transpose(x_to_upsample, (0, 2, 3, 1)).astype(jnp.float32)
    _, H, W, _ = xu.shape

    def interp(a, axis, in_size):
        d = jnp.arange(2 * in_size, dtype=jnp.float32)
        src = jnp.clip((d + 0.5) / 2.0 - 0.5, 0.0, in_size - 1.0)
        lo = jnp.floor(src).astype(jnp.int32)
        hi = jnp.minimum(lo + 1, in_size - 1)
        frac = src - lo.astype(jnp.float32)
        shape = [1] * a.ndim
        shape[axis] = 2 * in_size
        frac = frac.reshape(shape)
        return jnp.take(a, lo, axis=axis) * (1 - frac) + jnp.take(a, hi, axis=axis) * frac

    up = interp(interp(xu, 1, H), 2, W)
    xs = jnp.transpose(x_skip, (0, 2, 3, 1)).astype(jnp.float32)
    cat = jnp.concatenate([xs, up], axis=-1)

    def conv_bn_relu(x, w, g, b, m, v):
        y = jax.lax.conv_general_dilated(
            x, jnp.transpose(w, (2, 3, 1, 0)).astype(jnp.float32),
            window_strides=(1, 1), padding="SAME",
            dimension_numbers=("NHWC", "HWIO", "NHWC"),
            precision=jax.lax.Precision.HIGHEST)
        inv = 1.0 / jnp.sqrt(v + eps)
        y = (y - m) * inv * g + b
        return jnp.maximum(y, 0.0)

    h = conv_bn_relu(cat, w1, g1, b1, m1, v1)
    y = conv_bn_relu(h, w2, g2, b2, m2, v2)
    return jnp.transpose(y, (0, 3, 1, 2))


if __name__ == "__main__":
    # Small shapes consistent with the module: skip at 2x the spatial size of
    # the tensor being upsampled; in_channels = Cskip + Cup = 8, out_channels = 8.
    N, Cup, H, W = 2, 4, 8, 8
    Cskip = 4
    Cin = Cskip + Cup
    Cout = 8

    key = jax.random.PRNGKey(0)
    ks = jax.random.split(key, 12)
    x_to_up = jax.random.normal(ks[0], (N, Cup, H, W), dtype=jnp.float32)
    x_skip = jax.random.normal(ks[1], (N, Cskip, 2 * H, 2 * W), dtype=jnp.float32)
    w1 = 0.1 * jax.random.normal(ks[2], (Cout, Cin, 3, 3), dtype=jnp.float32)
    g1 = 1.0 + 0.1 * jax.random.normal(ks[3], (Cout,), dtype=jnp.float32)
    b1 = 0.1 * jax.random.normal(ks[4], (Cout,), dtype=jnp.float32)
    m1 = 0.1 * jax.random.normal(ks[5], (Cout,), dtype=jnp.float32)
    v1 = jax.random.uniform(ks[6], (Cout,), minval=0.5, maxval=1.5, dtype=jnp.float32)
    w2 = 0.1 * jax.random.normal(ks[7], (Cout, Cout, 3, 3), dtype=jnp.float32)
    g2 = 1.0 + 0.1 * jax.random.normal(ks[8], (Cout,), dtype=jnp.float32)
    b2 = 0.1 * jax.random.normal(ks[9], (Cout,), dtype=jnp.float32)
    m2 = 0.1 * jax.random.normal(ks[10], (Cout,), dtype=jnp.float32)
    v2 = jax.random.uniform(ks[11], (Cout,), minval=0.5, maxval=1.5, dtype=jnp.float32)

    out = upsampling_concat_forward(x_to_up, x_skip, w1, g1, b1, m1, v1,
                                    w2, g2, b2, m2, v2)
    out = jax.block_until_ready(out)

    ref = _ref_forward(x_to_up, x_skip, w1, g1, b1, m1, v1, w2, g2, b2, m2, v2)
    assert out.shape == (N, Cout, 2 * H, 2 * W), out.shape
    np.testing.assert_allclose(np.asarray(out), np.asarray(ref), rtol=1e-2, atol=1e-2)

    print("KERNEL_OK")
</pallas_src>

<mosaic_0001>
module attributes {stable_mosaic.version = 11 : i64} {
  func.func @_upsampling_concat_kernel(%arg0: i32, %arg1: memref<1x8x8x4xf32, #tpu.memory_space<vmem>>, %arg2: memref<1x16x16x4xf32, #tpu.memory_space<vmem>>, %arg3: memref<9x4x8xf32, #tpu.memory_space<vmem>>, %arg4: memref<9x4x8xf32, #tpu.memory_space<vmem>>, %arg5: memref<1x8xf32, #tpu.memory_space<vmem>>, %arg6: memref<9x8x8xf32, #tpu.memory_space<vmem>>, %arg7: memref<1x8xf32, #tpu.memory_space<vmem>>, %arg8: memref<1x16x16x8xf32, #tpu.memory_space<vmem>>) attributes {dimension_semantics = [#tpu.dimension_semantics<parallel>], iteration_bounds = array<i64: 2>, scalar_prefetch = 0 : i64, scratch_operands = 0 : i64, tpu.core_type = #tpu.core_type<tc>, window_params = [{transform_indices = @transform_0, window_bounds = array<i64: 1, 8, 8, 4>}, {transform_indices = @transform_1, window_bounds = array<i64: 1, 16, 16, 4>}, {pipeline_mode = #tpu.pipeline_mode<synchronous>, transform_indices = @transform_2, window_bounds = array<i64: 9, 4, 8>}, {pipeline_mode = #tpu.pipeline_mode<synchronous>, transform_indices = @transform_3, window_bounds = array<i64: 9, 4, 8>}, {pipeline_mode = #tpu.pipeline_mode<synchronous>, transform_indices = @transform_4, window_bounds = array<i64: 1, 8>}, {pipeline_mode = #tpu.pipeline_mode<synchronous>, transform_indices = @transform_5, window_bounds = array<i64: 9, 8, 8>}, {pipeline_mode = #tpu.pipeline_mode<synchronous>, transform_indices = @transform_6, window_bounds = array<i64: 1, 8>}, {transform_indices = @transform_7, window_bounds = array<i64: 1, 16, 16, 8>}]} {
    %c0 = arith.constant 0 : index
    %c0_0 = arith.constant 0 : index
    %c0_1 = arith.constant 0 : index
    %c0_2 = arith.constant 0 : index
    %0 = vector.load %arg1[%c0, %c0_0, %c0_1, %c0_2] : memref<1x8x8x4xf32, #tpu.memory_space<vmem>>, vector<1x8x8x4xf32>
    %1 = vector.shape_cast %0 : vector<1x8x8x4xf32> to vector<8x8x4xf32>
    %c0_3 = arith.constant 0 : index
    %c0_4 = arith.constant 0 : index
    %c0_5 = arith.constant 0 : index
    %c0_6 = arith.constant 0 : index
    %2 = vector.load %arg2[%c0_3, %c0_4, %c0_5, %c0_6] : memref<1x16x16x4xf32, #tpu.memory_space<vmem>>, vector<1x16x16x4xf32>
    %3 = vector.shape_cast %2 : vector<1x16x16x4xf32> to vector<16x16x4xf32>
    %4 = vector.extract_strided_slice %1 {offsets = [0, 0, 0], sizes = [1, 8, 4], strides = [1, 1, 1]} : vector<8x8x4xf32> to vector<1x8x4xf32>
    %5 = vector.extract_strided_slice %1 {offsets = [0, 0, 0], sizes = [7, 8, 4], strides = [1, 1, 1]} : vector<8x8x4xf32> to vector<7x8x4xf32>
    %6 = tpu.concatenate %4, %5 in 0 : vector<1x8x4xf32>, vector<7x8x4xf32> -> vector<8x8x4xf32>
    %7 = vector.extract_strided_slice %1 {offsets = [1, 0, 0], sizes = [7, 8, 4], strides = [1, 1, 1]} : vector<8x8x4xf32> to vector<7x8x4xf32>
    %8 = vector.extract_strided_slice %1 {offsets = [7, 0, 0], sizes = [1, 8, 4], strides = [1, 1, 1]} : vector<8x8x4xf32> to vector<1x8x4xf32>
    %9 = tpu.concatenate %7, %8 in 0 : vector<7x8x4xf32>, vector<1x8x4xf32> -> vector<8x8x4xf32>
    %cst = arith.constant 2.500000e-01 : f32
    %10 = vector.broadcast %cst : f32 to vector<8x8x4xf32>
    %11 = arith.mulf %10, %6 : vector<8x8x4xf32>
    %cst_7 = arith.constant 7.500000e-01 : f32
    %12 = vector.broadcast %cst_7 : f32 to vector<8x8x4xf32>
    %13 = arith.mulf %12, %1 : vector<8x8x4xf32>
    %14 = arith.addf %11, %13 : vector<8x8x4xf32>
    %cst_8 = arith.constant 7.500000e-01 : f32
    %15 = vector.broadcast %cst_8 : f32 to vector<8x8x4xf32>
    %16 = arith.mulf %15, %1 : vector<8x8x4xf32>
    %cst_9 = arith.constant 2.500000e-01 : f32
    %17 = vector.broadcast %cst_9 : f32 to vector<8x8x4xf32>
    %18 = arith.mulf %17, %9 : vector<8x8x4xf32>
    %19 = arith.addf %16, %18 : vector<8x8x4xf32>
    %20 = vector.shape_cast %14 : vector<8x8x4xf32> to vector<8x1x8x4xf32>
    %21 = vector.shape_cast %19 : vector<8x8x4xf32> to vector<8x1x8x4xf32>
    %22 = tpu.concatenate %20, %21 in 1 : vector<8x1x8x4xf32>, vector<8x1x8x4xf32> -> vector<8x2x8x4xf32>
    %23 = vector.shape_cast %22 : vector<8x2x8x4xf32> to vector<16x8x4xf32>
    %24 = vector.extract_strided_slice %23 {offsets = [0, 0, 0], sizes = [16, 1, 4], strides = [1, 1, 1]} : vector<16x8x4xf32> to vector<16x1x4xf32>
    %25 = vector.extract_strided_slice %23 {offsets = [0, 0, 0], sizes = [16, 7, 4], strides = [1, 1, 1]} : vector<16x8x4xf32> to vector<16x7x4xf32>
    %26 = tpu.concatenate %24, %25 in 1 : vector<16x1x4xf32>, vector<16x7x4xf32> -> vector<16x8x4xf32>
    %27 = vector.extract_strided_slice %23 {offsets = [0, 1, 0], sizes = [16, 7, 4], strides = [1, 1, 1]} : vector<16x8x4xf32> to vector<16x7x4xf32>
    %28 = vector.extract_strided_slice %23 {offsets = [0, 7, 0], sizes = [16, 1, 4], strides = [1, 1, 1]} : vector<16x8x4xf32> to vector<16x1x4xf32>
    %29 = tpu.concatenate %27, %28 in 1 : vector<16x7x4xf32>, vector<16x1x4xf32> -> vector<16x8x4xf32>
    %cst_10 = arith.constant 2.500000e-01 : f32
    %30 = vector.broadcast %cst_10 : f32 to vector<16x8x4xf32>
    %31 = arith.mulf %30, %26 : vector<16x8x4xf32>
    %cst_11 = arith.constant 7.500000e-01 : f32
    %32 = vector.broadcast %cst_11 : f32 to vector<16x8x4xf32>
    %33 = arith.mulf %32, %23 : vector<16x8x4xf32>
    %34 = arith.addf %31, %33 : vector<16x8x4xf32>
    %cst_12 = arith.constant 7.500000e-01 : f32
    %35 = vector.broadcast %cst_12 : f32 to vector<16x8x4xf32>
    %36 = arith.mulf %35, %23 : vector<16x8x4xf32>
    %cst_13 = arith.constant 2.500000e-01 : f32
    %37 = vector.broadcast %cst_13 : f32 to vector<16x8x4xf32>
    %38 = arith.mulf %37, %29 : vector<16x8x4xf32>
    %39 = arith.addf %36, %38 : vector<16x8x4xf32>
    %40 = vector.shape_cast %34 : vector<16x8x4xf32> to vector<16x8x1x4xf32>
    %41 = vector.shape_cast %39 : vector<16x8x4xf32> to vector<16x8x1x4xf32>
    %42 = tpu.concatenate %40, %41 in 2 : vector<16x8x1x4xf32>, vector<16x8x1x4xf32> -> vector<16x8x2x4xf32>
    %43 = vector.shape_cast %42 : vector<16x8x2x4xf32> to vector<16x16x4xf32>
    %cst_14 = arith.constant 0.000000e+00 : f32
    %44 = vector.broadcast %cst_14 : f32 to vector<256x8xf32>
    %cst_15 = arith.constant 0.000000e+00 : f32
    %45 = vector.broadcast %cst_15 : f32 to vector<1x16x4xf32>
    %46 = vector.extract_strided_slice %3 {offsets = [0, 0, 0], sizes = [15, 16, 4], strides = [1, 1, 1]} : vector<16x16x4xf32> to vector<15x16x4xf32>
    %47 = tpu.concatenate %45, %46 in 0 : vector<1x16x4xf32>, vector<15x16x4xf32> -> vector<16x16x4xf32>
    %cst_16 = arith.constant 0.000000e+00 : f32
    %48 = vector.broadcast %cst_16 : f32 to vector<16x1x4xf32>
    %49 = vector.extract_strided_slice %47 {offsets = [0, 0, 0], sizes = [16, 15, 4], strides = [1, 1, 1]} : vector<16x16x4xf32> to vector<16x15x4xf32>
    %50 = tpu.concatenate %48, %49 in 1 : vector<16x1x4xf32>, vector<16x15x4xf32> -> vector<16x16x4xf32>
    %51 = vector.shape_cast %50 : vector<16x16x4xf32> to vector<256x4xf32>
    %c0_17 = arith.constant 0 : index
    %c0_18 = arith.constant 0 : index
    %c0_19 = arith.constant 0 : index
    %52 = vector.load %arg3[%c0_17, %c0_18, %c0_19] : memref<9x4x8xf32, #tpu.memory_space<vmem>>, vector<1x4x8xf32>
    %53 = vector.shape_cast %52 : vector<1x4x8xf32> to vector<4x8xf32>
    %cst_20 = arith.constant dense<0.000000e+00> : vector<256x8xf32>
    %54 = tpu.matmul %51, %53, %cst_20 {dimension_numbers = #tpu.dot_dimension_numbers<[1], [0], [0], [1], [0, 0, 1, 1], [], []>} : vector<256x4xf32>, vector<4x8xf32>, vector<256x8xf32> -> vector<256x8xf32>
    %55 = arith.addf %44, %54 : vector<256x8xf32>
    %cst_21 = arith.constant 0.000000e+00 : f32
    %56 = vector.broadcast %cst_21 : f32 to vector<1x16x4xf32>
    %57 = vector.extract_strided_slice %43 {offsets = [0, 0, 0], sizes = [15, 16, 4], strides = [1, 1, 1]} : vector<16x16x4xf32> to vector<15x16x4xf32>
    %58 = tpu.concatenate %56, %57 in 0 : vector<1x16x4xf32>, vector<15x16x4xf32> -> vector<16x16x4xf32>
    %cst_22 = arith.constant 0.000000e+00 : f32
    %59 = vector.broadcast %cst_22 : f32 to vector<16x1x4xf32>
    %60 = vector.extract_strided_slice %58 {offsets = [0, 0, 0], sizes = [16, 15, 4], strides = [1, 1, 1]} : vector<16x16x4xf32> to vector<16x15x4xf32>
    %61 = tpu.concatenate %59, %60 in 1 : vector<16x1x4xf32>, vector<16x15x4xf32> -> vector<16x16x4xf32>
    %62 = vector.shape_cast %61 : vector<16x16x4xf32> to vector<256x4xf32>
    %c0_23 = arith.constant 0 : index
    %c0_24 = arith.constant 0 : index
    %c0_25 = arith.constant 0 : index
    %63 = vector.load %arg4[%c0_23, %c0_24, %c0_25] : memref<9x4x8xf32, #tpu.memory_space<vmem>>, vector<1x4x8xf32>
    %64 = vector.shape_cast %63 : vector<1x4x8xf32> to vector<4x8xf32>
    %cst_26 = arith.constant dense<0.000000e+00> : vector<256x8xf32>
    %65 = tpu.matmul %62, %64, %cst_26 {dimension_numbers = #tpu.dot_dimension_numbers<[1], [0], [0], [1], [0, 0, 1, 1], [], []>} : vector<256x4xf32>, vector<4x8xf32>, vector<256x8xf32> -> vector<256x8xf32>
    %66 = arith.addf %55, %65 : vector<256x8xf32>
    %cst_27 = arith.constant 0.000000e+00 : f32
    %67 = vector.broadcast %cst_27 : f32 to vector<1x16x4xf32>
    %68 = vector.extract_strided_slice %3 {offsets = [0, 0, 0], sizes = [15, 16, 4], strides = [1, 1, 1]} : vector<16x16x4xf32> to vector<15x16x4xf32>
    %69 = tpu.concatenate %67, %68 in 0 : vector<1x16x4xf32>, vector<15x16x4xf32> -> vector<16x16x4xf32>
    %70 = vector.shape_cast %69 : vector<16x16x4xf32> to vector<256x4xf32>
    %c1 = arith.constant 1 : index
    %c0_28 = arith.constant 0 : index
    %c0_29 = arith.constant 0 : index
    %71 = vector.load %arg3[%c1, %c0_28, %c0_29] : memref<9x4x8xf32, #tpu.memory_space<vmem>>, vector<1x4x8xf32>
    %72 = vector.shape_cast %71 : vector<1x4x8xf32> to vector<4x8xf32>
    %cst_30 = arith.constant dense<0.000000e+00> : vector<256x8xf32>
    %73 = tpu.matmul %70, %72, %cst_30 {dimension_numbers = #tpu.dot_dimension_numbers<[1], [0], [0], [1], [0, 0, 1, 1], [], []>} : vector<256x4xf32>, vector<4x8xf32>, vector<256x8xf32> -> vector<256x8xf32>
    %74 = arith.addf %66, %73 : vector<256x8xf32>
    %cst_31 = arith.constant 0.000000e+00 : f32
    %75 = vector.broadcast %cst_31 : f32 to vector<1x16x4xf32>
    %76 = vector.extract_strided_slice %43 {offsets = [0, 0, 0], sizes = [15, 16, 4], strides = [1, 1, 1]} : vector<16x16x4xf32> to vector<15x16x4xf32>
    %77 = tpu.concatenate %75, %76 in 0 : vector<1x16x4xf32>, vector<15x16x4xf32> -> vector<16x16x4xf32>
    %78 = vector.shape_cast %77 : vector<16x16x4xf32> to vector<256x4xf32>
    %c1_32 = arith.constant 1 : index
    %c0_33 = arith.constant 0 : index
    %c0_34 = arith.constant 0 : index
    %79 = vector.load %arg4[%c1_32, %c0_33, %c0_34] : memref<9x4x8xf32, #tpu.memory_space<vmem>>, vector<1x4x8xf32>
    %80 = vector.shape_cast %79 : vector<1x4x8xf32> to vector<4x8xf32>
    %cst_35 = arith.constant dense<0.000000e+00> : vector<256x8xf32>
    %81 = tpu.matmul %78, %80, %cst_35 {dimension_numbers = #tpu.dot_dimension_numbers<[1], [0], [0], [1], [0, 0, 1, 1], [], []>} : vector<256x4xf32>, vector<4x8xf32>, vector<256x8xf32> -> vector<256x8xf32>
    %82 = arith.addf %74, %81 : vector<256x8xf32>
    %cst_36 = arith.constant 0.000000e+00 : f32
    %83 = vector.broadcast %cst_36 : f32 to vector<1x16x4xf32>
    %84 = vector.extract_strided_slice %3 {offsets = [0, 0, 0], sizes = [15, 16, 4], strides = [1, 1, 1]} : vector<16x16x4xf32> to vector<15x16x4xf32>
    %85 = tpu.concatenate %83, %84 in 0 : vector<1x16x4xf32>, vector<15x16x4xf32> -> vector<16x16x4xf32>
    %86 = vector.extract_strided_slice %85 {offsets = [0, 1, 0], sizes = [16, 15, 4], strides = [1, 1, 1]} : vector<16x16x4xf32> to vector<16x15x4xf32>
    %cst_37 = arith.constant 0.000000e+00 : f32
    %87 = vector.broadcast %cst_37 : f32 to vector<16x1x4xf32>
    %88 = tpu.concatenate %86, %87 in 1 : vector<16x15x4xf32>, vector<16x1x4xf32> -> vector<16x16x4xf32>
    %89 = vector.shape_cast %88 : vector<16x16x4xf32> to vector<256x4xf32>
    %c2 = arith.constant 2 : index
    %c0_38 = arith.constant 0 : index
    %c0_39 = arith.constant 0 : index
    %90 = vector.load %arg3[%c2, %c0_38, %c0_39] : memref<9x4x8xf32, #tpu.memory_space<vmem>>, vector<1x4x8xf32>
    %91 = vector.shape_cast %90 : vector<1x4x8xf32> to vector<4x8xf32>
    %cst_40 = arith.constant dense<0.000000e+00> : vector<256x8xf32>
    %92 = tpu.matmul %89, %91, %cst_40 {dimension_numbers = #tpu.dot_dimension_numbers<[1], [0], [0], [1], [0, 0, 1, 1], [], []>} : vector<256x4xf32>, vector<4x8xf32>, vector<256x8xf32> -> vector<256x8xf32>
    %93 = arith.addf %82, %92 : vector<256x8xf32>
    %cst_41 = arith.constant 0.000000e+00 : f32
    %94 = vector.broadcast %cst_41 : f32 to vector<1x16x4xf32>
    %95 = vector.extract_strided_slice %43 {offsets = [0, 0, 0], sizes = [15, 16, 4], strides = [1, 1, 1]} : vector<16x16x4xf32> to vector<15x16x4xf32>
    %96 = tpu.concatenate %94, %95 in 0 : vector<1x16x4xf32>, vector<15x16x4xf32> -> vector<16x16x4xf32>
    %97 = vector.extract_strided_slice %96 {offsets = [0, 1, 0], sizes = [16, 15, 4], strides = [1, 1, 1]} : vector<16x16x4xf32> to vector<16x15x4xf32>
    %cst_42 = arith.constant 0.000000e+00 : f32
    %98 = vector.broadcast %cst_42 : f32 to vector<16x1x4xf32>
    %99 = tpu.concatenate %97, %98 in 1 : vector<16x15x4xf32>, vector<16x1x4xf32> -> vector<16x16x4xf32>
    %100 = vector.shape_cast %99 : vector<16x16x4xf32> to vector<256x4xf32>
    %c2_43 = arith.constant 2 : index
    %c0_44 = arith.constant 0 : index
    %c0_45 = arith.constant 0 : index
    %101 = vector.load %arg4[%c2_43, %c0_44, %c0_45] : memref<9x4x8xf32, #tpu.memory_space<vmem>>, vector<1x4x8xf32>
    %102 = vector.shape_cast %101 : vector<1x4x8xf32> to vector<4x8xf32>
    %cst_46 = arith.constant dense<0.000000e+00> : vector<256x8xf32>
    %103 = tpu.matmul %100, %102, %cst_46 {dimension_numbers = #tpu.dot_dimension_numbers<[1], [0], [0], [1], [0, 0, 1, 1], [], []>} : vector<256x4xf32>, vector<4x8xf32>, vector<256x8xf32> -> vector<256x8xf32>
    %104 = arith.addf %93, %103 : vector<256x8xf32>
    %cst_47 = arith.constant 0.000000e+00 : f32
    %105 = vector.broadcast %cst_47 : f32 to vector<16x1x4xf32>
    %106 = vector.extract_strided_slice %3 {offsets = [0, 0, 0], sizes = [16, 15, 4], strides = [1, 1, 1]} : vector<16x16x4xf32> to vector<16x15x4xf32>
    %107 = tpu.concatenate %105, %106 in 1 : vector<16x1x4xf32>, vector<16x15x4xf32> -> vector<16x16x4xf32>
    %108 = vector.shape_cast %107 : vector<16x16x4xf32> to vector<256x4xf32>
    %c3 = arith.constant 3 : index
    %c0_48 = arith.constant 0 : index
    %c0_49 = arith.constant 0 : index
    %109 = vector.load %arg3[%c3, %c0_48, %c0_49] : memref<9x4x8xf32, #tpu.memory_space<vmem>>, vector<1x4x8xf32>
    %110 = vector.shape_cast %109 : vector<1x4x8xf32> to vector<4x8xf32>
    %cst_50 = arith.constant dense<0.000000e+00> : vector<256x8xf32>
    %111 = tpu.matmul %108, %110, %cst_50 {dimension_numbers = #tpu.dot_dimension_numbers<[1], [0], [0], [1], [0, 0, 1, 1], [], []>} : vector<256x4xf32>, vector<4x8xf32>, vector<256x8xf32> -> vector<256x8xf32>
    %112 = arith.addf %104, %111 : vector<256x8xf32>
    %cst_51 = arith.constant 0.000000e+00 : f32
    %113 = vector.broadcast %cst_51 : f32 to vector<16x1x4xf32>
    %114 = vector.extract_strided_slice %43 {offsets = [0, 0, 0], sizes = [16, 15, 4], strides = [1, 1, 1]} : vector<16x16x4xf32> to vector<16x15x4xf32>
    %115 = tpu.concatenate %113, %114 in 1 : vector<16x1x4xf32>, vector<16x15x4xf32> -> vector<16x16x4xf32>
    %116 = vector.shape_cast %115 : vector<16x16x4xf32> to vector<256x4xf32>
    %c3_52 = arith.constant 3 : index
    %c0_53 = arith.constant 0 : index
    %c0_54 = arith.constant 0 : index
    %117 = vector.load %arg4[%c3_52, %c0_53, %c0_54] : memref<9x4x8xf32, #tpu.memory_space<vmem>>, vector<1x4x8xf32>
    %118 = vector.shape_cast %117 : vector<1x4x8xf32> to vector<4x8xf32>
    %cst_55 = arith.constant dense<0.000000e+00> : vector<256x8xf32>
    %119 = tpu.matmul %116, %118, %cst_55 {dimension_numbers = #tpu.dot_dimension_numbers<[1], [0], [0], [1], [0, 0, 1, 1], [], []>} : vector<256x4xf32>, vector<4x8xf32>, vector<256x8xf32> -> vector<256x8xf32>
    %120 = arith.addf %112, %119 : vector<256x8xf32>
    %121 = vector.shape_cast %3 : vector<16x16x4xf32> to vector<256x4xf32>
    %c4 = arith.constant 4 : index
    %c0_56 = arith.constant 0 : index
    %c0_57 = arith.constant 0 : index
    %122 = vector.load %arg3[%c4, %c0_56, %c0_57] : memref<9x4x8xf32, #tpu.memory_space<vmem>>, vector<1x4x8xf32>
    %123 = vector.shape_cast %122 : vector<1x4x8xf32> to vector<4x8xf32>
    %cst_58 = arith.constant dense<0.000000e+00> : vector<256x8xf32>
    %124 = tpu.matmul %121, %123, %cst_58 {dimension_numbers = #tpu.dot_dimension_numbers<[1], [0], [0], [1], [0, 0, 1, 1], [], []>} : vector<256x4xf32>, vector<4x8xf32>, vector<256x8xf32> -> vector<256x8xf32>
    %125 = arith.addf %120, %124 : vector<256x8xf32>
    %126 = vector.shape_cast %43 : vector<16x16x4xf32> to vector<256x4xf32>
    %c4_59 = arith.constant 4 : index
    %c0_60 = arith.constant 0 : index
    %c0_61 = arith.constant 0 : index
    %127 = vector.load %arg4[%c4_59, %c0_60, %c0_61] : memref<9x4x8xf32, #tpu.memory_space<vmem>>, vector<1x4x8xf32>
    %128 = vector.shape_cast %127 : vector<1x4x8xf32> to vector<4x8xf32>
    %cst_62 = arith.constant dense<0.000000e+00> : vector<256x8xf32>
    %129 = tpu.matmul %126, %128, %cst_62 {dimension_numbers = #tpu.dot_dimension_numbers<[1], [0], [0], [1], [0, 0, 1, 1], [], []>} : vector<256x4xf32>, vector<4x8xf32>, vector<256x8xf32> -> vector<256x8xf32>
    %130 = arith.addf %125, %129 : vector<256x8xf32>
    %131 = vector.extract_strided_slice %3 {offsets = [0, 1, 0], sizes = [16, 15, 4], strides = [1, 1, 1]} : vector<16x16x4xf32> to vector<16x15x4xf32>
    %cst_63 = arith.constant 0.000000e+00 : f32
    %132 = vector.broadcast %cst_63 : f32 to vector<16x1x4xf32>
    %133 = tpu.concatenate %131, %132 in 1 : vector<16x15x4xf32>, vector<16x1x4xf32> -> vector<16x16x4xf32>
    %134 = vector.shape_cast %133 : vector<16x16x4xf32> to vector<256x4xf32>
    %c5 = arith.constant 5 : index
    %c0_64 = arith.constant 0 : index
    %c0_65 = arith.constant 0 : index
    %135 = vector.load %arg3[%c5, %c0_64, %c0_65] : memref<9x4x8xf32, #tpu.memory_space<vmem>>, vector<1x4x8xf32>
    %136 = vector.shape_cast %135 : vector<1x4x8xf32> to vector<4x8xf32>
    %cst_66 = arith.constant dense<0.000000e+00> : vector<256x8xf32>
    %137 = tpu.matmul %134, %136, %cst_66 {dimension_numbers = #tpu.dot_dimension_numbers<[1], [0], [0], [1], [0, 0, 1, 1], [], []>} : vector<256x4xf32>, vector<4x8xf32>, vector<256x8xf32> -> vector<256x8xf32>
    %138 = arith.addf %130, %137 : vector<256x8xf32>
    %139 = vector.extract_strided_slice %43 {offsets = [0, 1, 0], sizes = [16, 15, 4], strides = [1, 1, 1]} : vector<16x16x4xf32> to vector<16x15x4xf32>
    %cst_67 = arith.constant 0.000000e+00 : f32
    %140 = vector.broadcast %cst_67 : f32 to vector<16x1x4xf32>
    %141 = tpu.concatenate %139, %140 in 1 : vector<16x15x4xf32>, vector<16x1x4xf32> -> vector<16x16x4xf32>
    %142 = vector.shape_cast %141 : vector<16x16x4xf32> to vector<256x4xf32>
    %c5_68 = arith.constant 5 : index
    %c0_69 = arith.constant 0 : index
    %c0_70 = arith.constant 0 : index
    %143 = vector.load %arg4[%c5_68, %c0_69, %c0_70] : memref<9x4x8xf32, #tpu.memory_space<vmem>>, vector<1x4x8xf32>
    %144 = vector.shape_cast %143 : vector<1x4x8xf32> to vector<4x8xf32>
    %cst_71 = arith.constant dense<0.000000e+00> : vector<256x8xf32>
    %145 = tpu.matmul %142, %144, %cst_71 {dimension_numbers = #tpu.dot_dimension_numbers<[1], [0], [0], [1], [0, 0, 1, 1], [], []>} : vector<256x4xf32>, vector<4x8xf32>, vector<256x8xf32> -> vector<256x8xf32>
    %146 = arith.addf %138, %145 : vector<256x8xf32>
    %147 = vector.extract_strided_slice %3 {offsets = [1, 0, 0], sizes = [15, 16, 4], strides = [1, 1, 1]} : vector<16x16x4xf32> to vector<15x16x4xf32>
    %cst_72 = arith.constant 0.000000e+00 : f32
    %148 = vector.broadcast %cst_72 : f32 to vector<1x16x4xf32>
    %149 = tpu.concatenate %147, %148 in 0 : vector<15x16x4xf32>, vector<1x16x4xf32> -> vector<16x16x4xf32>
    %cst_73 = arith.constant 0.000000e+00 : f32
    %150 = vector.broadcast %cst_73 : f32 to vector<16x1x4xf32>
    %151 = vector.extract_strided_slice %149 {offsets = [0, 0, 0], sizes = [16, 15, 4], strides = [1, 1, 1]} : vector<16x16x4xf32> to vector<16x15x4xf32>
    %152 = tpu.concatenate %150, %151 in 1 : vector<16x1x4xf32>, vector<16x15x4xf32> -> vector<16x16x4xf32>
    %153 = vector.shape_cast %152 : vector<16x16x4xf32> to vector<256x4xf32>
    %c6 = arith.constant 6 : index
    %c0_74 = arith.constant 0 : index
    %c0_75 = arith.constant 0 : index
    %154 = vector.load %arg3[%c6, %c0_74, %c0_75] : memref<9x4x8xf32, #tpu.memory_space<vmem>>, vector<1x4x8xf32>
    %155 = vector.shape_cast %154 : vector<1x4x8xf32> to vector<4x8xf32>
    %cst_76 = arith.constant dense<0.000000e+00> : vector<256x8xf32>
    %156 = tpu.matmul %153, %155, %cst_76 {dimension_numbers = #tpu.dot_dimension_numbers<[1], [0], [0], [1], [0, 0, 1, 1], [], []>} : vector<256x4xf32>, vector<4x8xf32>, vector<256x8xf32> -> vector<256x8xf32>
    %157 = arith.addf %146, %156 : vector<256x8xf32>
    %158 = vector.extract_strided_slice %43 {offsets = [1, 0, 0], sizes = [15, 16, 4], strides = [1, 1, 1]} : vector<16x16x4xf32> to vector<15x16x4xf32>
    %cst_77 = arith.constant 0.000000e+00 : f32
    %159 = vector.broadcast %cst_77 : f32 to vector<1x16x4xf32>
    %160 = tpu.concatenate %158, %159 in 0 : vector<15x16x4xf32>, vector<1x16x4xf32> -> vector<16x16x4xf32>
    %cst_78 = arith.constant 0.000000e+00 : f32
    %161 = vector.broadcast %cst_78 : f32 to vector<16x1x4xf32>
    %162 = vector.extract_strided_slice %160 {offsets = [0, 0, 0], sizes = [16, 15, 4], strides = [1, 1, 1]} : vector<16x16x4xf32> to vector<16x15x4xf32>
    %163 = tpu.concatenate %161, %162 in 1 : vector<16x1x4xf32>, vector<16x15x4xf32> -> vector<16x16x4xf32>
    %164 = vector.shape_cast %163 : vector<16x16x4xf32> to vector<256x4xf32>
    %c6_79 = arith.constant 6 : index
    %c0_80 = arith.constant 0 : index
    %c0_81 = arith.constant 0 : index
    %165 = vector.load %arg4[%c6_79, %c0_80, %c0_81] : memref<9x4x8xf32, #tpu.memory_space<vmem>>, vector<1x4x8xf32>
    %166 = vector.shape_cast %165 : vector<1x4x8xf32> to vector<4x8xf32>
    %cst_82 = arith.constant dense<0.000000e+00> : vector<256x8xf32>
    %167 = tpu.matmul %164, %166, %cst_82 {dimension_numbers = #tpu.dot_dimension_numbers<[1], [0], [0], [1], [0, 0, 1, 1], [], []>} : vector<256x4xf32>, vector<4x8xf32>, vector<256x8xf32> -> vector<256x8xf32>
    %168 = arith.addf %157, %167 : vector<256x8xf32>
    %169 = vector.extract_strided_slice %3 {offsets = [1, 0, 0], sizes = [15, 16, 4], strides = [1, 1, 1]} : vector<16x16x4xf32> to vector<15x16x4xf32>
    %cst_83 = arith.constant 0.000000e+00 : f32
    %170 = vector.broadcast %cst_83 : f32 to vector<1x16x4xf32>
    %171 = tpu.concatenate %169, %170 in 0 : vector<15x16x4xf32>, vector<1x16x4xf32> -> vector<16x16x4xf32>
    %172 = vector.shape_cast %171 : vector<16x16x4xf32> to vector<256x4xf32>
    %c7 = arith.constant 7 : index
    %c0_84 = arith.constant 0 : index
    %c0_85 = arith.constant 0 : index
    %173 = vector.load %arg3[%c7, %c0_84, %c0_85] : memref<9x4x8xf32, #tpu.memory_space<vmem>>, vector<1x4x8xf32>
    %174 = vector.shape_cast %173 : vector<1x4x8xf32> to vector<4x8xf32>
    %cst_86 = arith.constant dense<0.000000e+00> : vector<256x8xf32>
    %175 = tpu.matmul %172, %174, %cst_86 {dimension_numbers = #tpu.dot_dimension_numbers<[1], [0], [0], [1], [0, 0, 1, 1], [], []>} : vector<256x4xf32>, vector<4x8xf32>, vector<256x8xf32> -> vector<256x8xf32>
    %176 = arith.addf %168, %175 : vector<256x8xf32>
    %177 = vector.extract_strided_slice %43 {offsets = [1, 0, 0], sizes = [15, 16, 4], strides = [1, 1, 1]} : vector<16x16x4xf32> to vector<15x16x4xf32>
    %cst_87 = arith.constant 0.000000e+00 : f32
    %178 = vector.broadcast %cst_87 : f32 to vector<1x16x4xf32>
    %179 = tpu.concatenate %177, %178 in 0 : vector<15x16x4xf32>, vector<1x16x4xf32> -> vector<16x16x4xf32>
    %180 = vector.shape_cast %179 : vector<16x16x4xf32> to vector<256x4xf32>
    %c7_88 = arith.constant 7 : index
    %c0_89 = arith.constant 0 : index
    %c0_90 = arith.constant 0 : index
    %181 = vector.load %arg4[%c7_88, %c0_89, %c0_90] : memref<9x4x8xf32, #tpu.memory_space<vmem>>, vector<1x4x8xf32>
    %182 = vector.shape_cast %181 : vector<1x4x8xf32> to vector<4x8xf32>
    %cst_91 = arith.constant dense<0.000000e+00> : vector<256x8xf32>
    %183 = tpu.matmul %180, %182, %cst_91 {dimension_numbers = #tpu.dot_dimension_numbers<[1], [0], [0], [1], [0, 0, 1, 1], [], []>} : vector<256x4xf32>, vector<4x8xf32>, vector<256x8xf32> -> vector<256x8xf32>
    %184 = arith.addf %176, %183 : vector<256x8xf32>
    %185 = vector.extract_strided_slice %3 {offsets = [1, 0, 0], sizes = [15, 16, 4], strides = [1, 1, 1]} : vector<16x16x4xf32> to vector<15x16x4xf32>
    %cst_92 = arith.constant 0.000000e+00 : f32
    %186 = vector.broadcast %cst_92 : f32 to vector<1x16x4xf32>
    %187 = tpu.concatenate %185, %186 in 0 : vector<15x16x4xf32>, vector<1x16x4xf32> -> vector<16x16x4xf32>
    %188 = vector.extract_strided_slice %187 {offsets = [0, 1, 0], sizes = [16, 15, 4], strides = [1, 1, 1]} : vector<16x16x4xf32> to vector<16x15x4xf32>
    %cst_93 = arith.constant 0.000000e+00 : f32
    %189 = vector.broadcast %cst_93 : f32 to vector<16x1x4xf32>
    %190 = tpu.concatenate %188, %189 in 1 : vector<16x15x4xf32>, vector<16x1x4xf32> -> vector<16x16x4xf32>
    %191 = vector.shape_cast %190 : vector<16x16x4xf32> to vector<256x4xf32>
    %c8 = arith.constant 8 : index
    %c0_94 = arith.constant 0 : index
    %c0_95 = arith.constant 0 : index
    %192 = vector.load %arg3[%c8, %c0_94, %c0_95] : memref<9x4x8xf32, #tpu.memory_space<vmem>>, vector<1x4x8xf32>
    %193 = vector.shape_cast %192 : vector<1x4x8xf32> to vector<4x8xf32>
    %cst_96 = arith.constant dense<0.000000e+00> : vector<256x8xf32>
    %194 = tpu.matmul %191, %193, %cst_96 {dimension_numbers = #tpu.dot_dimension_numbers<[1], [0], [0], [1], [0, 0, 1, 1], [], []>} : vector<256x4xf32>, vector<4x8xf32>, vector<256x8xf32> -> vector<256x8xf32>
    %195 = arith.addf %184, %194 : vector<256x8xf32>
    %196 = vector.extract_strided_slice %43 {offsets = [1, 0, 0], sizes = [15, 16, 4], strides = [1, 1, 1]} : vector<16x16x4xf32> to vector<15x16x4xf32>
    %cst_97 = arith.constant 0.000000e+00 : f32
    %197 = vector.broadcast %cst_97 : f32 to vector<1x16x4xf32>
    %198 = tpu.concatenate %196, %197 in 0 : vector<15x16x4xf32>, vector<1x16x4xf32> -> vector<16x16x4xf32>
    %199 = vector.extract_strided_slice %198 {offsets = [0, 1, 0], sizes = [16, 15, 4], strides = [1, 1, 1]} : vector<16x16x4xf32> to vector<16x15x4xf32>
    %cst_98 = arith.constant 0.000000e+00 : f32
    %200 = vector.broadcast %cst_98 : f32 to vector<16x1x4xf32>
    %201 = tpu.concatenate %199, %200 in 1 : vector<16x15x4xf32>, vector<16x1x4xf32> -> vector<16x16x4xf32>
    %202 = vector.shape_cast %201 : vector<16x16x4xf32> to vector<256x4xf32>
    %c8_99 = arith.constant 8 : index
    %c0_100 = arith.constant 0 : index
    %c0_101 = arith.constant 0 : index
    %203 = vector.load %arg4[%c8_99, %c0_100, %c0_101] : memref<9x4x8xf32, #tpu.memory_space<vmem>>, vector<1x4x8xf32>
    %204 = vector.shape_cast %203 : vector<1x4x8xf32> to vector<4x8xf32>
    %cst_102 = arith.constant dense<0.000000e+00> : vector<256x8xf32>
    %205 = tpu.matmul %202, %204, %cst_102 {dimension_numbers = #tpu.dot_dimension_numbers<[1], [0], [0], [1], [0, 0, 1, 1], [], []>} : vector<256x4xf32>, vector<4x8xf32>, vector<256x8xf32> -> vector<256x8xf32>
    %206 = arith.addf %195, %205 : vector<256x8xf32>
    %c0_103 = arith.constant 0 : index
    %c0_104 = arith.constant 0 : index
    %207 = vector.load %arg5[%c0_103, %c0_104] : memref<1x8xf32, #tpu.memory_space<vmem>>, vector<1x8xf32>
    %208 = vector.broadcast %207 : vector<1x8xf32> to vector<256x8xf32>
    %209 = arith.addf %206, %208 : vector<256x8xf32>
    %cst_105 = arith.constant 0.000000e+00 : f32
    %210 = vector.broadcast %cst_105 : f32 to vector<256x8xf32>
    %211 = arith.maximumf %209, %210 : vector<256x8xf32>
    %212 = vector.shape_cast %211 : vector<256x8xf32> to vector<16x16x8xf32>
    %cst_106 = arith.constant 0.000000e+00 : f32
    %213 = vector.broadcast %cst_106 : f32 to vector<256x8xf32>
    %cst_107 = arith.constant 0.000000e+00 : f32
    %214 = vector.broadcast %cst_107 : f32 to vector<1x16x8xf32>
    %215 = vector.extract_strided_slice %212 {offsets = [0, 0, 0], sizes = [15, 16, 8], strides = [1, 1, 1]} : vector<16x16x8xf32> to vector<15x16x8xf32>
    %216 = tpu.concatenate %214, %215 in 0 : vector<1x16x8xf32>, vector<15x16x8xf32> -> vector<16x16x8xf32>
    %cst_108 = arith.constant 0.000000e+00 : f32
    %217 = vector.broadcast %cst_108 : f32 to vector<16x1x8xf32>
    %218 = vector.extract_strided_slice %216 {offsets = [0, 0, 0], sizes = [16, 15, 8], strides = [1, 1, 1]} : vector<16x16x8xf32> to vector<16x15x8xf32>
    %219 = tpu.concatenate %217, %218 in 1 : vector<16x1x8xf32>, vector<16x15x8xf32> -> vector<16x16x8xf32>
    %220 = vector.shape_cast %219 : vector<16x16x8xf32> to vector<256x8xf32>
    %c0_109 = arith.constant 0 : index
    %c0_110 = arith.constant 0 : index
    %c0_111 = arith.constant 0 : index
    %221 = vector.load %arg6[%c0_109, %c0_110, %c0_111] : memref<9x8x8xf32, #tpu.memory_space<vmem>>, vector<1x8x8xf32>
    %222 = vector.shape_cast %221 : vector<1x8x8xf32> to vector<8x8xf32>
    %cst_112 = arith.constant dense<0.000000e+00> : vector<256x8xf32>
    %223 = tpu.matmul %220, %222, %cst_112 {dimension_numbers = #tpu.dot_dimension_numbers<[1], [0], [0], [1], [0, 0, 1, 1], [], []>} : vector<256x8xf32>, vector<8x8xf32>, vector<256x8xf32> -> vector<256x8xf32>
    %224 = arith.addf %213, %223 : vector<256x8xf32>
    %cst_113 = arith.constant 0.000000e+00 : f32
    %225 = vector.broadcast %cst_113 : f32 to vector<1x16x8xf32>
    %226 = vector.extract_strided_slice %212 {offsets = [0, 0, 0], sizes = [15, 16, 8], strides = [1, 1, 1]} : vector<16x16x8xf32> to vector<15x16x8xf32>
    %227 = tpu.concatenate %225, %226 in 0 : vector<1x16x8xf32>, vector<15x16x8xf32> -> vector<16x16x8xf32>
    %228 = vector.shape_cast %227 : vector<16x16x8xf32> to vector<256x8xf32>
    %c1_114 = arith.constant 1 : index
    %c0_115 = arith.constant 0 : index
    %c0_116 = arith.constant 0 : index
    %229 = vector.load %arg6[%c1_114, %c0_115, %c0_116] : memref<9x8x8xf32, #tpu.memory_space<vmem>>, vector<1x8x8xf32>
    %230 = vector.shape_cast %229 : vector<1x8x8xf32> to vector<8x8xf32>
    %cst_117 = arith.constant dense<0.000000e+00> : vector<256x8xf32>
    %231 = tpu.matmul %228, %230, %cst_117 {dimension_numbers = #tpu.dot_dimension_numbers<[1], [0], [0], [1], [0, 0, 1, 1], [], []>} : vector<256x8xf32>, vector<8x8xf32>, vector<256x8xf32> -> vector<256x8xf32>
    %232 = arith.addf %224, %231 : vector<256x8xf32>
    %cst_118 = arith.constant 0.000000e+00 : f32
    %233 = vector.broadcast %cst_118 : f32 to vector<1x16x8xf32>
    %234 = vector.extract_strided_slice %212 {offsets = [0, 0, 0], sizes = [15, 16, 8], strides = [1, 1, 1]} : vector<16x16x8xf32> to vector<15x16x8xf32>
    %235 = tpu.concatenate %233, %234 in 0 : vector<1x16x8xf32>, vector<15x16x8xf32> -> vector<16x16x8xf32>
    %236 = vector.extract_strided_slice %235 {offsets = [0, 1, 0], sizes = [16, 15, 8], strides = [1, 1, 1]} : vector<16x16x8xf32> to vector<16x15x8xf32>
    %cst_119 = arith.constant 0.000000e+00 : f32
    %237 = vector.broadcast %cst_119 : f32 to vector<16x1x8xf32>
    %238 = tpu.concatenate %236, %237 in 1 : vector<16x15x8xf32>, vector<16x1x8xf32> -> vector<16x16x8xf32>
    %239 = vector.shape_cast %238 : vector<16x16x8xf32> to vector<256x8xf32>
    %c2_120 = arith.constant 2 : index
    %c0_121 = arith.constant 0 : index
    %c0_122 = arith.constant 0 : index
    %240 = vector.load %arg6[%c2_120, %c0_121, %c0_122] : memref<9x8x8xf32, #tpu.memory_space<vmem>>, vector<1x8x8xf32>
    %241 = vector.shape_cast %240 : vector<1x8x8xf32> to vector<8x8xf32>
    %cst_123 = arith.constant dense<0.000000e+00> : vector<256x8xf32>
    %242 = tpu.matmul %239, %241, %cst_123 {dimension_numbers = #tpu.dot_dimension_numbers<[1], [0], [0], [1], [0, 0, 1, 1], [], []>} : vector<256x8xf32>, vector<8x8xf32>, vector<256x8xf32> -> vector<256x8xf32>
    %243 = arith.addf %232, %242 : vector<256x8xf32>
    %cst_124 = arith.constant 0.000000e+00 : f32
    %244 = vector.broadcast %cst_124 : f32 to vector<16x1x8xf32>
    %245 = vector.extract_strided_slice %212 {offsets = [0, 0, 0], sizes = [16, 15, 8], strides = [1, 1, 1]} : vector<16x16x8xf32> to vector<16x15x8xf32>
    %246 = tpu.concatenate %244, %245 in 1 : vector<16x1x8xf32>, vector<16x15x8xf32> -> vector<16x16x8xf32>
    %247 = vector.shape_cast %246 : vector<16x16x8xf32> to vector<256x8xf32>
    %c3_125 = arith.constant 3 : index
    %c0_126 = arith.constant 0 : index
    %c0_127 = arith.constant 0 : index
    %248 = vector.load %arg6[%c3_125, %c0_126, %c0_127] : memref<9x8x8xf32, #tpu.memory_space<vmem>>, vector<1x8x8xf32>
    %249 = vector.shape_cast %248 : vector<1x8x8xf32> to vector<8x8xf32>
    %cst_128 = arith.constant dense<0.000000e+00> : vector<256x8xf32>
    %250 = tpu.matmul %247, %249, %cst_128 {dimension_numbers = #tpu.dot_dimension_numbers<[1], [0], [0], [1], [0, 0, 1, 1], [], []>} : vector<256x8xf32>, vector<8x8xf32>, vector<256x8xf32> -> vector<256x8xf32>
    %251 = arith.addf %243, %250 : vector<256x8xf32>
    %252 = vector.shape_cast %212 : vector<16x16x8xf32> to vector<256x8xf32>
    %c4_129 = arith.constant 4 : index
    %c0_130 = arith.constant 0 : index
    %c0_131 = arith.constant 0 : index
    %253 = vector.load %arg6[%c4_129, %c0_130, %c0_131] : memref<9x8x8xf32, #tpu.memory_space<vmem>>, vector<1x8x8xf32>
    %254 = vector.shape_cast %253 : vector<1x8x8xf32> to vector<8x8xf32>
    %cst_132 = arith.constant dense<0.000000e+00> : vector<256x8xf32>
    %255 = tpu.matmul %252, %254, %cst_132 {dimension_numbers = #tpu.dot_dimension_numbers<[1], [0], [0], [1], [0, 0, 1, 1], [], []>} : vector<256x8xf32>, vector<8x8xf32>, vector<256x8xf32> -> vector<256x8xf32>
    %256 = arith.addf %251, %255 : vector<256x8xf32>
    %257 = vector.extract_strided_slice %212 {offsets = [0, 1, 0], sizes = [16, 15, 8], strides = [1, 1, 1]} : vector<16x16x8xf32> to vector<16x15x8xf32>
    %cst_133 = arith.constant 0.000000e+00 : f32
    %258 = vector.broadcast %cst_133 : f32 to vector<16x1x8xf32>
    %259 = tpu.concatenate %257, %258 in 1 : vector<16x15x8xf32>, vector<16x1x8xf32> -> vector<16x16x8xf32>
    %260 = vector.shape_cast %259 : vector<16x16x8xf32> to vector<256x8xf32>
    %c5_134 = arith.constant 5 : index
    %c0_135 = arith.constant 0 : index
    %c0_136 = arith.constant 0 : index
    %261 = vector.load %arg6[%c5_134, %c0_135, %c0_136] : memref<9x8x8xf32, #tpu.memory_space<vmem>>, vector<1x8x8xf32>
    %262 = vector.shape_cast %261 : vector<1x8x8xf32> to vector<8x8xf32>
    %cst_137 = arith.constant dense<0.000000e+00> : vector<256x8xf32>
    %263 = tpu.matmul %260, %262, %cst_137 {dimension_numbers = #tpu.dot_dimension_numbers<[1], [0], [0], [1], [0, 0, 1, 1], [], []>} : vector<256x8xf32>, vector<8x8xf32>, vector<256x8xf32> -> vector<256x8xf32>
    %264 = arith.addf %256, %263 : vector<256x8xf32>
    %265 = vector.extract_strided_slice %212 {offsets = [1, 0, 0], sizes = [15, 16, 8], strides = [1, 1, 1]} : vector<16x16x8xf32> to vector<15x16x8xf32>
    %cst_138 = arith.constant 0.000000e+00 : f32
    %266 = vector.broadcast %cst_138 : f32 to vector<1x16x8xf32>
    %267 = tpu.concatenate %265, %266 in 0 : vector<15x16x8xf32>, vector<1x16x8xf32> -> vector<16x16x8xf32>
    %cst_139 = arith.constant 0.000000e+00 : f32
    %268 = vector.broadcast %cst_139 : f32 to vector<16x1x8xf32>
    %269 = vector.extract_strided_slice %267 {offsets = [0, 0, 0], sizes = [16, 15, 8], strides = [1, 1, 1]} : vector<16x16x8xf32> to vector<16x15x8xf32>
    %270 = tpu.concatenate %268, %269 in 1 : vector<16x1x8xf32>, vector<16x15x8xf32> -> vector<16x16x8xf32>
    %271 = vector.shape_cast %270 : vector<16x16x8xf32> to vector<256x8xf32>
    %c6_140 = arith.constant 6 : index
    %c0_141 = arith.constant 0 : index
    %c0_142 = arith.constant 0 : index
    %272 = vector.load %arg6[%c6_140, %c0_141, %c0_142] : memref<9x8x8xf32, #tpu.memory_space<vmem>>, vector<1x8x8xf32>
    %273 = vector.shape_cast %272 : vector<1x8x8xf32> to vector<8x8xf32>
    %cst_143 = arith.constant dense<0.000000e+00> : vector<256x8xf32>
    %274 = tpu.matmul %271, %273, %cst_143 {dimension_numbers = #tpu.dot_dimension_numbers<[1], [0], [0], [1], [0, 0, 1, 1], [], []>} : vector<256x8xf32>, vector<8x8xf32>, vector<256x8xf32> -> vector<256x8xf32>
    %275 = arith.addf %264, %274 : vector<256x8xf32>
    %276 = vector.extract_strided_slice %212 {offsets = [1, 0, 0], sizes = [15, 16, 8], strides = [1, 1, 1]} : vector<16x16x8xf32> to vector<15x16x8xf32>
    %cst_144 = arith.constant 0.000000e+00 : f32
    %277 = vector.broadcast %cst_144 : f32 to vector<1x16x8xf32>
    %278 = tpu.concatenate %276, %277 in 0 : vector<15x16x8xf32>, vector<1x16x8xf32> -> vector<16x16x8xf32>
    %279 = vector.shape_cast %278 : vector<16x16x8xf32> to vector<256x8xf32>
    %c7_145 = arith.constant 7 : index
    %c0_146 = arith.constant 0 : index
    %c0_147 = arith.constant 0 : index
    %280 = vector.load %arg6[%c7_145, %c0_146, %c0_147] : memref<9x8x8xf32, #tpu.memory_space<vmem>>, vector<1x8x8xf32>
    %281 = vector.shape_cast %280 : vector<1x8x8xf32> to vector<8x8xf32>
    %cst_148 = arith.constant dense<0.000000e+00> : vector<256x8xf32>
    %282 = tpu.matmul %279, %281, %cst_148 {dimension_numbers = #tpu.dot_dimension_numbers<[1], [0], [0], [1], [0, 0, 1, 1], [], []>} : vector<256x8xf32>, vector<8x8xf32>, vector<256x8xf32> -> vector<256x8xf32>
    %283 = arith.addf %275, %282 : vector<256x8xf32>
    %284 = vector.extract_strided_slice %212 {offsets = [1, 0, 0], sizes = [15, 16, 8], strides = [1, 1, 1]} : vector<16x16x8xf32> to vector<15x16x8xf32>
    %cst_149 = arith.constant 0.000000e+00 : f32
    %285 = vector.broadcast %cst_149 : f32 to vector<1x16x8xf32>
    %286 = tpu.concatenate %284, %285 in 0 : vector<15x16x8xf32>, vector<1x16x8xf32> -> vector<16x16x8xf32>
    %287 = vector.extract_strided_slice %286 {offsets = [0, 1, 0], sizes = [16, 15, 8], strides = [1, 1, 1]} : vector<16x16x8xf32> to vector<16x15x8xf32>
    %cst_150 = arith.constant 0.000000e+00 : f32
    %288 = vector.broadcast %cst_150 : f32 to vector<16x1x8xf32>
    %289 = tpu.concatenate %287, %288 in 1 : vector<16x15x8xf32>, vector<16x1x8xf32> -> vector<16x16x8xf32>
    %290 = vector.shape_cast %289 : vector<16x16x8xf32> to vector<256x8xf32>
    %c8_151 = arith.constant 8 : index
    %c0_152 = arith.constant 0 : index
    %c0_153 = arith.constant 0 : index
    %291 = vector.load %arg6[%c8_151, %c0_152, %c0_153] : memref<9x8x8xf32, #tpu.memory_space<vmem>>, vector<1x8x8xf32>
    %292 = vector.shape_cast %291 : vector<1x8x8xf32> to vector<8x8xf32>
    %cst_154 = arith.constant dense<0.000000e+00> : vector<256x8xf32>
    %293 = tpu.matmul %290, %292, %cst_154 {dimension_numbers = #tpu.dot_dimension_numbers<[1], [0], [0], [1], [0, 0, 1, 1], [], []>} : vector<256x8xf32>, vector<8x8xf32>, vector<256x8xf32> -> vector<256x8xf32>
    %294 = arith.addf %283, %293 : vector<256x8xf32>
    %c0_155 = arith.constant 0 : index
    %c0_156 = arith.constant 0 : index
    %295 = vector.load %arg7[%c0_155, %c0_156] : memref<1x8xf32, #tpu.memory_space<vmem>>, vector<1x8xf32>
    %296 = vector.broadcast %295 : vector<1x8xf32> to vector<256x8xf32>
    %297 = arith.addf %294, %296 : vector<256x8xf32>
    %cst_157 = arith.constant 0.000000e+00 : f32
    %298 = vector.broadcast %cst_157 : f32 to vector<256x8xf32>
    %299 = arith.maximumf %297, %298 : vector<256x8xf32>
    %300 = vector.shape_cast %299 : vector<256x8xf32> to vector<16x16x8xf32>
    %c0_158 = arith.constant 0 : index
    %c0_159 = arith.constant 0 : index
    %c0_160 = arith.constant 0 : index
    %c0_161 = arith.constant 0 : index
    %301 = vector.load %arg8[%c0_158, %c0_159, %c0_160, %c0_161] : memref<1x16x16x8xf32, #tpu.memory_space<vmem>>, vector<1x16x16x8xf32>
    %302 = vector.shape_cast %301 : vector<1x16x16x8xf32> to vector<16x16x8xf32>
    %303 = vector.shape_cast %300 : vector<16x16x8xf32> to vector<1x16x16x8xf32>
    tpu.vector_store %arg8[%c0_158, %c0_159, %c0_160, %c0_161], %303 {strides = array<i32>} : memref<1x16x16x8xf32, #tpu.memory_space<vmem>>, vector<1x16x16x8xf32>,
    return
  }
  func.func @transform_0(%arg0: i32) -> (i32, i32, i32, i32) {
    %c0_i32 = arith.constant 0 : i32
    %c0_i32_0 = arith.constant 0 : i32
    %c0_i32_1 = arith.constant 0 : i32
    %c0_i32_2 = arith.constant 0 : i32
    return %arg0, %c0_i32, %c0_i32_0, %c0_i32_1 : i32, i32, i32, i32
  }
  func.func @transform_1(%arg0: i32) -> (i32, i32, i32, i32) {
    %c0_i32 = arith.constant 0 : i32
    %c0_i32_0 = arith.constant 0 : i32
    %c0_i32_1 = arith.constant 0 : i32
    %c0_i32_2 = arith.constant 0 : i32
    return %arg0, %c0_i32, %c0_i32_0, %c0_i32_1 : i32, i32, i32, i32
  }
  func.func @transform_2(%arg0: i32) -> (i32, i32, i32) {
    %c0_i32 = arith.constant 0 : i32
    %c0_i32_0 = arith.constant 0 : i32
    %c0_i32_1 = arith.constant 0 : i32
    %c0_i32_2 = arith.constant 0 : i32
    return %c0_i32, %c0_i32_0, %c0_i32_1 : i32, i32, i32
  }
  func.func @transform_3(%arg0: i32) -> (i32, i32, i32) {
    %c0_i32 = arith.constant 0 : i32
    %c0_i32_0 = arith.constant 0 : i32
    %c0_i32_1 = arith.constant 0 : i32
    %c0_i32_2 = arith.constant 0 : i32
    return %c0_i32, %c0_i32_0, %c0_i32_1 : i32, i32, i32
  }
  func.func @transform_4(%arg0: i32) -> (i32, i32) {
    %c0_i32 = arith.constant 0 : i32
    %c0_i32_0 = arith.constant 0 : i32
    %c0_i32_1 = arith.constant 0 : i32
    return %c0_i32, %c0_i32_0 : i32, i32
  }
  func.func @transform_5(%arg0: i32) -> (i32, i32, i32) {
    %c0_i32 = arith.constant 0 : i32
    %c0_i32_0 = arith.constant 0 : i32
    %c0_i32_1 = arith.constant 0 : i32
    %c0_i32_2 = arith.constant 0 : i32
    return %c0_i32, %c0_i32_0, %c0_i32_1 : i32, i32, i32
  }
  func.func @transform_6(%arg0: i32) -> (i32, i32) {
    %c0_i32 = arith.constant 0 : i32
    %c0_i32_0 = arith.constant 0 : i32
    %c0_i32_1 = arith.constant 0 : i32
    return %c0_i32, %c0_i32_0 : i32, i32
  }
  func.func @transform_7(%arg0: i32) -> (i32, i32, i32, i32) {
    %c0_i32 = arith.constant 0 : i32
    %c0_i32_0 = arith.constant 0 : i32
    %c0_i32_1 = arith.constant 0 : i32
    %c0_i32_2 = arith.constant 0 : i32
    return %arg0, %c0_i32, %c0_i32_0, %c0_i32_1 : i32, i32, i32, i32
  }
}

</mosaic_0001>

<llo_original>
// kernel: upsampling_concat_forward.1
$region0: #{upsampling_concat_forward.1}
  #allocation0 [shape = 'u32[]', space=smem, size = 0x4, offset = 0x4, fixed_abs, tag = 'smem constant byte address 0x4 - core index']
  #allocation1 [shape = 'u32[144,128]{1,0:T(1,128)}', space=vmem, size = 0x12000, scoped, tag = 'internal scratch']
  %s0 = inlined_call_operand.vmem [shape: f32[2,8,8,4], index: 0, kind: input, shape index: {}]
  %s1 = inlined_call_operand.vmem [shape: f32[2,16,16,4], index: 1, kind: input, shape index: {}]
  %s2 = inlined_call_operand.vmem [shape: f32[9,4,8], index: 2, kind: input, shape index: {}]
  %s3 = inlined_call_operand.vmem [shape: f32[9,4,8], index: 3, kind: input, shape index: {}]
  %s4 = inlined_call_operand.vmem [shape: f32[1,8], index: 4, kind: input, shape index: {}]
  %s5 = inlined_call_operand.vmem [shape: f32[9,8,8], index: 5, kind: input, shape index: {}]
  %s6 = inlined_call_operand.vmem [shape: f32[1,8], index: 6, kind: input, shape index: {}]
  %s7 = inlined_call_operand.vmem [shape: f32[2,16,16,8], index: 7, kind: output, shape index: {}]
  %s8 = sld [smem:[#allocation0]]
  $region61: #{upsampling_concat_forward.1} parent=0
    _
  %s10 = ssub.s32 1, %s8
  %s11 = scalar_select 0, %s10, %s8
  loop: start=0, step=1, limit=4
  $region2: #{upsampling_concat_forward.1} parent=0 // loop_pre_header
    _
  $region3: #{upsampling_concat_forward.1} parent=0 // loop_header
    %s13 = sphi 0, %s17
    %p14 = scmp.ge.s32.totalorder %s13, 4
    %s23 = sphi 0, %s25
    %s26 = sphi 0, %s23
    %s27 = sphi 0, %s26
    %s43 = sphi 0, %s27
    %s49 = sphi 0, %s51
    %s52 = sphi 0, %s49
    %s53 = sphi 0, %s52
    %s69 = sphi 0, %s53
    %s73 = sphi 0, %s73
    %s75 = sphi 0, %s73
    %s76 = sphi 0, %s75
    %s90 = sphi 0, %s76
    %s94 = sphi 0, %s94
    %s96 = sphi 0, %s94
    %s97 = sphi 0, %s96
    %s111 = sphi 0, %s97
    %s115 = sphi 0, %s115
    %s117 = sphi 0, %s115
    %s118 = sphi 0, %s117
    %s132 = sphi 0, %s118
    %s136 = sphi 0, %s136
    %s138 = sphi 0, %s136
    %s139 = sphi 0, %s138
    %s153 = sphi 0, %s139
    %s157 = sphi 0, %s157
    %s159 = sphi 0, %s157
    %s160 = sphi 0, %s159
    %s174 = sphi 0, %s160
    %s180 = sphi 0, %s182
    %s183 = sphi 0, %s180
    %s184 = sphi 0, %s183
    %s200 = sphi 0, %s184
  $region4: #{upsampling_concat_forward.1} parent=0 // loop_header_branch
    %16 = sbr.rel (%p14) target = $region8
  $region5: #{upsampling_concat_forward.1} parent=0 // loop_body
    %s18 = ssub.s32 %s13, 1
    %s19 = ssub.s32 %s13, 2
    %s20 = sadd.s32 %s13, 1
    %s21 = ssub.s32 %s13, %s20
    %p22 = scmp.eq.s32.totalorder %s21, 0
    %s24 = sadd.s32 %s23, 1
    %s25 = scalar_select %p22, %s23, %s24
    %p28 = pneg %p22
    %p29 = scmp.eq.s32.totalorder %s13, 1
    %p30 = por %p28, %p29
    %p31 = scmp.ne.s32.totalorder %s23, %s26
    %p32 = scmp.eq.s32.totalorder %s13, 0
    %p33 = por %p31, %p32
    %p34 = scmp.ne.s32.totalorder %s23, %s26
    %p35 = scmp.eq.s32.totalorder %s18, 1
    %p36 = por %p34, %p35
    %p37 = scmp.ne.s32.totalorder %s26, %s27
    %p38 = scmp.eq.s32.totalorder %s18, 0
    %p39 = por %p37, %p38
    %p40 = scmp.ne.s32.totalorder %s26, %s27
    %p41 = scmp.eq.s32.totalorder %s19, 1
    %p42 = por %p40, %p41
    %p44 = scmp.ne.s32.totalorder %s27, %s43
    %p45 = scmp.eq.s32.totalorder %s19, 0
    %p46 = por %p44, %p45
    %s47 = ssub.s32 %s13, %s20
    %p48 = scmp.eq.s32.totalorder %s47, 0
    %s50 = sadd.s32 %s49, 1
    %s51 = scalar_select %p48, %s49, %s50
    %p54 = pneg %p48
    %p55 = scmp.eq.s32.totalorder %s13, 1
    %p56 = por %p54, %p55
    %p57 = scmp.ne.s32.totalorder %s49, %s52
    %p58 = scmp.eq.s32.totalorder %s13, 0
    %p59 = por %p57, %p58
    %p60 = scmp.ne.s32.totalorder %s49, %s52
    %p61 = scmp.eq.s32.totalorder %s18, 1
    %p62 = por %p60, %p61
    %p63 = scmp.ne.s32.totalorder %s52, %s53
    %p64 = scmp.eq.s32.totalorder %s18, 0
    %p65 = por %p63, %p64
    %p66 = scmp.ne.s32.totalorder %s52, %s53
    %p67 = scmp.eq.s32.totalorder %s19, 1
    %p68 = por %p66, %p67
    %p70 = scmp.ne.s32.totalorder %s53, %s69
    %p71 = scmp.eq.s32.totalorder %s19, 0
    %p72 = por %p70, %p71
    %s74 = sadd.s32 %s73, 1
    %p77 = scmp.eq.s32.totalorder %s13, 1
    %p78 = scmp.ne.s32.totalorder %s73, %s75
    %p79 = scmp.eq.s32.totalorder %s13, 0
    %p80 = por %p78, %p79
    %p81 = scmp.ne.s32.totalorder %s73, %s75
    %p82 = scmp.eq.s32.totalorder %s18, 1
    %p83 = por %p81, %p82
    %p84 = scmp.ne.s32.totalorder %s75, %s76
    %p85 = scmp.eq.s32.totalorder %s18, 0
    %p86 = por %p84, %p85
    %p87 = scmp.ne.s32.totalorder %s75, %s76
    %p88 = scmp.eq.s32.totalorder %s19, 1
    %p89 = por %p87, %p88
    %p91 = scmp.ne.s32.totalorder %s76, %s90
    %p92 = scmp.eq.s32.totalorder %s19, 0
    %p93 = por %p91, %p92
    %s95 = sadd.s32 %s94, 1
    %p98 = scmp.eq.s32.totalorder %s13, 1
    %p99 = scmp.ne.s32.totalorder %s94, %s96
    %p100 = scmp.eq.s32.totalorder %s13, 0
    %p101 = por %p99, %p100
    %p102 = scmp.ne.s32.totalorder %s94, %s96
    %p103 = scmp.eq.s32.totalorder %s18, 1
    %p104 = por %p102, %p103
    %p105 = scmp.ne.s32.totalorder %s96, %s97
    %p106 = scmp.eq.s32.totalorder %s18, 0
    %p107 = por %p105, %p106
    %p108 = scmp.ne.s32.totalorder %s96, %s97
    %p109 = scmp.eq.s32.totalorder %s19, 1
    %p110 = por %p108, %p109
    %p112 = scmp.ne.s32.totalorder %s97, %s111
    %p113 = scmp.eq.s32.totalorder %s19, 0
    %p114 = por %p112, %p113
    %s116 = sadd.s32 %s115, 1
    %p119 = scmp.eq.s32.totalorder %s13, 1
    %p120 = scmp.ne.s32.totalorder %s115, %s117
    %p121 = scmp.eq.s32.totalorder %s13, 0
    %p122 = por %p120, %p121
    %p123 = scmp.ne.s32.totalorder %s115, %s117
    %p124 = scmp.eq.s32.totalorder %s18, 1
    %p125 = por %p123, %p124
    %p126 = scmp.ne.s32.totalorder %s117, %s118
    %p127 = scmp.eq.s32.totalorder %s18, 0
    %p128 = por %p126, %p127
    %p129 = scmp.ne.s32.totalorder %s117, %s118
    %p130 = scmp.eq.s32.totalorder %s19, 1
    %p131 = por %p129, %p130
    %p133 = scmp.ne.s32.totalorder %s118, %s132
    %p134 = scmp.eq.s32.totalorder %s19, 0
    %p135 = por %p133, %p134
    %s137 = sadd.s32 %s136, 1
    %p140 = scmp.eq.s32.totalorder %s13, 1
    %p141 = scmp.ne.s32.totalorder %s136, %s138
    %p142 = scmp.eq.s32.totalorder %s13, 0
    %p143 = por %p141, %p142
    %p144 = scmp.ne.s32.totalorder %s136, %s138
    %p145 = scmp.eq.s32.totalorder %s18, 1
    %p146 = por %p144, %p145
    %p147 = scmp.ne.s32.totalorder %s138, %s139
    %p148 = scmp.eq.s32.totalorder %s18, 0
    %p149 = por %p147, %p148
    %p150 = scmp.ne.s32.totalorder %s138, %s139
    %p151 = scmp.eq.s32.totalorder %s19, 1
    %p152 = por %p150, %p151
    %p154 = scmp.ne.s32.totalorder %s139, %s153
    %p155 = scmp.eq.s32.totalorder %s19, 0
    %p156 = por %p154, %p155
    %s158 = sadd.s32 %s157, 1
    %p161 = scmp.eq.s32.totalorder %s13, 1
    %p162 = scmp.ne.s32.totalorder %s157, %s159
    %p163 = scmp.eq.s32.totalorder %s13, 0
    %p164 = por %p162, %p163
    %p165 = scmp.ne.s32.totalorder %s157, %s159
    %p166 = scmp.eq.s32.totalorder %s18, 1
    %p167 = por %p165, %p166
    %p168 = scmp.ne.s32.totalorder %s159, %s160
    %p169 = scmp.eq.s32.totalorder %s18, 0
    %p170 = por %p168, %p169
    %p171 = scmp.ne.s32.totalorder %s159, %s160
    %p172 = scmp.eq.s32.totalorder %s19, 1
    %p173 = por %p171, %p172
    %p175 = scmp.ne.s32.totalorder %s160, %s174
    %p176 = scmp.eq.s32.totalorder %s19, 0
    %p177 = por %p175, %p176
    %s178 = ssub.s32 %s13, %s20
    %p179 = scmp.eq.s32.totalorder %s178, 0
    %s181 = sadd.s32 %s180, 1
    %s182 = scalar_select %p179, %s180, %s181
    %p185 = pneg %p179
    %p186 = scmp.eq.s32.totalorder %s13, 1
    %p187 = por %p185, %p186
    %p188 = scmp.ne.s32.totalorder %s180, %s183
    %p189 = scmp.eq.s32.totalorder %s13, 0
    %p190 = por %p188, %p189
    %p191 = scmp.ne.s32.totalorder %s180, %s183
    %p192 = scmp.eq.s32.totalorder %s18, 1
    %p193 = por %p191, %p192
    %p194 = scmp.ne.s32.totalorder %s183, %s184
    %p195 = scmp.eq.s32.totalorder %s18, 0
    %p196 = por %p194, %p195
    %p197 = scmp.ne.s32.totalorder %s183, %s184
    %p198 = scmp.eq.s32.totalorder %s19, 1
    %p199 = por %p197, %p198
    %p201 = scmp.ne.s32.totalorder %s184, %s200
    %p202 = scmp.eq.s32.totalorder %s19, 0
    %p203 = por %p201, %p202
    %p204 = scmp.le.s32.totalorder 1, %s13
    %p205 = scmp.lt.s32.totalorder %s13, 3
    %p206 = pnand %p204, %p205
    %p207 = pneg %p206
    // Predicated region
    $region9: #{upsampling_concat_forward.1} parent=5 // pred_check
      _
    $region10: #{upsampling_concat_forward.1} parent=5 // pred_check_branch
      %209 = sbr.rel (%p206) target = $region12
    $region11: #{upsampling_concat_forward.1} parent=5 // pred_region
      %s210 = ssub.s32 %s13, 1
      // Predicated region
      $region13: #{upsampling_concat_forward.1} parent=11 // pred_check
        %p211 = pneg %p86
      $region14: #{upsampling_concat_forward.1} parent=11 // pred_check_branch
        %213 = sbr.rel (%p211) target = $region16
      $region15: #{upsampling_concat_forward.1} parent=11 // pred_region
        _
      $region16: #{upsampling_concat_forward.1} parent=11 // pred_fallthru
        _
      // Predicated region
      $region17: #{upsampling_concat_forward.1} parent=11 // pred_check
        %p214 = pneg %p107
      $region18: #{upsampling_concat_forward.1} parent=11 // pred_check_branch
        %216 = sbr.rel (%p214) target = $region20
      $region19: #{upsampling_concat_forward.1} parent=11 // pred_region
        _
      $region20: #{upsampling_concat_forward.1} parent=11 // pred_fallthru
        _
      // Predicated region
      $region21: #{upsampling_concat_forward.1} parent=11 // pred_check
        %p217 = pneg %p128
      $region22: #{upsampling_concat_forward.1} parent=11 // pred_check_branch
        %219 = sbr.rel (%p217) target = $region24
      $region23: #{upsampling_concat_forward.1} parent=11 // pred_region
        _
      $region24: #{upsampling_concat_forward.1} parent=11 // pred_fallthru
        _
      // Predicated region
      $region25: #{upsampling_concat_forward.1} parent=11 // pred_check
        %p220 = pneg %p149
      $region26: #{upsampling_concat_forward.1} parent=11 // pred_check_branch
        %222 = sbr.rel (%p220) target = $region28
      $region27: #{upsampling_concat_forward.1} parent=11 // pred_region
        _
      $region28: #{upsampling_concat_forward.1} parent=11 // pred_fallthru
        _
      // Predicated region
      $region29: #{upsampling_concat_forward.1} parent=11 // pred_check
        %p223 = pneg %p170
      $region30: #{upsampling_concat_forward.1} parent=11 // pred_check_branch
        %225 = sbr.rel (%p223) target = $region32
      $region31: #{upsampling_concat_forward.1} parent=11 // pred_region
        _
      $region32: #{upsampling_concat_forward.1} parent=11 // pred_fallthru
        _
    $region12: #{upsampling_concat_forward.1} parent=5 // pred_fallthru
      _
    %p226 = scmp.lt.s32.totalorder %s13, 2
    // Predicated region
    $region33: #{upsampling_concat_forward.1} parent=5 // pred_check
      %p227 = pneg %p226
    $region34: #{upsampling_concat_forward.1} parent=5 // pred_check_branch
      %229 = sbr.rel (%p227) target = $region36
    $region35: #{upsampling_concat_forward.1} parent=5 // pred_region
      // Predicated region
      $region37: #{upsampling_concat_forward.1} parent=35 // pred_check
        %p230 = pneg %p33
      $region38: #{upsampling_concat_forward.1} parent=35 // pred_check_branch
        %232 = sbr.rel (%p230) target = $region40
      $region39: #{upsampling_concat_forward.1} parent=35 // pred_region
        %p233 = scmp.lt.s32.totalorder %s13, 1
        %s234 = scalar_select %p233, %s13, 1
        %s235 = smul.addr %s234, 8
        %s236 = smul.addr %s235, 8
        %s237 = scalar_lea.vmem %s0, %s236
      $region40: #{upsampling_concat_forward.1} parent=35 // pred_fallthru
        _
      // Predicated region
      $region41: #{upsampling_concat_forward.1} parent=35 // pred_check
        %p238 = pneg %p59
      $region42: #{upsampling_concat_forward.1} parent=35 // pred_check_branch
        %240 = sbr.rel (%p238) target = $region44
      $region43: #{upsampling_concat_forward.1} parent=35 // pred_region
        %p241 = scmp.lt.s32.totalorder %s13, 1
        %s242 = scalar_select %p241, %s13, 1
        %s243 = smul.addr %s242, 32
        %s244 = smul.addr %s243, 8
        %s245 = scalar_lea.vmem %s1, %s244
      $region44: #{upsampling_concat_forward.1} parent=35 // pred_fallthru
        _
    $region36: #{upsampling_concat_forward.1} parent=5 // pred_fallthru
      _
    %p246 = scmp.le.s32.totalorder 1, %s13
    %p247 = scmp.lt.s32.totalorder %s13, 3
    %p248 = pnand %p246, %p247
    %p249 = pneg %p248
    // Predicated region
    $region45: #{upsampling_concat_forward.1} parent=5 // pred_check
      _
    $region46: #{upsampling_concat_forward.1} parent=5 // pred_check_branch
      %251 = sbr.rel (%p248) target = $region48
    $region47: #{upsampling_concat_forward.1} parent=5 // pred_region
      %s252 = ssub.s32 %s13, 1
      %p253 = scmp.lt.s32.totalorder %s18, 1
      %s254 = scalar_select %p253, %s18, 1
      %s255 = smul.addr %s254, 8
      %s256 = smul.addr %s255, 8
      %s257 = scalar_lea.vmem %s0, %s256
      %p258 = pneg %p39
      %p259 = pneg %p36
      %p260 = scmp.lt.s32.totalorder %s18, 1
      %s261 = scalar_select %p260, %s18, 1
      %s262 = smul.addr %s261, 32
      %s263 = smul.addr %s262, 8
      %s264 = scalar_lea.vmem %s1, %s263
      %p265 = pneg %p65
      %p266 = pneg %p62
      %p267 = pneg %p86
      %p268 = pneg %p83
      %p269 = pneg %p107
      %p270 = pneg %p104
      %p271 = pneg %p128
      %p272 = pneg %p125
      %p273 = pneg %p149
      %p274 = pneg %p146
      %p275 = pneg %p170
      %p276 = pneg %p167
      %p277 = pneg %p196
      %p278 = pneg %p193
      %p279 = scmp.lt.s32.totalorder %s18, 1
      %s280 = scalar_select %p279, %s18, 1
      %s281 = smul.addr %s280, 32
      %s282 = smul.addr %s281, 8
      %s283 = scalar_lea.vmem %s7, %s282
      %p284 = scmp.lt.s32.totalorder %s18, 1
      %s285 = scalar_select %p284, %s18, 1
      %s286 = smul.addr %s285, 8
      %s287 = smul.addr %s286, 8
      %s288 = scalar_lea.vmem %s0, %s287
      %p289 = scmp.lt.s32.totalorder %s18, 1
      %s290 = scalar_select %p289, %s18, 1
      %s291 = smul.addr %s290, 32
      %s292 = smul.addr %s291, 8
      %s293 = scalar_lea.vmem %s1, %s292
      %p294 = scmp.lt.s32.totalorder %s18, 1
      %s295 = scalar_select %p294, %s18, 1
      %s296 = smul.addr %s295, 32
      %s297 = smul.addr %s296, 8
      %s298 = scalar_lea.vmem %s7, %s297
      %v299 = vld [vmem:[%s288] sm:$0xff]
      %v300 = vld [vmem:[%s288 + $0x8] sm:$0xff]
      %v301 = vld [vmem:[%s288 + $0x10] sm:$0xff]
      %v302 = vld [vmem:[%s288 + $0x18] sm:$0xff]
      %v303 = vld [vmem:[%s288 + $0x20] sm:$0xff]
      %v304 = vld [vmem:[%s288 + $0x28] sm:$0xff]
      %v305 = vld [vmem:[%s288 + $0x30] sm:$0xff]
      %v306 = vld [vmem:[%s288 + $0x38] sm:$0xff]
      %v307 = vld [vmem:[%s293] sm:$0xff]
      %v308 = vld [vmem:[%s293 + $0x8] sm:$0xff]
      %v309 = vld [vmem:[%s293 + $0x10] sm:$0xff]
      %v310 = vld [vmem:[%s293 + $0x18] sm:$0xff]
      %v311 = vld [vmem:[%s293 + $0x20] sm:$0xff]
      %v312 = vld [vmem:[%s293 + $0x28] sm:$0xff]
      %v313 = vld [vmem:[%s293 + $0x30] sm:$0xff]
      %v314 = vld [vmem:[%s293 + $0x38] sm:$0xff]
      %v315 = vld [vmem:[%s293 + $0x40] sm:$0xff]
      %v316 = vld [vmem:[%s293 + $0x48] sm:$0xff]
      %v317 = vld [vmem:[%s293 + $0x50] sm:$0xff]
      %v318 = vld [vmem:[%s293 + $0x58] sm:$0xff]
      %v319 = vld [vmem:[%s293 + $0x60] sm:$0xff]
      %v320 = vld [vmem:[%s293 + $0x68] sm:$0xff]
      %v321 = vld [vmem:[%s293 + $0x70] sm:$0xff]
      %v322 = vld [vmem:[%s293 + $0x78] sm:$0xff]
      %v323 = vld [vmem:[%s293 + $0x80] sm:$0xff]
      %v324 = vld [vmem:[%s293 + $0x88] sm:$0xff]
      %v325 = vld [vmem:[%s293 + $0x90] sm:$0xff]
      %v326 = vld [vmem:[%s293 + $0x98] sm:$0xff]
      %v327 = vld [vmem:[%s293 + $0xa0] sm:$0xff]
      %v328 = vld [vmem:[%s293 + $0xa8] sm:$0xff]
      %v329 = vld [vmem:[%s293 + $0xb0] sm:$0xff]
      %v330 = vld [vmem:[%s293 + $0xb8] sm:$0xff]
      %v331 = vld [vmem:[%s293 + $0xc0] sm:$0xff]
      %v332 = vld [vmem:[%s293 + $0xc8] sm:$0xff]
      %v333 = vld [vmem:[%s293 + $0xd0] sm:$0xff]
      %v334 = vld [vmem:[%s293 + $0xd8] sm:$0xff]
      %v335 = vld [vmem:[%s293 + $0xe0] sm:$0xff]
      %v336 = vld [vmem:[%s293 + $0xe8] sm:$0xff]
      %v337 = vld [vmem:[%s293 + $0xf0] sm:$0xff]
      %v338 = vld [vmem:[%s293 + $0xf8] sm:$0xff]
      %v339 = vmul.f32 %v299, 0.25
      %v340 = vmul.f32 %v300, 0.25
      %v341 = vmul.f32 %v301, 0.25
      %v342 = vmul.f32 %v302, 0.25
      %v343 = vmul.f32 %v303, 0.25
      %v344 = vmul.f32 %v304, 0.25
      %v345 = vmul.f32 %v305, 0.25
      %v346 = vmul.f32 %v299, 0.75
      %v347 = vmul.f32 %v300, 0.75
      %v348 = vmul.f32 %v301, 0.75
      %v349 = vmul.f32 %v302, 0.75
      %v350 = vmul.f32 %v303, 0.75
      %v351 = vmul.f32 %v304, 0.75
      %v352 = vmul.f32 %v305, 0.75
      %v353 = vmul.f32 %v306, 0.75
      %v354 = vadd.f32 %v339, %v346
      %v355 = vadd.f32 %v339, %v347
      %v356 = vadd.f32 %v340, %v348
      %v357 = vadd.f32 %v341, %v349
      %v358 = vadd.f32 %v342, %v350
      %v359 = vadd.f32 %v343, %v351
      %v360 = vadd.f32 %v344, %v352
      %v361 = vadd.f32 %v345, %v353
      %v362 = vmul.f32 %v306, 0.25
      %v363 = vadd.f32 %v346, %v340
      %v364 = vadd.f32 %v347, %v341
      %v365 = vadd.f32 %v348, %v342
      %v366 = vadd.f32 %v349, %v343
      %v367 = vadd.f32 %v350, %v344
      %v368 = vadd.f32 %v351, %v345
      %v369 = vadd.f32 %v352, %v362
      %v370 = vadd.f32 %v353, %v362
      %v387 = vrot.slane %v354, 7
      %v388 = vrot.slane %v363, 7
      %v389 = vrot.slane %v355, 7
      %v390 = vrot.slane %v364, 7
      %v391 = vrot.slane %v356, 7
      %v392 = vrot.slane %v365, 7
      %v393 = vrot.slane %v357, 7
      %v394 = vrot.slane %v366, 7
      %v395 = vrot.slane %v358, 7
      %v396 = vrot.slane %v367, 7
      %v397 = vrot.slane %v359, 7
      %v398 = vrot.slane %v368, 7
      %v399 = vrot.slane %v360, 7
      %v400 = vrot.slane %v369, 7
      %v401 = vrot.slane %v361, 7
      %v402 = vrot.slane %v370, 7
      %vm419 = vcmask 1040384
      %v420 = vsel %vm419, %v354, %v387
      %v421 = vsel %vm419, %v363, %v388
      %v422 = vsel %vm419, %v355, %v389
      %v423 = vsel %vm419, %v364, %v390
      %v424 = vsel %vm419, %v356, %v391
      %v425 = vsel %vm419, %v365, %v392
      %v426 = vsel %vm419, %v357, %v393
      %v427 = vsel %vm419, %v366, %v394
      %v428 = vsel %vm419, %v358, %v395
      %v429 = vsel %vm419, %v367, %v396
      %v430 = vsel %vm419, %v359, %v397
      %v431 = vsel %vm419, %v368, %v398
      %v432 = vsel %vm419, %v360, %v399
      %v433 = vsel %vm419, %v369, %v400
      %v434 = vsel %vm419, %v361, %v401
      %v435 = vsel %vm419, %v370, %v402
      %v436 = vrot.slane %v354, 1
      %v437 = vrot.slane %v363, 1
      %v438 = vrot.slane %v355, 1
      %v439 = vrot.slane %v364, 1
      %v440 = vrot.slane %v356, 1
      %v441 = vrot.slane %v365, 1
      %v442 = vrot.slane %v357, 1
      %v443 = vrot.slane %v366, 1
      %v444 = vrot.slane %v358, 1
      %v445 = vrot.slane %v367, 1
      %v446 = vrot.slane %v359, 1
      %v447 = vrot.slane %v368, 1
      %v448 = vrot.slane %v360, 1
      %v449 = vrot.slane %v369, 1
      %v450 = vrot.slane %v361, 1
      %v451 = vrot.slane %v370, 1
      %vm468 = vcmask 1046528
      %v469 = vsel %vm468, %v436, %v354
      %v470 = vsel %vm468, %v437, %v363
      %v471 = vsel %vm468, %v438, %v355
      %v472 = vsel %vm468, %v439, %v364
      %v473 = vsel %vm468, %v440, %v356
      %v474 = vsel %vm468, %v441, %v365
      %v475 = vsel %vm468, %v442, %v357
      %v476 = vsel %vm468, %v443, %v366
      %v477 = vsel %vm468, %v444, %v358
      %v478 = vsel %vm468, %v445, %v367
      %v479 = vsel %vm468, %v446, %v359
      %v480 = vsel %vm468, %v447, %v368
      %v481 = vsel %vm468, %v448, %v360
      %v482 = vsel %vm468, %v449, %v369
      %v483 = vsel %vm468, %v450, %v361
      %v484 = vsel %vm468, %v451, %v370
      %v485 = vmul.f32 %v420, 0.25
      %v486 = vmul.f32 %v421, 0.25
      %v487 = vmul.f32 %v422, 0.25
      %v488 = vmul.f32 %v423, 0.25
      %v489 = vmul.f32 %v424, 0.25
      %v490 = vmul.f32 %v425, 0.25
      %v491 = vmul.f32 %v426, 0.25
      %v492 = vmul.f32 %v427, 0.25
      %v493 = vmul.f32 %v428, 0.25
      %v494 = vmul.f32 %v429, 0.25
      %v495 = vmul.f32 %v430, 0.25
      %v496 = vmul.f32 %v431, 0.25
      %v497 = vmul.f32 %v432, 0.25
      %v498 = vmul.f32 %v433, 0.25
      %v499 = vmul.f32 %v434, 0.25
      %v500 = vmul.f32 %v435, 0.25
      %v501 = vmul.f32 %v354, 0.75
      %v502 = vmul.f32 %v363, 0.75
      %v503 = vmul.f32 %v355, 0.75
      %v504 = vmul.f32 %v364, 0.75
      %v505 = vmul.f32 %v356, 0.75
      %v506 = vmul.f32 %v365, 0.75
      %v507 = vmul.f32 %v357, 0.75
      %v508 = vmul.f32 %v366, 0.75
      %v509 = vmul.f32 %v358, 0.75
      %v510 = vmul.f32 %v367, 0.75
      %v511 = vmul.f32 %v359, 0.75
      %v512 = vmul.f32 %v368, 0.75
      %v513 = vmul.f32 %v360, 0.75
      %v514 = vmul.f32 %v369, 0.75
      %v515 = vmul.f32 %v361, 0.75
      %v516 = vmul.f32 %v370, 0.75
      %v517 = vadd.f32 %v485, %v501
      %v518 = vadd.f32 %v486, %v502
      %v519 = vadd.f32 %v487, %v503
      %v520 = vadd.f32 %v488, %v504
      %v521 = vadd.f32 %v489, %v505
      %v522 = vadd.f32 %v490, %v506
      %v523 = vadd.f32 %v491, %v507
      %v524 = vadd.f32 %v492, %v508
      %v525 = vadd.f32 %v493, %v509
      %v526 = vadd.f32 %v494, %v510
      %v527 = vadd.f32 %v495, %v511
      %v528 = vadd.f32 %v496, %v512
      %v529 = vadd.f32 %v497, %v513
      %v530 = vadd.f32 %v498, %v514
      %v531 = vadd.f32 %v499, %v515
      %v532 = vadd.f32 %v500, %v516
      %v533 = vmul.f32 %v469, 0.25
      %v534 = vmul.f32 %v470, 0.25
      %v535 = vmul.f32 %v471, 0.25
      %v536 = vmul.f32 %v472, 0.25
      %v537 = vmul.f32 %v473, 0.25
      %v538 = vmul.f32 %v474, 0.25
      %v539 = vmul.f32 %v475, 0.25
      %v540 = vmul.f32 %v476, 0.25
      %v541 = vmul.f32 %v477, 0.25
      %v542 = vmul.f32 %v478, 0.25
      %v543 = vmul.f32 %v479, 0.25
      %v544 = vmul.f32 %v480, 0.25
      %v545 = vmul.f32 %v481, 0.25
      %v546 = vmul.f32 %v482, 0.25
      %v547 = vmul.f32 %v483, 0.25
      %v548 = vmul.f32 %v484, 0.25
      %v549 = vadd.f32 %v501, %v533
      %v550 = vadd.f32 %v502, %v534
      %v551 = vadd.f32 %v503, %v535
      %v552 = vadd.f32 %v504, %v536
      %v553 = vadd.f32 %v505, %v537
      %v554 = vadd.f32 %v506, %v538
      %v555 = vadd.f32 %v507, %v539
      %v556 = vadd.f32 %v508, %v540
      %v557 = vadd.f32 %v509, %v541
      %v558 = vadd.f32 %v510, %v542
      %v559 = vadd.f32 %v511, %v543
      %v560 = vadd.f32 %v512, %v544
      %v561 = vadd.f32 %v513, %v545
      %v562 = vadd.f32 %v514, %v546
      %v563 = vadd.f32 %v515, %v547
      %v564 = vadd.f32 %v516, %v548
      %v581 = vcombine.high %v517, %v517
      %v583 = vunpack.c.l.s4 1966171168
      %v584 = vunpack.c.0.s8 %v583
      %v585 = vlaneseq
      %v586 = vshrl.u32 %v585, 7
      %v587 = vsub.s32 %v584, %v586
      %v588 = vrot.slane %v517, %v587
      %v590 = vunpack.c.l.s4 1966171168
      %v591 = vunpack.c.0.s8 %v590
      %v592 = vlaneseq
      %v593 = vshrl.u32 %v592, 7
      %v594 = vsub.s32 %v591, %v593
      %v595 = vrot.slane %v581, %v594
      %v596 = vcombine.high %v588, %v588
      %v597 = vcombine.high %v595, %v595
      %v599 = vunpack.c.l.s4 1966171168
      %v600 = vunpack.c.0.s8 %v599
      %v601 = vlaneseq
      %v602 = vshrl.u32 %v601, 7
      %v603 = vsub.s32 %v600, %v602
      %v604 = vrot.slane %v588, %v603
      %v606 = vunpack.c.l.s4 1966171168
      %v607 = vunpack.c.0.s8 %v606
      %v608 = vlaneseq
      %v609 = vshrl.u32 %v608, 7
      %v610 = vsub.s32 %v607, %v609
      %v611 = vrot.slane %v595, %v610
      %v613 = vunpack.c.l.s4 1966171168
      %v614 = vunpack.c.0.s8 %v613
      %v615 = vlaneseq
      %v616 = vshrl.u32 %v615, 7
      %v617 = vsub.s32 %v614, %v616
      %v618 = vrot.slane %v596, %v617
      %v620 = vunpack.c.l.s4 1966171168
      %v621 = vunpack.c.0.s8 %v620
      %v622 = vlaneseq
      %v623 = vshrl.u32 %v622, 7
      %v624 = vsub.s32 %v621, %v623
      %v625 = vrot.slane %v597, %v624
      %v626 = vcombine.high %v604, %v604
      %v627 = vcombine.high %v611, %v611
      %v628 = vcombine.high %v618, %v618
      %v629 = vcombine.high %v625, %v625
      %v630 = vcombine.high %v518, %v518
      %v632 = vunpack.c.l.s4 1966171168
      %v633 = vunpack.c.0.s8 %v632
      %v634 = vlaneseq
      %v635 = vshrl.u32 %v634, 7
      %v636 = vsub.s32 %v633, %v635
      %v637 = vrot.slane %v518, %v636
      %v639 = vunpack.c.l.s4 1966171168
      %v640 = vunpack.c.0.s8 %v639
      %v641 = vlaneseq
      %v642 = vshrl.u32 %v641, 7
      %v643 = vsub.s32 %v640, %v642
      %v644 = vrot.slane %v630, %v643
      %v645 = vcombine.high %v637, %v637
      %v646 = vcombine.high %v644, %v644
      %v648 = vunpack.c.l.s4 1966171168
      %v649 = vunpack.c.0.s8 %v648
      %v650 = vlaneseq
      %v651 = vshrl.u32 %v650, 7
      %v652 = vsub.s32 %v649, %v651
      %v653 = vrot.slane %v637, %v652
      %v655 = vunpack.c.l.s4 1966171168
      %v656 = vunpack.c.0.s8 %v655
      %v657 = vlaneseq
      %v658 = vshrl.u32 %v657, 7
      %v659 = vsub.s32 %v656, %v658
      %v660 = vrot.slane %v644, %v659
      %v662 = vunpack.c.l.s4 1966171168
      %v663 = vunpack.c.0.s8 %v662
      %v664 = vlaneseq
      %v665 = vshrl.u32 %v664, 7
      %v666 = vsub.s32 %v663, %v665
      %v667 = vrot.slane %v645, %v666
      %v669 = vunpack.c.l.s4 1966171168
      %v670 = vunpack.c.0.s8 %v669
      %v671 = vlaneseq
      %v672 = vshrl.u32 %v671, 7
      %v673 = vsub.s32 %v670, %v672
      %v674 = vrot.slane %v646, %v673
      %v675 = vcombine.high %v653, %v653
      %v676 = vcombine.high %v660, %v660
      %v677 = vcombine.high %v667, %v667
      %v678 = vcombine.high %v674, %v674
      %v679 = vcombine.high %v519, %v519
      %v681 = vunpack.c.l.s4 1966171168
      %v682 = vunpack.c.0.s8 %v681
      %v683 = vlaneseq
      %v684 = vshrl.u32 %v683, 7
      %v685 = vsub.s32 %v682, %v684
      %v686 = vrot.slane %v519, %v685
      %v688 = vunpack.c.l.s4 1966171168
      %v689 = vunpack.c.0.s8 %v688
      %v690 = vlaneseq
      %v691 = vshrl.u32 %v690, 7
      %v692 = vsub.s32 %v689, %v691
      %v693 = vrot.slane %v679, %v692
      %v694 = vcombine.high %v686, %v686
      %v695 = vcombine.high %v693, %v693
      %v697 = vunpack.c.l.s4 1966171168
      %v698 = vunpack.c.0.s8 %v697
      %v699 = vlaneseq
      %v700 = vshrl.u32 %v699, 7
      %v701 = vsub.s32 %v698, %v700
      %v702 = vrot.slane %v686, %v701
      %v704 = vunpack.c.l.s4 1966171168
      %v705 = vunpack.c.0.s8 %v704
      %v706 = vlaneseq
      %v707 = vshrl.u32 %v706, 7
      %v708 = vsub.s32 %v705, %v707
      %v709 = vrot.slane %v693, %v708
      %v711 = vunpack.c.l.s4 1966171168
      %v712 = vunpack.c.0.s8 %v711
      %v713 = vlaneseq
      %v714 = vshrl.u32 %v713, 7
      %v715 = vsub.s32 %v712, %v714
      %v716 = vrot.slane %v694, %v715
      %v718 = vunpack.c.l.s4 1966171168
      %v719 = vunpack.c.0.s8 %v718
      %v720 = vlaneseq
      %v721 = vshrl.u32 %v720, 7
      %v722 = vsub.s32 %v719, %v721
      %v723 = vrot.slane %v695, %v722
      %v724 = vcombine.high %v702, %v702
      %v725 = vcombine.high %v709, %v709
      %v726 = vcombine.high %v716, %v716
      %v727 = vcombine.high %v723, %v723
      %v728 = vcombine.high %v520, %v520
      %v730 = vunpack.c.l.s4 1966171168
      %v731 = vunpack.c.0.s8 %v730
      %v732 = vlaneseq
      %v733 = vshrl.u32 %v732, 7
      %v734 = vsub.s32 %v731, %v733
      %v735 = vrot.slane %v520, %v734
      %v737 = vunpack.c.l.s4 1966171168
      %v738 = vunpack.c.0.s8 %v737
      %v739 = vlaneseq
      %v740 = vshrl.u32 %v739, 7
      %v741 = vsub.s32 %v738, %v740
      %v742 = vrot.slane %v728, %v741
      %v743 = vcombine.high %v735, %v735
      %v744 = vcombine.high %v742, %v742
      %v746 = vunpack.c.l.s4 1966171168
      %v747 = vunpack.c.0.s8 %v746
      %v748 = vlaneseq
      %v749 = vshrl.u32 %v748, 7
      %v750 = vsub.s32 %v747, %v749
      %v751 = vrot.slane %v735, %v750
      %v753 = vunpack.c.l.s4 1966171168
      %v754 = vunpack.c.0.s8 %v753
      %v755 = vlaneseq
      %v756 = vshrl.u32 %v755, 7
      %v757 = vsub.s32 %v754, %v756
      %v758 = vrot.slane %v742, %v757
      %v760 = vunpack.c.l.s4 1966171168
      %v761 = vunpack.c.0.s8 %v760
      %v762 = vlaneseq
      %v763 = vshrl.u32 %v762, 7
      %v764 = vsub.s32 %v761, %v763
      %v765 = vrot.slane %v743, %v764
      %v767 = vunpack.c.l.s4 1966171168
      %v768 = vunpack.c.0.s8 %v767
      %v769 = vlaneseq
      %v770 = vshrl.u32 %v769, 7
      %v771 = vsub.s32 %v768, %v770
      %v772 = vrot.slane %v744, %v771
      %v773 = vcombine.high %v751, %v751
      %v774 = vcombine.high %v758, %v758
      %v775 = vcombine.high %v765, %v765
      %v776 = vcombine.high %v772, %v772
      %v777 = vcombine.high %v521, %v521
      %v779 = vunpack.c.l.s4 1966171168
      %v780 = vunpack.c.0.s8 %v779
      %v781 = vlaneseq
      %v782 = vshrl.u32 %v781, 7
      %v783 = vsub.s32 %v780, %v782
      %v784 = vrot.slane %v521, %v783
      %v786 = vunpack.c.l.s4 1966171168
      %v787 = vunpack.c.0.s8 %v786
      %v788 = vlaneseq
      %v789 = vshrl.u32 %v788, 7
      %v790 = vsub.s32 %v787, %v789
      %v791 = vrot.slane %v777, %v790
      %v792 = vcombine.high %v784, %v784
      %v793 = vcombine.high %v791, %v791
      %v795 = vunpack.c.l.s4 1966171168
      %v796 = vunpack.c.0.s8 %v795
      %v797 = vlaneseq
      %v798 = vshrl.u32 %v797, 7
      %v799 = vsub.s32 %v796, %v798
      %v800 = vrot.slane %v784, %v799
      %v802 = vunpack.c.l.s4 1966171168
      %v803 = vunpack.c.0.s8 %v802
      %v804 = vlaneseq
      %v805 = vshrl.u32 %v804, 7
      %v806 = vsub.s32 %v803, %v805
      %v807 = vrot.slane %v791, %v806
      %v809 = vunpack.c.l.s4 1966171168
      %v810 = vunpack.c.0.s8 %v809
      %v811 = vlaneseq
      %v812 = vshrl.u32 %v811, 7
      %v813 = vsub.s32 %v810, %v812
      %v814 = vrot.slane %v792, %v813
      %v816 = vunpack.c.l.s4 1966171168
      %v817 = vunpack.c.0.s8 %v816
      %v818 = vlaneseq
      %v819 = vshrl.u32 %v818, 7
      %v820 = vsub.s32 %v817, %v819
      %v821 = vrot.slane %v793, %v820
      %v822 = vcombine.high %v800, %v800
      %v823 = vcombine.high %v807, %v807
      %v824 = vcombine.high %v814, %v814
      %v825 = vcombine.high %v821, %v821
      %v826 = vcombine.high %v522, %v522
      %v828 = vunpack.c.l.s4 1966171168
      %v829 = vunpack.c.0.s8 %v828
      %v830 = vlaneseq
      %v831 = vshrl.u32 %v830, 7
      %v832 = vsub.s32 %v829, %v831
      %v833 = vrot.slane %v522, %v832
      %v835 = vunpack.c.l.s4 1966171168
      %v836 = vunpack.c.0.s8 %v835
      %v837 = vlaneseq
      %v838 = vshrl.u32 %v837, 7
      %v839 = vsub.s32 %v836, %v838
      %v840 = vrot.slane %v826, %v839
      %v841 = vcombine.high %v833, %v833
      %v842 = vcombine.high %v840, %v840
      %v844 = vunpack.c.l.s4 1966171168
      %v845 = vunpack.c.0.s8 %v844
      %v846 = vlaneseq
      %v847 = vshrl.u32 %v846, 7
      %v848 = vsub.s32 %v845, %v847
      %v849 = vrot.slane %v833, %v848
      %v851 = vunpack.c.l.s4 1966171168
      %v852 = vunpack.c.0.s8 %v851
      %v853 = vlaneseq
      %v854 = vshrl.u32 %v853, 7
      %v855 = vsub.s32 %v852, %v854
      %v856 = vrot.slane %v840, %v855
      %v858 = vunpack.c.l.s4 1966171168
      %v859 = vunpack.c.0.s8 %v858
      %v860 = vlaneseq
      %v861 = vshrl.u32 %v860, 7
      %v862 = vsub.s32 %v859, %v861
      %v863 = vrot.slane %v841, %v862
      %v865 = vunpack.c.l.s4 1966171168
      %v866 = vunpack.c.0.s8 %v865
      %v867 = vlaneseq
      %v868 = vshrl.u32 %v867, 7
      %v869 = vsub.s32 %v866, %v868
      %v870 = vrot.slane %v842, %v869
      %v871 = vcombine.high %v849, %v849
      %v872 = vcombine.high %v856, %v856
      %v873 = vcombine.high %v863, %v863
      %v874 = vcombine.high %v870, %v870
      %v875 = vcombine.high %v523, %v523
      %v877 = vunpack.c.l.s4 1966171168
      %v878 = vunpack.c.0.s8 %v877
      %v879 = vlaneseq
      %v880 = vshrl.u32 %v879, 7
      %v881 = vsub.s32 %v878, %v880
      %v882 = vrot.slane %v523, %v881
      %v884 = vunpack.c.l.s4 1966171168
      %v885 = vunpack.c.0.s8 %v884
      %v886 = vlaneseq
      %v887 = vshrl.u32 %v886, 7
      %v888 = vsub.s32 %v885, %v887
      %v889 = vrot.slane %v875, %v888
      %v890 = vcombine.high %v882, %v882
      %v891 = vcombine.high %v889, %v889
      %v893 = vunpack.c.l.s4 1966171168
      %v894 = vunpack.c.0.s8 %v893
      %v895 = vlaneseq
      %v896 = vshrl.u32 %v895, 7
      %v897 = vsub.s32 %v894, %v896
      %v898 = vrot.slane %v882, %v897
      %v900 = vunpack.c.l.s4 1966171168
      %v901 = vunpack.c.0.s8 %v900
      %v902 = vlaneseq
      %v903 = vshrl.u32 %v902, 7
      %v904 = vsub.s32 %v901, %v903
      %v905 = vrot.slane %v889, %v904
      %v907 = vunpack.c.l.s4 1966171168
      %v908 = vunpack.c.0.s8 %v907
      %v909 = vlaneseq
      %v910 = vshrl.u32 %v909, 7
      %v911 = vsub.s32 %v908, %v910
      %v912 = vrot.slane %v890, %v911
      %v914 = vunpack.c.l.s4 1966171168
      %v915 = vunpack.c.0.s8 %v914
      %v916 = vlaneseq
      %v917 = vshrl.u32 %v916, 7
      %v918 = vsub.s32 %v915, %v917
      %v919 = vrot.slane %v891, %v918
      %v920 = vcombine.high %v898, %v898
      %v921 = vcombine.high %v905, %v905
      %v922 = vcombine.high %v912, %v912
      %v923 = vcombine.high %v919, %v919
      %v924 = vcombine.high %v524, %v524
      %v926 = vunpack.c.l.s4 1966171168
      %v927 = vunpack.c.0.s8 %v926
      %v928 = vlaneseq
      %v929 = vshrl.u32 %v928, 7
      %v930 = vsub.s32 %v927, %v929
      %v931 = vrot.slane %v524, %v930
      %v933 = vunpack.c.l.s4 1966171168
      %v934 = vunpack.c.0.s8 %v933
      %v935 = vlaneseq
      %v936 = vshrl.u32 %v935, 7
      %v937 = vsub.s32 %v934, %v936
      %v938 = vrot.slane %v924, %v937
      %v939 = vcombine.high %v931, %v931
      %v940 = vcombine.high %v938, %v938
      %v942 = vunpack.c.l.s4 1966171168
      %v943 = vunpack.c.0.s8 %v942
      %v944 = vlaneseq
      %v945 = vshrl.u32 %v944, 7
      %v946 = vsub.s32 %v943, %v945
      %v947 = vrot.slane %v931, %v946
      %v949 = vunpack.c.l.s4 1966171168
      %v950 = vunpack.c.0.s8 %v949
      %v951 = vlaneseq
      %v952 = vshrl.u32 %v951, 7
      %v953 = vsub.s32 %v950, %v952
      %v954 = vrot.slane %v938, %v953
      %v956 = vunpack.c.l.s4 1966171168
      %v957 = vunpack.c.0.s8 %v956
      %v958 = vlaneseq
      %v959 = vshrl.u32 %v958, 7
      %v960 = vsub.s32 %v957, %v959
      %v961 = vrot.slane %v939, %v960
      %v963 = vunpack.c.l.s4 1966171168
      %v964 = vunpack.c.0.s8 %v963
      %v965 = vlaneseq
      %v966 = vshrl.u32 %v965, 7
      %v967 = vsub.s32 %v964, %v966
      %v968 = vrot.slane %v940, %v967
      %v969 = vcombine.high %v947, %v947
      %v970 = vcombine.high %v954, %v954
      %v971 = vcombine.high %v961, %v961
      %v972 = vcombine.high %v968, %v968
      %v973 = vcombine.high %v525, %v525
      %v975 = vunpack.c.l.s4 1966171168
      %v976 = vunpack.c.0.s8 %v975
      %v977 = vlaneseq
      %v978 = vshrl.u32 %v977, 7
      %v979 = vsub.s32 %v976, %v978
      %v980 = vrot.slane %v525, %v979
      %v982 = vunpack.c.l.s4 1966171168
      %v983 = vunpack.c.0.s8 %v982
      %v984 = vlaneseq
      %v985 = vshrl.u32 %v984, 7
      %v986 = vsub.s32 %v983, %v985
      %v987 = vrot.slane %v973, %v986
      %v988 = vcombine.high %v980, %v980
      %v989 = vcombine.high %v987, %v987
      %v991 = vunpack.c.l.s4 1966171168
      %v992 = vunpack.c.0.s8 %v991
      %v993 = vlaneseq
      %v994 = vshrl.u32 %v993, 7
      %v995 = vsub.s32 %v992, %v994
      %v996 = vrot.slane %v980, %v995
      %v998 = vunpack.c.l.s4 1966171168
      %v999 = vunpack.c.0.s8 %v998
      %v1000 = vlaneseq
      %v1001 = vshrl.u32 %v1000, 7
      %v1002 = vsub.s32 %v999, %v1001
      %v1003 = vrot.slane %v987, %v1002
      %v1005 = vunpack.c.l.s4 1966171168
      %v1006 = vunpack.c.0.s8 %v1005
      %v1007 = vlaneseq
      %v1008 = vshrl.u32 %v1007, 7
      %v1009 = vsub.s32 %v1006, %v1008
      %v1010 = vrot.slane %v988, %v1009
      %v1012 = vunpack.c.l.s4 1966171168
      %v1013 = vunpack.c.0.s8 %v1012
      %v1014 = vlaneseq
      %v1015 = vshrl.u32 %v1014, 7
      %v1016 = vsub.s32 %v1013, %v1015
      %v1017 = vrot.slane %v989, %v1016
      %v1018 = vcombine.high %v996, %v996
      %v1019 = vcombine.high %v1003, %v1003
      %v1020 = vcombine.high %v1010, %v1010
      %v1021 = vcombine.high %v1017, %v1017
      %v1022 = vcombine.high %v526, %v526
      %v1024 = vunpack.c.l.s4 1966171168
      %v1025 = vunpack.c.0.s8 %v1024
      %v1026 = vlaneseq
      %v1027 = vshrl.u32 %v1026, 7
      %v1028 = vsub.s32 %v1025, %v1027
      %v1029 = vrot.slane %v526, %v1028
      %v1031 = vunpack.c.l.s4 1966171168
      %v1032 = vunpack.c.0.s8 %v1031
      %v1033 = vlaneseq
      %v1034 = vshrl.u32 %v1033, 7
      %v1035 = vsub.s32 %v1032, %v1034
      %v1036 = vrot.slane %v1022, %v1035
      %v1037 = vcombine.high %v1029, %v1029
      %v1038 = vcombine.high %v1036, %v1036
      %v1040 = vunpack.c.l.s4 1966171168
      %v1041 = vunpack.c.0.s8 %v1040
      %v1042 = vlaneseq
      %v1043 = vshrl.u32 %v1042, 7
      %v1044 = vsub.s32 %v1041, %v1043
      %v1045 = vrot.slane %v1029, %v1044
      %v1047 = vunpack.c.l.s4 1966171168
      %v1048 = vunpack.c.0.s8 %v1047
      %v1049 = vlaneseq
      %v1050 = vshrl.u32 %v1049, 7
      %v1051 = vsub.s32 %v1048, %v1050
      %v1052 = vrot.slane %v1036, %v1051
      %v1054 = vunpack.c.l.s4 1966171168
      %v1055 = vunpack.c.0.s8 %v1054
      %v1056 = vlaneseq
      %v1057 = vshrl.u32 %v1056, 7
      %v1058 = vsub.s32 %v1055, %v1057
      %v1059 = vrot.slane %v1037, %v1058
      %v1061 = vunpack.c.l.s4 1966171168
      %v1062 = vunpack.c.0.s8 %v1061
      %v1063 = vlaneseq
      %v1064 = vshrl.u32 %v1063, 7
      %v1065 = vsub.s32 %v1062, %v1064
      %v1066 = vrot.slane %v1038, %v1065
      %v1067 = vcombine.high %v1045, %v1045
      %v1068 = vcombine.high %v1052, %v1052
      %v1069 = vcombine.high %v1059, %v1059
      %v1070 = vcombine.high %v1066, %v1066
      %v1071 = vcombine.high %v527, %v527
      %v1073 = vunpack.c.l.s4 1966171168
      %v1074 = vunpack.c.0.s8 %v1073
      %v1075 = vlaneseq
      %v1076 = vshrl.u32 %v1075, 7
      %v1077 = vsub.s32 %v1074, %v1076
      %v1078 = vrot.slane %v527, %v1077
      %v1080 = vunpack.c.l.s4 1966171168
      %v1081 = vunpack.c.0.s8 %v1080
      %v1082 = vlaneseq
      %v1083 = vshrl.u32 %v1082, 7
      %v1084 = vsub.s32 %v1081, %v1083
      %v1085 = vrot.slane %v1071, %v1084
      %v1086 = vcombine.high %v1078, %v1078
      %v1087 = vcombine.high %v1085, %v1085
      %v1089 = vunpack.c.l.s4 1966171168
      %v1090 = vunpack.c.0.s8 %v1089
      %v1091 = vlaneseq
      %v1092 = vshrl.u32 %v1091, 7
      %v1093 = vsub.s32 %v1090, %v1092
      %v1094 = vrot.slane %v1078, %v1093
      %v1096 = vunpack.c.l.s4 1966171168
      %v1097 = vunpack.c.0.s8 %v1096
      %v1098 = vlaneseq
      %v1099 = vshrl.u32 %v1098, 7
      %v1100 = vsub.s32 %v1097, %v1099
      %v1101 = vrot.slane %v1085, %v1100
      %v1103 = vunpack.c.l.s4 1966171168
      %v1104 = vunpack.c.0.s8 %v1103
      %v1105 = vlaneseq
      %v1106 = vshrl.u32 %v1105, 7
      %v1107 = vsub.s32 %v1104, %v1106
      %v1108 = vrot.slane %v1086, %v1107
      %v1110 = vunpack.c.l.s4 1966171168
      %v1111 = vunpack.c.0.s8 %v1110
      %v1112 = vlaneseq
      %v1113 = vshrl.u32 %v1112, 7
      %v1114 = vsub.s32 %v1111, %v1113
      %v1115 = vrot.slane %v1087, %v1114
      %v1116 = vcombine.high %v1094, %v1094
      %v1117 = vcombine.high %v1101, %v1101
      %v1118 = vcombine.high %v1108, %v1108
      %v1119 = vcombine.high %v1115, %v1115
      %v1120 = vcombine.high %v528, %v528
      %v1122 = vunpack.c.l.s4 1966171168
      %v1123 = vunpack.c.0.s8 %v1122
      %v1124 = vlaneseq
      %v1125 = vshrl.u32 %v1124, 7
      %v1126 = vsub.s32 %v1123, %v1125
      %v1127 = vrot.slane %v528, %v1126
      %v1129 = vunpack.c.l.s4 1966171168
      %v1130 = vunpack.c.0.s8 %v1129
      %v1131 = vlaneseq
      %v1132 = vshrl.u32 %v1131, 7
      %v1133 = vsub.s32 %v1130, %v1132
      %v1134 = vrot.slane %v1120, %v1133
      %v1135 = vcombine.high %v1127, %v1127
      %v1136 = vcombine.high %v1134, %v1134
      %v1138 = vunpack.c.l.s4 1966171168
      %v1139 = vunpack.c.0.s8 %v1138
      %v1140 = vlaneseq
      %v1141 = vshrl.u32 %v1140, 7
      %v1142 = vsub.s32 %v1139, %v1141
      %v1143 = vrot.slane %v1127, %v1142
      %v1145 = vunpack.c.l.s4 1966171168
      %v1146 = vunpack.c.0.s8 %v1145
      %v1147 = vlaneseq
      %v1148 = vshrl.u32 %v1147, 7
      %v1149 = vsub.s32 %v1146, %v1148
      %v1150 = vrot.slane %v1134, %v1149
      %v1152 = vunpack.c.l.s4 1966171168
      %v1153 = vunpack.c.0.s8 %v1152
      %v1154 = vlaneseq
      %v1155 = vshrl.u32 %v1154, 7
      %v1156 = vsub.s32 %v1153, %v1155
      %v1157 = vrot.slane %v1135, %v1156
      %v1159 = vunpack.c.l.s4 1966171168
      %v1160 = vunpack.c.0.s8 %v1159
      %v1161 = vlaneseq
      %v1162 = vshrl.u32 %v1161, 7
      %v1163 = vsub.s32 %v1160, %v1162
      %v1164 = vrot.slane %v1136, %v1163
      %v1165 = vcombine.high %v1143, %v1143
      %v1166 = vcombine.high %v1150, %v1150
      %v1167 = vcombine.high %v1157, %v1157
      %v1168 = vcombine.high %v1164, %v1164
      %v1169 = vcombine.high %v529, %v529
      %v1171 = vunpack.c.l.s4 1966171168
      %v1172 = vunpack.c.0.s8 %v1171
      %v1173 = vlaneseq
      %v1174 = vshrl.u32 %v1173, 7
      %v1175 = vsub.s32 %v1172, %v1174
      %v1176 = vrot.slane %v529, %v1175
      %v1178 = vunpack.c.l.s4 1966171168
      %v1179 = vunpack.c.0.s8 %v1178
      %v1180 = vlaneseq
      %v1181 = vshrl.u32 %v1180, 7
      %v1182 = vsub.s32 %v1179, %v1181
      %v1183 = vrot.slane %v1169, %v1182
      %v1184 = vcombine.high %v1176, %v1176
      %v1185 = vcombine.high %v1183, %v1183
      %v1187 = vunpack.c.l.s4 1966171168
      %v1188 = vunpack.c.0.s8 %v1187
      %v1189 = vlaneseq
      %v1190 = vshrl.u32 %v1189, 7
      %v1191 = vsub.s32 %v1188, %v1190
      %v1192 = vrot.slane %v1176, %v1191
      %v1194 = vunpack.c.l.s4 1966171168
      %v1195 = vunpack.c.0.s8 %v1194
      %v1196 = vlaneseq
      %v1197 = vshrl.u32 %v1196, 7
      %v1198 = vsub.s32 %v1195, %v1197
      %v1199 = vrot.slane %v1183, %v1198
      %v1201 = vunpack.c.l.s4 1966171168
      %v1202 = vunpack.c.0.s8 %v1201
      %v1203 = vlaneseq
      %v1204 = vshrl.u32 %v1203, 7
      %v1205 = vsub.s32 %v1202, %v1204
      %v1206 = vrot.slane %v1184, %v1205
      %v1208 = vunpack.c.l.s4 1966171168
      %v1209 = vunpack.c.0.s8 %v1208
      %v1210 = vlaneseq
      %v1211 = vshrl.u32 %v1210, 7
      %v1212 = vsub.s32 %v1209, %v1211
      %v1213 = vrot.slane %v1185, %v1212
      %v1214 = vcombine.high %v1192, %v1192
      %v1215 = vcombine.high %v1199, %v1199
      %v1216 = vcombine.high %v1206, %v1206
      %v1217 = vcombine.high %v1213, %v1213
      %v1218 = vcombine.high %v530, %v530
      %v1220 = vunpack.c.l.s4 1966171168
      %v1221 = vunpack.c.0.s8 %v1220
      %v1222 = vlaneseq
      %v1223 = vshrl.u32 %v1222, 7
      %v1224 = vsub.s32 %v1221, %v1223
      %v1225 = vrot.slane %v530, %v1224
      %v1227 = vunpack.c.l.s4 1966171168
      %v1228 = vunpack.c.0.s8 %v1227
      %v1229 = vlaneseq
      %v1230 = vshrl.u32 %v1229, 7
      %v1231 = vsub.s32 %v1228, %v1230
      %v1232 = vrot.slane %v1218, %v1231
      %v1233 = vcombine.high %v1225, %v1225
      %v1234 = vcombine.high %v1232, %v1232
      %v1236 = vunpack.c.l.s4 1966171168
      %v1237 = vunpack.c.0.s8 %v1236
      %v1238 = vlaneseq
      %v1239 = vshrl.u32 %v1238, 7
      %v1240 = vsub.s32 %v1237, %v1239
      %v1241 = vrot.slane %v1225, %v1240
      %v1243 = vunpack.c.l.s4 1966171168
      %v1244 = vunpack.c.0.s8 %v1243
      %v1245 = vlaneseq
      %v1246 = vshrl.u32 %v1245, 7
      %v1247 = vsub.s32 %v1244, %v1246
      %v1248 = vrot.slane %v1232, %v1247
      %v1250 = vunpack.c.l.s4 1966171168
      %v1251 = vunpack.c.0.s8 %v1250
      %v1252 = vlaneseq
      %v1253 = vshrl.u32 %v1252, 7
      %v1254 = vsub.s32 %v1251, %v1253
      %v1255 = vrot.slane %v1233, %v1254
      %v1257 = vunpack.c.l.s4 1966171168
      %v1258 = vunpack.c.0.s8 %v1257
      %v1259 = vlaneseq
      %v1260 = vshrl.u32 %v1259, 7
      %v1261 = vsub.s32 %v1258, %v1260
      %v1262 = vrot.slane %v1234, %v1261
      %v1263 = vcombine.high %v1241, %v1241
      %v1264 = vcombine.high %v1248, %v1248
      %v1265 = vcombine.high %v1255, %v1255
      %v1266 = vcombine.high %v1262, %v1262
      %v1267 = vcombine.high %v531, %v531
      %v1269 = vunpack.c.l.s4 1966171168
      %v1270 = vunpack.c.0.s8 %v1269
      %v1271 = vlaneseq
      %v1272 = vshrl.u32 %v1271, 7
      %v1273 = vsub.s32 %v1270, %v1272
      %v1274 = vrot.slane %v531, %v1273
      %v1276 = vunpack.c.l.s4 1966171168
      %v1277 = vunpack.c.0.s8 %v1276
      %v1278 = vlaneseq
      %v1279 = vshrl.u32 %v1278, 7
      %v1280 = vsub.s32 %v1277, %v1279
      %v1281 = vrot.slane %v1267, %v1280
      %v1282 = vcombine.high %v1274, %v1274
      %v1283 = vcombine.high %v1281, %v1281
      %v1285 = vunpack.c.l.s4 1966171168
      %v1286 = vunpack.c.0.s8 %v1285
      %v1287 = vlaneseq
      %v1288 = vshrl.u32 %v1287, 7
      %v1289 = vsub.s32 %v1286, %v1288
      %v1290 = vrot.slane %v1274, %v1289
      %v1292 = vunpack.c.l.s4 1966171168
      %v1293 = vunpack.c.0.s8 %v1292
      %v1294 = vlaneseq
      %v1295 = vshrl.u32 %v1294, 7
      %v1296 = vsub.s32 %v1293, %v1295
      %v1297 = vrot.slane %v1281, %v1296
      %v1299 = vunpack.c.l.s4 1966171168
      %v1300 = vunpack.c.0.s8 %v1299
      %v1301 = vlaneseq
      %v1302 = vshrl.u32 %v1301, 7
      %v1303 = vsub.s32 %v1300, %v1302
      %v1304 = vrot.slane %v1282, %v1303
      %v1306 = vunpack.c.l.s4 1966171168
      %v1307 = vunpack.c.0.s8 %v1306
      %v1308 = vlaneseq
      %v1309 = vshrl.u32 %v1308, 7
      %v1310 = vsub.s32 %v1307, %v1309
      %v1311 = vrot.slane %v1283, %v1310
      %v1312 = vcombine.high %v1290, %v1290
      %v1313 = vcombine.high %v1297, %v1297
      %v1314 = vcombine.high %v1304, %v1304
      %v1315 = vcombine.high %v1311, %v1311
      %v1316 = vcombine.high %v532, %v532
      %v1318 = vunpack.c.l.s4 1966171168
      %v1319 = vunpack.c.0.s8 %v1318
      %v1320 = vlaneseq
      %v1321 = vshrl.u32 %v1320, 7
      %v1322 = vsub.s32 %v1319, %v1321
      %v1323 = vrot.slane %v532, %v1322
      %v1325 = vunpack.c.l.s4 1966171168
      %v1326 = vunpack.c.0.s8 %v1325
      %v1327 = vlaneseq
      %v1328 = vshrl.u32 %v1327, 7
      %v1329 = vsub.s32 %v1326, %v1328
      %v1330 = vrot.slane %v1316, %v1329
      %v1331 = vcombine.high %v1323, %v1323
      %v1332 = vcombine.high %v1330, %v1330
      %v1334 = vunpack.c.l.s4 1966171168
      %v1335 = vunpack.c.0.s8 %v1334
      %v1336 = vlaneseq
      %v1337 = vshrl.u32 %v1336, 7
      %v1338 = vsub.s32 %v1335, %v1337
      %v1339 = vrot.slane %v1323, %v1338
      %v1341 = vunpack.c.l.s4 1966171168
      %v1342 = vunpack.c.0.s8 %v1341
      %v1343 = vlaneseq
      %v1344 = vshrl.u32 %v1343, 7
      %v1345 = vsub.s32 %v1342, %v1344
      %v1346 = vrot.slane %v1330, %v1345
      %v1348 = vunpack.c.l.s4 1966171168
      %v1349 = vunpack.c.0.s8 %v1348
      %v1350 = vlaneseq
      %v1351 = vshrl.u32 %v1350, 7
      %v1352 = vsub.s32 %v1349, %v1351
      %v1353 = vrot.slane %v1331, %v1352
      %v1355 = vunpack.c.l.s4 1966171168
      %v1356 = vunpack.c.0.s8 %v1355
      %v1357 = vlaneseq
      %v1358 = vshrl.u32 %v1357, 7
      %v1359 = vsub.s32 %v1356, %v1358
      %v1360 = vrot.slane %v1332, %v1359
      %v1361 = vcombine.high %v1339, %v1339
      %v1362 = vcombine.high %v1346, %v1346
      %v1363 = vcombine.high %v1353, %v1353
      %v1364 = vcombine.high %v1360, %v1360
      %v1509 = vcombine.high %v549, %v549
      %v1511 = vunpack.c.l.s4 1966171168
      %v1512 = vunpack.c.0.s8 %v1511
      %v1513 = vlaneseq
      %v1514 = vshrl.u32 %v1513, 7
      %v1515 = vsub.s32 %v1512, %v1514
      %v1516 = vrot.slane %v549, %v1515
      %v1518 = vunpack.c.l.s4 1966171168
      %v1519 = vunpack.c.0.s8 %v1518
      %v1520 = vlaneseq
      %v1521 = vshrl.u32 %v1520, 7
      %v1522 = vsub.s32 %v1519, %v1521
      %v1523 = vrot.slane %v1509, %v1522
      %v1524 = vcombine.high %v1516, %v1516
      %v1525 = vcombine.high %v1523, %v1523
      %v1527 = vunpack.c.l.s4 1966171168
      %v1528 = vunpack.c.0.s8 %v1527
      %v1529 = vlaneseq
      %v1530 = vshrl.u32 %v1529, 7
      %v1531 = vsub.s32 %v1528, %v1530
      %v1532 = vrot.slane %v1516, %v1531
      %v1534 = vunpack.c.l.s4 1966171168
      %v1535 = vunpack.c.0.s8 %v1534
      %v1536 = vlaneseq
      %v1537 = vshrl.u32 %v1536, 7
      %v1538 = vsub.s32 %v1535, %v1537
      %v1539 = vrot.slane %v1523, %v1538
      %v1541 = vunpack.c.l.s4 1966171168
      %v1542 = vunpack.c.0.s8 %v1541
      %v1543 = vlaneseq
      %v1544 = vshrl.u32 %v1543, 7
      %v1545 = vsub.s32 %v1542, %v1544
      %v1546 = vrot.slane %v1524, %v1545
      %v1548 = vunpack.c.l.s4 1966171168
      %v1549 = vunpack.c.0.s8 %v1548
      %v1550 = vlaneseq
      %v1551 = vshrl.u32 %v1550, 7
      %v1552 = vsub.s32 %v1549, %v1551
      %v1553 = vrot.slane %v1525, %v1552
      %v1554 = vcombine.high %v1532, %v1532
      %v1555 = vcombine.high %v1539, %v1539
      %v1556 = vcombine.high %v1546, %v1546
      %v1557 = vcombine.high %v1553, %v1553
      %v1558 = vcombine.high %v550, %v550
      %v1560 = vunpack.c.l.s4 1966171168
      %v1561 = vunpack.c.0.s8 %v1560
      %v1562 = vlaneseq
      %v1563 = vshrl.u32 %v1562, 7
      %v1564 = vsub.s32 %v1561, %v1563
      %v1565 = vrot.slane %v550, %v1564
      %v1567 = vunpack.c.l.s4 1966171168
      %v1568 = vunpack.c.0.s8 %v1567
      %v1569 = vlaneseq
      %v1570 = vshrl.u32 %v1569, 7
      %v1571 = vsub.s32 %v1568, %v1570
      %v1572 = vrot.slane %v1558, %v1571
      %v1573 = vcombine.high %v1565, %v1565
      %v1574 = vcombine.high %v1572, %v1572
      %v1576 = vunpack.c.l.s4 1966171168
      %v1577 = vunpack.c.0.s8 %v1576
      %v1578 = vlaneseq
      %v1579 = vshrl.u32 %v1578, 7
      %v1580 = vsub.s32 %v1577, %v1579
      %v1581 = vrot.slane %v1565, %v1580
      %v1583 = vunpack.c.l.s4 1966171168
      %v1584 = vunpack.c.0.s8 %v1583
      %v1585 = vlaneseq
      %v1586 = vshrl.u32 %v1585, 7
      %v1587 = vsub.s32 %v1584, %v1586
      %v1588 = vrot.slane %v1572, %v1587
      %v1590 = vunpack.c.l.s4 1966171168
      %v1591 = vunpack.c.0.s8 %v1590
      %v1592 = vlaneseq
      %v1593 = vshrl.u32 %v1592, 7
      %v1594 = vsub.s32 %v1591, %v1593
      %v1595 = vrot.slane %v1573, %v1594
      %v1597 = vunpack.c.l.s4 1966171168
      %v1598 = vunpack.c.0.s8 %v1597
      %v1599 = vlaneseq
      %v1600 = vshrl.u32 %v1599, 7
      %v1601 = vsub.s32 %v1598, %v1600
      %v1602 = vrot.slane %v1574, %v1601
      %v1603 = vcombine.high %v1581, %v1581
      %v1604 = vcombine.high %v1588, %v1588
      %v1605 = vcombine.high %v1595, %v1595
      %v1606 = vcombine.high %v1602, %v1602
      %v1607 = vcombine.high %v551, %v551
      %v1609 = vunpack.c.l.s4 1966171168
      %v1610 = vunpack.c.0.s8 %v1609
      %v1611 = vlaneseq
      %v1612 = vshrl.u32 %v1611, 7
      %v1613 = vsub.s32 %v1610, %v1612
      %v1614 = vrot.slane %v551, %v1613
      %v1616 = vunpack.c.l.s4 1966171168
      %v1617 = vunpack.c.0.s8 %v1616
      %v1618 = vlaneseq
      %v1619 = vshrl.u32 %v1618, 7
      %v1620 = vsub.s32 %v1617, %v1619
      %v1621 = vrot.slane %v1607, %v1620
      %v1622 = vcombine.high %v1614, %v1614
      %v1623 = vcombine.high %v1621, %v1621
      %v1625 = vunpack.c.l.s4 1966171168
      %v1626 = vunpack.c.0.s8 %v1625
      %v1627 = vlaneseq
      %v1628 = vshrl.u32 %v1627, 7
      %v1629 = vsub.s32 %v1626, %v1628
      %v1630 = vrot.slane %v1614, %v1629
      %v1632 = vunpack.c.l.s4 1966171168
      %v1633 = vunpack.c.0.s8 %v1632
      %v1634 = vlaneseq
      %v1635 = vshrl.u32 %v1634, 7
      %v1636 = vsub.s32 %v1633, %v1635
      %v1637 = vrot.slane %v1621, %v1636
      %v1639 = vunpack.c.l.s4 1966171168
      %v1640 = vunpack.c.0.s8 %v1639
      %v1641 = vlaneseq
      %v1642 = vshrl.u32 %v1641, 7
      %v1643 = vsub.s32 %v1640, %v1642
      %v1644 = vrot.slane %v1622, %v1643
      %v1646 = vunpack.c.l.s4 1966171168
      %v1647 = vunpack.c.0.s8 %v1646
      %v1648 = vlaneseq
      %v1649 = vshrl.u32 %v1648, 7
      %v1650 = vsub.s32 %v1647, %v1649
      %v1651 = vrot.slane %v1623, %v1650
      %v1652 = vcombine.high %v1630, %v1630
      %v1653 = vcombine.high %v1637, %v1637
      %v1654 = vcombine.high %v1644, %v1644
      %v1655 = vcombine.high %v1651, %v1651
      %v1656 = vcombine.high %v552, %v552
      %v1658 = vunpack.c.l.s4 1966171168
      %v1659 = vunpack.c.0.s8 %v1658
      %v1660 = vlaneseq
      %v1661 = vshrl.u32 %v1660, 7
      %v1662 = vsub.s32 %v1659, %v1661
      %v1663 = vrot.slane %v552, %v1662
      %v1665 = vunpack.c.l.s4 1966171168
      %v1666 = vunpack.c.0.s8 %v1665
      %v1667 = vlaneseq
      %v1668 = vshrl.u32 %v1667, 7
      %v1669 = vsub.s32 %v1666, %v1668
      %v1670 = vrot.slane %v1656, %v1669
      %v1671 = vcombine.high %v1663, %v1663
      %v1672 = vcombine.high %v1670, %v1670
      %v1674 = vunpack.c.l.s4 1966171168
      %v1675 = vunpack.c.0.s8 %v1674
      %v1676 = vlaneseq
      %v1677 = vshrl.u32 %v1676, 7
      %v1678 = vsub.s32 %v1675, %v1677
      %v1679 = vrot.slane %v1663, %v1678
      %v1681 = vunpack.c.l.s4 1966171168
      %v1682 = vunpack.c.0.s8 %v1681
      %v1683 = vlaneseq
      %v1684 = vshrl.u32 %v1683, 7
      %v1685 = vsub.s32 %v1682, %v1684
      %v1686 = vrot.slane %v1670, %v1685
      %v1688 = vunpack.c.l.s4 1966171168
      %v1689 = vunpack.c.0.s8 %v1688
      %v1690 = vlaneseq
      %v1691 = vshrl.u32 %v1690, 7
      %v1692 = vsub.s32 %v1689, %v1691
      %v1693 = vrot.slane %v1671, %v1692
      %v1695 = vunpack.c.l.s4 1966171168
      %v1696 = vunpack.c.0.s8 %v1695
      %v1697 = vlaneseq
      %v1698 = vshrl.u32 %v1697, 7
      %v1699 = vsub.s32 %v1696, %v1698
      %v1700 = vrot.slane %v1672, %v1699
      %v1701 = vcombine.high %v1679, %v1679
      %v1702 = vcombine.high %v1686, %v1686
      %v1703 = vcombine.high %v1693, %v1693
      %v1704 = vcombine.high %v1700, %v1700
      %v1705 = vcombine.high %v553, %v553
      %v1707 = vunpack.c.l.s4 1966171168
      %v1708 = vunpack.c.0.s8 %v1707
      %v1709 = vlaneseq
      %v1710 = vshrl.u32 %v1709, 7
      %v1711 = vsub.s32 %v1708, %v1710
      %v1712 = vrot.slane %v553, %v1711
      %v1714 = vunpack.c.l.s4 1966171168
      %v1715 = vunpack.c.0.s8 %v1714
      %v1716 = vlaneseq
      %v1717 = vshrl.u32 %v1716, 7
      %v1718 = vsub.s32 %v1715, %v1717
      %v1719 = vrot.slane %v1705, %v1718
      %v1720 = vcombine.high %v1712, %v1712
      %v1721 = vcombine.high %v1719, %v1719
      %v1723 = vunpack.c.l.s4 1966171168
      %v1724 = vunpack.c.0.s8 %v1723
      %v1725 = vlaneseq
      %v1726 = vshrl.u32 %v1725, 7
      %v1727 = vsub.s32 %v1724, %v1726
      %v1728 = vrot.slane %v1712, %v1727
      %v1730 = vunpack.c.l.s4 1966171168
      %v1731 = vunpack.c.0.s8 %v1730
      %v1732 = vlaneseq
      %v1733 = vshrl.u32 %v1732, 7
      %v1734 = vsub.s32 %v1731, %v1733
      %v1735 = vrot.slane %v1719, %v1734
      %v1737 = vunpack.c.l.s4 1966171168
      %v1738 = vunpack.c.0.s8 %v1737
      %v1739 = vlaneseq
      %v1740 = vshrl.u32 %v1739, 7
      %v1741 = vsub.s32 %v1738, %v1740
      %v1742 = vrot.slane %v1720, %v1741
      %v1744 = vunpack.c.l.s4 1966171168
      %v1745 = vunpack.c.0.s8 %v1744
      %v1746 = vlaneseq
      %v1747 = vshrl.u32 %v1746, 7
      %v1748 = vsub.s32 %v1745, %v1747
      %v1749 = vrot.slane %v1721, %v1748
      %v1750 = vcombine.high %v1728, %v1728
      %v1751 = vcombine.high %v1735, %v1735
      %v1752 = vcombine.high %v1742, %v1742
      %v1753 = vcombine.high %v1749, %v1749
      %v1754 = vcombine.high %v554, %v554
      %v1756 = vunpack.c.l.s4 1966171168
      %v1757 = vunpack.c.0.s8 %v1756
      %v1758 = vlaneseq
      %v1759 = vshrl.u32 %v1758, 7
      %v1760 = vsub.s32 %v1757, %v1759
      %v1761 = vrot.slane %v554, %v1760
      %v1763 = vunpack.c.l.s4 1966171168
      %v1764 = vunpack.c.0.s8 %v1763
      %v1765 = vlaneseq
      %v1766 = vshrl.u32 %v1765, 7
      %v1767 = vsub.s32 %v1764, %v1766
      %v1768 = vrot.slane %v1754, %v1767
      %v1769 = vcombine.high %v1761, %v1761
      %v1770 = vcombine.high %v1768, %v1768
      %v1772 = vunpack.c.l.s4 1966171168
      %v1773 = vunpack.c.0.s8 %v1772
      %v1774 = vlaneseq
      %v1775 = vshrl.u32 %v1774, 7
      %v1776 = vsub.s32 %v1773, %v1775
      %v1777 = vrot.slane %v1761, %v1776
      %v1779 = vunpack.c.l.s4 1966171168
      %v1780 = vunpack.c.0.s8 %v1779
      %v1781 = vlaneseq
      %v1782 = vshrl.u32 %v1781, 7
      %v1783 = vsub.s32 %v1780, %v1782
      %v1784 = vrot.slane %v1768, %v1783
      %v1786 = vunpack.c.l.s4 1966171168
      %v1787 = vunpack.c.0.s8 %v1786
      %v1788 = vlaneseq
      %v1789 = vshrl.u32 %v1788, 7
      %v1790 = vsub.s32 %v1787, %v1789
      %v1791 = vrot.slane %v1769, %v1790
      %v1793 = vunpack.c.l.s4 1966171168
      %v1794 = vunpack.c.0.s8 %v1793
      %v1795 = vlaneseq
      %v1796 = vshrl.u32 %v1795, 7
      %v1797 = vsub.s32 %v1794, %v1796
      %v1798 = vrot.slane %v1770, %v1797
      %v1799 = vcombine.high %v1777, %v1777
      %v1800 = vcombine.high %v1784, %v1784
      %v1801 = vcombine.high %v1791, %v1791
      %v1802 = vcombine.high %v1798, %v1798
      %v1803 = vcombine.high %v555, %v555
      %v1805 = vunpack.c.l.s4 1966171168
      %v1806 = vunpack.c.0.s8 %v1805
      %v1807 = vlaneseq
      %v1808 = vshrl.u32 %v1807, 7
      %v1809 = vsub.s32 %v1806, %v1808
      %v1810 = vrot.slane %v555, %v1809
      %v1812 = vunpack.c.l.s4 1966171168
      %v1813 = vunpack.c.0.s8 %v1812
      %v1814 = vlaneseq
      %v1815 = vshrl.u32 %v1814, 7
      %v1816 = vsub.s32 %v1813, %v1815
      %v1817 = vrot.slane %v1803, %v1816
      %v1818 = vcombine.high %v1810, %v1810
      %v1819 = vcombine.high %v1817, %v1817
      %v1821 = vunpack.c.l.s4 1966171168
      %v1822 = vunpack.c.0.s8 %v1821
      %v1823 = vlaneseq
      %v1824 = vshrl.u32 %v1823, 7
      %v1825 = vsub.s32 %v1822, %v1824
      %v1826 = vrot.slane %v1810, %v1825
      %v1828 = vunpack.c.l.s4 1966171168
      %v1829 = vunpack.c.0.s8 %v1828
      %v1830 = vlaneseq
      %v1831 = vshrl.u32 %v1830, 7
      %v1832 = vsub.s32 %v1829, %v1831
      %v1833 = vrot.slane %v1817, %v1832
      %v1835 = vunpack.c.l.s4 1966171168
      %v1836 = vunpack.c.0.s8 %v1835
      %v1837 = vlaneseq
      %v1838 = vshrl.u32 %v1837, 7
      %v1839 = vsub.s32 %v1836, %v1838
      %v1840 = vrot.slane %v1818, %v1839
      %v1842 = vunpack.c.l.s4 1966171168
      %v1843 = vunpack.c.0.s8 %v1842
      %v1844 = vlaneseq
      %v1845 = vshrl.u32 %v1844, 7
      %v1846 = vsub.s32 %v1843, %v1845
      %v1847 = vrot.slane %v1819, %v1846
      %v1848 = vcombine.high %v1826, %v1826
      %v1849 = vcombine.high %v1833, %v1833
      %v1850 = vcombine.high %v1840, %v1840
      %v1851 = vcombine.high %v1847, %v1847
      %v1852 = vcombine.high %v556, %v556
      %v1854 = vunpack.c.l.s4 1966171168
      %v1855 = vunpack.c.0.s8 %v1854
      %v1856 = vlaneseq
      %v1857 = vshrl.u32 %v1856, 7
      %v1858 = vsub.s32 %v1855, %v1857
      %v1859 = vrot.slane %v556, %v1858
      %v1861 = vunpack.c.l.s4 1966171168
      %v1862 = vunpack.c.0.s8 %v1861
      %v1863 = vlaneseq
      %v1864 = vshrl.u32 %v1863, 7
      %v1865 = vsub.s32 %v1862, %v1864
      %v1866 = vrot.slane %v1852, %v1865
      %v1867 = vcombine.high %v1859, %v1859
      %v1868 = vcombine.high %v1866, %v1866
      %v1870 = vunpack.c.l.s4 1966171168
      %v1871 = vunpack.c.0.s8 %v1870
      %v1872 = vlaneseq
      %v1873 = vshrl.u32 %v1872, 7
      %v1874 = vsub.s32 %v1871, %v1873
      %v1875 = vrot.slane %v1859, %v1874
      %v1877 = vunpack.c.l.s4 1966171168
      %v1878 = vunpack.c.0.s8 %v1877
      %v1879 = vlaneseq
      %v1880 = vshrl.u32 %v1879, 7
      %v1881 = vsub.s32 %v1878, %v1880
      %v1882 = vrot.slane %v1866, %v1881
      %v1884 = vunpack.c.l.s4 1966171168
      %v1885 = vunpack.c.0.s8 %v1884
      %v1886 = vlaneseq
      %v1887 = vshrl.u32 %v1886, 7
      %v1888 = vsub.s32 %v1885, %v1887
      %v1889 = vrot.slane %v1867, %v1888
      %v1891 = vunpack.c.l.s4 1966171168
      %v1892 = vunpack.c.0.s8 %v1891
      %v1893 = vlaneseq
      %v1894 = vshrl.u32 %v1893, 7
      %v1895 = vsub.s32 %v1892, %v1894
      %v1896 = vrot.slane %v1868, %v1895
      %v1897 = vcombine.high %v1875, %v1875
      %v1898 = vcombine.high %v1882, %v1882
      %v1899 = vcombine.high %v1889, %v1889
      %v1900 = vcombine.high %v1896, %v1896
      %v1901 = vcombine.high %v557, %v557
      %v1903 = vunpack.c.l.s4 1966171168
      %v1904 = vunpack.c.0.s8 %v1903
      %v1905 = vlaneseq
      %v1906 = vshrl.u32 %v1905, 7
      %v1907 = vsub.s32 %v1904, %v1906
      %v1908 = vrot.slane %v557, %v1907
      %v1910 = vunpack.c.l.s4 1966171168
      %v1911 = vunpack.c.0.s8 %v1910
      %v1912 = vlaneseq
      %v1913 = vshrl.u32 %v1912, 7
      %v1914 = vsub.s32 %v1911, %v1913
      %v1915 = vrot.slane %v1901, %v1914
      %v1916 = vcombine.high %v1908, %v1908
      %v1917 = vcombine.high %v1915, %v1915
      %v1919 = vunpack.c.l.s4 1966171168
      %v1920 = vunpack.c.0.s8 %v1919
      %v1921 = vlaneseq
      %v1922 = vshrl.u32 %v1921, 7
      %v1923 = vsub.s32 %v1920, %v1922
      %v1924 = vrot.slane %v1908, %v1923
      %v1926 = vunpack.c.l.s4 1966171168
      %v1927 = vunpack.c.0.s8 %v1926
      %v1928 = vlaneseq
      %v1929 = vshrl.u32 %v1928, 7
      %v1930 = vsub.s32 %v1927, %v1929
      %v1931 = vrot.slane %v1915, %v1930
      %v1933 = vunpack.c.l.s4 1966171168
      %v1934 = vunpack.c.0.s8 %v1933
      %v1935 = vlaneseq
      %v1936 = vshrl.u32 %v1935, 7
      %v1937 = vsub.s32 %v1934, %v1936
      %v1938 = vrot.slane %v1916, %v1937
      %v1940 = vunpack.c.l.s4 1966171168
      %v1941 = vunpack.c.0.s8 %v1940
      %v1942 = vlaneseq
      %v1943 = vshrl.u32 %v1942, 7
      %v1944 = vsub.s32 %v1941, %v1943
      %v1945 = vrot.slane %v1917, %v1944
      %v1946 = vcombine.high %v1924, %v1924
      %v1947 = vcombine.high %v1931, %v1931
      %v1948 = vcombine.high %v1938, %v1938
      %v1949 = vcombine.high %v1945, %v1945
      %v1950 = vcombine.high %v558, %v558
      %v1952 = vunpack.c.l.s4 1966171168
      %v1953 = vunpack.c.0.s8 %v1952
      %v1954 = vlaneseq
      %v1955 = vshrl.u32 %v1954, 7
      %v1956 = vsub.s32 %v1953, %v1955
      %v1957 = vrot.slane %v558, %v1956
      %v1959 = vunpack.c.l.s4 1966171168
      %v1960 = vunpack.c.0.s8 %v1959
      %v1961 = vlaneseq
      %v1962 = vshrl.u32 %v1961, 7
      %v1963 = vsub.s32 %v1960, %v1962
      %v1964 = vrot.slane %v1950, %v1963
      %v1965 = vcombine.high %v1957, %v1957
      %v1966 = vcombine.high %v1964, %v1964
      %v1968 = vunpack.c.l.s4 1966171168
      %v1969 = vunpack.c.0.s8 %v1968
      %v1970 = vlaneseq
      %v1971 = vshrl.u32 %v1970, 7
      %v1972 = vsub.s32 %v1969, %v1971
      %v1973 = vrot.slane %v1957, %v1972
      %v1975 = vunpack.c.l.s4 1966171168
      %v1976 = vunpack.c.0.s8 %v1975
      %v1977 = vlaneseq
      %v1978 = vshrl.u32 %v1977, 7
      %v1979 = vsub.s32 %v1976, %v1978
      %v1980 = vrot.slane %v1964, %v1979
      %v1982 = vunpack.c.l.s4 1966171168
      %v1983 = vunpack.c.0.s8 %v1982
      %v1984 = vlaneseq
      %v1985 = vshrl.u32 %v1984, 7
      %v1986 = vsub.s32 %v1983, %v1985
      %v1987 = vrot.slane %v1965, %v1986
      %v1989 = vunpack.c.l.s4 1966171168
      %v1990 = vunpack.c.0.s8 %v1989
      %v1991 = vlaneseq
      %v1992 = vshrl.u32 %v1991, 7
      %v1993 = vsub.s32 %v1990, %v1992
      %v1994 = vrot.slane %v1966, %v1993
      %v1995 = vcombine.high %v1973, %v1973
      %v1996 = vcombine.high %v1980, %v1980
      %v1997 = vcombine.high %v1987, %v1987
      %v1998 = vcombine.high %v1994, %v1994
      %v1999 = vcombine.high %v559, %v559
      %v2001 = vunpack.c.l.s4 1966171168
      %v2002 = vunpack.c.0.s8 %v2001
      %v2003 = vlaneseq
      %v2004 = vshrl.u32 %v2003, 7
      %v2005 = vsub.s32 %v2002, %v2004
      %v2006 = vrot.slane %v559, %v2005
      %v2008 = vunpack.c.l.s4 1966171168
      %v2009 = vunpack.c.0.s8 %v2008
      %v2010 = vlaneseq
      %v2011 = vshrl.u32 %v2010, 7
      %v2012 = vsub.s32 %v2009, %v2011
      %v2013 = vrot.slane %v1999, %v2012
      %v2014 = vcombine.high %v2006, %v2006
      %v2015 = vcombine.high %v2013, %v2013
      %v2017 = vunpack.c.l.s4 1966171168
      %v2018 = vunpack.c.0.s8 %v2017
      %v2019 = vlaneseq
      %v2020 = vshrl.u32 %v2019, 7
      %v2021 = vsub.s32 %v2018, %v2020
      %v2022 = vrot.slane %v2006, %v2021
      %v2024 = vunpack.c.l.s4 1966171168
      %v2025 = vunpack.c.0.s8 %v2024
      %v2026 = vlaneseq
      %v2027 = vshrl.u32 %v2026, 7
      %v2028 = vsub.s32 %v2025, %v2027
      %v2029 = vrot.slane %v2013, %v2028
      %v2031 = vunpack.c.l.s4 1966171168
      %v2032 = vunpack.c.0.s8 %v2031
      %v2033 = vlaneseq
      %v2034 = vshrl.u32 %v2033, 7
      %v2035 = vsub.s32 %v2032, %v2034
      %v2036 = vrot.slane %v2014, %v2035
      %v2038 = vunpack.c.l.s4 1966171168
      %v2039 = vunpack.c.0.s8 %v2038
      %v2040 = vlaneseq
      %v2041 = vshrl.u32 %v2040, 7
      %v2042 = vsub.s32 %v2039, %v2041
      %v2043 = vrot.slane %v2015, %v2042
      %v2044 = vcombine.high %v2022, %v2022
      %v2045 = vcombine.high %v2029, %v2029
      %v2046 = vcombine.high %v2036, %v2036
      %v2047 = vcombine.high %v2043, %v2043
      %v2048 = vcombine.high %v560, %v560
      %v2050 = vunpack.c.l.s4 1966171168
      %v2051 = vunpack.c.0.s8 %v2050
      %v2052 = vlaneseq
      %v2053 = vshrl.u32 %v2052, 7
      %v2054 = vsub.s32 %v2051, %v2053
      %v2055 = vrot.slane %v560, %v2054
      %v2057 = vunpack.c.l.s4 1966171168
      %v2058 = vunpack.c.0.s8 %v2057
      %v2059 = vlaneseq
      %v2060 = vshrl.u32 %v2059, 7
      %v2061 = vsub.s32 %v2058, %v2060
      %v2062 = vrot.slane %v2048, %v2061
      %v2063 = vcombine.high %v2055, %v2055
      %v2064 = vcombine.high %v2062, %v2062
      %v2066 = vunpack.c.l.s4 1966171168
      %v2067 = vunpack.c.0.s8 %v2066
      %v2068 = vlaneseq
      %v2069 = vshrl.u32 %v2068, 7
      %v2070 = vsub.s32 %v2067, %v2069
      %v2071 = vrot.slane %v2055, %v2070
      %v2073 = vunpack.c.l.s4 1966171168
      %v2074 = vunpack.c.0.s8 %v2073
      %v2075 = vlaneseq
      %v2076 = vshrl.u32 %v2075, 7
      %v2077 = vsub.s32 %v2074, %v2076
      %v2078 = vrot.slane %v2062, %v2077
      %v2080 = vunpack.c.l.s4 1966171168
      %v2081 = vunpack.c.0.s8 %v2080
      %v2082 = vlaneseq
      %v2083 = vshrl.u32 %v2082, 7
      %v2084 = vsub.s32 %v2081, %v2083
      %v2085 = vrot.slane %v2063, %v2084
      %v2087 = vunpack.c.l.s4 1966171168
      %v2088 = vunpack.c.0.s8 %v2087
      %v2089 = vlaneseq
      %v2090 = vshrl.u32 %v2089, 7
      %v2091 = vsub.s32 %v2088, %v2090
      %v2092 = vrot.slane %v2064, %v2091
      %v2093 = vcombine.high %v2071, %v2071
      %v2094 = vcombine.high %v2078, %v2078
      %v2095 = vcombine.high %v2085, %v2085
      %v2096 = vcombine.high %v2092, %v2092
      %v2097 = vcombine.high %v561, %v561
      %v2099 = vunpack.c.l.s4 1966171168
      %v2100 = vunpack.c.0.s8 %v2099
      %v2101 = vlaneseq
      %v2102 = vshrl.u32 %v2101, 7
      %v2103 = vsub.s32 %v2100, %v2102
      %v2104 = vrot.slane %v561, %v2103
      %v2106 = vunpack.c.l.s4 1966171168
      %v2107 = vunpack.c.0.s8 %v2106
      %v2108 = vlaneseq
      %v2109 = vshrl.u32 %v2108, 7
      %v2110 = vsub.s32 %v2107, %v2109
      %v2111 = vrot.slane %v2097, %v2110
      %v2112 = vcombine.high %v2104, %v2104
      %v2113 = vcombine.high %v2111, %v2111
      %v2115 = vunpack.c.l.s4 1966171168
      %v2116 = vunpack.c.0.s8 %v2115
      %v2117 = vlaneseq
      %v2118 = vshrl.u32 %v2117, 7
      %v2119 = vsub.s32 %v2116, %v2118
      %v2120 = vrot.slane %v2104, %v2119
      %v2122 = vunpack.c.l.s4 1966171168
      %v2123 = vunpack.c.0.s8 %v2122
      %v2124 = vlaneseq
      %v2125 = vshrl.u32 %v2124, 7
      %v2126 = vsub.s32 %v2123, %v2125
      %v2127 = vrot.slane %v2111, %v2126
      %v2129 = vunpack.c.l.s4 1966171168
      %v2130 = vunpack.c.0.s8 %v2129
      %v2131 = vlaneseq
      %v2132 = vshrl.u32 %v2131, 7
      %v2133 = vsub.s32 %v2130, %v2132
      %v2134 = vrot.slane %v2112, %v2133
      %v2136 = vunpack.c.l.s4 1966171168
      %v2137 = vunpack.c.0.s8 %v2136
      %v2138 = vlaneseq
      %v2139 = vshrl.u32 %v2138, 7
      %v2140 = vsub.s32 %v2137, %v2139
      %v2141 = vrot.slane %v2113, %v2140
      %v2142 = vcombine.high %v2120, %v2120
      %v2143 = vcombine.high %v2127, %v2127
      %v2144 = vcombine.high %v2134, %v2134
      %v2145 = vcombine.high %v2141, %v2141
      %v2146 = vcombine.high %v562, %v562
      %v2148 = vunpack.c.l.s4 1966171168
      %v2149 = vunpack.c.0.s8 %v2148
      %v2150 = vlaneseq
      %v2151 = vshrl.u32 %v2150, 7
      %v2152 = vsub.s32 %v2149, %v2151
      %v2153 = vrot.slane %v562, %v2152
      %v2155 = vunpack.c.l.s4 1966171168
      %v2156 = vunpack.c.0.s8 %v2155
      %v2157 = vlaneseq
      %v2158 = vshrl.u32 %v2157, 7
      %v2159 = vsub.s32 %v2156, %v2158
      %v2160 = vrot.slane %v2146, %v2159
      %v2161 = vcombine.high %v2153, %v2153
      %v2162 = vcombine.high %v2160, %v2160
      %v2164 = vunpack.c.l.s4 1966171168
      %v2165 = vunpack.c.0.s8 %v2164
      %v2166 = vlaneseq
      %v2167 = vshrl.u32 %v2166, 7
      %v2168 = vsub.s32 %v2165, %v2167
      %v2169 = vrot.slane %v2153, %v2168
      %v2171 = vunpack.c.l.s4 1966171168
      %v2172 = vunpack.c.0.s8 %v2171
      %v2173 = vlaneseq
      %v2174 = vshrl.u32 %v2173, 7
      %v2175 = vsub.s32 %v2172, %v2174
      %v2176 = vrot.slane %v2160, %v2175
      %v2178 = vunpack.c.l.s4 1966171168
      %v2179 = vunpack.c.0.s8 %v2178
      %v2180 = vlaneseq
      %v2181 = vshrl.u32 %v2180, 7
      %v2182 = vsub.s32 %v2179, %v2181
      %v2183 = vrot.slane %v2161, %v2182
      %v2185 = vunpack.c.l.s4 1966171168
      %v2186 = vunpack.c.0.s8 %v2185
      %v2187 = vlaneseq
      %v2188 = vshrl.u32 %v2187, 7
      %v2189 = vsub.s32 %v2186, %v2188
      %v2190 = vrot.slane %v2162, %v2189
      %v2191 = vcombine.high %v2169, %v2169
      %v2192 = vcombine.high %v2176, %v2176
      %v2193 = vcombine.high %v2183, %v2183
      %v2194 = vcombine.high %v2190, %v2190
      %v2195 = vcombine.high %v563, %v563
      %v2197 = vunpack.c.l.s4 1966171168
      %v2198 = vunpack.c.0.s8 %v2197
      %v2199 = vlaneseq
      %v2200 = vshrl.u32 %v2199, 7
      %v2201 = vsub.s32 %v2198, %v2200
      %v2202 = vrot.slane %v563, %v2201
      %v2204 = vunpack.c.l.s4 1966171168
      %v2205 = vunpack.c.0.s8 %v2204
      %v2206 = vlaneseq
      %v2207 = vshrl.u32 %v2206, 7
      %v2208 = vsub.s32 %v2205, %v2207
      %v2209 = vrot.slane %v2195, %v2208
      %v2210 = vcombine.high %v2202, %v2202
      %v2211 = vcombine.high %v2209, %v2209
      %v2213 = vunpack.c.l.s4 1966171168
      %v2214 = vunpack.c.0.s8 %v2213
      %v2215 = vlaneseq
      %v2216 = vshrl.u32 %v2215, 7
      %v2217 = vsub.s32 %v2214, %v2216
      %v2218 = vrot.slane %v2202, %v2217
      %v2220 = vunpack.c.l.s4 1966171168
      %v2221 = vunpack.c.0.s8 %v2220
      %v2222 = vlaneseq
      %v2223 = vshrl.u32 %v2222, 7
      %v2224 = vsub.s32 %v2221, %v2223
      %v2225 = vrot.slane %v2209, %v2224
      %v2227 = vunpack.c.l.s4 1966171168
      %v2228 = vunpack.c.0.s8 %v2227
      %v2229 = vlaneseq
      %v2230 = vshrl.u32 %v2229, 7
      %v2231 = vsub.s32 %v2228, %v2230
      %v2232 = vrot.slane %v2210, %v2231
      %v2234 = vunpack.c.l.s4 1966171168
      %v2235 = vunpack.c.0.s8 %v2234
      %v2236 = vlaneseq
      %v2237 = vshrl.u32 %v2236, 7
      %v2238 = vsub.s32 %v2235, %v2237
      %v2239 = vrot.slane %v2211, %v2238
      %v2240 = vcombine.high %v2218, %v2218
      %v2241 = vcombine.high %v2225, %v2225
      %v2242 = vcombine.high %v2232, %v2232
      %v2243 = vcombine.high %v2239, %v2239
      %v2244 = vcombine.high %v564, %v564
      %v2246 = vunpack.c.l.s4 1966171168
      %v2247 = vunpack.c.0.s8 %v2246
      %v2248 = vlaneseq
      %v2249 = vshrl.u32 %v2248, 7
      %v2250 = vsub.s32 %v2247, %v2249
      %v2251 = vrot.slane %v564, %v2250
      %v2253 = vunpack.c.l.s4 1966171168
      %v2254 = vunpack.c.0.s8 %v2253
      %v2255 = vlaneseq
      %v2256 = vshrl.u32 %v2255, 7
      %v2257 = vsub.s32 %v2254, %v2256
      %v2258 = vrot.slane %v2244, %v2257
      %v2259 = vcombine.high %v2251, %v2251
      %v2260 = vcombine.high %v2258, %v2258
      %v2262 = vunpack.c.l.s4 1966171168
      %v2263 = vunpack.c.0.s8 %v2262
      %v2264 = vlaneseq
      %v2265 = vshrl.u32 %v2264, 7
      %v2266 = vsub.s32 %v2263, %v2265
      %v2267 = vrot.slane %v2251, %v2266
      %v2269 = vunpack.c.l.s4 1966171168
      %v2270 = vunpack.c.0.s8 %v2269
      %v2271 = vlaneseq
      %v2272 = vshrl.u32 %v2271, 7
      %v2273 = vsub.s32 %v2270, %v2272
      %v2274 = vrot.slane %v2258, %v2273
      %v2276 = vunpack.c.l.s4 1966171168
      %v2277 = vunpack.c.0.s8 %v2276
      %v2278 = vlaneseq
      %v2279 = vshrl.u32 %v2278, 7
      %v2280 = vsub.s32 %v2277, %v2279
      %v2281 = vrot.slane %v2259, %v2280
      %v2283 = vunpack.c.l.s4 1966171168
      %v2284 = vunpack.c.0.s8 %v2283
      %v2285 = vlaneseq
      %v2286 = vshrl.u32 %v2285, 7
      %v2287 = vsub.s32 %v2284, %v2286
      %v2288 = vrot.slane %v2260, %v2287
      %v2289 = vcombine.high %v2267, %v2267
      %v2290 = vcombine.high %v2274, %v2274
      %v2291 = vcombine.high %v2281, %v2281
      %v2292 = vcombine.high %v2288, %v2288
      %v2293 = vlaneseq
      %v2294 = vshrl.u32 %v2293, 7
      %v2295 = vsub.s32 0, %v2294
      %v2296 = vrot.slane %v1532, %v2295
      %v2297 = vlaneseq
      %v2298 = vshrl.u32 %v2297, 7
      %v2299 = vsub.s32 0, %v2298
      %v2300 = vrot.slane %v1546, %v2299
      %v2301 = vlaneseq
      %v2302 = vshrl.u32 %v2301, 7
      %v2303 = vsub.s32 0, %v2302
      %v2304 = vrot.slane %v1554, %v2303
      %v2305 = vlaneseq
      %v2306 = vshrl.u32 %v2305, 7
      %v2307 = vsub.s32 0, %v2306
      %v2308 = vrot.slane %v1556, %v2307
      %v2309 = vlaneseq
      %v2310 = vshrl.u32 %v2309, 7
      %v2311 = vsub.s32 0, %v2310
      %v2312 = vrot.slane %v1539, %v2311
      %v2313 = vlaneseq
      %v2314 = vshrl.u32 %v2313, 7
      %v2315 = vsub.s32 0, %v2314
      %v2316 = vrot.slane %v1553, %v2315
      %v2317 = vlaneseq
      %v2318 = vshrl.u32 %v2317, 7
      %v2319 = vsub.s32 0, %v2318
      %v2320 = vrot.slane %v1555, %v2319
      %v2321 = vlaneseq
      %v2322 = vshrl.u32 %v2321, 7
      %v2323 = vsub.s32 0, %v2322
      %v2324 = vrot.slane %v1557, %v2323
      %v2325 = vlaneseq
      %v2326 = vshrl.u32 %v2325, 7
      %v2327 = vsub.s32 0, %v2326
      %v2328 = vrot.slane %v1581, %v2327
      %v2329 = vlaneseq
      %v2330 = vshrl.u32 %v2329, 7
      %v2331 = vsub.s32 0, %v2330
      %v2332 = vrot.slane %v1595, %v2331
      %v2333 = vlaneseq
      %v2334 = vshrl.u32 %v2333, 7
      %v2335 = vsub.s32 0, %v2334
      %v2336 = vrot.slane %v1603, %v2335
      %v2337 = vlaneseq
      %v2338 = vshrl.u32 %v2337, 7
      %v2339 = vsub.s32 0, %v2338
      %v2340 = vrot.slane %v1605, %v2339
      %v2341 = vlaneseq
      %v2342 = vshrl.u32 %v2341, 7
      %v2343 = vsub.s32 0, %v2342
      %v2344 = vrot.slane %v1588, %v2343
      %v2345 = vlaneseq
      %v2346 = vshrl.u32 %v2345, 7
      %v2347 = vsub.s32 0, %v2346
      %v2348 = vrot.slane %v1602, %v2347
      %v2349 = vlaneseq
      %v2350 = vshrl.u32 %v2349, 7
      %v2351 = vsub.s32 0, %v2350
      %v2352 = vrot.slane %v1604, %v2351
      %v2353 = vlaneseq
      %v2354 = vshrl.u32 %v2353, 7
      %v2355 = vsub.s32 0, %v2354
      %v2356 = vrot.slane %v1606, %v2355
      %v2357 = vlaneseq
      %v2358 = vshrl.u32 %v2357, 7
      %v2359 = vsub.s32 0, %v2358
      %v2360 = vrot.slane %v1630, %v2359
      %v2361 = vlaneseq
      %v2362 = vshrl.u32 %v2361, 7
      %v2363 = vsub.s32 0, %v2362
      %v2364 = vrot.slane %v1644, %v2363
      %v2365 = vlaneseq
      %v2366 = vshrl.u32 %v2365, 7
      %v2367 = vsub.s32 0, %v2366
      %v2368 = vrot.slane %v1652, %v2367
      %v2369 = vlaneseq
      %v2370 = vshrl.u32 %v2369, 7
      %v2371 = vsub.s32 0, %v2370
      %v2372 = vrot.slane %v1654, %v2371
      %v2373 = vlaneseq
      %v2374 = vshrl.u32 %v2373, 7
      %v2375 = vsub.s32 0, %v2374
      %v2376 = vrot.slane %v1637, %v2375
      %v2377 = vlaneseq
      %v2378 = vshrl.u32 %v2377, 7
      %v2379 = vsub.s32 0, %v2378
      %v2380 = vrot.slane %v1651, %v2379
      %v2381 = vlaneseq
      %v2382 = vshrl.u32 %v2381, 7
      %v2383 = vsub.s32 0, %v2382
      %v2384 = vrot.slane %v1653, %v2383
      %v2385 = vlaneseq
      %v2386 = vshrl.u32 %v2385, 7
      %v2387 = vsub.s32 0, %v2386
      %v2388 = vrot.slane %v1655, %v2387
      %v2389 = vlaneseq
      %v2390 = vshrl.u32 %v2389, 7
      %v2391 = vsub.s32 0, %v2390
      %v2392 = vrot.slane %v1679, %v2391
      %v2393 = vlaneseq
      %v2394 = vshrl.u32 %v2393, 7
      %v2395 = vsub.s32 0, %v2394
      %v2396 = vrot.slane %v1693, %v2395
      %v2397 = vlaneseq
      %v2398 = vshrl.u32 %v2397, 7
      %v2399 = vsub.s32 0, %v2398
      %v2400 = vrot.slane %v1701, %v2399
      %v2401 = vlaneseq
      %v2402 = vshrl.u32 %v2401, 7
      %v2403 = vsub.s32 0, %v2402
      %v2404 = vrot.slane %v1703, %v2403
      %v2405 = vlaneseq
      %v2406 = vshrl.u32 %v2405, 7
      %v2407 = vsub.s32 0, %v2406
      %v2408 = vrot.slane %v1686, %v2407
      %v2409 = vlaneseq
      %v2410 = vshrl.u32 %v2409, 7
      %v2411 = vsub.s32 0, %v2410
      %v2412 = vrot.slane %v1700, %v2411
      %v2413 = vlaneseq
      %v2414 = vshrl.u32 %v2413, 7
      %v2415 = vsub.s32 0, %v2414
      %v2416 = vrot.slane %v1702, %v2415
      %v2417 = vlaneseq
      %v2418 = vshrl.u32 %v2417, 7
      %v2419 = vsub.s32 0, %v2418
      %v2420 = vrot.slane %v1704, %v2419
      %v2421 = vlaneseq
      %v2422 = vshrl.u32 %v2421, 7
      %v2423 = vsub.s32 0, %v2422
      %v2424 = vrot.slane %v1728, %v2423
      %v2425 = vlaneseq
      %v2426 = vshrl.u32 %v2425, 7
      %v2427 = vsub.s32 0, %v2426
      %v2428 = vrot.slane %v1742, %v2427
      %v2429 = vlaneseq
      %v2430 = vshrl.u32 %v2429, 7
      %v2431 = vsub.s32 0, %v2430
      %v2432 = vrot.slane %v1750, %v2431
      %v2433 = vlaneseq
      %v2434 = vshrl.u32 %v2433, 7
      %v2435 = vsub.s32 0, %v2434
      %v2436 = vrot.slane %v1752, %v2435
      %v2437 = vlaneseq
      %v2438 = vshrl.u32 %v2437, 7
      %v2439 = vsub.s32 0, %v2438
      %v2440 = vrot.slane %v1735, %v2439
      %v2441 = vlaneseq
      %v2442 = vshrl.u32 %v2441, 7
      %v2443 = vsub.s32 0, %v2442
      %v2444 = vrot.slane %v1749, %v2443
      %v2445 = vlaneseq
      %v2446 = vshrl.u32 %v2445, 7
      %v2447 = vsub.s32 0, %v2446
      %v2448 = vrot.slane %v1751, %v2447
      %v2449 = vlaneseq
      %v2450 = vshrl.u32 %v2449, 7
      %v2451 = vsub.s32 0, %v2450
      %v2452 = vrot.slane %v1753, %v2451
      %v2453 = vlaneseq
      %v2454 = vshrl.u32 %v2453, 7
      %v2455 = vsub.s32 0, %v2454
      %v2456 = vrot.slane %v1777, %v2455
      %v2457 = vlaneseq
      %v2458 = vshrl.u32 %v2457, 7
      %v2459 = vsub.s32 0, %v2458
      %v2460 = vrot.slane %v1791, %v2459
      %v2461 = vlaneseq
      %v2462 = vshrl.u32 %v2461, 7
      %v2463 = vsub.s32 0, %v2462
      %v2464 = vrot.slane %v1799, %v2463
      %v2465 = vlaneseq
      %v2466 = vshrl.u32 %v2465, 7
      %v2467 = vsub.s32 0, %v2466
      %v2468 = vrot.slane %v1801, %v2467
      %v2469 = vlaneseq
      %v2470 = vshrl.u32 %v2469, 7
      %v2471 = vsub.s32 0, %v2470
      %v2472 = vrot.slane %v1784, %v2471
      %v2473 = vlaneseq
      %v2474 = vshrl.u32 %v2473, 7
      %v2475 = vsub.s32 0, %v2474
      %v2476 = vrot.slane %v1798, %v2475
      %v2477 = vlaneseq
      %v2478 = vshrl.u32 %v2477, 7
      %v2479 = vsub.s32 0, %v2478
      %v2480 = vrot.slane %v1800, %v2479
      %v2481 = vlaneseq
      %v2482 = vshrl.u32 %v2481, 7
      %v2483 = vsub.s32 0, %v2482
      %v2484 = vrot.slane %v1802, %v2483
      %v2485 = vlaneseq
      %v2486 = vshrl.u32 %v2485, 7
      %v2487 = vsub.s32 0, %v2486
      %v2488 = vrot.slane %v1826, %v2487
      %v2489 = vlaneseq
      %v2490 = vshrl.u32 %v2489, 7
      %v2491 = vsub.s32 0, %v2490
      %v2492 = vrot.slane %v1840, %v2491
      %v2493 = vlaneseq
      %v2494 = vshrl.u32 %v2493, 7
      %v2495 = vsub.s32 0, %v2494
      %v2496 = vrot.slane %v1848, %v2495
      %v2497 = vlaneseq
      %v2498 = vshrl.u32 %v2497, 7
      %v2499 = vsub.s32 0, %v2498
      %v2500 = vrot.slane %v1850, %v2499
      %v2501 = vlaneseq
      %v2502 = vshrl.u32 %v2501, 7
      %v2503 = vsub.s32 0, %v2502
      %v2504 = vrot.slane %v1833, %v2503
      %v2505 = vlaneseq
      %v2506 = vshrl.u32 %v2505, 7
      %v2507 = vsub.s32 0, %v2506
      %v2508 = vrot.slane %v1847, %v2507
      %v2509 = vlaneseq
      %v2510 = vshrl.u32 %v2509, 7
      %v2511 = vsub.s32 0, %v2510
      %v2512 = vrot.slane %v1849, %v2511
      %v2513 = vlaneseq
      %v2514 = vshrl.u32 %v2513, 7
      %v2515 = vsub.s32 0, %v2514
      %v2516 = vrot.slane %v1851, %v2515
      %v2517 = vlaneseq
      %v2518 = vshrl.u32 %v2517, 7
      %v2519 = vsub.s32 0, %v2518
      %v2520 = vrot.slane %v1875, %v2519
      %v2521 = vlaneseq
      %v2522 = vshrl.u32 %v2521, 7
      %v2523 = vsub.s32 0, %v2522
      %v2524 = vrot.slane %v1889, %v2523
      %v2525 = vlaneseq
      %v2526 = vshrl.u32 %v2525, 7
      %v2527 = vsub.s32 0, %v2526
      %v2528 = vrot.slane %v1897, %v2527
      %v2529 = vlaneseq
      %v2530 = vshrl.u32 %v2529, 7
      %v2531 = vsub.s32 0, %v2530
      %v2532 = vrot.slane %v1899, %v2531
      %v2533 = vlaneseq
      %v2534 = vshrl.u32 %v2533, 7
      %v2535 = vsub.s32 0, %v2534
      %v2536 = vrot.slane %v1882, %v2535
      %v2537 = vlaneseq
      %v2538 = vshrl.u32 %v2537, 7
      %v2539 = vsub.s32 0, %v2538
      %v2540 = vrot.slane %v1896, %v2539
      %v2541 = vlaneseq
      %v2542 = vshrl.u32 %v2541, 7
      %v2543 = vsub.s32 0, %v2542
      %v2544 = vrot.slane %v1898, %v2543
      %v2545 = vlaneseq
      %v2546 = vshrl.u32 %v2545, 7
      %v2547 = vsub.s32 0, %v2546
      %v2548 = vrot.slane %v1900, %v2547
      %v2549 = vlaneseq
      %v2550 = vshrl.u32 %v2549, 7
      %v2551 = vsub.s32 0, %v2550
      %v2552 = vrot.slane %v1924, %v2551
      %v2553 = vlaneseq
      %v2554 = vshrl.u32 %v2553, 7
      %v2555 = vsub.s32 0, %v2554
      %v2556 = vrot.slane %v1938, %v2555
      %v2557 = vlaneseq
      %v2558 = vshrl.u32 %v2557, 7
      %v2559 = vsub.s32 0, %v2558
      %v2560 = vrot.slane %v1946, %v2559
      %v2561 = vlaneseq
      %v2562 = vshrl.u32 %v2561, 7
      %v2563 = vsub.s32 0, %v2562
      %v2564 = vrot.slane %v1948, %v2563
      %v2565 = vlaneseq
      %v2566 = vshrl.u32 %v2565, 7
      %v2567 = vsub.s32 0, %v2566
      %v2568 = vrot.slane %v1931, %v2567
      %v2569 = vlaneseq
      %v2570 = vshrl.u32 %v2569, 7
      %v2571 = vsub.s32 0, %v2570
      %v2572 = vrot.slane %v1945, %v2571
      %v2573 = vlaneseq
      %v2574 = vshrl.u32 %v2573, 7
      %v2575 = vsub.s32 0, %v2574
      %v2576 = vrot.slane %v1947, %v2575
      %v2577 = vlaneseq
      %v2578 = vshrl.u32 %v2577, 7
      %v2579 = vsub.s32 0, %v2578
      %v2580 = vrot.slane %v1949, %v2579
      %v2581 = vlaneseq
      %v2582 = vshrl.u32 %v2581, 7
      %v2583 = vsub.s32 0, %v2582
      %v2584 = vrot.slane %v1973, %v2583
      %v2585 = vlaneseq
      %v2586 = vshrl.u32 %v2585, 7
      %v2587 = vsub.s32 0, %v2586
      %v2588 = vrot.slane %v1987, %v2587
      %v2589 = vlaneseq
      %v2590 = vshrl.u32 %v2589, 7
      %v2591 = vsub.s32 0, %v2590
      %v2592 = vrot.slane %v1995, %v2591
      %v2593 = vlaneseq
      %v2594 = vshrl.u32 %v2593, 7
      %v2595 = vsub.s32 0, %v2594
      %v2596 = vrot.slane %v1997, %v2595
      %v2597 = vlaneseq
      %v2598 = vshrl.u32 %v2597, 7
      %v2599 = vsub.s32 0, %v2598
      %v2600 = vrot.slane %v1980, %v2599
      %v2601 = vlaneseq
      %v2602 = vshrl.u32 %v2601, 7
      %v2603 = vsub.s32 0, %v2602
      %v2604 = vrot.slane %v1994, %v2603
      %v2605 = vlaneseq
      %v2606 = vshrl.u32 %v2605, 7
      %v2607 = vsub.s32 0, %v2606
      %v2608 = vrot.slane %v1996, %v2607
      %v2609 = vlaneseq
      %v2610 = vshrl.u32 %v2609, 7
      %v2611 = vsub.s32 0, %v2610
      %v2612 = vrot.slane %v1998, %v2611
      %v2613 = vlaneseq
      %v2614 = vshrl.u32 %v2613, 7
      %v2615 = vsub.s32 0, %v2614
      %v2616 = vrot.slane %v2022, %v2615
      %v2617 = vlaneseq
      %v2618 = vshrl.u32 %v2617, 7
      %v2619 = vsub.s32 0, %v2618
      %v2620 = vrot.slane %v2036, %v2619
      %v2621 = vlaneseq
      %v2622 = vshrl.u32 %v2621, 7
      %v2623 = vsub.s32 0, %v2622
      %v2624 = vrot.slane %v2044, %v2623
      %v2625 = vlaneseq
      %v2626 = vshrl.u32 %v2625, 7
      %v2627 = vsub.s32 0, %v2626
      %v2628 = vrot.slane %v2046, %v2627
      %v2629 = vlaneseq
      %v2630 = vshrl.u32 %v2629, 7
      %v2631 = vsub.s32 0, %v2630
      %v2632 = vrot.slane %v2029, %v2631
      %v2633 = vlaneseq
      %v2634 = vshrl.u32 %v2633, 7
      %v2635 = vsub.s32 0, %v2634
      %v2636 = vrot.slane %v2043, %v2635
      %v2637 = vlaneseq
      %v2638 = vshrl.u32 %v2637, 7
      %v2639 = vsub.s32 0, %v2638
      %v2640 = vrot.slane %v2045, %v2639
      %v2641 = vlaneseq
      %v2642 = vshrl.u32 %v2641, 7
      %v2643 = vsub.s32 0, %v2642
      %v2644 = vrot.slane %v2047, %v2643
      %v2645 = vlaneseq
      %v2646 = vshrl.u32 %v2645, 7
      %v2647 = vsub.s32 0, %v2646
      %v2648 = vrot.slane %v2071, %v2647
      %v2649 = vlaneseq
      %v2650 = vshrl.u32 %v2649, 7
      %v2651 = vsub.s32 0, %v2650
      %v2652 = vrot.slane %v2085, %v2651
      %v2653 = vlaneseq
      %v2654 = vshrl.u32 %v2653, 7
      %v2655 = vsub.s32 0, %v2654
      %v2656 = vrot.slane %v2093, %v2655
      %v2657 = vlaneseq
      %v2658 = vshrl.u32 %v2657, 7
      %v2659 = vsub.s32 0, %v2658
      %v2660 = vrot.slane %v2095, %v2659
      %v2661 = vlaneseq
      %v2662 = vshrl.u32 %v2661, 7
      %v2663 = vsub.s32 0, %v2662
      %v2664 = vrot.slane %v2078, %v2663
      %v2665 = vlaneseq
      %v2666 = vshrl.u32 %v2665, 7
      %v2667 = vsub.s32 0, %v2666
      %v2668 = vrot.slane %v2092, %v2667
      %v2669 = vlaneseq
      %v2670 = vshrl.u32 %v2669, 7
      %v2671 = vsub.s32 0, %v2670
      %v2672 = vrot.slane %v2094, %v2671
      %v2673 = vlaneseq
      %v2674 = vshrl.u32 %v2673, 7
      %v2675 = vsub.s32 0, %v2674
      %v2676 = vrot.slane %v2096, %v2675
      %v2677 = vlaneseq
      %v2678 = vshrl.u32 %v2677, 7
      %v2679 = vsub.s32 0, %v2678
      %v2680 = vrot.slane %v2120, %v2679
      %v2681 = vlaneseq
      %v2682 = vshrl.u32 %v2681, 7
      %v2683 = vsub.s32 0, %v2682
      %v2684 = vrot.slane %v2134, %v2683
      %v2685 = vlaneseq
      %v2686 = vshrl.u32 %v2685, 7
      %v2687 = vsub.s32 0, %v2686
      %v2688 = vrot.slane %v2142, %v2687
      %v2689 = vlaneseq
      %v2690 = vshrl.u32 %v2689, 7
      %v2691 = vsub.s32 0, %v2690
      %v2692 = vrot.slane %v2144, %v2691
      %v2693 = vlaneseq
      %v2694 = vshrl.u32 %v2693, 7
      %v2695 = vsub.s32 0, %v2694
      %v2696 = vrot.slane %v2127, %v2695
      %v2697 = vlaneseq
      %v2698 = vshrl.u32 %v2697, 7
      %v2699 = vsub.s32 0, %v2698
      %v2700 = vrot.slane %v2141, %v2699
      %v2701 = vlaneseq
      %v2702 = vshrl.u32 %v2701, 7
      %v2703 = vsub.s32 0, %v2702
      %v2704 = vrot.slane %v2143, %v2703
      %v2705 = vlaneseq
      %v2706 = vshrl.u32 %v2705, 7
      %v2707 = vsub.s32 0, %v2706
      %v2708 = vrot.slane %v2145, %v2707
      %v2709 = vlaneseq
      %v2710 = vshrl.u32 %v2709, 7
      %v2711 = vsub.s32 0, %v2710
      %v2712 = vrot.slane %v2169, %v2711
      %v2713 = vlaneseq
      %v2714 = vshrl.u32 %v2713, 7
      %v2715 = vsub.s32 0, %v2714
      %v2716 = vrot.slane %v2183, %v2715
      %v2717 = vlaneseq
      %v2718 = vshrl.u32 %v2717, 7
      %v2719 = vsub.s32 0, %v2718
      %v2720 = vrot.slane %v2191, %v2719
      %v2721 = vlaneseq
      %v2722 = vshrl.u32 %v2721, 7
      %v2723 = vsub.s32 0, %v2722
      %v2724 = vrot.slane %v2193, %v2723
      %v2725 = vlaneseq
      %v2726 = vshrl.u32 %v2725, 7
      %v2727 = vsub.s32 0, %v2726
      %v2728 = vrot.slane %v2176, %v2727
      %v2729 = vlaneseq
      %v2730 = vshrl.u32 %v2729, 7
      %v2731 = vsub.s32 0, %v2730
      %v2732 = vrot.slane %v2190, %v2731
      %v2733 = vlaneseq
      %v2734 = vshrl.u32 %v2733, 7
      %v2735 = vsub.s32 0, %v2734
      %v2736 = vrot.slane %v2192, %v2735
      %v2737 = vlaneseq
      %v2738 = vshrl.u32 %v2737, 7
      %v2739 = vsub.s32 0, %v2738
      %v2740 = vrot.slane %v2194, %v2739
      %v2741 = vlaneseq
      %v2742 = vshrl.u32 %v2741, 7
      %v2743 = vsub.s32 0, %v2742
      %v2744 = vrot.slane %v2218, %v2743
      %v2745 = vlaneseq
      %v2746 = vshrl.u32 %v2745, 7
      %v2747 = vsub.s32 0, %v2746
      %v2748 = vrot.slane %v2232, %v2747
      %v2749 = vlaneseq
      %v2750 = vshrl.u32 %v2749, 7
      %v2751 = vsub.s32 0, %v2750
      %v2752 = vrot.slane %v2240, %v2751
      %v2753 = vlaneseq
      %v2754 = vshrl.u32 %v2753, 7
      %v2755 = vsub.s32 0, %v2754
      %v2756 = vrot.slane %v2242, %v2755
      %v2757 = vlaneseq
      %v2758 = vshrl.u32 %v2757, 7
      %v2759 = vsub.s32 0, %v2758
      %v2760 = vrot.slane %v2225, %v2759
      %v2761 = vlaneseq
      %v2762 = vshrl.u32 %v2761, 7
      %v2763 = vsub.s32 0, %v2762
      %v2764 = vrot.slane %v2239, %v2763
      %v2765 = vlaneseq
      %v2766 = vshrl.u32 %v2765, 7
      %v2767 = vsub.s32 0, %v2766
      %v2768 = vrot.slane %v2241, %v2767
      %v2769 = vlaneseq
      %v2770 = vshrl.u32 %v2769, 7
      %v2771 = vsub.s32 0, %v2770
      %v2772 = vrot.slane %v2243, %v2771
      %v2773 = vlaneseq
      %v2774 = vshrl.u32 %v2773, 7
      %v2775 = vsub.s32 0, %v2774
      %v2776 = vrot.slane %v2267, %v2775
      %v2777 = vlaneseq
      %v2778 = vshrl.u32 %v2777, 7
      %v2779 = vsub.s32 0, %v2778
      %v2780 = vrot.slane %v2281, %v2779
      %v2781 = vlaneseq
      %v2782 = vshrl.u32 %v2781, 7
      %v2783 = vsub.s32 0, %v2782
      %v2784 = vrot.slane %v2289, %v2783
      %v2785 = vlaneseq
      %v2786 = vshrl.u32 %v2785, 7
      %v2787 = vsub.s32 0, %v2786
      %v2788 = vrot.slane %v2291, %v2787
      %v2789 = vlaneseq
      %v2790 = vshrl.u32 %v2789, 7
      %v2791 = vsub.s32 0, %v2790
      %v2792 = vrot.slane %v2274, %v2791
      %v2793 = vlaneseq
      %v2794 = vshrl.u32 %v2793, 7
      %v2795 = vsub.s32 0, %v2794
      %v2796 = vrot.slane %v2288, %v2795
      %v2797 = vlaneseq
      %v2798 = vshrl.u32 %v2797, 7
      %v2799 = vsub.s32 0, %v2798
      %v2800 = vrot.slane %v2290, %v2799
      %v2801 = vlaneseq
      %v2802 = vshrl.u32 %v2801, 7
      %v2803 = vsub.s32 0, %v2802
      %v2804 = vrot.slane %v2292, %v2803
      %v2933 = vsel %vm419, %v604, %v2296
      %v2934 = vsel %vm419, %v618, %v2300
      %v2935 = vsel %vm419, %v626, %v2304
      %v2936 = vsel %vm419, %v628, %v2308
      %v2937 = vsel %vm419, %v611, %v2312
      %v2938 = vsel %vm419, %v625, %v2316
      %v2939 = vsel %vm419, %v627, %v2320
      %v2940 = vsel %vm419, %v629, %v2324
      %v2941 = vsel %vm419, %v653, %v2328
      %v2942 = vsel %vm419, %v667, %v2332
      %v2943 = vsel %vm419, %v675, %v2336
      %v2944 = vsel %vm419, %v677, %v2340
      %v2945 = vsel %vm419, %v660, %v2344
      %v2946 = vsel %vm419, %v674, %v2348
      %v2947 = vsel %vm419, %v676, %v2352
      %v2948 = vsel %vm419, %v678, %v2356
      %v2949 = vsel %vm419, %v702, %v2360
      %v2950 = vsel %vm419, %v716, %v2364
      %v2951 = vsel %vm419, %v724, %v2368
      %v2952 = vsel %vm419, %v726, %v2372
      %v2953 = vsel %vm419, %v709, %v2376
      %v2954 = vsel %vm419, %v723, %v2380
      %v2955 = vsel %vm419, %v725, %v2384
      %v2956 = vsel %vm419, %v727, %v2388
      %v2957 = vsel %vm419, %v751, %v2392
      %v2958 = vsel %vm419, %v765, %v2396
      %v2959 = vsel %vm419, %v773, %v2400
      %v2960 = vsel %vm419, %v775, %v2404
      %v2961 = vsel %vm419, %v758, %v2408
      %v2962 = vsel %vm419, %v772, %v2412
      %v2963 = vsel %vm419, %v774, %v2416
      %v2964 = vsel %vm419, %v776, %v2420
      %v2965 = vsel %vm419, %v800, %v2424
      %v2966 = vsel %vm419, %v814, %v2428
      %v2967 = vsel %vm419, %v822, %v2432
      %v2968 = vsel %vm419, %v824, %v2436
      %v2969 = vsel %vm419, %v807, %v2440
      %v2970 = vsel %vm419, %v821, %v2444
      %v2971 = vsel %vm419, %v823, %v2448
      %v2972 = vsel %vm419, %v825, %v2452
      %v2973 = vsel %vm419, %v849, %v2456
      %v2974 = vsel %vm419, %v863, %v2460
      %v2975 = vsel %vm419, %v871, %v2464
      %v2976 = vsel %vm419, %v873, %v2468
      %v2977 = vsel %vm419, %v856, %v2472
      %v2978 = vsel %vm419, %v870, %v2476
      %v2979 = vsel %vm419, %v872, %v2480
      %v2980 = vsel %vm419, %v874, %v2484
      %v2981 = vsel %vm419, %v898, %v2488
      %v2982 = vsel %vm419, %v912, %v2492
      %v2983 = vsel %vm419, %v920, %v2496
      %v2984 = vsel %vm419, %v922, %v2500
      %v2985 = vsel %vm419, %v905, %v2504
      %v2986 = vsel %vm419, %v919, %v2508
      %v2987 = vsel %vm419, %v921, %v2512
      %v2988 = vsel %vm419, %v923, %v2516
      %v2989 = vsel %vm419, %v947, %v2520
      %v2990 = vsel %vm419, %v961, %v2524
      %v2991 = vsel %vm419, %v969, %v2528
      %v2992 = vsel %vm419, %v971, %v2532
      %v2993 = vsel %vm419, %v954, %v2536
      %v2994 = vsel %vm419, %v968, %v2540
      %v2995 = vsel %vm419, %v970, %v2544
      %v2996 = vsel %vm419, %v972, %v2548
      %v2997 = vsel %vm419, %v996, %v2552
      %v2998 = vsel %vm419, %v1010, %v2556
      %v2999 = vsel %vm419, %v1018, %v2560
      %v3000 = vsel %vm419, %v1020, %v2564
      %v3001 = vsel %vm419, %v1003, %v2568
      %v3002 = vsel %vm419, %v1017, %v2572
      %v3003 = vsel %vm419, %v1019, %v2576
      %v3004 = vsel %vm419, %v1021, %v2580
      %v3005 = vsel %vm419, %v1045, %v2584
      %v3006 = vsel %vm419, %v1059, %v2588
      %v3007 = vsel %vm419, %v1067, %v2592
      %v3008 = vsel %vm419, %v1069, %v2596
      %v3009 = vsel %vm419, %v1052, %v2600
      %v3010 = vsel %vm419, %v1066, %v2604
      %v3011 = vsel %vm419, %v1068, %v2608
      %v3012 = vsel %vm419, %v1070, %v2612
      %v3013 = vsel %vm419, %v1094, %v2616
      %v3014 = vsel %vm419, %v1108, %v2620
      %v3015 = vsel %vm419, %v1116, %v2624
      %v3016 = vsel %vm419, %v1118, %v2628
      %v3017 = vsel %vm419, %v1101, %v2632
      %v3018 = vsel %vm419, %v1115, %v2636
      %v3019 = vsel %vm419, %v1117, %v2640
      %v3020 = vsel %vm419, %v1119, %v2644
      %v3021 = vsel %vm419, %v1143, %v2648
      %v3022 = vsel %vm419, %v1157, %v2652
      %v3023 = vsel %vm419, %v1165, %v2656
      %v3024 = vsel %vm419, %v1167, %v2660
      %v3025 = vsel %vm419, %v1150, %v2664
      %v3026 = vsel %vm419, %v1164, %v2668
      %v3027 = vsel %vm419, %v1166, %v2672
      %v3028 = vsel %vm419, %v1168, %v2676
      %v3029 = vsel %vm419, %v1192, %v2680
      %v3030 = vsel %vm419, %v1206, %v2684
      %v3031 = vsel %vm419, %v1214, %v2688
      %v3032 = vsel %vm419, %v1216, %v2692
      %v3033 = vsel %vm419, %v1199, %v2696
      %v3034 = vsel %vm419, %v1213, %v2700
      %v3035 = vsel %vm419, %v1215, %v2704
      %v3036 = vsel %vm419, %v1217, %v2708
      %v3037 = vsel %vm419, %v1241, %v2712
      %v3038 = vsel %vm419, %v1255, %v2716
      %v3039 = vsel %vm419, %v1263, %v2720
      %v3040 = vsel %vm419, %v1265, %v2724
      %v3041 = vsel %vm419, %v1248, %v2728
      %v3042 = vsel %vm419, %v1262, %v2732
      %v3043 = vsel %vm419, %v1264, %v2736
      %v3044 = vsel %vm419, %v1266, %v2740
      %v3045 = vsel %vm419, %v1290, %v2744
      %v3046 = vsel %vm419, %v1304, %v2748
      %v3047 = vsel %vm419, %v1312, %v2752
      %v3048 = vsel %vm419, %v1314, %v2756
      %v3049 = vsel %vm419, %v1297, %v2760
      %v3050 = vsel %vm419, %v1311, %v2764
      %v3051 = vsel %vm419, %v1313, %v2768
      %v3052 = vsel %vm419, %v1315, %v2772
      %v3053 = vsel %vm419, %v1339, %v2776
      %v3054 = vsel %vm419, %v1353, %v2780
      %v3055 = vsel %vm419, %v1361, %v2784
      %v3056 = vsel %vm419, %v1363, %v2788
      %v3057 = vsel %vm419, %v1346, %v2792
      %v3058 = vsel %vm419, %v1360, %v2796
      %v3059 = vsel %vm419, %v1362, %v2800
      %v3060 = vsel %vm419, %v1364, %v2804
      %v3092 = vrot.slane 0.0, 7
      %v3093 = vsel %vm419, %v3092, %v3092
      %v3094 = vrot.slane %v307, 7
      %v3095 = vrot.slane %v308, 7
      %v3096 = vsel %vm419, %v3094, %v3095
      %v3097 = vrot.slane %v309, 7
      %v3098 = vrot.slane %v310, 7
      %v3099 = vsel %vm419, %v3097, %v3098
      %v3100 = vrot.slane %v311, 7
      %v3101 = vrot.slane %v312, 7
      %v3102 = vsel %vm419, %v3100, %v3101
      %v3103 = vrot.slane %v313, 7
      %v3104 = vrot.slane %v314, 7
      %v3105 = vsel %vm419, %v3103, %v3104
      %v3106 = vrot.slane %v315, 7
      %v3107 = vrot.slane %v316, 7
      %v3108 = vsel %vm419, %v3106, %v3107
      %v3109 = vrot.slane %v317, 7
      %v3110 = vrot.slane %v318, 7
      %v3111 = vsel %vm419, %v3109, %v3110
      %v3112 = vrot.slane %v319, 7
      %v3113 = vrot.slane %v320, 7
      %v3114 = vsel %vm419, %v3112, %v3113
      %v3115 = vrot.slane %v321, 7
      %v3116 = vrot.slane %v322, 7
      %v3117 = vsel %vm419, %v3115, %v3116
      %v3118 = vrot.slane %v323, 7
      %v3119 = vrot.slane %v324, 7
      %v3120 = vsel %vm419, %v3118, %v3119
      %v3121 = vrot.slane %v325, 7
      %v3122 = vrot.slane %v326, 7
      %v3123 = vsel %vm419, %v3121, %v3122
      %v3124 = vrot.slane %v327, 7
      %v3125 = vrot.slane %v328, 7
      %v3126 = vsel %vm419, %v3124, %v3125
      %v3127 = vrot.slane %v329, 7
      %v3128 = vrot.slane %v330, 7
      %v3129 = vsel %vm419, %v3127, %v3128
      %v3130 = vrot.slane %v331, 7
      %v3131 = vrot.slane %v332, 7
      %v3132 = vsel %vm419, %v3130, %v3131
      %v3133 = vrot.slane %v333, 7
      %v3134 = vrot.slane %v334, 7
      %v3135 = vsel %vm419, %v3133, %v3134
      %v3136 = vrot.slane %v335, 7
      %v3137 = vrot.slane %v336, 7
      %v3138 = vsel %vm419, %v3136, %v3137
      %v3155 = vsel %vm419, 0.0, %v3092
      %v3156 = vsel %vm419, 0.0, %v3094
      %v3157 = vsel %vm419, 0.0, %v3097
      %v3158 = vsel %vm419, 0.0, %v3100
      %v3159 = vsel %vm419, 0.0, %v3103
      %v3160 = vsel %vm419, 0.0, %v3106
      %v3161 = vsel %vm419, 0.0, %v3109
      %v3162 = vsel %vm419, 0.0, %v3112
      %v3163 = vsel %vm419, 0.0, %v3115
      %v3164 = vsel %vm419, 0.0, %v3118
      %v3165 = vsel %vm419, 0.0, %v3121
      %v3166 = vsel %vm419, 0.0, %v3124
      %v3167 = vsel %vm419, 0.0, %v3127
      %v3168 = vsel %vm419, 0.0, %v3130
      %v3169 = vsel %vm419, 0.0, %v3133
      %v3170 = vsel %vm419, 0.0, %v3136
      %v3171 = vld [vmem:[%s2] sm:$0xf]
      %v3292 = vcombine.low %v2933, %v2934
      %v3293 = vcombine.low %v2935, %v2936
      %v3295 = vunpack.c.l.s4 1983009808
      %v3296 = vunpack.c.0.s8 %v3295
      %v3297 = vlaneseq
      %v3298 = vshrl.u32 %v3297, 7
      %v3299 = vsub.s32 %v3296, %v3298
      %v3300 = vrot.slane %v3292, %v3299
      %v3302 = vunpack.c.l.s4 1983009808
      %v3303 = vunpack.c.0.s8 %v3302
      %v3304 = vlaneseq
      %v3305 = vshrl.u32 %v3304, 7
      %v3306 = vsub.s32 %v3303, %v3305
      %v3307 = vrot.slane %v3293, %v3306
      %v3308 = vcombine.low %v3300, %v3307
      %v3309 = vcombine.low %v2937, %v2938
      %v3310 = vcombine.low %v2939, %v2940
      %v3312 = vunpack.c.l.s4 1983009808
      %v3313 = vunpack.c.0.s8 %v3312
      %v3314 = vlaneseq
      %v3315 = vshrl.u32 %v3314, 7
      %v3316 = vsub.s32 %v3313, %v3315
      %v3317 = vrot.slane %v3309, %v3316
      %v3319 = vunpack.c.l.s4 1983009808
      %v3320 = vunpack.c.0.s8 %v3319
      %v3321 = vlaneseq
      %v3322 = vshrl.u32 %v3321, 7
      %v3323 = vsub.s32 %v3320, %v3322
      %v3324 = vrot.slane %v3310, %v3323
      %v3325 = vcombine.low %v3317, %v3324
      %v3326 = vcombine.low %v2941, %v2942
      %v3327 = vcombine.low %v2943, %v2944
      %v3329 = vunpack.c.l.s4 1983009808
      %v3330 = vunpack.c.0.s8 %v3329
      %v3331 = vlaneseq
      %v3332 = vshrl.u32 %v3331, 7
      %v3333 = vsub.s32 %v3330, %v3332
      %v3334 = vrot.slane %v3326, %v3333
      %v3336 = vunpack.c.l.s4 1983009808
      %v3337 = vunpack.c.0.s8 %v3336
      %v3338 = vlaneseq
      %v3339 = vshrl.u32 %v3338, 7
      %v3340 = vsub.s32 %v3337, %v3339
      %v3341 = vrot.slane %v3327, %v3340
      %v3342 = vcombine.low %v3334, %v3341
      %v3343 = vcombine.low %v2945, %v2946
      %v3344 = vcombine.low %v2947, %v2948
      %v3346 = vunpack.c.l.s4 1983009808
      %v3347 = vunpack.c.0.s8 %v3346
      %v3348 = vlaneseq
      %v3349 = vshrl.u32 %v3348, 7
      %v3350 = vsub.s32 %v3347, %v3349
      %v3351 = vrot.slane %v3343, %v3350
      %v3353 = vunpack.c.l.s4 1983009808
      %v3354 = vunpack.c.0.s8 %v3353
      %v3355 = vlaneseq
      %v3356 = vshrl.u32 %v3355, 7
      %v3357 = vsub.s32 %v3354, %v3356
      %v3358 = vrot.slane %v3344, %v3357
      %v3359 = vcombine.low %v3351, %v3358
      %v3360 = vcombine.low %v2949, %v2950
      %v3361 = vcombine.low %v2951, %v2952
      %v3363 = vunpack.c.l.s4 1983009808
      %v3364 = vunpack.c.0.s8 %v3363
      %v3365 = vlaneseq
      %v3366 = vshrl.u32 %v3365, 7
      %v3367 = vsub.s32 %v3364, %v3366
      %v3368 = vrot.slane %v3360, %v3367
      %v3370 = vunpack.c.l.s4 1983009808
      %v3371 = vunpack.c.0.s8 %v3370
      %v3372 = vlaneseq
      %v3373 = vshrl.u32 %v3372, 7
      %v3374 = vsub.s32 %v3371, %v3373
      %v3375 = vrot.slane %v3361, %v3374
      %v3376 = vcombine.low %v3368, %v3375
      %v3377 = vcombine.low %v2953, %v2954
      %v3378 = vcombine.low %v2955, %v2956
      %v3380 = vunpack.c.l.s4 1983009808
      %v3381 = vunpack.c.0.s8 %v3380
      %v3382 = vlaneseq
      %v3383 = vshrl.u32 %v3382, 7
      %v3384 = vsub.s32 %v3381, %v3383
      %v3385 = vrot.slane %v3377, %v3384
      %v3387 = vunpack.c.l.s4 1983009808
      %v3388 = vunpack.c.0.s8 %v3387
      %v3389 = vlaneseq
      %v3390 = vshrl.u32 %v3389, 7
      %v3391 = vsub.s32 %v3388, %v3390
      %v3392 = vrot.slane %v3378, %v3391
      %v3393 = vcombine.low %v3385, %v3392
      %v3394 = vcombine.low %v2957, %v2958
      %v3395 = vcombine.low %v2959, %v2960
      %v3397 = vunpack.c.l.s4 1983009808
      %v3398 = vunpack.c.0.s8 %v3397
      %v3399 = vlaneseq
      %v3400 = vshrl.u32 %v3399, 7
      %v3401 = vsub.s32 %v3398, %v3400
      %v3402 = vrot.slane %v3394, %v3401
      %v3404 = vunpack.c.l.s4 1983009808
      %v3405 = vunpack.c.0.s8 %v3404
      %v3406 = vlaneseq
      %v3407 = vshrl.u32 %v3406, 7
      %v3408 = vsub.s32 %v3405, %v3407
      %v3409 = vrot.slane %v3395, %v3408
      %v3410 = vcombine.low %v3402, %v3409
      %v3411 = vcombine.low %v2961, %v2962
      %v3412 = vcombine.low %v2963, %v2964
      %v3414 = vunpack.c.l.s4 1983009808
      %v3415 = vunpack.c.0.s8 %v3414
      %v3416 = vlaneseq
      %v3417 = vshrl.u32 %v3416, 7
      %v3418 = vsub.s32 %v3415, %v3417
      %v3419 = vrot.slane %v3411, %v3418
      %v3421 = vunpack.c.l.s4 1983009808
      %v3422 = vunpack.c.0.s8 %v3421
      %v3423 = vlaneseq
      %v3424 = vshrl.u32 %v3423, 7
      %v3425 = vsub.s32 %v3422, %v3424
      %v3426 = vrot.slane %v3412, %v3425
      %v3427 = vcombine.low %v3419, %v3426
      %v3428 = vcombine.low %v2965, %v2966
      %v3429 = vcombine.low %v2967, %v2968
      %v3431 = vunpack.c.l.s4 1983009808
      %v3432 = vunpack.c.0.s8 %v3431
      %v3433 = vlaneseq
      %v3434 = vshrl.u32 %v3433, 7
      %v3435 = vsub.s32 %v3432, %v3434
      %v3436 = vrot.slane %v3428, %v3435
      %v3438 = vunpack.c.l.s4 1983009808
      %v3439 = vunpack.c.0.s8 %v3438
      %v3440 = vlaneseq
      %v3441 = vshrl.u32 %v3440, 7
      %v3442 = vsub.s32 %v3439, %v3441
      %v3443 = vrot.slane %v3429, %v3442
      %v3444 = vcombine.low %v3436, %v3443
      %v3445 = vcombine.low %v2969, %v2970
      %v3446 = vcombine.low %v2971, %v2972
      %v3448 = vunpack.c.l.s4 1983009808
      %v3449 = vunpack.c.0.s8 %v3448
      %v3450 = vlaneseq
      %v3451 = vshrl.u32 %v3450, 7
      %v3452 = vsub.s32 %v3449, %v3451
      %v3453 = vrot.slane %v3445, %v3452
      %v3455 = vunpack.c.l.s4 1983009808
      %v3456 = vunpack.c.0.s8 %v3455
      %v3457 = vlaneseq
      %v3458 = vshrl.u32 %v3457, 7
      %v3459 = vsub.s32 %v3456, %v3458
      %v3460 = vrot.slane %v3446, %v3459
      %v3461 = vcombine.low %v3453, %v3460
      %v3462 = vcombine.low %v2973, %v2974
      %v3463 = vcombine.low %v2975, %v2976
      %v3465 = vunpack.c.l.s4 1983009808
      %v3466 = vunpack.c.0.s8 %v3465
      %v3467 = vlaneseq
      %v3468 = vshrl.u32 %v3467, 7
      %v3469 = vsub.s32 %v3466, %v3468
      %v3470 = vrot.slane %v3462, %v3469
      %v3472 = vunpack.c.l.s4 1983009808
      %v3473 = vunpack.c.0.s8 %v3472
      %v3474 = vlaneseq
      %v3475 = vshrl.u32 %v3474, 7
      %v3476 = vsub.s32 %v3473, %v3475
      %v3477 = vrot.slane %v3463, %v3476
      %v3478 = vcombine.low %v3470, %v3477
      %v3479 = vcombine.low %v2977, %v2978
      %v3480 = vcombine.low %v2979, %v2980
      %v3482 = vunpack.c.l.s4 1983009808
      %v3483 = vunpack.c.0.s8 %v3482
      %v3484 = vlaneseq
      %v3485 = vshrl.u32 %v3484, 7
      %v3486 = vsub.s32 %v3483, %v3485
      %v3487 = vrot.slane %v3479, %v3486
      %v3489 = vunpack.c.l.s4 1983009808
      %v3490 = vunpack.c.0.s8 %v3489
      %v3491 = vlaneseq
      %v3492 = vshrl.u32 %v3491, 7
      %v3493 = vsub.s32 %v3490, %v3492
      %v3494 = vrot.slane %v3480, %v3493
      %v3495 = vcombine.low %v3487, %v3494
      %v3496 = vcombine.low %v2981, %v2982
      %v3497 = vcombine.low %v2983, %v2984
      %v3499 = vunpack.c.l.s4 1983009808
      %v3500 = vunpack.c.0.s8 %v3499
      %v3501 = vlaneseq
      %v3502 = vshrl.u32 %v3501, 7
      %v3503 = vsub.s32 %v3500, %v3502
      %v3504 = vrot.slane %v3496, %v3503
      %v3506 = vunpack.c.l.s4 1983009808
      %v3507 = vunpack.c.0.s8 %v3506
      %v3508 = vlaneseq
      %v3509 = vshrl.u32 %v3508, 7
      %v3510 = vsub.s32 %v3507, %v3509
      %v3511 = vrot.slane %v3497, %v3510
      %v3512 = vcombine.low %v3504, %v3511
      %v3513 = vcombine.low %v2985, %v2986
      %v3514 = vcombine.low %v2987, %v2988
      %v3516 = vunpack.c.l.s4 1983009808
      %v3517 = vunpack.c.0.s8 %v3516
      %v3518 = vlaneseq
      %v3519 = vshrl.u32 %v3518, 7
      %v3520 = vsub.s32 %v3517, %v3519
      %v3521 = vrot.slane %v3513, %v3520
      %v3523 = vunpack.c.l.s4 1983009808
      %v3524 = vunpack.c.0.s8 %v3523
      %v3525 = vlaneseq
      %v3526 = vshrl.u32 %v3525, 7
      %v3527 = vsub.s32 %v3524, %v3526
      %v3528 = vrot.slane %v3514, %v3527
      %v3529 = vcombine.low %v3521, %v3528
      %v3530 = vcombine.low %v2989, %v2990
      %v3531 = vcombine.low %v2991, %v2992
      %v3533 = vunpack.c.l.s4 1983009808
      %v3534 = vunpack.c.0.s8 %v3533
      %v3535 = vlaneseq
      %v3536 = vshrl.u32 %v3535, 7
      %v3537 = vsub.s32 %v3534, %v3536
      %v3538 = vrot.slane %v3530, %v3537
      %v3540 = vunpack.c.l.s4 1983009808
      %v3541 = vunpack.c.0.s8 %v3540
      %v3542 = vlaneseq
      %v3543 = vshrl.u32 %v3542, 7
      %v3544 = vsub.s32 %v3541, %v3543
      %v3545 = vrot.slane %v3531, %v3544
      %v3546 = vcombine.low %v3538, %v3545
      %v3547 = vcombine.low %v2993, %v2994
      %v3548 = vcombine.low %v2995, %v2996
      %v3550 = vunpack.c.l.s4 1983009808
      %v3551 = vunpack.c.0.s8 %v3550
      %v3552 = vlaneseq
      %v3553 = vshrl.u32 %v3552, 7
      %v3554 = vsub.s32 %v3551, %v3553
      %v3555 = vrot.slane %v3547, %v3554
      %v3557 = vunpack.c.l.s4 1983009808
      %v3558 = vunpack.c.0.s8 %v3557
      %v3559 = vlaneseq
      %v3560 = vshrl.u32 %v3559, 7
      %v3561 = vsub.s32 %v3558, %v3560
      %v3562 = vrot.slane %v3548, %v3561
      %v3563 = vcombine.low %v3555, %v3562
      %v3564 = vcombine.low %v2997, %v2998
      %v3565 = vcombine.low %v2999, %v3000
      %v3567 = vunpack.c.l.s4 1983009808
      %v3568 = vunpack.c.0.s8 %v3567
      %v3569 = vlaneseq
      %v3570 = vshrl.u32 %v3569, 7
      %v3571 = vsub.s32 %v3568, %v3570
      %v3572 = vrot.slane %v3564, %v3571
      %v3574 = vunpack.c.l.s4 1983009808
      %v3575 = vunpack.c.0.s8 %v3574
      %v3576 = vlaneseq
      %v3577 = vshrl.u32 %v3576, 7
      %v3578 = vsub.s32 %v3575, %v3577
      %v3579 = vrot.slane %v3565, %v3578
      %v3580 = vcombine.low %v3572, %v3579
      %v3581 = vcombine.low %v3001, %v3002
      %v3582 = vcombine.low %v3003, %v3004
      %v3584 = vunpack.c.l.s4 1983009808
      %v3585 = vunpack.c.0.s8 %v3584
      %v3586 = vlaneseq
      %v3587 = vshrl.u32 %v3586, 7
      %v3588 = vsub.s32 %v3585, %v3587
      %v3589 = vrot.slane %v3581, %v3588
      %v3591 = vunpack.c.l.s4 1983009808
      %v3592 = vunpack.c.0.s8 %v3591
      %v3593 = vlaneseq
      %v3594 = vshrl.u32 %v3593, 7
      %v3595 = vsub.s32 %v3592, %v3594
      %v3596 = vrot.slane %v3582, %v3595
      %v3597 = vcombine.low %v3589, %v3596
      %v3598 = vcombine.low %v3005, %v3006
      %v3599 = vcombine.low %v3007, %v3008
      %v3601 = vunpack.c.l.s4 1983009808
      %v3602 = vunpack.c.0.s8 %v3601
      %v3603 = vlaneseq
      %v3604 = vshrl.u32 %v3603, 7
      %v3605 = vsub.s32 %v3602, %v3604
      %v3606 = vrot.slane %v3598, %v3605
      %v3608 = vunpack.c.l.s4 1983009808
      %v3609 = vunpack.c.0.s8 %v3608
      %v3610 = vlaneseq
      %v3611 = vshrl.u32 %v3610, 7
      %v3612 = vsub.s32 %v3609, %v3611
      %v3613 = vrot.slane %v3599, %v3612
      %v3614 = vcombine.low %v3606, %v3613
      %v3615 = vcombine.low %v3009, %v3010
      %v3616 = vcombine.low %v3011, %v3012
      %v3618 = vunpack.c.l.s4 1983009808
      %v3619 = vunpack.c.0.s8 %v3618
      %v3620 = vlaneseq
      %v3621 = vshrl.u32 %v3620, 7
      %v3622 = vsub.s32 %v3619, %v3621
      %v3623 = vrot.slane %v3615, %v3622
      %v3625 = vunpack.c.l.s4 1983009808
      %v3626 = vunpack.c.0.s8 %v3625
      %v3627 = vlaneseq
      %v3628 = vshrl.u32 %v3627, 7
      %v3629 = vsub.s32 %v3626, %v3628
      %v3630 = vrot.slane %v3616, %v3629
      %v3631 = vcombine.low %v3623, %v3630
      %v3632 = vcombine.low %v3013, %v3014
      %v3633 = vcombine.low %v3015, %v3016
      %v3635 = vunpack.c.l.s4 1983009808
      %v3636 = vunpack.c.0.s8 %v3635
      %v3637 = vlaneseq
      %v3638 = vshrl.u32 %v3637, 7
      %v3639 = vsub.s32 %v3636, %v3638
      %v3640 = vrot.slane %v3632, %v3639
      %v3642 = vunpack.c.l.s4 1983009808
      %v3643 = vunpack.c.0.s8 %v3642
      %v3644 = vlaneseq
      %v3645 = vshrl.u32 %v3644, 7
      %v3646 = vsub.s32 %v3643, %v3645
      %v3647 = vrot.slane %v3633, %v3646
      %v3648 = vcombine.low %v3640, %v3647
      %v3649 = vcombine.low %v3017, %v3018
      %v3650 = vcombine.low %v3019, %v3020
      %v3652 = vunpack.c.l.s4 1983009808
      %v3653 = vunpack.c.0.s8 %v3652
      %v3654 = vlaneseq
      %v3655 = vshrl.u32 %v3654, 7
      %v3656 = vsub.s32 %v3653, %v3655
      %v3657 = vrot.slane %v3649, %v3656
      %v3659 = vunpack.c.l.s4 1983009808
      %v3660 = vunpack.c.0.s8 %v3659
      %v3661 = vlaneseq
      %v3662 = vshrl.u32 %v3661, 7
      %v3663 = vsub.s32 %v3660, %v3662
      %v3664 = vrot.slane %v3650, %v3663
      %v3665 = vcombine.low %v3657, %v3664
      %v3666 = vcombine.low %v3021, %v3022
      %v3667 = vcombine.low %v3023, %v3024
      %v3669 = vunpack.c.l.s4 1983009808
      %v3670 = vunpack.c.0.s8 %v3669
      %v3671 = vlaneseq
      %v3672 = vshrl.u32 %v3671, 7
      %v3673 = vsub.s32 %v3670, %v3672
      %v3674 = vrot.slane %v3666, %v3673
      %v3676 = vunpack.c.l.s4 1983009808
      %v3677 = vunpack.c.0.s8 %v3676
      %v3678 = vlaneseq
      %v3679 = vshrl.u32 %v3678, 7
      %v3680 = vsub.s32 %v3677, %v3679
      %v3681 = vrot.slane %v3667, %v3680
      %v3682 = vcombine.low %v3674, %v3681
      %v3683 = vcombine.low %v3025, %v3026
      %v3684 = vcombine.low %v3027, %v3028
      %v3686 = vunpack.c.l.s4 1983009808
      %v3687 = vunpack.c.0.s8 %v3686
      %v3688 = vlaneseq
      %v3689 = vshrl.u32 %v3688, 7
      %v3690 = vsub.s32 %v3687, %v3689
      %v3691 = vrot.slane %v3683, %v3690
      %v3693 = vunpack.c.l.s4 1983009808
      %v3694 = vunpack.c.0.s8 %v3693
      %v3695 = vlaneseq
      %v3696 = vshrl.u32 %v3695, 7
      %v3697 = vsub.s32 %v3694, %v3696
      %v3698 = vrot.slane %v3684, %v3697
      %v3699 = vcombine.low %v3691, %v3698
      %v3700 = vcombine.low %v3029, %v3030
      %v3701 = vcombine.low %v3031, %v3032
      %v3703 = vunpack.c.l.s4 1983009808
      %v3704 = vunpack.c.0.s8 %v3703
      %v3705 = vlaneseq
      %v3706 = vshrl.u32 %v3705, 7
      %v3707 = vsub.s32 %v3704, %v3706
      %v3708 = vrot.slane %v3700, %v3707
      %v3710 = vunpack.c.l.s4 1983009808
      %v3711 = vunpack.c.0.s8 %v3710
      %v3712 = vlaneseq
      %v3713 = vshrl.u32 %v3712, 7
      %v3714 = vsub.s32 %v3711, %v3713
      %v3715 = vrot.slane %v3701, %v3714
      %v3716 = vcombine.low %v3708, %v3715
      %v3717 = vcombine.low %v3033, %v3034
      %v3718 = vcombine.low %v3035, %v3036
      %v3720 = vunpack.c.l.s4 1983009808
      %v3721 = vunpack.c.0.s8 %v3720
      %v3722 = vlaneseq
      %v3723 = vshrl.u32 %v3722, 7
      %v3724 = vsub.s32 %v3721, %v3723
      %v3725 = vrot.slane %v3717, %v3724
      %v3727 = vunpack.c.l.s4 1983009808
      %v3728 = vunpack.c.0.s8 %v3727
      %v3729 = vlaneseq
      %v3730 = vshrl.u32 %v3729, 7
      %v3731 = vsub.s32 %v3728, %v3730
      %v3732 = vrot.slane %v3718, %v3731
      %v3733 = vcombine.low %v3725, %v3732
      %v3734 = vcombine.low %v3037, %v3038
      %v3735 = vcombine.low %v3039, %v3040
      %v3737 = vunpack.c.l.s4 1983009808
      %v3738 = vunpack.c.0.s8 %v3737
      %v3739 = vlaneseq
      %v3740 = vshrl.u32 %v3739, 7
      %v3741 = vsub.s32 %v3738, %v3740
      %v3742 = vrot.slane %v3734, %v3741
      %v3744 = vunpack.c.l.s4 1983009808
      %v3745 = vunpack.c.0.s8 %v3744
      %v3746 = vlaneseq
      %v3747 = vshrl.u32 %v3746, 7
      %v3748 = vsub.s32 %v3745, %v3747
      %v3749 = vrot.slane %v3735, %v3748
      %v3750 = vcombine.low %v3742, %v3749
      %v3751 = vcombine.low %v3041, %v3042
      %v3752 = vcombine.low %v3043, %v3044
      %v3754 = vunpack.c.l.s4 1983009808
      %v3755 = vunpack.c.0.s8 %v3754
      %v3756 = vlaneseq
      %v3757 = vshrl.u32 %v3756, 7
      %v3758 = vsub.s32 %v3755, %v3757
      %v3759 = vrot.slane %v3751, %v3758
      %v3761 = vunpack.c.l.s4 1983009808
      %v3762 = vunpack.c.0.s8 %v3761
      %v3763 = vlaneseq
      %v3764 = vshrl.u32 %v3763, 7
      %v3765 = vsub.s32 %v3762, %v3764
      %v3766 = vrot.slane %v3752, %v3765
      %v3767 = vcombine.low %v3759, %v3766
      %v3768 = vcombine.low %v3045, %v3046
      %v3769 = vcombine.low %v3047, %v3048
      %v3771 = vunpack.c.l.s4 1983009808
      %v3772 = vunpack.c.0.s8 %v3771
      %v3773 = vlaneseq
      %v3774 = vshrl.u32 %v3773, 7
      %v3775 = vsub.s32 %v3772, %v3774
      %v3776 = vrot.slane %v3768, %v3775
      %v3778 = vunpack.c.l.s4 1983009808
      %v3779 = vunpack.c.0.s8 %v3778
      %v3780 = vlaneseq
      %v3781 = vshrl.u32 %v3780, 7
      %v3782 = vsub.s32 %v3779, %v3781
      %v3783 = vrot.slane %v3769, %v3782
      %v3784 = vcombine.low %v3776, %v3783
      %v3785 = vcombine.low %v3049, %v3050
      %v3786 = vcombine.low %v3051, %v3052
      %v3788 = vunpack.c.l.s4 1983009808
      %v3789 = vunpack.c.0.s8 %v3788
      %v3790 = vlaneseq
      %v3791 = vshrl.u32 %v3790, 7
      %v3792 = vsub.s32 %v3789, %v3791
      %v3793 = vrot.slane %v3785, %v3792
      %v3795 = vunpack.c.l.s4 1983009808
      %v3796 = vunpack.c.0.s8 %v3795
      %v3797 = vlaneseq
      %v3798 = vshrl.u32 %v3797, 7
      %v3799 = vsub.s32 %v3796, %v3798
      %v3800 = vrot.slane %v3786, %v3799
      %v3801 = vcombine.low %v3793, %v3800
      %v3802 = vrot.slane %v3308, 7
      %v3803 = vrot.slane %v3325, 7
      %v3804 = vsel %vm419, %v3802, %v3803
      %v3805 = vrot.slane %v3342, 7
      %v3806 = vrot.slane %v3359, 7
      %v3807 = vsel %vm419, %v3805, %v3806
      %v3808 = vrot.slane %v3376, 7
      %v3809 = vrot.slane %v3393, 7
      %v3810 = vsel %vm419, %v3808, %v3809
      %v3811 = vrot.slane %v3410, 7
      %v3812 = vrot.slane %v3427, 7
      %v3813 = vsel %vm419, %v3811, %v3812
      %v3814 = vrot.slane %v3444, 7
      %v3815 = vrot.slane %v3461, 7
      %v3816 = vsel %vm419, %v3814, %v3815
      %v3817 = vrot.slane %v3478, 7
      %v3818 = vrot.slane %v3495, 7
      %v3819 = vsel %vm419, %v3817, %v3818
      %v3820 = vrot.slane %v3512, 7
      %v3821 = vrot.slane %v3529, 7
      %v3822 = vsel %vm419, %v3820, %v3821
      %v3823 = vrot.slane %v3546, 7
      %v3824 = vrot.slane %v3563, 7
      %v3825 = vsel %vm419, %v3823, %v3824
      %v3826 = vrot.slane %v3580, 7
      %v3827 = vrot.slane %v3597, 7
      %v3828 = vsel %vm419, %v3826, %v3827
      %v3829 = vrot.slane %v3614, 7
      %v3830 = vrot.slane %v3631, 7
      %v3831 = vsel %vm419, %v3829, %v3830
      %v3832 = vrot.slane %v3648, 7
      %v3833 = vrot.slane %v3665, 7
      %v3834 = vsel %vm419, %v3832, %v3833
      %v3835 = vrot.slane %v3682, 7
      %v3836 = vrot.slane %v3699, 7
      %v3837 = vsel %vm419, %v3835, %v3836
      %v3838 = vrot.slane %v3716, 7
      %v3839 = vrot.slane %v3733, 7
      %v3840 = vsel %vm419, %v3838, %v3839
      %v3841 = vrot.slane %v3750, 7
      %v3842 = vrot.slane %v3767, 7
      %v3843 = vsel %vm419, %v3841, %v3842
      %v3844 = vrot.slane %v3784, 7
      %v3845 = vrot.slane %v3801, 7
      %v3846 = vsel %vm419, %v3844, %v3845
      %v3862 = vsel %vm419, 0.0, %v3802
      %v3863 = vsel %vm419, 0.0, %v3805
      %v3864 = vsel %vm419, 0.0, %v3808
      %v3865 = vsel %vm419, 0.0, %v3811
      %v3866 = vsel %vm419, 0.0, %v3814
      %v3867 = vsel %vm419, 0.0, %v3817
      %v3868 = vsel %vm419, 0.0, %v3820
      %v3869 = vsel %vm419, 0.0, %v3823
      %v3870 = vsel %vm419, 0.0, %v3826
      %v3871 = vsel %vm419, 0.0, %v3829
      %v3872 = vsel %vm419, 0.0, %v3832
      %v3873 = vsel %vm419, 0.0, %v3835
      %v3874 = vsel %vm419, 0.0, %v3838
      %v3875 = vsel %vm419, 0.0, %v3841
      %v3876 = vsel %vm419, 0.0, %v3844
      %v3877 = vld [vmem:[%s3] sm:$0xf]
      %vm3878 = vcmask 31744
      %v3880 = vsel %vm3878, %v3155, 0
      %v3882 = vsel %vm3878, %v3093, 0
      %v3885 = vsel %vm3878, %v3862, 0
      %v3887 = vsel %vm3878, %v3804, 0
      %v3890 = vsel %vm3878, %v3863, 0
      %v3892 = vsel %vm3878, %v3807, 0
      %v3895 = vsel %vm3878, %v3864, 0
      %v3897 = vsel %vm3878, %v3810, 0
      %v3900 = vsel %vm3878, %v3865, 0
      %v3902 = vsel %vm3878, %v3813, 0
      %v3905 = vsel %vm3878, %v3866, 0
      %v3907 = vsel %vm3878, %v3816, 0
      %v3910 = vsel %vm3878, %v3867, 0
      %v3912 = vsel %vm3878, %v3819, 0
      %v3915 = vsel %vm3878, %v3868, 0
      %v3917 = vsel %vm3878, %v3822, 0
      %v3920 = vsel %vm3878, %v3869, 0
      %v3922 = vsel %vm3878, %v3825, 0
      %v3925 = vsel %vm3878, %v3870, 0
      %v3927 = vsel %vm3878, %v3828, 0
      %v3930 = vsel %vm3878, %v3871, 0
      %v3932 = vsel %vm3878, %v3831, 0
      %v3935 = vsel %vm3878, %v3872, 0
      %v3937 = vsel %vm3878, %v3834, 0
      %v3940 = vsel %vm3878, %v3873, 0
      %v3942 = vsel %vm3878, %v3837, 0
      %v3945 = vsel %vm3878, %v3874, 0
      %v3947 = vsel %vm3878, %v3840, 0
      %v3950 = vsel %vm3878, %v3875, 0
      %v3952 = vsel %vm3878, %v3843, 0
      %v3955 = vsel %vm3878, %v3876, 0
      %v3957 = vsel %vm3878, %v3846, 0
      %vm3959 = vcmask 1043456
      %v3961 = vsel %vm3959, %v3877, 0
      %3963 = vmatprep.subr.mxu0 0.0
      %3964 = vmatpush1.msra.mxu0 %v3961
      %3965 = vmatprep.subr.mxu0 0.0
      %3966 = vmatpush1.msra.mxu0 0.0
      %3967 = vmatprep.subr.mxu0 0.0
      %3968 = vmatpush1.msra.mxu0 0.0
      %3969 = vmatprep.subr.mxu0 0.0
      %3970 = vmatpush1.msra.mxu0 0.0
      %3971 = vmatprep.subr.mxu0 0.0
      %3972 = vmatpush1.msra.mxu0 0.0
      %3973 = vmatprep.subr.mxu0 0.0
      %3974 = vmatpush1.msra.mxu0 0.0
      %3975 = vmatprep.subr.mxu0 0.0
      %3976 = vmatpush1.msra.mxu0 0.0
      %3977 = vmatprep.subr.mxu0 0.0
      %3978 = vmatpush1.msra.mxu0 0.0
      %3979 = vmatprep.subr.mxu0 0.0
      %3980 = vmatpush1.msra.mxu0 0.0
      %3981 = vmatprep.subr.mxu0 0.0
      %3982 = vmatpush1.msra.mxu0 0.0
      %3983 = vmatprep.subr.mxu0 0.0
      %3984 = vmatpush1.msra.mxu0 0.0
      %3985 = vmatprep.subr.mxu0 0.0
      %3986 = vmatpush1.msra.mxu0 0.0
      %3987 = vmatprep.subr.mxu0 0.0
      %3988 = vmatpush1.msra.mxu0 0.0
      %3989 = vmatprep.subr.mxu0 0.0
      %3990 = vmatpush1.msra.mxu0 0.0
      %3991 = vmatprep.subr.mxu0 0.0
      %3992 = vmatpush1.msra.mxu0 0.0
      %3993 = vmatprep.subr.mxu0 0.0
      %3994 = vmatpush1.msra.mxu0 0.0
      %3995 = vmatprep.subr.mxu0 0.0
      %3996 = vmatpush1.msra.mxu0 0.0
      %3997 = vmatprep.subr.mxu0 0.0
      %3998 = vmatpush1.msra.mxu0 0.0
      %3999 = vmatprep.subr.mxu0 0.0
      %4000 = vmatpush1.msra.mxu0 0.0
      %4001 = vmatprep.subr.mxu0 0.0
      %4002 = vmatpush1.msra.mxu0 0.0
      %4003 = vmatprep.subr.mxu0 0.0
      %4004 = vmatpush1.msra.mxu0 0.0
      %4005 = vmatprep.subr.mxu0 0.0
      %4006 = vmatpush1.msra.mxu0 0.0
      %4007 = vmatprep.subr.mxu0 0.0
      %4008 = vmatpush1.msra.mxu0 0.0
      %4009 = vmatprep.subr.mxu0 0.0
      %4010 = vmatpush1.msra.mxu0 0.0
      %4011 = vmatprep.subr.mxu0 0.0
      %4012 = vmatpush1.msra.mxu0 0.0
      %4013 = vmatprep.subr.mxu0 0.0
      %4014 = vmatpush1.msra.mxu0 0.0
      %4015 = vmatprep.subr.mxu0 0.0
      %4016 = vmatpush1.msra.mxu0 0.0
      %4017 = vmatprep.subr.mxu0 0.0
      %4018 = vmatpush1.msra.mxu0 0.0
      %4019 = vmatprep.subr.mxu0 0.0
      %4020 = vmatpush1.msra.mxu0 0.0
      %4021 = vmatprep.subr.mxu0 0.0
      %4022 = vmatpush1.msra.mxu0 0.0
      %4023 = vmatprep.subr.mxu0 0.0
      %4024 = vmatpush1.msra.mxu0 0.0
      %4025 = vmatprep.subr.mxu0 0.0
      %4026 = vmatpush1.msra.mxu0 0.0
      %4027 = vmatprep.mubr.f32.mxu0 0.0
      %4028 = vmatmul.mubr.f32.gmra.mrb[0].mxu0 %v3880
      %v4029 = vpop.f32.mrb[0].mxu0
      %v4030 = vadd.f32 0.0, %v4029
      %v4031 = vpop.f32.mrb[0].mxu0
      %4032 = vmatprep.mubr.f32.mxu0 0.0
      %4033 = vmatmul.mubr.f32.gmra.mrb[0].mxu0 %v3882
      %v4034 = vpop.f32.mrb[0].mxu0
      %v4035 = vadd.f32 0.0, %v4034
      %v4036 = vpop.f32.mrb[0].mxu0
      %4037 = vmatprep.mubr.f32.mxu0 0.0
      %4038 = vmatmul.mubr.f32.gmra.mrb[0].mxu0 %v3885
      %v4039 = vpop.f32.mrb[0].mxu0
      %v4040 = vadd.f32 0.0, %v4039
      %v4041 = vpop.f32.mrb[0].mxu0
      %4042 = vmatprep.mubr.f32.mxu0 0.0
      %4043 = vmatmul.mubr.f32.gmra.mrb[0].mxu0 %v3887
      %v4044 = vpop.f32.mrb[0].mxu0
      %v4045 = vadd.f32 0.0, %v4044
      %v4046 = vpop.f32.mrb[0].mxu0
      %4047 = vmatprep.mubr.f32.mxu0 0.0
      %4048 = vmatmul.mubr.f32.gmra.mrb[0].mxu0 %v3890
      %v4049 = vpop.f32.mrb[0].mxu0
      %v4050 = vadd.f32 0.0, %v4049
      %v4051 = vpop.f32.mrb[0].mxu0
      %4052 = vmatprep.mubr.f32.mxu0 0.0
      %4053 = vmatmul.mubr.f32.gmra.mrb[0].mxu0 %v3892
      %v4054 = vpop.f32.mrb[0].mxu0
      %v4055 = vadd.f32 0.0, %v4054
      %v4056 = vpop.f32.mrb[0].mxu0
      %4057 = vmatprep.mubr.f32.mxu0 0.0
      %4058 = vmatmul.mubr.f32.gmra.mrb[0].mxu0 %v3895
      %v4059 = vpop.f32.mrb[0].mxu0
      %v4060 = vadd.f32 0.0, %v4059
      %v4061 = vpop.f32.mrb[0].mxu0
      %4062 = vmatprep.mubr.f32.mxu0 0.0
      %4063 = vmatmul.mubr.f32.gmra.mrb[0].mxu0 %v3897
      %v4064 = vpop.f32.mrb[0].mxu0
      %v4065 = vadd.f32 0.0, %v4064
      %v4066 = vpop.f32.mrb[0].mxu0
      %4067 = vmatprep.mubr.f32.mxu0 0.0
      %4068 = vmatmul.mubr.f32.gmra.mrb[0].mxu0 %v3900
      %v4069 = vpop.f32.mrb[0].mxu0
      %v4070 = vadd.f32 0.0, %v4069
      %v4071 = vpop.f32.mrb[0].mxu0
      %4072 = vmatprep.mubr.f32.mxu0 0.0
      %4073 = vmatmul.mubr.f32.gmra.mrb[0].mxu0 %v3902
      %v4074 = vpop.f32.mrb[0].mxu0
      %v4075 = vadd.f32 0.0, %v4074
      %v4076 = vpop.f32.mrb[0].mxu0
      %4077 = vmatprep.mubr.f32.mxu0 0.0
      %4078 = vmatmul.mubr.f32.gmra.mrb[0].mxu0 %v3905
      %v4079 = vpop.f32.mrb[0].mxu0
      %v4080 = vadd.f32 0.0, %v4079
      %v4081 = vpop.f32.mrb[0].mxu0
      %4082 = vmatprep.mubr.f32.mxu0 0.0
      %4083 = vmatmul.mubr.f32.gmra.mrb[0].mxu0 %v3907
      %v4084 = vpop.f32.mrb[0].mxu0
      %v4085 = vadd.f32 0.0, %v4084
      %v4086 = vpop.f32.mrb[0].mxu0
      %4087 = vmatprep.mubr.f32.mxu0 0.0
      %4088 = vmatmul.mubr.f32.gmra.mrb[0].mxu0 %v3910
      %v4089 = vpop.f32.mrb[0].mxu0
      %v4090 = vadd.f32 0.0, %v4089
      %v4091 = vpop.f32.mrb[0].mxu0
      %4092 = vmatprep.mubr.f32.mxu0 0.0
      %4093 = vmatmul.mubr.f32.gmra.mrb[0].mxu0 %v3912
      %v4094 = vpop.f32.mrb[0].mxu0
      %v4095 = vadd.f32 0.0, %v4094
      %v4096 = vpop.f32.mrb[0].mxu0
      %4097 = vmatprep.mubr.f32.mxu0 0.0
      %4098 = vmatmul.mubr.f32.gmra.mrb[0].mxu0 %v3915
      %v4099 = vpop.f32.mrb[0].mxu0
      %v4100 = vadd.f32 0.0, %v4099
      %v4101 = vpop.f32.mrb[0].mxu0
      %4102 = vmatprep.mubr.f32.mxu0 0.0
      %4103 = vmatmul.mubr.f32.gmra.mrb[0].mxu0 %v3917
      %v4104 = vpop.f32.mrb[0].mxu0
      %v4105 = vadd.f32 0.0, %v4104
      %v4106 = vpop.f32.mrb[0].mxu0
      %4107 = vmatprep.mubr.f32.mxu0 0.0
      %4108 = vmatmul.mubr.f32.gmra.mrb[0].mxu0 %v3920
      %v4109 = vpop.f32.mrb[0].mxu0
      %v4110 = vadd.f32 0.0, %v4109
      %v4111 = vpop.f32.mrb[0].mxu0
      %4112 = vmatprep.mubr.f32.mxu0 0.0
      %4113 = vmatmul.mubr.f32.gmra.mrb[0].mxu0 %v3922
      %v4114 = vpop.f32.mrb[0].mxu0
      %v4115 = vadd.f32 0.0, %v4114
      %v4116 = vpop.f32.mrb[0].mxu0
      %4117 = vmatprep.mubr.f32.mxu0 0.0
      %4118 = vmatmul.mubr.f32.gmra.mrb[0].mxu0 %v3925
      %v4119 = vpop.f32.mrb[0].mxu0
      %v4120 = vadd.f32 0.0, %v4119
      %v4121 = vpop.f32.mrb[0].mxu0
      %4122 = vmatprep.mubr.f32.mxu0 0.0
      %4123 = vmatmul.mubr.f32.gmra.mrb[0].mxu0 %v3927
      %v4124 = vpop.f32.mrb[0].mxu0
      %v4125 = vadd.f32 0.0, %v4124
      %v4126 = vpop.f32.mrb[0].mxu0
      %4127 = vmatprep.mubr.f32.mxu0 0.0
      %4128 = vmatmul.mubr.f32.gmra.mrb[0].mxu0 %v3930
      %v4129 = vpop.f32.mrb[0].mxu0
      %v4130 = vadd.f32 0.0, %v4129
      %v4131 = vpop.f32.mrb[0].mxu0
      %4132 = vmatprep.mubr.f32.mxu0 0.0
      %4133 = vmatmul.mubr.f32.gmra.mrb[0].mxu0 %v3932
      %v4134 = vpop.f32.mrb[0].mxu0
      %v4135 = vadd.f32 0.0, %v4134
      %v4136 = vpop.f32.mrb[0].mxu0
      %4137 = vmatprep.mubr.f32.mxu0 0.0
      %4138 = vmatmul.mubr.f32.gmra.mrb[0].mxu0 %v3935
      %v4139 = vpop.f32.mrb[0].mxu0
      %v4140 = vadd.f32 0.0, %v4139
      %v4141 = vpop.f32.mrb[0].mxu0
      %4142 = vmatprep.mubr.f32.mxu0 0.0
      %4143 = vmatmul.mubr.f32.gmra.mrb[0].mxu0 %v3937
      %v4144 = vpop.f32.mrb[0].mxu0
      %v4145 = vadd.f32 0.0, %v4144
      %v4146 = vpop.f32.mrb[0].mxu0
      %4147 = vmatprep.mubr.f32.mxu0 0.0
      %4148 = vmatmul.mubr.f32.gmra.mrb[0].mxu0 %v3940
      %v4149 = vpop.f32.mrb[0].mxu0
      %v4150 = vadd.f32 0.0, %v4149
      %v4151 = vpop.f32.mrb[0].mxu0
      %4152 = vmatprep.mubr.f32.mxu0 0.0
      %4153 = vmatmul.mubr.f32.gmra.mrb[0].mxu0 %v3942
      %v4154 = vpop.f32.mrb[0].mxu0
      %v4155 = vadd.f32 0.0, %v4154
      %v4156 = vpop.f32.mrb[0].mxu0
      %4157 = vmatprep.mubr.f32.mxu0 0.0
      %4158 = vmatmul.mubr.f32.gmra.mrb[0].mxu0 %v3945
      %v4159 = vpop.f32.mrb[0].mxu0
      %v4160 = vadd.f32 0.0, %v4159
      %v4161 = vpop.f32.mrb[0].mxu0
      %4162 = vmatprep.mubr.f32.mxu0 0.0
      %4163 = vmatmul.mubr.f32.gmra.mrb[0].mxu0 %v3947
      %v4164 = vpop.f32.mrb[0].mxu0
      %v4165 = vadd.f32 0.0, %v4164
      %v4166 = vpop.f32.mrb[0].mxu0
      %4167 = vmatprep.mubr.f32.mxu0 0.0
      %4168 = vmatmul.mubr.f32.gmra.mrb[0].mxu0 %v3950
      %v4169 = vpop.f32.mrb[0].mxu0
      %v4170 = vadd.f32 0.0, %v4169
      %v4171 = vpop.f32.mrb[0].mxu0
      %4172 = vmatprep.mubr.f32.mxu0 0.0
      %4173 = vmatmul.mubr.f32.gmra.mrb[0].mxu0 %v3952
      %v4174 = vpop.f32.mrb[0].mxu0
      %v4175 = vadd.f32 0.0, %v4174
      %v4176 = vpop.f32.mrb[0].mxu0
      %4177 = vmatprep.mubr.f32.mxu0 0.0
      %4178 = vmatmul.mubr.f32.gmra.mrb[0].mxu0 %v3955
      %v4179 = vpop.f32.mrb[0].mxu0
      %v4180 = vadd.f32 0.0, %v4179
      %v4181 = vpop.f32.mrb[0].mxu0
      %4182 = vmatprep.mubr.f32.mxu0 0.0
      %4183 = vmatmul.mubr.f32.gmra.mrb[0].mxu0 %v3957
      %v4184 = vpop.f32.mrb[0].mxu0
      %v4185 = vadd.f32 0.0, %v4184
      %v4186 = vpop.f32.mrb[0].mxu0
      %4187 = vdwg.mxu0
      %v4189 = vsel %vm3878, %v3156, 0
      %v4191 = vsel %vm3878, %v3096, 0
      %v4194 = vsel %vm3878, %v3157, 0
      %v4196 = vsel %vm3878, %v3099, 0
      %v4199 = vsel %vm3878, %v3158, 0
      %v4201 = vsel %vm3878, %v3102, 0
      %v4204 = vsel %vm3878, %v3159, 0
      %v4206 = vsel %vm3878, %v3105, 0
      %v4209 = vsel %vm3878, %v3160, 0
      %v4211 = vsel %vm3878, %v3108, 0
      %v4214 = vsel %vm3878, %v3161, 0
      %v4216 = vsel %vm3878, %v3111, 0
      %v4219 = vsel %vm3878, %v3162, 0
      %v4221 = vsel %vm3878, %v3114, 0
      %v4224 = vsel %vm3878, %v3163, 0
      %v4226 = vsel %vm3878, %v3117, 0
      %v4229 = vsel %vm3878, %v3164, 0
      %v4231 = vsel %vm3878, %v3120, 0
      %v4234 = vsel %vm3878, %v3165, 0
      %v4236 = vsel %vm3878, %v3123, 0
      %v4239 = vsel %vm3878, %v3166, 0
      %v4241 = vsel %vm3878, %v3126, 0
      %v4244 = vsel %vm3878, %v3167, 0
      %v4246 = vsel %vm3878, %v3129, 0
      %v4249 = vsel %vm3878, %v3168, 0
      %v4251 = vsel %vm3878, %v3132, 0
      %v4254 = vsel %vm3878, %v3169, 0
      %v4256 = vsel %vm3878, %v3135, 0
      %v4259 = vsel %vm3878, %v3170, 0
      %v4261 = vsel %vm3878, %v3138, 0
      %v4264 = vsel %vm3959, %v3171, 0
      %4266 = vmatprep.subr.mxu0 0.0
      %4267 = vmatpush1.msra.mxu0 %v4264
      %4268 = vmatprep.subr.mxu0 0.0
      %4269 = vmatpush1.msra.mxu0 0.0
      %4270 = vmatprep.subr.mxu0 0.0
      %4271 = vmatpush1.msra.mxu0 0.0
      %4272 = vmatprep.subr.mxu0 0.0
      %4273 = vmatpush1.msra.mxu0 0.0
      %4274 = vmatprep.subr.mxu0 0.0
      %4275 = vmatpush1.msra.mxu0 0.0
      %4276 = vmatprep.subr.mxu0 0.0
      %4277 = vmatpush1.msra.mxu0 0.0
      %4278 = vmatprep.subr.mxu0 0.0
      %4279 = vmatpush1.msra.mxu0 0.0
      %4280 = vmatprep.subr.mxu0 0.0
      %4281 = vmatpush1.msra.mxu0 0.0
      %4282 = vmatprep.subr.mxu0 0.0
      %4283 = vmatpush1.msra.mxu0 0.0
      %4284 = vmatprep.subr.mxu0 0.0
      %4285 = vmatpush1.msra.mxu0 0.0
      %4286 = vmatprep.subr.mxu0 0.0
      %4287 = vmatpush1.msra.mxu0 0.0
      %4288 = vmatprep.subr.mxu0 0.0
      %4289 = vmatpush1.msra.mxu0 0.0
      %4290 = vmatprep.subr.mxu0 0.0
      %4291 = vmatpush1.msra.mxu0 0.0
      %4292 = vmatprep.subr.mxu0 0.0
      %4293 = vmatpush1.msra.mxu0 0.0
      %4294 = vmatprep.subr.mxu0 0.0
      %4295 = vmatpush1.msra.mxu0 0.0
      %4296 = vmatprep.subr.mxu0 0.0
      %4297 = vmatpush1.msra.mxu0 0.0
      %4298 = vmatprep.subr.mxu0 0.0
      %4299 = vmatpush1.msra.mxu0 0.0
      %4300 = vmatprep.subr.mxu0 0.0
      %4301 = vmatpush1.msra.mxu0 0.0
      %4302 = vmatprep.subr.mxu0 0.0
      %4303 = vmatpush1.msra.mxu0 0.0
      %4304 = vmatprep.subr.mxu0 0.0
      %4305 = vmatpush1.msra.mxu0 0.0
      %4306 = vmatprep.subr.mxu0 0.0
      %4307 = vmatpush1.msra.mxu0 0.0
      %4308 = vmatprep.subr.mxu0 0.0
      %4309 = vmatpush1.msra.mxu0 0.0
      %4310 = vmatprep.subr.mxu0 0.0
      %4311 = vmatpush1.msra.mxu0 0.0
      %4312 = vmatprep.subr.mxu0 0.0
      %4313 = vmatpush1.msra.mxu0 0.0
      %4314 = vmatprep.subr.mxu0 0.0
      %4315 = vmatpush1.msra.mxu0 0.0
      %4316 = vmatprep.subr.mxu0 0.0
      %4317 = vmatpush1.msra.mxu0 0.0
      %4318 = vmatprep.subr.mxu0 0.0
      %4319 = vmatpush1.msra.mxu0 0.0
      %4320 = vmatprep.subr.mxu0 0.0
      %4321 = vmatpush1.msra.mxu0 0.0
      %4322 = vmatprep.subr.mxu0 0.0
      %4323 = vmatpush1.msra.mxu0 0.0
      %4324 = vmatprep.subr.mxu0 0.0
      %4325 = vmatpush1.msra.mxu0 0.0
      %4326 = vmatprep.subr.mxu0 0.0
      %4327 = vmatpush1.msra.mxu0 0.0
      %4328 = vmatprep.subr.mxu0 0.0
      %4329 = vmatpush1.msra.mxu0 0.0
      %4330 = vmatprep.mubr.f32.mxu0 0.0
      %4331 = vmatmul.mubr.f32.gmra.mrb[0].mxu0 %v3880
      %v4332 = vpop.f32.mrb[0].mxu0
      %v4333 = vadd.f32 %v4030, %v4332
      %v4334 = vpop.f32.mrb[0].mxu0
      %4335 = vmatprep.mubr.f32.mxu0 0.0
      %4336 = vmatmul.mubr.f32.gmra.mrb[0].mxu0 %v3882
      %v4337 = vpop.f32.mrb[0].mxu0
      %v4338 = vadd.f32 %v4035, %v4337
      %v4339 = vpop.f32.mrb[0].mxu0
      %4340 = vmatprep.mubr.f32.mxu0 0.0
      %4341 = vmatmul.mubr.f32.gmra.mrb[0].mxu0 %v4189
      %v4342 = vpop.f32.mrb[0].mxu0
      %v4343 = vadd.f32 %v4040, %v4342
      %v4344 = vpop.f32.mrb[0].mxu0
      %4345 = vmatprep.mubr.f32.mxu0 0.0
      %4346 = vmatmul.mubr.f32.gmra.mrb[0].mxu0 %v4191
      %v4347 = vpop.f32.mrb[0].mxu0
      %v4348 = vadd.f32 %v4045, %v4347
      %v4349 = vpop.f32.mrb[0].mxu0
      %4350 = vmatprep.mubr.f32.mxu0 0.0
      %4351 = vmatmul.mubr.f32.gmra.mrb[0].mxu0 %v4194
      %v4352 = vpop.f32.mrb[0].mxu0
      %v4353 = vadd.f32 %v4050, %v4352
      %v4354 = vpop.f32.mrb[0].mxu0
      %4355 = vmatprep.mubr.f32.mxu0 0.0
      %4356 = vmatmul.mubr.f32.gmra.mrb[0].mxu0 %v4196
      %v4357 = vpop.f32.mrb[0].mxu0
      %v4358 = vadd.f32 %v4055, %v4357
      %v4359 = vpop.f32.mrb[0].mxu0
      %4360 = vmatprep.mubr.f32.mxu0 0.0
      %4361 = vmatmul.mubr.f32.gmra.mrb[0].mxu0 %v4199
      %v4362 = vpop.f32.mrb[0].mxu0
      %v4363 = vadd.f32 %v4060, %v4362
      %v4364 = vpop.f32.mrb[0].mxu0
      %4365 = vmatprep.mubr.f32.mxu0 0.0
      %4366 = vmatmul.mubr.f32.gmra.mrb[0].mxu0 %v4201
      %v4367 = vpop.f32.mrb[0].mxu0
      %v4368 = vadd.f32 %v4065, %v4367
      %v4369 = vpop.f32.mrb[0].mxu0
      %4370 = vmatprep.mubr.f32.mxu0 0.0
      %4371 = vmatmul.mubr.f32.gmra.mrb[0].mxu0 %v4204
      %v4372 = vpop.f32.mrb[0].mxu0
      %v4373 = vadd.f32 %v4070, %v4372
      %v4374 = vpop.f32.mrb[0].mxu0
      %4375 = vmatprep.mubr.f32.mxu0 0.0
      %4376 = vmatmul.mubr.f32.gmra.mrb[0].mxu0 %v4206
      %v4377 = vpop.f32.mrb[0].mxu0
      %v4378 = vadd.f32 %v4075, %v4377
      %v4379 = vpop.f32.mrb[0].mxu0
      %4380 = vmatprep.mubr.f32.mxu0 0.0
      %4381 = vmatmul.mubr.f32.gmra.mrb[0].mxu0 %v4209
      %v4382 = vpop.f32.mrb[0].mxu0
      %v4383 = vadd.f32 %v4080, %v4382
      %v4384 = vpop.f32.mrb[0].mxu0
      %4385 = vmatprep.mubr.f32.mxu0 0.0
      %4386 = vmatmul.mubr.f32.gmra.mrb[0].mxu0 %v4211
      %v4387 = vpop.f32.mrb[0].mxu0
      %v4388 = vadd.f32 %v4085, %v4387
      %v4389 = vpop.f32.mrb[0].mxu0
      %4390 = vmatprep.mubr.f32.mxu0 0.0
      %4391 = vmatmul.mubr.f32.gmra.mrb[0].mxu0 %v4214
      %v4392 = vpop.f32.mrb[0].mxu0
      %v4393 = vadd.f32 %v4090, %v4392
      %v4394 = vpop.f32.mrb[0].mxu0
      %4395 = vmatprep.mubr.f32.mxu0 0.0
      %4396 = vmatmul.mubr.f32.gmra.mrb[0].mxu0 %v4216
      %v4397 = vpop.f32.mrb[0].mxu0
      %v4398 = vadd.f32 %v4095, %v4397
      %v4399 = vpop.f32.mrb[0].mxu0
      %4400 = vmatprep.mubr.f32.mxu0 0.0
      %4401 = vmatmul.mubr.f32.gmra.mrb[0].mxu0 %v4219
      %v4402 = vpop.f32.mrb[0].mxu0
      %v4403 = vadd.f32 %v4100, %v4402
      %v4404 = vpop.f32.mrb[0].mxu0
      %4405 = vmatprep.mubr.f32.mxu0 0.0
      %4406 = vmatmul.mubr.f32.gmra.mrb[0].mxu0 %v4221
      %v4407 = vpop.f32.mrb[0].mxu0
      %v4408 = vadd.f32 %v4105, %v4407
      %v4409 = vpop.f32.mrb[0].mxu0
      %4410 = vmatprep.mubr.f32.mxu0 0.0
      %4411 = vmatmul.mubr.f32.gmra.mrb[0].mxu0 %v4224
      %v4412 = vpop.f32.mrb[0].mxu0
      %v4413 = vadd.f32 %v4110, %v4412
      %v4414 = vpop.f32.mrb[0].mxu0
      %4415 = vmatprep.mubr.f32.mxu0 0.0
      %4416 = vmatmul.mubr.f32.gmra.mrb[0].mxu0 %v4226
      %v4417 = vpop.f32.mrb[0].mxu0
      %v4418 = vadd.f32 %v4115, %v4417
      %v4419 = vpop.f32.mrb[0].mxu0
      %4420 = vmatprep.mubr.f32.mxu0 0.0
      %4421 = vmatmul.mubr.f32.gmra.mrb[0].mxu0 %v4229
      %v4422 = vpop.f32.mrb[0].mxu0
      %v4423 = vadd.f32 %v4120, %v4422
      %v4424 = vpop.f32.mrb[0].mxu0
      %4425 = vmatprep.mubr.f32.mxu0 0.0
      %4426 = vmatmul.mubr.f32.gmra.mrb[0].mxu0 %v4231
      %v4427 = vpop.f32.mrb[0].mxu0
      %v4428 = vadd.f32 %v4125, %v4427
      %v4429 = vpop.f32.mrb[0].mxu0
      %4430 = vmatprep.mubr.f32.mxu0 0.0
      %4431 = vmatmul.mubr.f32.gmra.mrb[0].mxu0 %v4234
      %v4432 = vpop.f32.mrb[0].mxu0
      %v4433 = vadd.f32 %v4130, %v4432
      %v4434 = vpop.f32.mrb[0].mxu0
      %4435 = vmatprep.mubr.f32.mxu0 0.0
      %4436 = vmatmul.mubr.f32.gmra.mrb[0].mxu0 %v4236
      %v4437 = vpop.f32.mrb[0].mxu0
      %v4438 = vadd.f32 %v4135, %v4437
      %v4439 = vpop.f32.mrb[0].mxu0
      %4440 = vmatprep.mubr.f32.mxu0 0.0
      %4441 = vmatmul.mubr.f32.gmra.mrb[0].mxu0 %v4239
      %v4442 = vpop.f32.mrb[0].mxu0
      %v4443 = vadd.f32 %v4140, %v4442
      %v4444 = vpop.f32.mrb[0].mxu0
      %4445 = vmatprep.mubr.f32.mxu0 0.0
      %4446 = vmatmul.mubr.f32.gmra.mrb[0].mxu0 %v4241
      %v4447 = vpop.f32.mrb[0].mxu0
      %v4448 = vadd.f32 %v4145, %v4447
      %v4449 = vpop.f32.mrb[0].mxu0
      %4450 = vmatprep.mubr.f32.mxu0 0.0
      %4451 = vmatmul.mubr.f32.gmra.mrb[0].mxu0 %v4244
      %v4452 = vpop.f32.mrb[0].mxu0
      %v4453 = vadd.f32 %v4150, %v4452
      %v4454 = vpop.f32.mrb[0].mxu0
      %4455 = vmatprep.mubr.f32.mxu0 0.0
      %4456 = vmatmul.mubr.f32.gmra.mrb[0].mxu0 %v4246
      %v4457 = vpop.f32.mrb[0].mxu0
      %v4458 = vadd.f32 %v4155, %v4457
      %v4459 = vpop.f32.mrb[0].mxu0
      %4460 = vmatprep.mubr.f32.mxu0 0.0
      %4461 = vmatmul.mubr.f32.gmra.mrb[0].mxu0 %v4249
      %v4462 = vpop.f32.mrb[0].mxu0
      %v4463 = vadd.f32 %v4160, %v4462
      %v4464 = vpop.f32.mrb[0].mxu0
      %4465 = vmatprep.mubr.f32.mxu0 0.0
      %4466 = vmatmul.mubr.f32.gmra.mrb[0].mxu0 %v4251
      %v4467 = vpop.f32.mrb[0].mxu0
      %v4468 = vadd.f32 %v4165, %v4467
      %v4469 = vpop.f32.mrb[0].mxu0
      %4470 = vmatprep.mubr.f32.mxu0 0.0
      %4471 = vmatmul.mubr.f32.gmra.mrb[0].mxu0 %v4254
      %v4472 = vpop.f32.mrb[0].mxu0
      %v4473 = vadd.f32 %v4170, %v4472
      %v4474 = vpop.f32.mrb[0].mxu0
      %4475 = vmatprep.mubr.f32.mxu0 0.0
      %4476 = vmatmul.mubr.f32.gmra.mrb[0].mxu0 %v4256
      %v4477 = vpop.f32.mrb[0].mxu0
      %v4478 = vadd.f32 %v4175, %v4477
      %v4479 = vpop.f32.mrb[0].mxu0
      %4480 = vmatprep.mubr.f32.mxu0 0.0
      %4481 = vmatmul.mubr.f32.gmra.mrb[0].mxu0 %v4259
      %v4482 = vpop.f32.mrb[0].mxu0
      %v4483 = vadd.f32 %v4180, %v4482
      %v4484 = vpop.f32.mrb[0].mxu0
      %4485 = vmatprep.mubr.f32.mxu0 0.0
      %4486 = vmatmul.mubr.f32.gmra.mrb[0].mxu0 %v4261
      %v4487 = vpop.f32.mrb[0].mxu0
      %v4488 = vadd.f32 %v4185, %v4487
      %v4489 = vpop.f32.mrb[0].mxu0
      %4490 = vdwg.mxu0
      %s4491 = scalar_lea.vmem %s2, 4
      %v4492 = vld [vmem:[%s4491] sm:$0xf]
      %v4493 = vsel %vm3878, 0.0, 0
      %v4495 = vsel %vm3878, %v307, 0
      %v4497 = vsel %vm3878, %v308, 0
      %v4499 = vsel %vm3878, %v309, 0
      %v4501 = vsel %vm3878, %v310, 0
      %v4503 = vsel %vm3878, %v311, 0
      %v4505 = vsel %vm3878, %v312, 0
      %v4507 = vsel %vm3878, %v313, 0
      %v4509 = vsel %vm3878, %v314, 0
      %v4511 = vsel %vm3878, %v315, 0
      %v4513 = vsel %vm3878, %v316, 0
      %v4515 = vsel %vm3878, %v317, 0
      %v4517 = vsel %vm3878, %v318, 0
      %v4519 = vsel %vm3878, %v319, 0
      %v4521 = vsel %vm3878, %v320, 0
      %v4523 = vsel %vm3878, %v321, 0
      %v4525 = vsel %vm3878, %v322, 0
      %v4527 = vsel %vm3878, %v323, 0
      %v4529 = vsel %vm3878, %v324, 0
      %v4531 = vsel %vm3878, %v325, 0
      %v4533 = vsel %vm3878, %v326, 0
      %v4535 = vsel %vm3878, %v327, 0
      %v4537 = vsel %vm3878, %v328, 0
      %v4539 = vsel %vm3878, %v329, 0
      %v4541 = vsel %vm3878, %v330, 0
      %v4543 = vsel %vm3878, %v331, 0
      %v4545 = vsel %vm3878, %v332, 0
      %v4547 = vsel %vm3878, %v333, 0
      %v4549 = vsel %vm3878, %v334, 0
      %v4551 = vsel %vm3878, %v335, 0
      %v4553 = vsel %vm3878, %v336, 0
      %v4556 = vsel %vm3959, %v4492, 0
      %4558 = vmatprep.subr.mxu0 0.0
      %4559 = vmatpush1.msra.mxu0 %v4556
      %4560 = vmatprep.subr.mxu0 0.0
      %4561 = vmatpush1.msra.mxu0 0.0
      %4562 = vmatprep.subr.mxu0 0.0
      %4563 = vmatpush1.msra.mxu0 0.0
      %4564 = vmatprep.subr.mxu0 0.0
      %4565 = vmatpush1.msra.mxu0 0.0
      %4566 = vmatprep.subr.mxu0 0.0
      %4567 = vmatpush1.msra.mxu0 0.0
      %4568 = vmatprep.subr.mxu0 0.0
      %4569 = vmatpush1.msra.mxu0 0.0
      %4570 = vmatprep.subr.mxu0 0.0
      %4571 = vmatpush1.msra.mxu0 0.0
      %4572 = vmatprep.subr.mxu0 0.0
      %4573 = vmatpush1.msra.mxu0 0.0
      %4574 = vmatprep.subr.mxu0 0.0
      %4575 = vmatpush1.msra.mxu0 0.0
      %4576 = vmatprep.subr.mxu0 0.0
      %4577 = vmatpush1.msra.mxu0 0.0
      %4578 = vmatprep.subr.mxu0 0.0
      %4579 = vmatpush1.msra.mxu0 0.0
      %4580 = vmatprep.subr.mxu0 0.0
      %4581 = vmatpush1.msra.mxu0 0.0
      %4582 = vmatprep.subr.mxu0 0.0
      %4583 = vmatpush1.msra.mxu0 0.0
      %4584 = vmatprep.subr.mxu0 0.0
      %4585 = vmatpush1.msra.mxu0 0.0
      %4586 = vmatprep.subr.mxu0 0.0
      %4587 = vmatpush1.msra.mxu0 0.0
      %4588 = vmatprep.subr.mxu0 0.0
      %4589 = vmatpush1.msra.mxu0 0.0
      %4590 = vmatprep.subr.mxu0 0.0
      %4591 = vmatpush1.msra.mxu0 0.0
      %4592 = vmatprep.subr.mxu0 0.0
      %4593 = vmatpush1.msra.mxu0 0.0
      %4594 = vmatprep.subr.mxu0 0.0
      %4595 = vmatpush1.msra.mxu0 0.0
      %4596 = vmatprep.subr.mxu0 0.0
      %4597 = vmatpush1.msra.mxu0 0.0
      %4598 = vmatprep.subr.mxu0 0.0
      %4599 = vmatpush1.msra.mxu0 0.0
      %4600 = vmatprep.subr.mxu0 0.0
      %4601 = vmatpush1.msra.mxu0 0.0
      %4602 = vmatprep.subr.mxu0 0.0
      %4603 = vmatpush1.msra.mxu0 0.0
      %4604 = vmatprep.subr.mxu0 0.0
      %4605 = vmatpush1.msra.mxu0 0.0
      %4606 = vmatprep.subr.mxu0 0.0
      %4607 = vmatpush1.msra.mxu0 0.0
      %4608 = vmatprep.subr.mxu0 0.0
      %4609 = vmatpush1.msra.mxu0 0.0
      %4610 = vmatprep.subr.mxu0 0.0
      %4611 = vmatpush1.msra.mxu0 0.0
      %4612 = vmatprep.subr.mxu0 0.0
      %4613 = vmatpush1.msra.mxu0 0.0
      %4614 = vmatprep.subr.mxu0 0.0
      %4615 = vmatpush1.msra.mxu0 0.0
      %4616 = vmatprep.subr.mxu0 0.0
      %4617 = vmatpush1.msra.mxu0 0.0
      %4618 = vmatprep.subr.mxu0 0.0
      %4619 = vmatpush1.msra.mxu0 0.0
      %4620 = vmatprep.subr.mxu0 0.0
      %4621 = vmatpush1.msra.mxu0 0.0
      %4622 = vmatprep.mubr.f32.mxu0 0.0
      %4623 = vmatmul.mubr.f32.gmra.mrb[0].mxu0 %v4493
      %v4624 = vpop.f32.mrb[0].mxu0
      %v4625 = vadd.f32 0.0, %v4624
      %v4626 = vpop.f32.mrb[0].mxu0
      %4627 = vmatprep.mubr.f32.mxu0 0.0
      %4628 = vmatmul.mubr.f32.gmra.mrb[0].mxu0 %v4493
      %v4629 = vpop.f32.mrb[0].mxu0
      %v4630 = vadd.f32 0.0, %v4629
      %v4631 = vpop.f32.mrb[0].mxu0
      %4632 = vmatprep.mubr.f32.mxu0 0.0
      %4633 = vmatmul.mubr.f32.gmra.mrb[0].mxu0 %v4495
      %v4634 = vpop.f32.mrb[0].mxu0
      %v4635 = vadd.f32 0.0, %v4634
      %v4636 = vpop.f32.mrb[0].mxu0
      %4637 = vmatprep.mubr.f32.mxu0 0.0
      %4638 = vmatmul.mubr.f32.gmra.mrb[0].mxu0 %v4497
      %v4639 = vpop.f32.mrb[0].mxu0
      %v4640 = vadd.f32 0.0, %v4639
      %v4641 = vpop.f32.mrb[0].mxu0
      %4642 = vmatprep.mubr.f32.mxu0 0.0
      %4643 = vmatmul.mubr.f32.gmra.mrb[0].mxu0 %v4499
      %v4644 = vpop.f32.mrb[0].mxu0
      %v4645 = vadd.f32 0.0, %v4644
      %v4646 = vpop.f32.mrb[0].mxu0
      %4647 = vmatprep.mubr.f32.mxu0 0.0
      %4648 = vmatmul.mubr.f32.gmra.mrb[0].mxu0 %v4501
      %v4649 = vpop.f32.mrb[0].mxu0
      %v4650 = vadd.f32 0.0, %v4649
      %v4651 = vpop.f32.mrb[0].mxu0
      %4652 = vmatprep.mubr.f32.mxu0 0.0
      %4653 = vmatmul.mubr.f32.gmra.mrb[0].mxu0 %v4503
      %v4654 = vpop.f32.mrb[0].mxu0
      %v4655 = vadd.f32 0.0, %v4654
      %v4656 = vpop.f32.mrb[0].mxu0
      %4657 = vmatprep.mubr.f32.mxu0 0.0
      %4658 = vmatmul.mubr.f32.gmra.mrb[0].mxu0 %v4505
      %v4659 = vpop.f32.mrb[0].mxu0
      %v4660 = vadd.f32 0.0, %v4659
      %v4661 = vpop.f32.mrb[0].mxu0
      %4662 = vmatprep.mubr.f32.mxu0 0.0
      %4663 = vmatmul.mubr.f32.gmra.mrb[0].mxu0 %v4507
      %v4664 = vpop.f32.mrb[0].mxu0
      %v4665 = vadd.f32 0.0, %v4664
      %v4666 = vpop.f32.mrb[0].mxu0
      %4667 = vmatprep.mubr.f32.mxu0 0.0
      %4668 = vmatmul.mubr.f32.gmra.mrb[0].mxu0 %v4509
      %v4669 = vpop.f32.mrb[0].mxu0
      %v4670 = vadd.f32 0.0, %v4669
      %v4671 = vpop.f32.mrb[0].mxu0
      %4672 = vmatprep.mubr.f32.mxu0 0.0
      %4673 = vmatmul.mubr.f32.gmra.mrb[0].mxu0 %v4511
      %v4674 = vpop.f32.mrb[0].mxu0
      %v4675 = vadd.f32 0.0, %v4674
      %v4676 = vpop.f32.mrb[0].mxu0
      %4677 = vmatprep.mubr.f32.mxu0 0.0
      %4678 = vmatmul.mubr.f32.gmra.mrb[0].mxu0 %v4513
      %v4679 = vpop.f32.mrb[0].mxu0
      %v4680 = vadd.f32 0.0, %v4679
      %v4681 = vpop.f32.mrb[0].mxu0
      %4682 = vmatprep.mubr.f32.mxu0 0.0
      %4683 = vmatmul.mubr.f32.gmra.mrb[0].mxu0 %v4515
      %v4684 = vpop.f32.mrb[0].mxu0
      %v4685 = vadd.f32 0.0, %v4684
      %v4686 = vpop.f32.mrb[0].mxu0
      %4687 = vmatprep.mubr.f32.mxu0 0.0
      %4688 = vmatmul.mubr.f32.gmra.mrb[0].mxu0 %v4517
      %v4689 = vpop.f32.mrb[0].mxu0
      %v4690 = vadd.f32 0.0, %v4689
      %v4691 = vpop.f32.mrb[0].mxu0
      %4692 = vmatprep.mubr.f32.mxu0 0.0
      %4693 = vmatmul.mubr.f32.gmra.mrb[0].mxu0 %v4519
      %v4694 = vpop.f32.mrb[0].mxu0
      %v4695 = vadd.f32 0.0, %v4694
      %v4696 = vpop.f32.mrb[0].mxu0
      %4697 = vmatprep.mubr.f32.mxu0 0.0
      %4698 = vmatmul.mubr.f32.gmra.mrb[0].mxu0 %v4521
      %v4699 = vpop.f32.mrb[0].mxu0
      %v4700 = vadd.f32 0.0, %v4699
      %v4701 = vpop.f32.mrb[0].mxu0
      %4702 = vmatprep.mubr.f32.mxu0 0.0
      %4703 = vmatmul.mubr.f32.gmra.mrb[0].mxu0 %v4523
      %v4704 = vpop.f32.mrb[0].mxu0
      %v4705 = vadd.f32 0.0, %v4704
      %v4706 = vpop.f32.mrb[0].mxu0
      %4707 = vmatprep.mubr.f32.mxu0 0.0
      %4708 = vmatmul.mubr.f32.gmra.mrb[0].mxu0 %v4525
      %v4709 = vpop.f32.mrb[0].mxu0
      %v4710 = vadd.f32 0.0, %v4709
      %v4711 = vpop.f32.mrb[0].mxu0
      %4712 = vmatprep.mubr.f32.mxu0 0.0
      %4713 = vmatmul.mubr.f32.gmra.mrb[0].mxu0 %v4527
      %v4714 = vpop.f32.mrb[0].mxu0
      %v4715 = vadd.f32 0.0, %v4714
      %v4716 = vpop.f32.mrb[0].mxu0
      %4717 = vmatprep.mubr.f32.mxu0 0.0
      %4718 = vmatmul.mubr.f32.gmra.mrb[0].mxu0 %v4529
      %v4719 = vpop.f32.mrb[0].mxu0
      %v4720 = vadd.f32 0.0, %v4719
      %v4721 = vpop.f32.mrb[0].mxu0
      %4722 = vmatprep.mubr.f32.mxu0 0.0
      %4723 = vmatmul.mubr.f32.gmra.mrb[0].mxu0 %v4531
      %v4724 = vpop.f32.mrb[0].mxu0
      %v4725 = vadd.f32 0.0, %v4724
      %v4726 = vpop.f32.mrb[0].mxu0
      %4727 = vmatprep.mubr.f32.mxu0 0.0
      %4728 = vmatmul.mubr.f32.gmra.mrb[0].mxu0 %v4533
      %v4729 = vpop.f32.mrb[0].mxu0
      %v4730 = vadd.f32 0.0, %v4729
      %v4731 = vpop.f32.mrb[0].mxu0
      %4732 = vmatprep.mubr.f32.mxu0 0.0
      %4733 = vmatmul.mubr.f32.gmra.mrb[0].mxu0 %v4535
      %v4734 = vpop.f32.mrb[0].mxu0
      %v4735 = vadd.f32 0.0, %v4734
      %v4736 = vpop.f32.mrb[0].mxu0
      %4737 = vmatprep.mubr.f32.mxu0 0.0
      %4738 = vmatmul.mubr.f32.gmra.mrb[0].mxu0 %v4537
      %v4739 = vpop.f32.mrb[0].mxu0
      %v4740 = vadd.f32 0.0, %v4739
      %v4741 = vpop.f32.mrb[0].mxu0
      %4742 = vmatprep.mubr.f32.mxu0 0.0
      %4743 = vmatmul.mubr.f32.gmra.mrb[0].mxu0 %v4539
      %v4744 = vpop.f32.mrb[0].mxu0
      %v4745 = vadd.f32 0.0, %v4744
      %v4746 = vpop.f32.mrb[0].mxu0
      %4747 = vmatprep.mubr.f32.mxu0 0.0
      %4748 = vmatmul.mubr.f32.gmra.mrb[0].mxu0 %v4541
      %v4749 = vpop.f32.mrb[0].mxu0
      %v4750 = vadd.f32 0.0, %v4749
      %v4751 = vpop.f32.mrb[0].mxu0
      %4752 = vmatprep.mubr.f32.mxu0 0.0
      %4753 = vmatmul.mubr.f32.gmra.mrb[0].mxu0 %v4543
      %v4754 = vpop.f32.mrb[0].mxu0
      %v4755 = vadd.f32 0.0, %v4754
      %v4756 = vpop.f32.mrb[0].mxu0
      %4757 = vmatprep.mubr.f32.mxu0 0.0
      %4758 = vmatmul.mubr.f32.gmra.mrb[0].mxu0 %v4545
      %v4759 = vpop.f32.mrb[0].mxu0
      %v4760 = vadd.f32 0.0, %v4759
      %v4761 = vpop.f32.mrb[0].mxu0
      %4762 = vmatprep.mubr.f32.mxu0 0.0
      %4763 = vmatmul.mubr.f32.gmra.mrb[0].mxu0 %v4547
      %v4764 = vpop.f32.mrb[0].mxu0
      %v4765 = vadd.f32 0.0, %v4764
      %v4766 = vpop.f32.mrb[0].mxu0
      %4767 = vmatprep.mubr.f32.mxu0 0.0
      %4768 = vmatmul.mubr.f32.gmra.mrb[0].mxu0 %v4549
      %v4769 = vpop.f32.mrb[0].mxu0
      %v4770 = vadd.f32 0.0, %v4769
      %v4771 = vpop.f32.mrb[0].mxu0
      %4772 = vmatprep.mubr.f32.mxu0 0.0
      %4773 = vmatmul.mubr.f32.gmra.mrb[0].mxu0 %v4551
      %v4774 = vpop.f32.mrb[0].mxu0
      %v4775 = vadd.f32 0.0, %v4774
      %v4776 = vpop.f32.mrb[0].mxu0
      %4777 = vmatprep.mubr.f32.mxu0 0.0
      %4778 = vmatmul.mubr.f32.gmra.mrb[0].mxu0 %v4553
      %v4779 = vpop.f32.mrb[0].mxu0
      %v4780 = vadd.f32 0.0, %v4779
      %v4781 = vpop.f32.mrb[0].mxu0
      %4782 = vdwg.mxu0
      %v4783 = vadd.f32 %v4333, %v4625
      %v4784 = vadd.f32 %v4338, %v4630
      %v4785 = vadd.f32 %v4343, %v4635
      %v4786 = vadd.f32 %v4348, %v4640
      %v4787 = vadd.f32 %v4353, %v4645
      %v4788 = vadd.f32 %v4358, %v4650
      %v4789 = vadd.f32 %v4363, %v4655
      %v4790 = vadd.f32 %v4368, %v4660
      %v4791 = vadd.f32 %v4373, %v4665
      %v4792 = vadd.f32 %v4378, %v4670
      %v4793 = vadd.f32 %v4383, %v4675
      %v4794 = vadd.f32 %v4388, %v4680
      %v4795 = vadd.f32 %v4393, %v4685
      %v4796 = vadd.f32 %v4398, %v4690
      %v4797 = vadd.f32 %v4403, %v4695
      %v4798 = vadd.f32 %v4408, %v4700
      %v4799 = vadd.f32 %v4413, %v4705
      %v4800 = vadd.f32 %v4418, %v4710
      %v4801 = vadd.f32 %v4423, %v4715
      %v4802 = vadd.f32 %v4428, %v4720
      %v4803 = vadd.f32 %v4433, %v4725
      %v4804 = vadd.f32 %v4438, %v4730
      %v4805 = vadd.f32 %v4443, %v4735
      %v4806 = vadd.f32 %v4448, %v4740
      %v4807 = vadd.f32 %v4453, %v4745
      %v4808 = vadd.f32 %v4458, %v4750
      %v4809 = vadd.f32 %v4463, %v4755
      %v4810 = vadd.f32 %v4468, %v4760
      %v4811 = vadd.f32 %v4473, %v4765
      %v4812 = vadd.f32 %v4478, %v4770
      %v4813 = vadd.f32 %v4483, %v4775
      %v4814 = vadd.f32 %v4488, %v4780
      %s4815 = scalar_lea.vmem %s3, 4
      %v4816 = vld [vmem:[%s4815] sm:$0xf]
      %v4817 = vsel %vm3878, %v3308, 0
      %v4819 = vsel %vm3878, %v3325, 0
      %v4821 = vsel %vm3878, %v3342, 0
      %v4823 = vsel %vm3878, %v3359, 0
      %v4825 = vsel %vm3878, %v3376, 0
      %v4827 = vsel %vm3878, %v3393, 0
      %v4829 = vsel %vm3878, %v3410, 0
      %v4831 = vsel %vm3878, %v3427, 0
      %v4833 = vsel %vm3878, %v3444, 0
      %v4835 = vsel %vm3878, %v3461, 0
      %v4837 = vsel %vm3878, %v3478, 0
      %v4839 = vsel %vm3878, %v3495, 0
      %v4841 = vsel %vm3878, %v3512, 0
      %v4843 = vsel %vm3878, %v3529, 0
      %v4845 = vsel %vm3878, %v3546, 0
      %v4847 = vsel %vm3878, %v3563, 0
      %v4849 = vsel %vm3878, %v3580, 0
      %v4851 = vsel %vm3878, %v3597, 0
      %v4853 = vsel %vm3878, %v3614, 0
      %v4855 = vsel %vm3878, %v3631, 0
      %v4857 = vsel %vm3878, %v3648, 0
      %v4859 = vsel %vm3878, %v3665, 0
      %v4861 = vsel %vm3878, %v3682, 0
      %v4863 = vsel %vm3878, %v3699, 0
      %v4865 = vsel %vm3878, %v3716, 0
      %v4867 = vsel %vm3878, %v3733, 0
      %v4869 = vsel %vm3878, %v3750, 0
      %v4871 = vsel %vm3878, %v3767, 0
      %v4873 = vsel %vm3878, %v3784, 0
      %v4875 = vsel %vm3878, %v3801, 0
      %v4878 = vsel %vm3959, %v4816, 0
      %4880 = vmatprep.subr.mxu0 0.0
      %4881 = vmatpush1.msra.mxu0 %v4878
      %4882 = vmatprep.subr.mxu0 0.0
      %4883 = vmatpush1.msra.mxu0 0.0
      %4884 = vmatprep.subr.mxu0 0.0
      %4885 = vmatpush1.msra.mxu0 0.0
      %4886 = vmatprep.subr.mxu0 0.0
      %4887 = vmatpush1.msra.mxu0 0.0
      %4888 = vmatprep.subr.mxu0 0.0
      %4889 = vmatpush1.msra.mxu0 0.0
      %4890 = vmatprep.subr.mxu0 0.0
      %4891 = vmatpush1.msra.mxu0 0.0
      %4892 = vmatprep.subr.mxu0 0.0
      %4893 = vmatpush1.msra.mxu0 0.0
      %4894 = vmatprep.subr.mxu0 0.0
      %4895 = vmatpush1.msra.mxu0 0.0
      %4896 = vmatprep.subr.mxu0 0.0
      %4897 = vmatpush1.msra.mxu0 0.0
      %4898 = vmatprep.subr.mxu0 0.0
      %4899 = vmatpush1.msra.mxu0 0.0
      %4900 = vmatprep.subr.mxu0 0.0
      %4901 = vmatpush1.msra.mxu0 0.0
      %4902 = vmatprep.subr.mxu0 0.0
      %4903 = vmatpush1.msra.mxu0 0.0
      %4904 = vmatprep.subr.mxu0 0.0
      %4905 = vmatpush1.msra.mxu0 0.0
      %4906 = vmatprep.subr.mxu0 0.0
      %4907 = vmatpush1.msra.mxu0 0.0
      %4908 = vmatprep.subr.mxu0 0.0
      %4909 = vmatpush1.msra.mxu0 0.0
      %4910 = vmatprep.subr.mxu0 0.0
      %4911 = vmatpush1.msra.mxu0 0.0
      %4912 = vmatprep.subr.mxu0 0.0
      %4913 = vmatpush1.msra.mxu0 0.0
      %4914 = vmatprep.subr.mxu0 0.0
      %4915 = vmatpush1.msra.mxu0 0.0
      %4916 = vmatprep.subr.mxu0 0.0
      %4917 = vmatpush1.msra.mxu0 0.0
      %4918 = vmatprep.subr.mxu0 0.0
      %4919 = vmatpush1.msra.mxu0 0.0
      %4920 = vmatprep.subr.mxu0 0.0
      %4921 = vmatpush1.msra.mxu0 0.0
      %4922 = vmatprep.subr.mxu0 0.0
      %4923 = vmatpush1.msra.mxu0 0.0
      %4924 = vmatprep.subr.mxu0 0.0
      %4925 = vmatpush1.msra.mxu0 0.0
      %4926 = vmatprep.subr.mxu0 0.0
      %4927 = vmatpush1.msra.mxu0 0.0
      %4928 = vmatprep.subr.mxu0 0.0
      %4929 = vmatpush1.msra.mxu0 0.0
      %4930 = vmatprep.subr.mxu0 0.0
      %4931 = vmatpush1.msra.mxu0 0.0
      %4932 = vmatprep.subr.mxu0 0.0
      %4933 = vmatpush1.msra.mxu0 0.0
      %4934 = vmatprep.subr.mxu0 0.0
      %4935 = vmatpush1.msra.mxu0 0.0
      %4936 = vmatprep.subr.mxu0 0.0
      %4937 = vmatpush1.msra.mxu0 0.0
      %4938 = vmatprep.subr.mxu0 0.0
      %4939 = vmatpush1.msra.mxu0 0.0
      %4940 = vmatprep.subr.mxu0 0.0
      %4941 = vmatpush1.msra.mxu0 0.0
      %4942 = vmatprep.subr.mxu0 0.0
      %4943 = vmatpush1.msra.mxu0 0.0
      %4944 = vmatprep.mubr.f32.mxu0 0.0
      %4945 = vmatmul.mubr.f32.gmra.mrb[0].mxu0 %v4493
      %v4946 = vpop.f32.mrb[0].mxu0
      %v4947 = vadd.f32 0.0, %v4946
      %v4948 = vpop.f32.mrb[0].mxu0
      %4949 = vmatprep.mubr.f32.mxu0 0.0
      %4950 = vmatmul.mubr.f32.gmra.mrb[0].mxu0 %v4493
      %v4951 = vpop.f32.mrb[0].mxu0
      %v4952 = vadd.f32 0.0, %v4951
      %v4953 = vpop.f32.mrb[0].mxu0
      %4954 = vmatprep.mubr.f32.mxu0 0.0
      %4955 = vmatmul.mubr.f32.gmra.mrb[0].mxu0 %v4817
      %v4956 = vpop.f32.mrb[0].mxu0
      %v4957 = vadd.f32 0.0, %v4956
      %v4958 = vpop.f32.mrb[0].mxu0
      %4959 = vmatprep.mubr.f32.mxu0 0.0
      %4960 = vmatmul.mubr.f32.gmra.mrb[0].mxu0 %v4819
      %v4961 = vpop.f32.mrb[0].mxu0
      %v4962 = vadd.f32 0.0, %v4961
      %v4963 = vpop.f32.mrb[0].mxu0
      %4964 = vmatprep.mubr.f32.mxu0 0.0
      %4965 = vmatmul.mubr.f32.gmra.mrb[0].mxu0 %v4821
      %v4966 = vpop.f32.mrb[0].mxu0
      %v4967 = vadd.f32 0.0, %v4966
      %v4968 = vpop.f32.mrb[0].mxu0
      %4969 = vmatprep.mubr.f32.mxu0 0.0
      %4970 = vmatmul.mubr.f32.gmra.mrb[0].mxu0 %v4823
      %v4971 = vpop.f32.mrb[0].mxu0
      %v4972 = vadd.f32 0.0, %v4971
      %v4973 = vpop.f32.mrb[0].mxu0
      %4974 = vmatprep.mubr.f32.mxu0 0.0
      %4975 = vmatmul.mubr.f32.gmra.mrb[0].mxu0 %v4825
      %v4976 = vpop.f32.mrb[0].mxu0
      %v4977 = vadd.f32 0.0, %v4976
      %v4978 = vpop.f32.mrb[0].mxu0
      %4979 = vmatprep.mubr.f32.mxu0 0.0
      %4980 = vmatmul.mubr.f32.gmra.mrb[0].mxu0 %v4827
      %v4981 = vpop.f32.mrb[0].mxu0
      %v4982 = vadd.f32 0.0, %v4981
      %v4983 = vpop.f32.mrb[0].mxu0
      %4984 = vmatprep.mubr.f32.mxu0 0.0
      %4985 = vmatmul.mubr.f32.gmra.mrb[0].mxu0 %v4829
      %v4986 = vpop.f32.mrb[0].mxu0
      %v4987 = vadd.f32 0.0, %v4986
      %v4988 = vpop.f32.mrb[0].mxu0
      %4989 = vmatprep.mubr.f32.mxu0 0.0
      %4990 = vmatmul.mubr.f32.gmra.mrb[0].mxu0 %v4831
      %v4991 = vpop.f32.mrb[0].mxu0
      %v4992 = vadd.f32 0.0, %v4991
      %v4993 = vpop.f32.mrb[0].mxu0
      %4994 = vmatprep.mubr.f32.mxu0 0.0
      %4995 = vmatmul.mubr.f32.gmra.mrb[0].mxu0 %v4833
      %v4996 = vpop.f32.mrb[0].mxu0
      %v4997 = vadd.f32 0.0, %v4996
      %v4998 = vpop.f32.mrb[0].mxu0
      %4999 = vmatprep.mubr.f32.mxu0 0.0
      %5000 = vmatmul.mubr.f32.gmra.mrb[0].mxu0 %v4835
      %v5001 = vpop.f32.mrb[0].mxu0
      %v5002 = vadd.f32 0.0, %v5001
      %v5003 = vpop.f32.mrb[0].mxu0
      %5004 = vmatprep.mubr.f32.mxu0 0.0
      %5005 = vmatmul.mubr.f32.gmra.mrb[0].mxu0 %v4837
      %v5006 = vpop.f32.mrb[0].mxu0
      %v5007 = vadd.f32 0.0, %v5006
      %v5008 = vpop.f32.mrb[0].mxu0
      %5009 = vmatprep.mubr.f32.mxu0 0.0
      %5010 = vmatmul.mubr.f32.gmra.mrb[0].mxu0 %v4839
      %v5011 = vpop.f32.mrb[0].mxu0
      %v5012 = vadd.f32 0.0, %v5011
      %v5013 = vpop.f32.mrb[0].mxu0
      %5014 = vmatprep.mubr.f32.mxu0 0.0
      %5015 = vmatmul.mubr.f32.gmra.mrb[0].mxu0 %v4841
      %v5016 = vpop.f32.mrb[0].mxu0
      %v5017 = vadd.f32 0.0, %v5016
      %v5018 = vpop.f32.mrb[0].mxu0
      %5019 = vmatprep.mubr.f32.mxu0 0.0
      %5020 = vmatmul.mubr.f32.gmra.mrb[0].mxu0 %v4843
      %v5021 = vpop.f32.mrb[0].mxu0
      %v5022 = vadd.f32 0.0, %v5021
      %v5023 = vpop.f32.mrb[0].mxu0
      %5024 = vmatprep.mubr.f32.mxu0 0.0
      %5025 = vmatmul.mubr.f32.gmra.mrb[0].mxu0 %v4845
      %v5026 = vpop.f32.mrb[0].mxu0
      %v5027 = vadd.f32 0.0, %v5026
      %v5028 = vpop.f32.mrb[0].mxu0
      %5029 = vmatprep.mubr.f32.mxu0 0.0
      %5030 = vmatmul.mubr.f32.gmra.mrb[0].mxu0 %v4847
      %v5031 = vpop.f32.mrb[0].mxu0
      %v5032 = vadd.f32 0.0, %v5031
      %v5033 = vpop.f32.mrb[0].mxu0
      %5034 = vmatprep.mubr.f32.mxu0 0.0
      %5035 = vmatmul.mubr.f32.gmra.mrb[0].mxu0 %v4849
      %v5036 = vpop.f32.mrb[0].mxu0
      %v5037 = vadd.f32 0.0, %v5036
      %v5038 = vpop.f32.mrb[0].mxu0
      %5039 = vmatprep.mubr.f32.mxu0 0.0
      %5040 = vmatmul.mubr.f32.gmra.mrb[0].mxu0 %v4851
      %v5041 = vpop.f32.mrb[0].mxu0
      %v5042 = vadd.f32 0.0, %v5041
      %v5043 = vpop.f32.mrb[0].mxu0
      %5044 = vmatprep.mubr.f32.mxu0 0.0
      %5045 = vmatmul.mubr.f32.gmra.mrb[0].mxu0 %v4853
      %v5046 = vpop.f32.mrb[0].mxu0
      %v5047 = vadd.f32 0.0, %v5046
      %v5048 = vpop.f32.mrb[0].mxu0
      %5049 = vmatprep.mubr.f32.mxu0 0.0
      %5050 = vmatmul.mubr.f32.gmra.mrb[0].mxu0 %v4855
      %v5051 = vpop.f32.mrb[0].mxu0
      %v5052 = vadd.f32 0.0, %v5051
      %v5053 = vpop.f32.mrb[0].mxu0
      %5054 = vmatprep.mubr.f32.mxu0 0.0
      %5055 = vmatmul.mubr.f32.gmra.mrb[0].mxu0 %v4857
      %v5056 = vpop.f32.mrb[0].mxu0
      %v5057 = vadd.f32 0.0, %v5056
      %v5058 = vpop.f32.mrb[0].mxu0
      %5059 = vmatprep.mubr.f32.mxu0 0.0
      %5060 = vmatmul.mubr.f32.gmra.mrb[0].mxu0 %v4859
      %v5061 = vpop.f32.mrb[0].mxu0
      %v5062 = vadd.f32 0.0, %v5061
      %v5063 = vpop.f32.mrb[0].mxu0
      %5064 = vmatprep.mubr.f32.mxu0 0.0
      %5065 = vmatmul.mubr.f32.gmra.mrb[0].mxu0 %v4861
      %v5066 = vpop.f32.mrb[0].mxu0
      %v5067 = vadd.f32 0.0, %v5066
      %v5068 = vpop.f32.mrb[0].mxu0
      %5069 = vmatprep.mubr.f32.mxu0 0.0
      %5070 = vmatmul.mubr.f32.gmra.mrb[0].mxu0 %v4863
      %v5071 = vpop.f32.mrb[0].mxu0
      %v5072 = vadd.f32 0.0, %v5071
      %v5073 = vpop.f32.mrb[0].mxu0
      %5074 = vmatprep.mubr.f32.mxu0 0.0
      %5075 = vmatmul.mubr.f32.gmra.mrb[0].mxu0 %v4865
      %v5076 = vpop.f32.mrb[0].mxu0
      %v5077 = vadd.f32 0.0, %v5076
      %v5078 = vpop.f32.mrb[0].mxu0
      %5079 = vmatprep.mubr.f32.mxu0 0.0
      %5080 = vmatmul.mubr.f32.gmra.mrb[0].mxu0 %v4867
      %v5081 = vpop.f32.mrb[0].mxu0
      %v5082 = vadd.f32 0.0, %v5081
      %v5083 = vpop.f32.mrb[0].mxu0
      %5084 = vmatprep.mubr.f32.mxu0 0.0
      %5085 = vmatmul.mubr.f32.gmra.mrb[0].mxu0 %v4869
      %v5086 = vpop.f32.mrb[0].mxu0
      %v5087 = vadd.f32 0.0, %v5086
      %v5088 = vpop.f32.mrb[0].mxu0
      %5089 = vmatprep.mubr.f32.mxu0 0.0
      %5090 = vmatmul.mubr.f32.gmra.mrb[0].mxu0 %v4871
      %v5091 = vpop.f32.mrb[0].mxu0
      %v5092 = vadd.f32 0.0, %v5091
      %v5093 = vpop.f32.mrb[0].mxu0
      %5094 = vmatprep.mubr.f32.mxu0 0.0
      %5095 = vmatmul.mubr.f32.gmra.mrb[0].mxu0 %v4873
      %v5096 = vpop.f32.mrb[0].mxu0
      %v5097 = vadd.f32 0.0, %v5096
      %v5098 = vpop.f32.mrb[0].mxu0
      %5099 = vmatprep.mubr.f32.mxu0 0.0
      %5100 = vmatmul.mubr.f32.gmra.mrb[0].mxu0 %v4875
      %v5101 = vpop.f32.mrb[0].mxu0
      %v5102 = vadd.f32 0.0, %v5101
      %v5103 = vpop.f32.mrb[0].mxu0
      %5104 = vdwg.mxu0
      %v5105 = vadd.f32 %v4783, %v4947
      %v5106 = vadd.f32 %v4784, %v4952
      %v5107 = vadd.f32 %v4785, %v4957
      %v5108 = vadd.f32 %v4786, %v4962
      %v5109 = vadd.f32 %v4787, %v4967
      %v5110 = vadd.f32 %v4788, %v4972
      %v5111 = vadd.f32 %v4789, %v4977
      %v5112 = vadd.f32 %v4790, %v4982
      %v5113 = vadd.f32 %v4791, %v4987
      %v5114 = vadd.f32 %v4792, %v4992
      %v5115 = vadd.f32 %v4793, %v4997
      %v5116 = vadd.f32 %v4794, %v5002
      %v5117 = vadd.f32 %v4795, %v5007
      %v5118 = vadd.f32 %v4796, %v5012
      %v5119 = vadd.f32 %v4797, %v5017
      %v5120 = vadd.f32 %v4798, %v5022
      %v5121 = vadd.f32 %v4799, %v5027
      %v5122 = vadd.f32 %v4800, %v5032
      %v5123 = vadd.f32 %v4801, %v5037
      %v5124 = vadd.f32 %v4802, %v5042
      %v5125 = vadd.f32 %v4803, %v5047
      %v5126 = vadd.f32 %v4804, %v5052
      %v5127 = vadd.f32 %v4805, %v5057
      %v5128 = vadd.f32 %v4806, %v5062
      %v5129 = vadd.f32 %v4807, %v5067
      %v5130 = vadd.f32 %v4808, %v5072
      %v5131 = vadd.f32 %v4809, %v5077
      %v5132 = vadd.f32 %v4810, %v5082
      %v5133 = vadd.f32 %v4811, %v5087
      %v5134 = vadd.f32 %v4812, %v5092
      %v5135 = vadd.f32 %v4813, %v5097
      %v5136 = vadd.f32 %v4814, %v5102
      %v5137 = vrot.slane 0.0, 1
      %v5138 = vsel %vm468, %v5137, %v5137
      %v5139 = vrot.slane %v307, 1
      %v5140 = vrot.slane %v308, 1
      %v5141 = vsel %vm468, %v5139, %v5140
      %v5142 = vrot.slane %v309, 1
      %v5143 = vrot.slane %v310, 1
      %v5144 = vsel %vm468, %v5142, %v5143
      %v5145 = vrot.slane %v311, 1
      %v5146 = vrot.slane %v312, 1
      %v5147 = vsel %vm468, %v5145, %v5146
      %v5148 = vrot.slane %v313, 1
      %v5149 = vrot.slane %v314, 1
      %v5150 = vsel %vm468, %v5148, %v5149
      %v5151 = vrot.slane %v315, 1
      %v5152 = vrot.slane %v316, 1
      %v5153 = vsel %vm468, %v5151, %v5152
      %v5154 = vrot.slane %v317, 1
      %v5155 = vrot.slane %v318, 1
      %v5156 = vsel %vm468, %v5154, %v5155
      %v5157 = vrot.slane %v319, 1
      %v5158 = vrot.slane %v320, 1
      %v5159 = vsel %vm468, %v5157, %v5158
      %v5160 = vrot.slane %v321, 1
      %v5161 = vrot.slane %v322, 1
      %v5162 = vsel %vm468, %v5160, %v5161
      %v5163 = vrot.slane %v323, 1
      %v5164 = vrot.slane %v324, 1
      %v5165 = vsel %vm468, %v5163, %v5164
      %v5166 = vrot.slane %v325, 1
      %v5167 = vrot.slane %v326, 1
      %v5168 = vsel %vm468, %v5166, %v5167
      %v5169 = vrot.slane %v327, 1
      %v5170 = vrot.slane %v328, 1
      %v5171 = vsel %vm468, %v5169, %v5170
      %v5172 = vrot.slane %v329, 1
      %v5173 = vrot.slane %v330, 1
      %v5174 = vsel %vm468, %v5172, %v5173
      %v5175 = vrot.slane %v331, 1
      %v5176 = vrot.slane %v332, 1
      %v5177 = vsel %vm468, %v5175, %v5176
      %v5178 = vrot.slane %v333, 1
      %v5179 = vrot.slane %v334, 1
      %v5180 = vsel %vm468, %v5178, %v5179
      %v5181 = vrot.slane %v335, 1
      %v5182 = vrot.slane %v336, 1
      %v5183 = vsel %vm468, %v5181, %v5182
      %v5200 = vsel %vm468, %v5137, 0.0
      %v5201 = vsel %vm468, %v5140, 0.0
      %v5202 = vsel %vm468, %v5143, 0.0
      %v5203 = vsel %vm468, %v5146, 0.0
      %v5204 = vsel %vm468, %v5149, 0.0
      %v5205 = vsel %vm468, %v5152, 0.0
      %v5206 = vsel %vm468, %v5155, 0.0
      %v5207 = vsel %vm468, %v5158, 0.0
      %v5208 = vsel %vm468, %v5161, 0.0
      %v5209 = vsel %vm468, %v5164, 0.0
      %v5210 = vsel %vm468, %v5167, 0.0
      %v5211 = vsel %vm468, %v5170, 0.0
      %v5212 = vsel %vm468, %v5173, 0.0
      %v5213 = vsel %vm468, %v5176, 0.0
      %v5214 = vsel %vm468, %v5179, 0.0
      %v5215 = vsel %vm468, %v5182, 0.0
      %s5216 = scalar_lea.vmem %s2, 8
      %v5217 = vld [vmem:[%s5216] sm:$0xf]
      %v5218 = vsel %vm3878, %v5138, 0
      %v5221 = vsel %vm3878, %v5200, 0
      %v5223 = vsel %vm3878, %v5141, 0
      %v5226 = vsel %vm3878, %v5201, 0
      %v5228 = vsel %vm3878, %v5144, 0
      %v5231 = vsel %vm3878, %v5202, 0
      %v5233 = vsel %vm3878, %v5147, 0
      %v5236 = vsel %vm3878, %v5203, 0
      %v5238 = vsel %vm3878, %v5150, 0
      %v5241 = vsel %vm3878, %v5204, 0
      %v5243 = vsel %vm3878, %v5153, 0
      %v5246 = vsel %vm3878, %v5205, 0
      %v5248 = vsel %vm3878, %v5156, 0
      %v5251 = vsel %vm3878, %v5206, 0
      %v5253 = vsel %vm3878, %v5159, 0
      %v5256 = vsel %vm3878, %v5207, 0
      %v5258 = vsel %vm3878, %v5162, 0
      %v5261 = vsel %vm3878, %v5208, 0
      %v5263 = vsel %vm3878, %v5165, 0
      %v5266 = vsel %vm3878, %v5209, 0
      %v5268 = vsel %vm3878, %v5168, 0
      %v5271 = vsel %vm3878, %v5210, 0
      %v5273 = vsel %vm3878, %v5171, 0
      %v5276 = vsel %vm3878, %v5211, 0
      %v5278 = vsel %vm3878, %v5174, 0
      %v5281 = vsel %vm3878, %v5212, 0
      %v5283 = vsel %vm3878, %v5177, 0
      %v5286 = vsel %vm3878, %v5213, 0
      %v5288 = vsel %vm3878, %v5180, 0
      %v5291 = vsel %vm3878, %v5214, 0
      %v5293 = vsel %vm3878, %v5183, 0
      %v5296 = vsel %vm3878, %v5215, 0
      %v5299 = vsel %vm3959, %v5217, 0
      %5301 = vmatprep.subr.mxu0 0.0
      %5302 = vmatpush1.msra.mxu0 %v5299
      %5303 = vmatprep.subr.mxu0 0.0
      %5304 = vmatpush1.msra.mxu0 0.0
      %5305 = vmatprep.subr.mxu0 0.0
      %5306 = vmatpush1.msra.mxu0 0.0
      %5307 = vmatprep.subr.mxu0 0.0
      %5308 = vmatpush1.msra.mxu0 0.0
      %5309 = vmatprep.subr.mxu0 0.0
      %5310 = vmatpush1.msra.mxu0 0.0
      %5311 = vmatprep.subr.mxu0 0.0
      %5312 = vmatpush1.msra.mxu0 0.0
      %5313 = vmatprep.subr.mxu0 0.0
      %5314 = vmatpush1.msra.mxu0 0.0
      %5315 = vmatprep.subr.mxu0 0.0
      %5316 = vmatpush1.msra.mxu0 0.0
      %5317 = vmatprep.subr.mxu0 0.0
      %5318 = vmatpush1.msra.mxu0 0.0
      %5319 = vmatprep.subr.mxu0 0.0
      %5320 = vmatpush1.msra.mxu0 0.0
      %5321 = vmatprep.subr.mxu0 0.0
      %5322 = vmatpush1.msra.mxu0 0.0
      %5323 = vmatprep.subr.mxu0 0.0
      %5324 = vmatpush1.msra.mxu0 0.0
      %5325 = vmatprep.subr.mxu0 0.0
      %5326 = vmatpush1.msra.mxu0 0.0
      %5327 = vmatprep.subr.mxu0 0.0
      %5328 = vmatpush1.msra.mxu0 0.0
      %5329 = vmatprep.subr.mxu0 0.0
      %5330 = vmatpush1.msra.mxu0 0.0
      %5331 = vmatprep.subr.mxu0 0.0
      %5332 = vmatpush1.msra.mxu0 0.0
      %5333 = vmatprep.subr.mxu0 0.0
      %5334 = vmatpush1.msra.mxu0 0.0
      %5335 = vmatprep.subr.mxu0 0.0
      %5336 = vmatpush1.msra.mxu0 0.0
      %5337 = vmatprep.subr.mxu0 0.0
      %5338 = vmatpush1.msra.mxu0 0.0
      %5339 = vmatprep.subr.mxu0 0.0
      %5340 = vmatpush1.msra.mxu0 0.0
      %5341 = vmatprep.subr.mxu0 0.0
      %5342 = vmatpush1.msra.mxu0 0.0
      %5343 = vmatprep.subr.mxu0 0.0
      %5344 = vmatpush1.msra.mxu0 0.0
      %5345 = vmatprep.subr.mxu0 0.0
      %5346 = vmatpush1.msra.mxu0 0.0
      %5347 = vmatprep.subr.mxu0 0.0
      %5348 = vmatpush1.msra.mxu0 0.0
      %5349 = vmatprep.subr.mxu0 0.0
      %5350 = vmatpush1.msra.mxu0 0.0
      %5351 = vmatprep.subr.mxu0 0.0
      %5352 = vmatpush1.msra.mxu0 0.0
      %5353 = vmatprep.subr.mxu0 0.0
      %5354 = vmatpush1.msra.mxu0 0.0
      %5355 = vmatprep.subr.mxu0 0.0
      %5356 = vmatpush1.msra.mxu0 0.0
      %5357 = vmatprep.subr.mxu0 0.0
      %5358 = vmatpush1.msra.mxu0 0.0
      %5359 = vmatprep.subr.mxu0 0.0
      %5360 = vmatpush1.msra.mxu0 0.0
      %5361 = vmatprep.subr.mxu0 0.0
      %5362 = vmatpush1.msra.mxu0 0.0
      %5363 = vmatprep.subr.mxu0 0.0
      %5364 = vmatpush1.msra.mxu0 0.0
      %5365 = vmatprep.mubr.f32.mxu0 0.0
      %5366 = vmatmul.mubr.f32.gmra.mrb[0].mxu0 %v5218
      %v5367 = vpop.f32.mrb[0].mxu0
      %v5368 = vadd.f32 0.0, %v5367
      %v5369 = vpop.f32.mrb[0].mxu0
      %5370 = vmatprep.mubr.f32.mxu0 0.0
      %5371 = vmatmul.mubr.f32.gmra.mrb[0].mxu0 %v5221
      %v5372 = vpop.f32.mrb[0].mxu0
      %v5373 = vadd.f32 0.0, %v5372
      %v5374 = vpop.f32.mrb[0].mxu0
      %5375 = vmatprep.mubr.f32.mxu0 0.0
      %5376 = vmatmul.mubr.f32.gmra.mrb[0].mxu0 %v5223
      %v5377 = vpop.f32.mrb[0].mxu0
      %v5378 = vadd.f32 0.0, %v5377
      %v5379 = vpop.f32.mrb[0].mxu0
      %5380 = vmatprep.mubr.f32.mxu0 0.0
      %5381 = vmatmul.mubr.f32.gmra.mrb[0].mxu0 %v5226
      %v5382 = vpop.f32.mrb[0].mxu0
      %v5383 = vadd.f32 0.0, %v5382
      %v5384 = vpop.f32.mrb[0].mxu0
      %5385 = vmatprep.mubr.f32.mxu0 0.0
      %5386 = vmatmul.mubr.f32.gmra.mrb[0].mxu0 %v5228
      %v5387 = vpop.f32.mrb[0].mxu0
      %v5388 = vadd.f32 0.0, %v5387
      %v5389 = vpop.f32.mrb[0].mxu0
      %5390 = vmatprep.mubr.f32.mxu0 0.0
      %5391 = vmatmul.mubr.f32.gmra.mrb[0].mxu0 %v5231
      %v5392 = vpop.f32.mrb[0].mxu0
      %v5393 = vadd.f32 0.0, %v5392
      %v5394 = vpop.f32.mrb[0].mxu0
      %5395 = vmatprep.mubr.f32.mxu0 0.0
      %5396 = vmatmul.mubr.f32.gmra.mrb[0].mxu0 %v5233
      %v5397 = vpop.f32.mrb[0].mxu0
      %v5398 = vadd.f32 0.0, %v5397
      %v5399 = vpop.f32.mrb[0].mxu0
      %5400 = vmatprep.mubr.f32.mxu0 0.0
      %5401 = vmatmul.mubr.f32.gmra.mrb[0].mxu0 %v5236
      %v5402 = vpop.f32.mrb[0].mxu0
      %v5403 = vadd.f32 0.0, %v5402
      %v5404 = vpop.f32.mrb[0].mxu0
      %5405 = vmatprep.mubr.f32.mxu0 0.0
      %5406 = vmatmul.mubr.f32.gmra.mrb[0].mxu0 %v5238
      %v5407 = vpop.f32.mrb[0].mxu0
      %v5408 = vadd.f32 0.0, %v5407
      %v5409 = vpop.f32.mrb[0].mxu0
      %5410 = vmatprep.mubr.f32.mxu0 0.0
      %5411 = vmatmul.mubr.f32.gmra.mrb[0].mxu0 %v5241
      %v5412 = vpop.f32.mrb[0].mxu0
      %v5413 = vadd.f32 0.0, %v5412
      %v5414 = vpop.f32.mrb[0].mxu0
      %5415 = vmatprep.mubr.f32.mxu0 0.0
      %5416 = vmatmul.mubr.f32.gmra.mrb[0].mxu0 %v5243
      %v5417 = vpop.f32.mrb[0].mxu0
      %v5418 = vadd.f32 0.0, %v5417
      %v5419 = vpop.f32.mrb[0].mxu0
      %5420 = vmatprep.mubr.f32.mxu0 0.0
      %5421 = vmatmul.mubr.f32.gmra.mrb[0].mxu0 %v5246
      %v5422 = vpop.f32.mrb[0].mxu0
      %v5423 = vadd.f32 0.0, %v5422
      %v5424 = vpop.f32.mrb[0].mxu0
      %5425 = vmatprep.mubr.f32.mxu0 0.0
      %5426 = vmatmul.mubr.f32.gmra.mrb[0].mxu0 %v5248
      %v5427 = vpop.f32.mrb[0].mxu0
      %v5428 = vadd.f32 0.0, %v5427
      %v5429 = vpop.f32.mrb[0].mxu0
      %5430 = vmatprep.mubr.f32.mxu0 0.0
      %5431 = vmatmul.mubr.f32.gmra.mrb[0].mxu0 %v5251
      %v5432 = vpop.f32.mrb[0].mxu0
      %v5433 = vadd.f32 0.0, %v5432
      %v5434 = vpop.f32.mrb[0].mxu0
      %5435 = vmatprep.mubr.f32.mxu0 0.0
      %5436 = vmatmul.mubr.f32.gmra.mrb[0].mxu0 %v5253
      %v5437 = vpop.f32.mrb[0].mxu0
      %v5438 = vadd.f32 0.0, %v5437
      %v5439 = vpop.f32.mrb[0].mxu0
      %5440 = vmatprep.mubr.f32.mxu0 0.0
      %5441 = vmatmul.mubr.f32.gmra.mrb[0].mxu0 %v5256
      %v5442 = vpop.f32.mrb[0].mxu0
      %v5443 = vadd.f32 0.0, %v5442
      %v5444 = vpop.f32.mrb[0].mxu0
      %5445 = vmatprep.mubr.f32.mxu0 0.0
      %5446 = vmatmul.mubr.f32.gmra.mrb[0].mxu0 %v5258
      %v5447 = vpop.f32.mrb[0].mxu0
      %v5448 = vadd.f32 0.0, %v5447
      %v5449 = vpop.f32.mrb[0].mxu0
      %5450 = vmatprep.mubr.f32.mxu0 0.0
      %5451 = vmatmul.mubr.f32.gmra.mrb[0].mxu0 %v5261
      %v5452 = vpop.f32.mrb[0].mxu0
      %v5453 = vadd.f32 0.0, %v5452
      %v5454 = vpop.f32.mrb[0].mxu0
      %5455 = vmatprep.mubr.f32.mxu0 0.0
      %5456 = vmatmul.mubr.f32.gmra.mrb[0].mxu0 %v5263
      %v5457 = vpop.f32.mrb[0].mxu0
      %v5458 = vadd.f32 0.0, %v5457
      %v5459 = vpop.f32.mrb[0].mxu0
      %5460 = vmatprep.mubr.f32.mxu0 0.0
      %5461 = vmatmul.mubr.f32.gmra.mrb[0].mxu0 %v5266
      %v5462 = vpop.f32.mrb[0].mxu0
      %v5463 = vadd.f32 0.0, %v5462
      %v5464 = vpop.f32.mrb[0].mxu0
      %5465 = vmatprep.mubr.f32.mxu0 0.0
      %5466 = vmatmul.mubr.f32.gmra.mrb[0].mxu0 %v5268
      %v5467 = vpop.f32.mrb[0].mxu0
      %v5468 = vadd.f32 0.0, %v5467
      %v5469 = vpop.f32.mrb[0].mxu0
      %5470 = vmatprep.mubr.f32.mxu0 0.0
      %5471 = vmatmul.mubr.f32.gmra.mrb[0].mxu0 %v5271
      %v5472 = vpop.f32.mrb[0].mxu0
      %v5473 = vadd.f32 0.0, %v5472
      %v5474 = vpop.f32.mrb[0].mxu0
      %5475 = vmatprep.mubr.f32.mxu0 0.0
      %5476 = vmatmul.mubr.f32.gmra.mrb[0].mxu0 %v5273
      %v5477 = vpop.f32.mrb[0].mxu0
      %v5478 = vadd.f32 0.0, %v5477
      %v5479 = vpop.f32.mrb[0].mxu0
      %5480 = vmatprep.mubr.f32.mxu0 0.0
      %5481 = vmatmul.mubr.f32.gmra.mrb[0].mxu0 %v5276
      %v5482 = vpop.f32.mrb[0].mxu0
      %v5483 = vadd.f32 0.0, %v5482
      %v5484 = vpop.f32.mrb[0].mxu0
      %5485 = vmatprep.mubr.f32.mxu0 0.0
      %5486 = vmatmul.mubr.f32.gmra.mrb[0].mxu0 %v5278
      %v5487 = vpop.f32.mrb[0].mxu0
      %v5488 = vadd.f32 0.0, %v5487
      %v5489 = vpop.f32.mrb[0].mxu0
      %5490 = vmatprep.mubr.f32.mxu0 0.0
      %5491 = vmatmul.mubr.f32.gmra.mrb[0].mxu0 %v5281
      %v5492 = vpop.f32.mrb[0].mxu0
      %v5493 = vadd.f32 0.0, %v5492
      %v5494 = vpop.f32.mrb[0].mxu0
      %5495 = vmatprep.mubr.f32.mxu0 0.0
      %5496 = vmatmul.mubr.f32.gmra.mrb[0].mxu0 %v5283
      %v5497 = vpop.f32.mrb[0].mxu0
      %v5498 = vadd.f32 0.0, %v5497
      %v5499 = vpop.f32.mrb[0].mxu0
      %5500 = vmatprep.mubr.f32.mxu0 0.0
      %5501 = vmatmul.mubr.f32.gmra.mrb[0].mxu0 %v5286
      %v5502 = vpop.f32.mrb[0].mxu0
      %v5503 = vadd.f32 0.0, %v5502
      %v5504 = vpop.f32.mrb[0].mxu0
      %5505 = vmatprep.mubr.f32.mxu0 0.0
      %5506 = vmatmul.mubr.f32.gmra.mrb[0].mxu0 %v5288
      %v5507 = vpop.f32.mrb[0].mxu0
      %v5508 = vadd.f32 0.0, %v5507
      %v5509 = vpop.f32.mrb[0].mxu0
      %5510 = vmatprep.mubr.f32.mxu0 0.0
      %5511 = vmatmul.mubr.f32.gmra.mrb[0].mxu0 %v5291
      %v5512 = vpop.f32.mrb[0].mxu0
      %v5513 = vadd.f32 0.0, %v5512
      %v5514 = vpop.f32.mrb[0].mxu0
      %5515 = vmatprep.mubr.f32.mxu0 0.0
      %5516 = vmatmul.mubr.f32.gmra.mrb[0].mxu0 %v5293
      %v5517 = vpop.f32.mrb[0].mxu0
      %v5518 = vadd.f32 0.0, %v5517
      %v5519 = vpop.f32.mrb[0].mxu0
      %5520 = vmatprep.mubr.f32.mxu0 0.0
      %5521 = vmatmul.mubr.f32.gmra.mrb[0].mxu0 %v5296
      %v5522 = vpop.f32.mrb[0].mxu0
      %v5523 = vadd.f32 0.0, %v5522
      %v5524 = vpop.f32.mrb[0].mxu0
      %5525 = vdwg.mxu0
      %v5526 = vadd.f32 %v5105, %v5368
      %v5527 = vadd.f32 %v5106, %v5373
      %v5528 = vadd.f32 %v5107, %v5378
      %v5529 = vadd.f32 %v5108, %v5383
      %v5530 = vadd.f32 %v5109, %v5388
      %v5531 = vadd.f32 %v5110, %v5393
      %v5532 = vadd.f32 %v5111, %v5398
      %v5533 = vadd.f32 %v5112, %v5403
      %v5534 = vadd.f32 %v5113, %v5408
      %v5535 = vadd.f32 %v5114, %v5413
      %v5536 = vadd.f32 %v5115, %v5418
      %v5537 = vadd.f32 %v5116, %v5423
      %v5538 = vadd.f32 %v5117, %v5428
      %v5539 = vadd.f32 %v5118, %v5433
      %v5540 = vadd.f32 %v5119, %v5438
      %v5541 = vadd.f32 %v5120, %v5443
      %v5542 = vadd.f32 %v5121, %v5448
      %v5543 = vadd.f32 %v5122, %v5453
      %v5544 = vadd.f32 %v5123, %v5458
      %v5545 = vadd.f32 %v5124, %v5463
      %v5546 = vadd.f32 %v5125, %v5468
      %v5547 = vadd.f32 %v5126, %v5473
      %v5548 = vadd.f32 %v5127, %v5478
      %v5549 = vadd.f32 %v5128, %v5483
      %v5550 = vadd.f32 %v5129, %v5488
      %v5551 = vadd.f32 %v5130, %v5493
      %v5552 = vadd.f32 %v5131, %v5498
      %v5553 = vadd.f32 %v5132, %v5503
      %v5554 = vadd.f32 %v5133, %v5508
      %v5555 = vadd.f32 %v5134, %v5513
      %v5556 = vadd.f32 %v5135, %v5518
      %v5557 = vadd.f32 %v5136, %v5523
      %v5558 = vrot.slane %v3308, 1
      %v5559 = vrot.slane %v3325, 1
      %v5560 = vsel %vm468, %v5558, %v5559
      %v5561 = vrot.slane %v3342, 1
      %v5562 = vrot.slane %v3359, 1
      %v5563 = vsel %vm468, %v5561, %v5562
      %v5564 = vrot.slane %v3376, 1
      %v5565 = vrot.slane %v3393, 1
      %v5566 = vsel %vm468, %v5564, %v5565
      %v5567 = vrot.slane %v3410, 1
      %v5568 = vrot.slane %v3427, 1
      %v5569 = vsel %vm468, %v5567, %v5568
      %v5570 = vrot.slane %v3444, 1
      %v5571 = vrot.slane %v3461, 1
      %v5572 = vsel %vm468, %v5570, %v5571
      %v5573 = vrot.slane %v3478, 1
      %v5574 = vrot.slane %v3495, 1
      %v5575 = vsel %vm468, %v5573, %v5574
      %v5576 = vrot.slane %v3512, 1
      %v5577 = vrot.slane %v3529, 1
      %v5578 = vsel %vm468, %v5576, %v5577
      %v5579 = vrot.slane %v3546, 1
      %v5580 = vrot.slane %v3563, 1
      %v5581 = vsel %vm468, %v5579, %v5580
      %v5582 = vrot.slane %v3580, 1
      %v5583 = vrot.slane %v3597, 1
      %v5584 = vsel %vm468, %v5582, %v5583
      %v5585 = vrot.slane %v3614, 1
      %v5586 = vrot.slane %v3631, 1
      %v5587 = vsel %vm468, %v5585, %v5586
      %v5588 = vrot.slane %v3648, 1
      %v5589 = vrot.slane %v3665, 1
      %v5590 = vsel %vm468, %v5588, %v5589
      %v5591 = vrot.slane %v3682, 1
      %v5592 = vrot.slane %v3699, 1
      %v5593 = vsel %vm468, %v5591, %v5592
      %v5594 = vrot.slane %v3716, 1
      %v5595 = vrot.slane %v3733, 1
      %v5596 = vsel %vm468, %v5594, %v5595
      %v5597 = vrot.slane %v3750, 1
      %v5598 = vrot.slane %v3767, 1
      %v5599 = vsel %vm468, %v5597, %v5598
      %v5600 = vrot.slane %v3784, 1
      %v5601 = vrot.slane %v3801, 1
      %v5602 = vsel %vm468, %v5600, %v5601
      %v5618 = vsel %vm468, %v5559, 0.0
      %v5619 = vsel %vm468, %v5562, 0.0
      %v5620 = vsel %vm468, %v5565, 0.0
      %v5621 = vsel %vm468, %v5568, 0.0
      %v5622 = vsel %vm468, %v5571, 0.0
      %v5623 = vsel %vm468, %v5574, 0.0
      %v5624 = vsel %vm468, %v5577, 0.0
      %v5625 = vsel %vm468, %v5580, 0.0
      %v5626 = vsel %vm468, %v5583, 0.0
      %v5627 = vsel %vm468, %v5586, 0.0
      %v5628 = vsel %vm468, %v5589, 0.0
      %v5629 = vsel %vm468, %v5592, 0.0
      %v5630 = vsel %vm468, %v5595, 0.0
      %v5631 = vsel %vm468, %v5598, 0.0
      %v5632 = vsel %vm468, %v5601, 0.0
      %s5633 = scalar_lea.vmem %s3, 8
      %v5634 = vld [vmem:[%s5633] sm:$0xf]
      %v5635 = vsel %vm3878, %v5560, 0
      %v5638 = vsel %vm3878, %v5618, 0
      %v5640 = vsel %vm3878, %v5563, 0
      %v5643 = vsel %vm3878, %v5619, 0
      %v5645 = vsel %vm3878, %v5566, 0
      %v5648 = vsel %vm3878, %v5620, 0
      %v5650 = vsel %vm3878, %v5569, 0
      %v5653 = vsel %vm3878, %v5621, 0
      %v5655 = vsel %vm3878, %v5572, 0
      %v5658 = vsel %vm3878, %v5622, 0
      %v5660 = vsel %vm3878, %v5575, 0
      %v5663 = vsel %vm3878, %v5623, 0
      %v5665 = vsel %vm3878, %v5578, 0
      %v5668 = vsel %vm3878, %v5624, 0
      %v5670 = vsel %vm3878, %v5581, 0
      %v5673 = vsel %vm3878, %v5625, 0
      %v5675 = vsel %vm3878, %v5584, 0
      %v5678 = vsel %vm3878, %v5626, 0
      %v5680 = vsel %vm3878, %v5587, 0
      %v5683 = vsel %vm3878, %v5627, 0
      %v5685 = vsel %vm3878, %v5590, 0
      %v5688 = vsel %vm3878, %v5628, 0
      %v5690 = vsel %vm3878, %v5593, 0
      %v5693 = vsel %vm3878, %v5629, 0
      %v5695 = vsel %vm3878, %v5596, 0
      %v5698 = vsel %vm3878, %v5630, 0
      %v5700 = vsel %vm3878, %v5599, 0
      %v5703 = vsel %vm3878, %v5631, 0
      %v5705 = vsel %vm3878, %v5602, 0
      %v5708 = vsel %vm3878, %v5632, 0
      %v5711 = vsel %vm3959, %v5634, 0
      %5713 = vmatprep.subr.mxu0 0.0
      %5714 = vmatpush1.msra.mxu0 %v5711
      %5715 = vmatprep.subr.mxu0 0.0
      %5716 = vmatpush1.msra.mxu0 0.0
      %5717 = vmatprep.subr.mxu0 0.0
      %5718 = vmatpush1.msra.mxu0 0.0
      %5719 = vmatprep.subr.mxu0 0.0
      %5720 = vmatpush1.msra.mxu0 0.0
      %5721 = vmatprep.subr.mxu0 0.0
      %5722 = vmatpush1.msra.mxu0 0.0
      %5723 = vmatprep.subr.mxu0 0.0
      %5724 = vmatpush1.msra.mxu0 0.0
      %5725 = vmatprep.subr.mxu0 0.0
      %5726 = vmatpush1.msra.mxu0 0.0
      %5727 = vmatprep.subr.mxu0 0.0
      %5728 = vmatpush1.msra.mxu0 0.0
      %5729 = vmatprep.subr.mxu0 0.0
      %5730 = vmatpush1.msra.mxu0 0.0
      %5731 = vmatprep.subr.mxu0 0.0
      %5732 = vmatpush1.msra.mxu0 0.0
      %5733 = vmatprep.subr.mxu0 0.0
      %5734 = vmatpush1.msra.mxu0 0.0
      %5735 = vmatprep.subr.mxu0 0.0
      %5736 = vmatpush1.msra.mxu0 0.0
      %5737 = vmatprep.subr.mxu0 0.0
      %5738 = vmatpush1.msra.mxu0 0.0
      %5739 = vmatprep.subr.mxu0 0.0
      %5740 = vmatpush1.msra.mxu0 0.0
      %5741 = vmatprep.subr.mxu0 0.0
      %5742 = vmatpush1.msra.mxu0 0.0
      %5743 = vmatprep.subr.mxu0 0.0
      %5744 = vmatpush1.msra.mxu0 0.0
      %5745 = vmatprep.subr.mxu0 0.0
      %5746 = vmatpush1.msra.mxu0 0.0
      %5747 = vmatprep.subr.mxu0 0.0
      %5748 = vmatpush1.msra.mxu0 0.0
      %5749 = vmatprep.subr.mxu0 0.0
      %5750 = vmatpush1.msra.mxu0 0.0
      %5751 = vmatprep.subr.mxu0 0.0
      %5752 = vmatpush1.msra.mxu0 0.0
      %5753 = vmatprep.subr.mxu0 0.0
      %5754 = vmatpush1.msra.mxu0 0.0
      %5755 = vmatprep.subr.mxu0 0.0
      %5756 = vmatpush1.msra.mxu0 0.0
      %5757 = vmatprep.subr.mxu0 0.0
      %5758 = vmatpush1.msra.mxu0 0.0
      %5759 = vmatprep.subr.mxu0 0.0
      %5760 = vmatpush1.msra.mxu0 0.0
      %5761 = vmatprep.subr.mxu0 0.0
      %5762 = vmatpush1.msra.mxu0 0.0
      %5763 = vmatprep.subr.mxu0 0.0
      %5764 = vmatpush1.msra.mxu0 0.0
      %5765 = vmatprep.subr.mxu0 0.0
      %5766 = vmatpush1.msra.mxu0 0.0
      %5767 = vmatprep.subr.mxu0 0.0
      %5768 = vmatpush1.msra.mxu0 0.0
      %5769 = vmatprep.subr.mxu0 0.0
      %5770 = vmatpush1.msra.mxu0 0.0
      %5771 = vmatprep.subr.mxu0 0.0
      %5772 = vmatpush1.msra.mxu0 0.0
      %5773 = vmatprep.subr.mxu0 0.0
      %5774 = vmatpush1.msra.mxu0 0.0
      %5775 = vmatprep.subr.mxu0 0.0
      %5776 = vmatpush1.msra.mxu0 0.0
      %5777 = vmatprep.mubr.f32.mxu0 0.0
      %5778 = vmatmul.mubr.f32.gmra.mrb[0].mxu0 %v5218
      %v5779 = vpop.f32.mrb[0].mxu0
      %v5780 = vadd.f32 0.0, %v5779
      %v5781 = vpop.f32.mrb[0].mxu0
      %5782 = vmatprep.mubr.f32.mxu0 0.0
      %5783 = vmatmul.mubr.f32.gmra.mrb[0].mxu0 %v5221
      %v5784 = vpop.f32.mrb[0].mxu0
      %v5785 = vadd.f32 0.0, %v5784
      %v5786 = vpop.f32.mrb[0].mxu0
      %5787 = vmatprep.mubr.f32.mxu0 0.0
      %5788 = vmatmul.mubr.f32.gmra.mrb[0].mxu0 %v5635
      %v5789 = vpop.f32.mrb[0].mxu0
      %v5790 = vadd.f32 0.0, %v5789
      %v5791 = vpop.f32.mrb[0].mxu0
      %5792 = vmatprep.mubr.f32.mxu0 0.0
      %5793 = vmatmul.mubr.f32.gmra.mrb[0].mxu0 %v5638
      %v5794 = vpop.f32.mrb[0].mxu0
      %v5795 = vadd.f32 0.0, %v5794
      %v5796 = vpop.f32.mrb[0].mxu0
      %5797 = vmatprep.mubr.f32.mxu0 0.0
      %5798 = vmatmul.mubr.f32.gmra.mrb[0].mxu0 %v5640
      %v5799 = vpop.f32.mrb[0].mxu0
      %v5800 = vadd.f32 0.0, %v5799
      %v5801 = vpop.f32.mrb[0].mxu0
      %5802 = vmatprep.mubr.f32.mxu0 0.0
      %5803 = vmatmul.mubr.f32.gmra.mrb[0].mxu0 %v5643
      %v5804 = vpop.f32.mrb[0].mxu0
      %v5805 = vadd.f32 0.0, %v5804
      %v5806 = vpop.f32.mrb[0].mxu0
      %5807 = vmatprep.mubr.f32.mxu0 0.0
      %5808 = vmatmul.mubr.f32.gmra.mrb[0].mxu0 %v5645
      %v5809 = vpop.f32.mrb[0].mxu0
      %v5810 = vadd.f32 0.0, %v5809
      %v5811 = vpop.f32.mrb[0].mxu0
      %5812 = vmatprep.mubr.f32.mxu0 0.0
      %5813 = vmatmul.mubr.f32.gmra.mrb[0].mxu0 %v5648
      %v5814 = vpop.f32.mrb[0].mxu0
      %v5815 = vadd.f32 0.0, %v5814
      %v5816 = vpop.f32.mrb[0].mxu0
      %5817 = vmatprep.mubr.f32.mxu0 0.0
      %5818 = vmatmul.mubr.f32.gmra.mrb[0].mxu0 %v5650
      %v5819 = vpop.f32.mrb[0].mxu0
      %v5820 = vadd.f32 0.0, %v5819
      %v5821 = vpop.f32.mrb[0].mxu0
      %5822 = vmatprep.mubr.f32.mxu0 0.0
      %5823 = vmatmul.mubr.f32.gmra.mrb[0].mxu0 %v5653
      %v5824 = vpop.f32.mrb[0].mxu0
      %v5825 = vadd.f32 0.0, %v5824
      %v5826 = vpop.f32.mrb[0].mxu0
      %5827 = vmatprep.mubr.f32.mxu0 0.0
      %5828 = vmatmul.mubr.f32.gmra.mrb[0].mxu0 %v5655
      %v5829 = vpop.f32.mrb[0].mxu0
      %v5830 = vadd.f32 0.0, %v5829
      %v5831 = vpop.f32.mrb[0].mxu0
      %5832 = vmatprep.mubr.f32.mxu0 0.0
      %5833 = vmatmul.mubr.f32.gmra.mrb[0].mxu0 %v5658
      %v5834 = vpop.f32.mrb[0].mxu0
      %v5835 = vadd.f32 0.0, %v5834
      %v5836 = vpop.f32.mrb[0].mxu0
      %5837 = vmatprep.mubr.f32.mxu0 0.0
      %5838 = vmatmul.mubr.f32.gmra.mrb[0].mxu0 %v5660
      %v5839 = vpop.f32.mrb[0].mxu0
      %v5840 = vadd.f32 0.0, %v5839
      %v5841 = vpop.f32.mrb[0].mxu0
      %5842 = vmatprep.mubr.f32.mxu0 0.0
      %5843 = vmatmul.mubr.f32.gmra.mrb[0].mxu0 %v5663
      %v5844 = vpop.f32.mrb[0].mxu0
      %v5845 = vadd.f32 0.0, %v5844
      %v5846 = vpop.f32.mrb[0].mxu0
      %5847 = vmatprep.mubr.f32.mxu0 0.0
      %5848 = vmatmul.mubr.f32.gmra.mrb[0].mxu0 %v5665
      %v5849 = vpop.f32.mrb[0].mxu0
      %v5850 = vadd.f32 0.0, %v5849
      %v5851 = vpop.f32.mrb[0].mxu0
      %5852 = vmatprep.mubr.f32.mxu0 0.0
      %5853 = vmatmul.mubr.f32.gmra.mrb[0].mxu0 %v5668
      %v5854 = vpop.f32.mrb[0].mxu0
      %v5855 = vadd.f32 0.0, %v5854
      %v5856 = vpop.f32.mrb[0].mxu0
      %5857 = vmatprep.mubr.f32.mxu0 0.0
      %5858 = vmatmul.mubr.f32.gmra.mrb[0].mxu0 %v5670
      %v5859 = vpop.f32.mrb[0].mxu0
      %v5860 = vadd.f32 0.0, %v5859
      %v5861 = vpop.f32.mrb[0].mxu0
      %5862 = vmatprep.mubr.f32.mxu0 0.0
      %5863 = vmatmul.mubr.f32.gmra.mrb[0].mxu0 %v5673
      %v5864 = vpop.f32.mrb[0].mxu0
      %v5865 = vadd.f32 0.0, %v5864
      %v5866 = vpop.f32.mrb[0].mxu0
      %5867 = vmatprep.mubr.f32.mxu0 0.0
      %5868 = vmatmul.mubr.f32.gmra.mrb[0].mxu0 %v5675
      %v5869 = vpop.f32.mrb[0].mxu0
      %v5870 = vadd.f32 0.0, %v5869
      %v5871 = vpop.f32.mrb[0].mxu0
      %5872 = vmatprep.mubr.f32.mxu0 0.0
      %5873 = vmatmul.mubr.f32.gmra.mrb[0].mxu0 %v5678
      %v5874 = vpop.f32.mrb[0].mxu0
      %v5875 = vadd.f32 0.0, %v5874
      %v5876 = vpop.f32.mrb[0].mxu0
      %5877 = vmatprep.mubr.f32.mxu0 0.0
      %5878 = vmatmul.mubr.f32.gmra.mrb[0].mxu0 %v5680
      %v5879 = vpop.f32.mrb[0].mxu0
      %v5880 = vadd.f32 0.0, %v5879
      %v5881 = vpop.f32.mrb[0].mxu0
      %5882 = vmatprep.mubr.f32.mxu0 0.0
      %5883 = vmatmul.mubr.f32.gmra.mrb[0].mxu0 %v5683
      %v5884 = vpop.f32.mrb[0].mxu0
      %v5885 = vadd.f32 0.0, %v5884
      %v5886 = vpop.f32.mrb[0].mxu0
      %5887 = vmatprep.mubr.f32.mxu0 0.0
      %5888 = vmatmul.mubr.f32.gmra.mrb[0].mxu0 %v5685
      %v5889 = vpop.f32.mrb[0].mxu0
      %v5890 = vadd.f32 0.0, %v5889
      %v5891 = vpop.f32.mrb[0].mxu0
      %5892 = vmatprep.mubr.f32.mxu0 0.0
      %5893 = vmatmul.mubr.f32.gmra.mrb[0].mxu0 %v5688
      %v5894 = vpop.f32.mrb[0].mxu0
      %v5895 = vadd.f32 0.0, %v5894
      %v5896 = vpop.f32.mrb[0].mxu0
      %5897 = vmatprep.mubr.f32.mxu0 0.0
      %5898 = vmatmul.mubr.f32.gmra.mrb[0].mxu0 %v5690
      %v5899 = vpop.f32.mrb[0].mxu0
      %v5900 = vadd.f32 0.0, %v5899
      %v5901 = vpop.f32.mrb[0].mxu0
      %5902 = vmatprep.mubr.f32.mxu0 0.0
      %5903 = vmatmul.mubr.f32.gmra.mrb[0].mxu0 %v5693
      %v5904 = vpop.f32.mrb[0].mxu0
      %v5905 = vadd.f32 0.0, %v5904
      %v5906 = vpop.f32.mrb[0].mxu0
      %5907 = vmatprep.mubr.f32.mxu0 0.0
      %5908 = vmatmul.mubr.f32.gmra.mrb[0].mxu0 %v5695
      %v5909 = vpop.f32.mrb[0].mxu0
      %v5910 = vadd.f32 0.0, %v5909
      %v5911 = vpop.f32.mrb[0].mxu0
      %5912 = vmatprep.mubr.f32.mxu0 0.0
      %5913 = vmatmul.mubr.f32.gmra.mrb[0].mxu0 %v5698
      %v5914 = vpop.f32.mrb[0].mxu0
      %v5915 = vadd.f32 0.0, %v5914
      %v5916 = vpop.f32.mrb[0].mxu0
      %5917 = vmatprep.mubr.f32.mxu0 0.0
      %5918 = vmatmul.mubr.f32.gmra.mrb[0].mxu0 %v5700
      %v5919 = vpop.f32.mrb[0].mxu0
      %v5920 = vadd.f32 0.0, %v5919
      %v5921 = vpop.f32.mrb[0].mxu0
      %5922 = vmatprep.mubr.f32.mxu0 0.0
      %5923 = vmatmul.mubr.f32.gmra.mrb[0].mxu0 %v5703
      %v5924 = vpop.f32.mrb[0].mxu0
      %v5925 = vadd.f32 0.0, %v5924
      %v5926 = vpop.f32.mrb[0].mxu0
      %5927 = vmatprep.mubr.f32.mxu0 0.0
      %5928 = vmatmul.mubr.f32.gmra.mrb[0].mxu0 %v5705
      %v5929 = vpop.f32.mrb[0].mxu0
      %v5930 = vadd.f32 0.0, %v5929
      %v5931 = vpop.f32.mrb[0].mxu0
      %5932 = vmatprep.mubr.f32.mxu0 0.0
      %5933 = vmatmul.mubr.f32.gmra.mrb[0].mxu0 %v5708
      %v5934 = vpop.f32.mrb[0].mxu0
      %v5935 = vadd.f32 0.0, %v5934
      %v5936 = vpop.f32.mrb[0].mxu0
      %5937 = vdwg.mxu0
      %v5938 = vadd.f32 %v5526, %v5780
      %v5939 = vadd.f32 %v5527, %v5785
      %v5940 = vadd.f32 %v5528, %v5790
      %v5941 = vadd.f32 %v5529, %v5795
      %v5942 = vadd.f32 %v5530, %v5800
      %v5943 = vadd.f32 %v5531, %v5805
      %v5944 = vadd.f32 %v5532, %v5810
      %v5945 = vadd.f32 %v5533, %v5815
      %v5946 = vadd.f32 %v5534, %v5820
      %v5947 = vadd.f32 %v5535, %v5825
      %v5948 = vadd.f32 %v5536, %v5830
      %v5949 = vadd.f32 %v5537, %v5835
      %v5950 = vadd.f32 %v5538, %v5840
      %v5951 = vadd.f32 %v5539, %v5845
      %v5952 = vadd.f32 %v5540, %v5850
      %v5953 = vadd.f32 %v5541, %v5855
      %v5954 = vadd.f32 %v5542, %v5860
      %v5955 = vadd.f32 %v5543, %v5865
      %v5956 = vadd.f32 %v5544, %v5870
      %v5957 = vadd.f32 %v5545, %v5875
      %v5958 = vadd.f32 %v5546, %v5880
      %v5959 = vadd.f32 %v5547, %v5885
      %v5960 = vadd.f32 %v5548, %v5890
      %v5961 = vadd.f32 %v5549, %v5895
      %v5962 = vadd.f32 %v5550, %v5900
      %v5963 = vadd.f32 %v5551, %v5905
      %v5964 = vadd.f32 %v5552, %v5910
      %v5965 = vadd.f32 %v5553, %v5915
      %v5966 = vadd.f32 %v5554, %v5920
      %v5967 = vadd.f32 %v5555, %v5925
      %v5968 = vadd.f32 %v5556, %v5930
      %v5969 = vadd.f32 %v5557, %v5935
      %v5972 = vrot.slane %v337, 7
      %v5973 = vrot.slane %v338, 7
      %v5974 = vsel %vm419, %v5972, %v5973
      %v5976 = vsel %vm419, 0.0, %v5972
      %s5977 = scalar_lea.vmem %s2, 12
      %v5978 = vld [vmem:[%s5977] sm:$0xf]
      %v5980 = vsel %vm3878, %v5976, 0
      %v5982 = vsel %vm3878, %v5974, 0
      %v5985 = vsel %vm3959, %v5978, 0
      %5987 = vmatprep.subr.mxu0 0.0
      %5988 = vmatpush1.msra.mxu0 %v5985
      %5989 = vmatprep.subr.mxu0 0.0
      %5990 = vmatpush1.msra.mxu0 0.0
      %5991 = vmatprep.subr.mxu0 0.0
      %5992 = vmatpush1.msra.mxu0 0.0
      %5993 = vmatprep.subr.mxu0 0.0
      %5994 = vmatpush1.msra.mxu0 0.0
      %5995 = vmatprep.subr.mxu0 0.0
      %5996 = vmatpush1.msra.mxu0 0.0
      %5997 = vmatprep.subr.mxu0 0.0
      %5998 = vmatpush1.msra.mxu0 0.0
      %5999 = vmatprep.subr.mxu0 0.0
      %6000 = vmatpush1.msra.mxu0 0.0
      %6001 = vmatprep.subr.mxu0 0.0
      %6002 = vmatpush1.msra.mxu0 0.0
      %6003 = vmatprep.subr.mxu0 0.0
      %6004 = vmatpush1.msra.mxu0 0.0
      %6005 = vmatprep.subr.mxu0 0.0
      %6006 = vmatpush1.msra.mxu0 0.0
      %6007 = vmatprep.subr.mxu0 0.0
      %6008 = vmatpush1.msra.mxu0 0.0
      %6009 = vmatprep.subr.mxu0 0.0
      %6010 = vmatpush1.msra.mxu0 0.0
      %6011 = vmatprep.subr.mxu0 0.0
      %6012 = vmatpush1.msra.mxu0 0.0
      %6013 = vmatprep.subr.mxu0 0.0
      %6014 = vmatpush1.msra.mxu0 0.0
      %6015 = vmatprep.subr.mxu0 0.0
      %6016 = vmatpush1.msra.mxu0 0.0
      %6017 = vmatprep.subr.mxu0 0.0
      %6018 = vmatpush1.msra.mxu0 0.0
      %6019 = vmatprep.subr.mxu0 0.0
      %6020 = vmatpush1.msra.mxu0 0.0
      %6021 = vmatprep.subr.mxu0 0.0
      %6022 = vmatpush1.msra.mxu0 0.0
      %6023 = vmatprep.subr.mxu0 0.0
      %6024 = vmatpush1.msra.mxu0 0.0
      %6025 = vmatprep.subr.mxu0 0.0
      %6026 = vmatpush1.msra.mxu0 0.0
      %6027 = vmatprep.subr.mxu0 0.0
      %6028 = vmatpush1.msra.mxu0 0.0
      %6029 = vmatprep.subr.mxu0 0.0
      %6030 = vmatpush1.msra.mxu0 0.0
      %6031 = vmatprep.subr.mxu0 0.0
      %6032 = vmatpush1.msra.mxu0 0.0
      %6033 = vmatprep.subr.mxu0 0.0
      %6034 = vmatpush1.msra.mxu0 0.0
      %6035 = vmatprep.subr.mxu0 0.0
      %6036 = vmatpush1.msra.mxu0 0.0
      %6037 = vmatprep.subr.mxu0 0.0
      %6038 = vmatpush1.msra.mxu0 0.0
      %6039 = vmatprep.subr.mxu0 0.0
      %6040 = vmatpush1.msra.mxu0 0.0
      %6041 = vmatprep.subr.mxu0 0.0
      %6042 = vmatpush1.msra.mxu0 0.0
      %6043 = vmatprep.subr.mxu0 0.0
      %6044 = vmatpush1.msra.mxu0 0.0
      %6045 = vmatprep.subr.mxu0 0.0
      %6046 = vmatpush1.msra.mxu0 0.0
      %6047 = vmatprep.subr.mxu0 0.0
      %6048 = vmatpush1.msra.mxu0 0.0
      %6049 = vmatprep.subr.mxu0 0.0
      %6050 = vmatpush1.msra.mxu0 0.0
      %6051 = vmatprep.mubr.f32.mxu0 0.0
      %6052 = vmatmul.mubr.f32.gmra.mrb[0].mxu0 %v4189
      %v6053 = vpop.f32.mrb[0].mxu0
      %v6054 = vadd.f32 0.0, %v6053
      %v6055 = vpop.f32.mrb[0].mxu0
      %6056 = vmatprep.mubr.f32.mxu0 0.0
      %6057 = vmatmul.mubr.f32.gmra.mrb[0].mxu0 %v4191
      %v6058 = vpop.f32.mrb[0].mxu0
      %v6059 = vadd.f32 0.0, %v6058
      %v6060 = vpop.f32.mrb[0].mxu0
      %6061 = vmatprep.mubr.f32.mxu0 0.0
      %6062 = vmatmul.mubr.f32.gmra.mrb[0].mxu0 %v4194
      %v6063 = vpop.f32.mrb[0].mxu0
      %v6064 = vadd.f32 0.0, %v6063
      %v6065 = vpop.f32.mrb[0].mxu0
      %6066 = vmatprep.mubr.f32.mxu0 0.0
      %6067 = vmatmul.mubr.f32.gmra.mrb[0].mxu0 %v4196
      %v6068 = vpop.f32.mrb[0].mxu0
      %v6069 = vadd.f32 0.0, %v6068
      %v6070 = vpop.f32.mrb[0].mxu0
      %6071 = vmatprep.mubr.f32.mxu0 0.0
      %6072 = vmatmul.mubr.f32.gmra.mrb[0].mxu0 %v4199
      %v6073 = vpop.f32.mrb[0].mxu0
      %v6074 = vadd.f32 0.0, %v6073
      %v6075 = vpop.f32.mrb[0].mxu0
      %6076 = vmatprep.mubr.f32.mxu0 0.0
      %6077 = vmatmul.mubr.f32.gmra.mrb[0].mxu0 %v4201
      %v6078 = vpop.f32.mrb[0].mxu0
      %v6079 = vadd.f32 0.0, %v6078
      %v6080 = vpop.f32.mrb[0].mxu0
      %6081 = vmatprep.mubr.f32.mxu0 0.0
      %6082 = vmatmul.mubr.f32.gmra.mrb[0].mxu0 %v4204
      %v6083 = vpop.f32.mrb[0].mxu0
      %v6084 = vadd.f32 0.0, %v6083
      %v6085 = vpop.f32.mrb[0].mxu0
      %6086 = vmatprep.mubr.f32.mxu0 0.0
      %6087 = vmatmul.mubr.f32.gmra.mrb[0].mxu0 %v4206
      %v6088 = vpop.f32.mrb[0].mxu0
      %v6089 = vadd.f32 0.0, %v6088
      %v6090 = vpop.f32.mrb[0].mxu0
      %6091 = vmatprep.mubr.f32.mxu0 0.0
      %6092 = vmatmul.mubr.f32.gmra.mrb[0].mxu0 %v4209
      %v6093 = vpop.f32.mrb[0].mxu0
      %v6094 = vadd.f32 0.0, %v6093
      %v6095 = vpop.f32.mrb[0].mxu0
      %6096 = vmatprep.mubr.f32.mxu0 0.0
      %6097 = vmatmul.mubr.f32.gmra.mrb[0].mxu0 %v4211
      %v6098 = vpop.f32.mrb[0].mxu0
      %v6099 = vadd.f32 0.0, %v6098
      %v6100 = vpop.f32.mrb[0].mxu0
      %6101 = vmatprep.mubr.f32.mxu0 0.0
      %6102 = vmatmul.mubr.f32.gmra.mrb[0].mxu0 %v4214
      %v6103 = vpop.f32.mrb[0].mxu0
      %v6104 = vadd.f32 0.0, %v6103
      %v6105 = vpop.f32.mrb[0].mxu0
      %6106 = vmatprep.mubr.f32.mxu0 0.0
      %6107 = vmatmul.mubr.f32.gmra.mrb[0].mxu0 %v4216
      %v6108 = vpop.f32.mrb[0].mxu0
      %v6109 = vadd.f32 0.0, %v6108
      %v6110 = vpop.f32.mrb[0].mxu0
      %6111 = vmatprep.mubr.f32.mxu0 0.0
      %6112 = vmatmul.mubr.f32.gmra.mrb[0].mxu0 %v4219
      %v6113 = vpop.f32.mrb[0].mxu0
      %v6114 = vadd.f32 0.0, %v6113
      %v6115 = vpop.f32.mrb[0].mxu0
      %6116 = vmatprep.mubr.f32.mxu0 0.0
      %6117 = vmatmul.mubr.f32.gmra.mrb[0].mxu0 %v4221
      %v6118 = vpop.f32.mrb[0].mxu0
      %v6119 = vadd.f32 0.0, %v6118
      %v6120 = vpop.f32.mrb[0].mxu0
      %6121 = vmatprep.mubr.f32.mxu0 0.0
      %6122 = vmatmul.mubr.f32.gmra.mrb[0].mxu0 %v4224
      %v6123 = vpop.f32.mrb[0].mxu0
      %v6124 = vadd.f32 0.0, %v6123
      %v6125 = vpop.f32.mrb[0].mxu0
      %6126 = vmatprep.mubr.f32.mxu0 0.0
      %6127 = vmatmul.mubr.f32.gmra.mrb[0].mxu0 %v4226
      %v6128 = vpop.f32.mrb[0].mxu0
      %v6129 = vadd.f32 0.0, %v6128
      %v6130 = vpop.f32.mrb[0].mxu0
      %6131 = vmatprep.mubr.f32.mxu0 0.0
      %6132 = vmatmul.mubr.f32.gmra.mrb[0].mxu0 %v4229
      %v6133 = vpop.f32.mrb[0].mxu0
      %v6134 = vadd.f32 0.0, %v6133
      %v6135 = vpop.f32.mrb[0].mxu0
      %6136 = vmatprep.mubr.f32.mxu0 0.0
      %6137 = vmatmul.mubr.f32.gmra.mrb[0].mxu0 %v4231
      %v6138 = vpop.f32.mrb[0].mxu0
      %v6139 = vadd.f32 0.0, %v6138
      %v6140 = vpop.f32.mrb[0].mxu0
      %6141 = vmatprep.mubr.f32.mxu0 0.0
      %6142 = vmatmul.mubr.f32.gmra.mrb[0].mxu0 %v4234
      %v6143 = vpop.f32.mrb[0].mxu0
      %v6144 = vadd.f32 0.0, %v6143
      %v6145 = vpop.f32.mrb[0].mxu0
      %6146 = vmatprep.mubr.f32.mxu0 0.0
      %6147 = vmatmul.mubr.f32.gmra.mrb[0].mxu0 %v4236
      %v6148 = vpop.f32.mrb[0].mxu0
      %v6149 = vadd.f32 0.0, %v6148
      %v6150 = vpop.f32.mrb[0].mxu0
      %6151 = vmatprep.mubr.f32.mxu0 0.0
      %6152 = vmatmul.mubr.f32.gmra.mrb[0].mxu0 %v4239
      %v6153 = vpop.f32.mrb[0].mxu0
      %v6154 = vadd.f32 0.0, %v6153
      %v6155 = vpop.f32.mrb[0].mxu0
      %6156 = vmatprep.mubr.f32.mxu0 0.0
      %6157 = vmatmul.mubr.f32.gmra.mrb[0].mxu0 %v4241
      %v6158 = vpop.f32.mrb[0].mxu0
      %v6159 = vadd.f32 0.0, %v6158
      %v6160 = vpop.f32.mrb[0].mxu0
      %6161 = vmatprep.mubr.f32.mxu0 0.0
      %6162 = vmatmul.mubr.f32.gmra.mrb[0].mxu0 %v4244
      %v6163 = vpop.f32.mrb[0].mxu0
      %v6164 = vadd.f32 0.0, %v6163
      %v6165 = vpop.f32.mrb[0].mxu0
      %6166 = vmatprep.mubr.f32.mxu0 0.0
      %6167 = vmatmul.mubr.f32.gmra.mrb[0].mxu0 %v4246
      %v6168 = vpop.f32.mrb[0].mxu0
      %v6169 = vadd.f32 0.0, %v6168
      %v6170 = vpop.f32.mrb[0].mxu0
      %6171 = vmatprep.mubr.f32.mxu0 0.0
      %6172 = vmatmul.mubr.f32.gmra.mrb[0].mxu0 %v4249
      %v6173 = vpop.f32.mrb[0].mxu0
      %v6174 = vadd.f32 0.0, %v6173
      %v6175 = vpop.f32.mrb[0].mxu0
      %6176 = vmatprep.mubr.f32.mxu0 0.0
      %6177 = vmatmul.mubr.f32.gmra.mrb[0].mxu0 %v4251
      %v6178 = vpop.f32.mrb[0].mxu0
      %v6179 = vadd.f32 0.0, %v6178
      %v6180 = vpop.f32.mrb[0].mxu0
      %6181 = vmatprep.mubr.f32.mxu0 0.0
      %6182 = vmatmul.mubr.f32.gmra.mrb[0].mxu0 %v4254
      %v6183 = vpop.f32.mrb[0].mxu0
      %v6184 = vadd.f32 0.0, %v6183
      %v6185 = vpop.f32.mrb[0].mxu0
      %6186 = vmatprep.mubr.f32.mxu0 0.0
      %6187 = vmatmul.mubr.f32.gmra.mrb[0].mxu0 %v4256
      %v6188 = vpop.f32.mrb[0].mxu0
      %v6189 = vadd.f32 0.0, %v6188
      %v6190 = vpop.f32.mrb[0].mxu0
      %6191 = vmatprep.mubr.f32.mxu0 0.0
      %6192 = vmatmul.mubr.f32.gmra.mrb[0].mxu0 %v4259
      %v6193 = vpop.f32.mrb[0].mxu0
      %v6194 = vadd.f32 0.0, %v6193
      %v6195 = vpop.f32.mrb[0].mxu0
      %6196 = vmatprep.mubr.f32.mxu0 0.0
      %6197 = vmatmul.mubr.f32.gmra.mrb[0].mxu0 %v4261
      %v6198 = vpop.f32.mrb[0].mxu0
      %v6199 = vadd.f32 0.0, %v6198
      %v6200 = vpop.f32.mrb[0].mxu0
      %6201 = vmatprep.mubr.f32.mxu0 0.0
      %6202 = vmatmul.mubr.f32.gmra.mrb[0].mxu0 %v5980
      %v6203 = vpop.f32.mrb[0].mxu0
      %v6204 = vadd.f32 0.0, %v6203
      %v6205 = vpop.f32.mrb[0].mxu0
      %6206 = vmatprep.mubr.f32.mxu0 0.0
      %6207 = vmatmul.mubr.f32.gmra.mrb[0].mxu0 %v5982
      %v6208 = vpop.f32.mrb[0].mxu0
      %v6209 = vadd.f32 0.0, %v6208
      %v6210 = vpop.f32.mrb[0].mxu0
      %6211 = vdwg.mxu0
      %v6212 = vadd.f32 %v5938, %v6054
      %v6213 = vadd.f32 %v5939, %v6059
      %v6214 = vadd.f32 %v5940, %v6064
      %v6215 = vadd.f32 %v5941, %v6069
      %v6216 = vadd.f32 %v5942, %v6074
      %v6217 = vadd.f32 %v5943, %v6079
      %v6218 = vadd.f32 %v5944, %v6084
      %v6219 = vadd.f32 %v5945, %v6089
      %v6220 = vadd.f32 %v5946, %v6094
      %v6221 = vadd.f32 %v5947, %v6099
      %v6222 = vadd.f32 %v5948, %v6104
      %v6223 = vadd.f32 %v5949, %v6109
      %v6224 = vadd.f32 %v5950, %v6114
      %v6225 = vadd.f32 %v5951, %v6119
      %v6226 = vadd.f32 %v5952, %v6124
      %v6227 = vadd.f32 %v5953, %v6129
      %v6228 = vadd.f32 %v5954, %v6134
      %v6229 = vadd.f32 %v5955, %v6139
      %v6230 = vadd.f32 %v5956, %v6144
      %v6231 = vadd.f32 %v5957, %v6149
      %v6232 = vadd.f32 %v5958, %v6154
      %v6233 = vadd.f32 %v5959, %v6159
      %v6234 = vadd.f32 %v5960, %v6164
      %v6235 = vadd.f32 %v5961, %v6169
      %v6236 = vadd.f32 %v5962, %v6174
      %v6237 = vadd.f32 %v5963, %v6179
      %v6238 = vadd.f32 %v5964, %v6184
      %v6239 = vadd.f32 %v5965, %v6189
      %v6240 = vadd.f32 %v5966, %v6194
      %v6241 = vadd.f32 %v5967, %v6199
      %v6242 = vadd.f32 %v5968, %v6204
      %v6243 = vadd.f32 %v5969, %v6209
      %v6252 = vcombine.low %v3053, %v3054
      %v6253 = vcombine.low %v3055, %v3056
      %v6255 = vunpack.c.l.s4 1983009808
      %v6256 = vunpack.c.0.s8 %v6255
      %v6257 = vlaneseq
      %v6258 = vshrl.u32 %v6257, 7
      %v6259 = vsub.s32 %v6256, %v6258
      %v6260 = vrot.slane %v6252, %v6259
      %v6262 = vunpack.c.l.s4 1983009808
      %v6263 = vunpack.c.0.s8 %v6262
      %v6264 = vlaneseq
      %v6265 = vshrl.u32 %v6264, 7
      %v6266 = vsub.s32 %v6263, %v6265
      %v6267 = vrot.slane %v6253, %v6266
      %v6268 = vcombine.low %v6260, %v6267
      %v6269 = vcombine.low %v3057, %v3058
      %v6270 = vcombine.low %v3059, %v3060
      %v6272 = vunpack.c.l.s4 1983009808
      %v6273 = vunpack.c.0.s8 %v6272
      %v6274 = vlaneseq
      %v6275 = vshrl.u32 %v6274, 7
      %v6276 = vsub.s32 %v6273, %v6275
      %v6277 = vrot.slane %v6269, %v6276
      %v6279 = vunpack.c.l.s4 1983009808
      %v6280 = vunpack.c.0.s8 %v6279
      %v6281 = vlaneseq
      %v6282 = vshrl.u32 %v6281, 7
      %v6283 = vsub.s32 %v6280, %v6282
      %v6284 = vrot.slane %v6270, %v6283
      %v6285 = vcombine.low %v6277, %v6284
      %v6286 = vrot.slane %v6268, 7
      %v6287 = vrot.slane %v6285, 7
      %v6288 = vsel %vm419, %v6286, %v6287
      %v6290 = vsel %vm419, 0.0, %v6286
      %s6291 = scalar_lea.vmem %s3, 12
      %v6292 = vld [vmem:[%s6291] sm:$0xf]
      %v6294 = vsel %vm3878, %v6290, 0
      %v6296 = vsel %vm3878, %v6288, 0
      %v6299 = vsel %vm3959, %v6292, 0
      %6301 = vmatprep.subr.mxu0 0.0
      %6302 = vmatpush1.msra.mxu0 %v6299
      %6303 = vmatprep.subr.mxu0 0.0
      %6304 = vmatpush1.msra.mxu0 0.0
      %6305 = vmatprep.subr.mxu0 0.0
      %6306 = vmatpush1.msra.mxu0 0.0
      %6307 = vmatprep.subr.mxu0 0.0
      %6308 = vmatpush1.msra.mxu0 0.0
      %6309 = vmatprep.subr.mxu0 0.0
      %6310 = vmatpush1.msra.mxu0 0.0
      %6311 = vmatprep.subr.mxu0 0.0
      %6312 = vmatpush1.msra.mxu0 0.0
      %6313 = vmatprep.subr.mxu0 0.0
      %6314 = vmatpush1.msra.mxu0 0.0
      %6315 = vmatprep.subr.mxu0 0.0
      %6316 = vmatpush1.msra.mxu0 0.0
      %6317 = vmatprep.subr.mxu0 0.0
      %6318 = vmatpush1.msra.mxu0 0.0
      %6319 = vmatprep.subr.mxu0 0.0
      %6320 = vmatpush1.msra.mxu0 0.0
      %6321 = vmatprep.subr.mxu0 0.0
      %6322 = vmatpush1.msra.mxu0 0.0
      %6323 = vmatprep.subr.mxu0 0.0
      %6324 = vmatpush1.msra.mxu0 0.0
      %6325 = vmatprep.subr.mxu0 0.0
      %6326 = vmatpush1.msra.mxu0 0.0
      %6327 = vmatprep.subr.mxu0 0.0
      %6328 = vmatpush1.msra.mxu0 0.0
      %6329 = vmatprep.subr.mxu0 0.0
      %6330 = vmatpush1.msra.mxu0 0.0
      %6331 = vmatprep.subr.mxu0 0.0
      %6332 = vmatpush1.msra.mxu0 0.0
      %6333 = vmatprep.subr.mxu0 0.0
      %6334 = vmatpush1.msra.mxu0 0.0
      %6335 = vmatprep.subr.mxu0 0.0
      %6336 = vmatpush1.msra.mxu0 0.0
      %6337 = vmatprep.subr.mxu0 0.0
      %6338 = vmatpush1.msra.mxu0 0.0
      %6339 = vmatprep.subr.mxu0 0.0
      %6340 = vmatpush1.msra.mxu0 0.0
      %6341 = vmatprep.subr.mxu0 0.0
      %6342 = vmatpush1.msra.mxu0 0.0
      %6343 = vmatprep.subr.mxu0 0.0
      %6344 = vmatpush1.msra.mxu0 0.0
      %6345 = vmatprep.subr.mxu0 0.0
      %6346 = vmatpush1.msra.mxu0 0.0
      %6347 = vmatprep.subr.mxu0 0.0
      %6348 = vmatpush1.msra.mxu0 0.0
      %6349 = vmatprep.subr.mxu0 0.0
      %6350 = vmatpush1.msra.mxu0 0.0
      %6351 = vmatprep.subr.mxu0 0.0
      %6352 = vmatpush1.msra.mxu0 0.0
      %6353 = vmatprep.subr.mxu0 0.0
      %6354 = vmatpush1.msra.mxu0 0.0
      %6355 = vmatprep.subr.mxu0 0.0
      %6356 = vmatpush1.msra.mxu0 0.0
      %6357 = vmatprep.subr.mxu0 0.0
      %6358 = vmatpush1.msra.mxu0 0.0
      %6359 = vmatprep.subr.mxu0 0.0
      %6360 = vmatpush1.msra.mxu0 0.0
      %6361 = vmatprep.subr.mxu0 0.0
      %6362 = vmatpush1.msra.mxu0 0.0
      %6363 = vmatprep.subr.mxu0 0.0
      %6364 = vmatpush1.msra.mxu0 0.0
      %6365 = vmatprep.mubr.f32.mxu0 0.0
      %6366 = vmatmul.mubr.f32.gmra.mrb[0].mxu0 %v3885
      %v6367 = vpop.f32.mrb[0].mxu0
      %v6368 = vadd.f32 0.0, %v6367
      %v6369 = vpop.f32.mrb[0].mxu0
      %6370 = vmatprep.mubr.f32.mxu0 0.0
      %6371 = vmatmul.mubr.f32.gmra.mrb[0].mxu0 %v3887
      %v6372 = vpop.f32.mrb[0].mxu0
      %v6373 = vadd.f32 0.0, %v6372
      %v6374 = vpop.f32.mrb[0].mxu0
      %6375 = vmatprep.mubr.f32.mxu0 0.0
      %6376 = vmatmul.mubr.f32.gmra.mrb[0].mxu0 %v3890
      %v6377 = vpop.f32.mrb[0].mxu0
      %v6378 = vadd.f32 0.0, %v6377
      %v6379 = vpop.f32.mrb[0].mxu0
      %6380 = vmatprep.mubr.f32.mxu0 0.0
      %6381 = vmatmul.mubr.f32.gmra.mrb[0].mxu0 %v3892
      %v6382 = vpop.f32.mrb[0].mxu0
      %v6383 = vadd.f32 0.0, %v6382
      %v6384 = vpop.f32.mrb[0].mxu0
      %6385 = vmatprep.mubr.f32.mxu0 0.0
      %6386 = vmatmul.mubr.f32.gmra.mrb[0].mxu0 %v3895
      %v6387 = vpop.f32.mrb[0].mxu0
      %v6388 = vadd.f32 0.0, %v6387
      %v6389 = vpop.f32.mrb[0].mxu0
      %6390 = vmatprep.mubr.f32.mxu0 0.0
      %6391 = vmatmul.mubr.f32.gmra.mrb[0].mxu0 %v3897
      %v6392 = vpop.f32.mrb[0].mxu0
      %v6393 = vadd.f32 0.0, %v6392
      %v6394 = vpop.f32.mrb[0].mxu0
      %6395 = vmatprep.mubr.f32.mxu0 0.0
      %6396 = vmatmul.mubr.f32.gmra.mrb[0].mxu0 %v3900
      %v6397 = vpop.f32.mrb[0].mxu0
      %v6398 = vadd.f32 0.0, %v6397
      %v6399 = vpop.f32.mrb[0].mxu0
      %6400 = vmatprep.mubr.f32.mxu0 0.0
      %6401 = vmatmul.mubr.f32.gmra.mrb[0].mxu0 %v3902
      %v6402 = vpop.f32.mrb[0].mxu0
      %v6403 = vadd.f32 0.0, %v6402
      %v6404 = vpop.f32.mrb[0].mxu0
      %6405 = vmatprep.mubr.f32.mxu0 0.0
      %6406 = vmatmul.mubr.f32.gmra.mrb[0].mxu0 %v3905
      %v6407 = vpop.f32.mrb[0].mxu0
      %v6408 = vadd.f32 0.0, %v6407
      %v6409 = vpop.f32.mrb[0].mxu0
      %6410 = vmatprep.mubr.f32.mxu0 0.0
      %6411 = vmatmul.mubr.f32.gmra.mrb[0].mxu0 %v3907
      %v6412 = vpop.f32.mrb[0].mxu0
      %v6413 = vadd.f32 0.0, %v6412
      %v6414 = vpop.f32.mrb[0].mxu0
      %6415 = vmatprep.mubr.f32.mxu0 0.0
      %6416 = vmatmul.mubr.f32.gmra.mrb[0].mxu0 %v3910
      %v6417 = vpop.f32.mrb[0].mxu0
      %v6418 = vadd.f32 0.0, %v6417
      %v6419 = vpop.f32.mrb[0].mxu0
      %6420 = vmatprep.mubr.f32.mxu0 0.0
      %6421 = vmatmul.mubr.f32.gmra.mrb[0].mxu0 %v3912
      %v6422 = vpop.f32.mrb[0].mxu0
      %v6423 = vadd.f32 0.0, %v6422
      %v6424 = vpop.f32.mrb[0].mxu0
      %6425 = vmatprep.mubr.f32.mxu0 0.0
      %6426 = vmatmul.mubr.f32.gmra.mrb[0].mxu0 %v3915
      %v6427 = vpop.f32.mrb[0].mxu0
      %v6428 = vadd.f32 0.0, %v6427
      %v6429 = vpop.f32.mrb[0].mxu0
      %6430 = vmatprep.mubr.f32.mxu0 0.0
      %6431 = vmatmul.mubr.f32.gmra.mrb[0].mxu0 %v3917
      %v6432 = vpop.f32.mrb[0].mxu0
      %v6433 = vadd.f32 0.0, %v6432
      %v6434 = vpop.f32.mrb[0].mxu0
      %6435 = vmatprep.mubr.f32.mxu0 0.0
      %6436 = vmatmul.mubr.f32.gmra.mrb[0].mxu0 %v3920
      %v6437 = vpop.f32.mrb[0].mxu0
      %v6438 = vadd.f32 0.0, %v6437
      %v6439 = vpop.f32.mrb[0].mxu0
      %6440 = vmatprep.mubr.f32.mxu0 0.0
      %6441 = vmatmul.mubr.f32.gmra.mrb[0].mxu0 %v3922
      %v6442 = vpop.f32.mrb[0].mxu0
      %v6443 = vadd.f32 0.0, %v6442
      %v6444 = vpop.f32.mrb[0].mxu0
      %6445 = vmatprep.mubr.f32.mxu0 0.0
      %6446 = vmatmul.mubr.f32.gmra.mrb[0].mxu0 %v3925
      %v6447 = vpop.f32.mrb[0].mxu0
      %v6448 = vadd.f32 0.0, %v6447
      %v6449 = vpop.f32.mrb[0].mxu0
      %6450 = vmatprep.mubr.f32.mxu0 0.0
      %6451 = vmatmul.mubr.f32.gmra.mrb[0].mxu0 %v3927
      %v6452 = vpop.f32.mrb[0].mxu0
      %v6453 = vadd.f32 0.0, %v6452
      %v6454 = vpop.f32.mrb[0].mxu0
      %6455 = vmatprep.mubr.f32.mxu0 0.0
      %6456 = vmatmul.mubr.f32.gmra.mrb[0].mxu0 %v3930
      %v6457 = vpop.f32.mrb[0].mxu0
      %v6458 = vadd.f32 0.0, %v6457
      %v6459 = vpop.f32.mrb[0].mxu0
      %6460 = vmatprep.mubr.f32.mxu0 0.0
      %6461 = vmatmul.mubr.f32.gmra.mrb[0].mxu0 %v3932
      %v6462 = vpop.f32.mrb[0].mxu0
      %v6463 = vadd.f32 0.0, %v6462
      %v6464 = vpop.f32.mrb[0].mxu0
      %6465 = vmatprep.mubr.f32.mxu0 0.0
      %6466 = vmatmul.mubr.f32.gmra.mrb[0].mxu0 %v3935
      %v6467 = vpop.f32.mrb[0].mxu0
      %v6468 = vadd.f32 0.0, %v6467
      %v6469 = vpop.f32.mrb[0].mxu0
      %6470 = vmatprep.mubr.f32.mxu0 0.0
      %6471 = vmatmul.mubr.f32.gmra.mrb[0].mxu0 %v3937
      %v6472 = vpop.f32.mrb[0].mxu0
      %v6473 = vadd.f32 0.0, %v6472
      %v6474 = vpop.f32.mrb[0].mxu0
      %6475 = vmatprep.mubr.f32.mxu0 0.0
      %6476 = vmatmul.mubr.f32.gmra.mrb[0].mxu0 %v3940
      %v6477 = vpop.f32.mrb[0].mxu0
      %v6478 = vadd.f32 0.0, %v6477
      %v6479 = vpop.f32.mrb[0].mxu0
      %6480 = vmatprep.mubr.f32.mxu0 0.0
      %6481 = vmatmul.mubr.f32.gmra.mrb[0].mxu0 %v3942
      %v6482 = vpop.f32.mrb[0].mxu0
      %v6483 = vadd.f32 0.0, %v6482
      %v6484 = vpop.f32.mrb[0].mxu0
      %6485 = vmatprep.mubr.f32.mxu0 0.0
      %6486 = vmatmul.mubr.f32.gmra.mrb[0].mxu0 %v3945
      %v6487 = vpop.f32.mrb[0].mxu0
      %v6488 = vadd.f32 0.0, %v6487
      %v6489 = vpop.f32.mrb[0].mxu0
      %6490 = vmatprep.mubr.f32.mxu0 0.0
      %6491 = vmatmul.mubr.f32.gmra.mrb[0].mxu0 %v3947
      %v6492 = vpop.f32.mrb[0].mxu0
      %v6493 = vadd.f32 0.0, %v6492
      %v6494 = vpop.f32.mrb[0].mxu0
      %6495 = vmatprep.mubr.f32.mxu0 0.0
      %6496 = vmatmul.mubr.f32.gmra.mrb[0].mxu0 %v3950
      %v6497 = vpop.f32.mrb[0].mxu0
      %v6498 = vadd.f32 0.0, %v6497
      %v6499 = vpop.f32.mrb[0].mxu0
      %6500 = vmatprep.mubr.f32.mxu0 0.0
      %6501 = vmatmul.mubr.f32.gmra.mrb[0].mxu0 %v3952
      %v6502 = vpop.f32.mrb[0].mxu0
      %v6503 = vadd.f32 0.0, %v6502
      %v6504 = vpop.f32.mrb[0].mxu0
      %6505 = vmatprep.mubr.f32.mxu0 0.0
      %6506 = vmatmul.mubr.f32.gmra.mrb[0].mxu0 %v3955
      %v6507 = vpop.f32.mrb[0].mxu0
      %v6508 = vadd.f32 0.0, %v6507
      %v6509 = vpop.f32.mrb[0].mxu0
      %6510 = vmatprep.mubr.f32.mxu0 0.0
      %6511 = vmatmul.mubr.f32.gmra.mrb[0].mxu0 %v3957
      %v6512 = vpop.f32.mrb[0].mxu0
      %v6513 = vadd.f32 0.0, %v6512
      %v6514 = vpop.f32.mrb[0].mxu0
      %6515 = vmatprep.mubr.f32.mxu0 0.0
      %6516 = vmatmul.mubr.f32.gmra.mrb[0].mxu0 %v6294
      %v6517 = vpop.f32.mrb[0].mxu0
      %v6518 = vadd.f32 0.0, %v6517
      %v6519 = vpop.f32.mrb[0].mxu0
      %6520 = vmatprep.mubr.f32.mxu0 0.0
      %6521 = vmatmul.mubr.f32.gmra.mrb[0].mxu0 %v6296
      %v6522 = vpop.f32.mrb[0].mxu0
      %v6523 = vadd.f32 0.0, %v6522
      %v6524 = vpop.f32.mrb[0].mxu0
      %6525 = vdwg.mxu0
      %v6526 = vadd.f32 %v6212, %v6368
      %v6527 = vadd.f32 %v6213, %v6373
      %v6528 = vadd.f32 %v6214, %v6378
      %v6529 = vadd.f32 %v6215, %v6383
      %v6530 = vadd.f32 %v6216, %v6388
      %v6531 = vadd.f32 %v6217, %v6393
      %v6532 = vadd.f32 %v6218, %v6398
      %v6533 = vadd.f32 %v6219, %v6403
      %v6534 = vadd.f32 %v6220, %v6408
      %v6535 = vadd.f32 %v6221, %v6413
      %v6536 = vadd.f32 %v6222, %v6418
      %v6537 = vadd.f32 %v6223, %v6423
      %v6538 = vadd.f32 %v6224, %v6428
      %v6539 = vadd.f32 %v6225, %v6433
      %v6540 = vadd.f32 %v6226, %v6438
      %v6541 = vadd.f32 %v6227, %v6443
      %v6542 = vadd.f32 %v6228, %v6448
      %v6543 = vadd.f32 %v6229, %v6453
      %v6544 = vadd.f32 %v6230, %v6458
      %v6545 = vadd.f32 %v6231, %v6463
      %v6546 = vadd.f32 %v6232, %v6468
      %v6547 = vadd.f32 %v6233, %v6473
      %v6548 = vadd.f32 %v6234, %v6478
      %v6549 = vadd.f32 %v6235, %v6483
      %v6550 = vadd.f32 %v6236, %v6488
      %v6551 = vadd.f32 %v6237, %v6493
      %v6552 = vadd.f32 %v6238, %v6498
      %v6553 = vadd.f32 %v6239, %v6503
      %v6554 = vadd.f32 %v6240, %v6508
      %v6555 = vadd.f32 %v6241, %v6513
      %v6556 = vadd.f32 %v6242, %v6518
      %v6557 = vadd.f32 %v6243, %v6523
      %s6558 = scalar_lea.vmem %s2, 16
      %v6559 = vld [vmem:[%s6558] sm:$0xf]
      %v6560 = vsel %vm3878, %v337, 0
      %v6562 = vsel %vm3878, %v338, 0
      %v6565 = vsel %vm3959, %v6559, 0
      %6567 = vmatprep.subr.mxu0 0.0
      %6568 = vmatpush1.msra.mxu0 %v6565
      %6569 = vmatprep.subr.mxu0 0.0
      %6570 = vmatpush1.msra.mxu0 0.0
      %6571 = vmatprep.subr.mxu0 0.0
      %6572 = vmatpush1.msra.mxu0 0.0
      %6573 = vmatprep.subr.mxu0 0.0
      %6574 = vmatpush1.msra.mxu0 0.0
      %6575 = vmatprep.subr.mxu0 0.0
      %6576 = vmatpush1.msra.mxu0 0.0
      %6577 = vmatprep.subr.mxu0 0.0
      %6578 = vmatpush1.msra.mxu0 0.0
      %6579 = vmatprep.subr.mxu0 0.0
      %6580 = vmatpush1.msra.mxu0 0.0
      %6581 = vmatprep.subr.mxu0 0.0
      %6582 = vmatpush1.msra.mxu0 0.0
      %6583 = vmatprep.subr.mxu0 0.0
      %6584 = vmatpush1.msra.mxu0 0.0
      %6585 = vmatprep.subr.mxu0 0.0
      %6586 = vmatpush1.msra.mxu0 0.0
      %6587 = vmatprep.subr.mxu0 0.0
      %6588 = vmatpush1.msra.mxu0 0.0
      %6589 = vmatprep.subr.mxu0 0.0
      %6590 = vmatpush1.msra.mxu0 0.0
      %6591 = vmatprep.subr.mxu0 0.0
      %6592 = vmatpush1.msra.mxu0 0.0
      %6593 = vmatprep.subr.mxu0 0.0
      %6594 = vmatpush1.msra.mxu0 0.0
      %6595 = vmatprep.subr.mxu0 0.0
      %6596 = vmatpush1.msra.mxu0 0.0
      %6597 = vmatprep.subr.mxu0 0.0
      %6598 = vmatpush1.msra.mxu0 0.0
      %6599 = vmatprep.subr.mxu0 0.0
      %6600 = vmatpush1.msra.mxu0 0.0
      %6601 = vmatprep.subr.mxu0 0.0
      %6602 = vmatpush1.msra.mxu0 0.0
      %6603 = vmatprep.subr.mxu0 0.0
      %6604 = vmatpush1.msra.mxu0 0.0
      %6605 = vmatprep.subr.mxu0 0.0
      %6606 = vmatpush1.msra.mxu0 0.0
      %6607 = vmatprep.subr.mxu0 0.0
      %6608 = vmatpush1.msra.mxu0 0.0
      %6609 = vmatprep.subr.mxu0 0.0
      %6610 = vmatpush1.msra.mxu0 0.0
      %6611 = vmatprep.subr.mxu0 0.0
      %6612 = vmatpush1.msra.mxu0 0.0
      %6613 = vmatprep.subr.mxu0 0.0
      %6614 = vmatpush1.msra.mxu0 0.0
      %6615 = vmatprep.subr.mxu0 0.0
      %6616 = vmatpush1.msra.mxu0 0.0
      %6617 = vmatprep.subr.mxu0 0.0
      %6618 = vmatpush1.msra.mxu0 0.0
      %6619 = vmatprep.subr.mxu0 0.0
      %6620 = vmatpush1.msra.mxu0 0.0
      %6621 = vmatprep.subr.mxu0 0.0
      %6622 = vmatpush1.msra.mxu0 0.0
      %6623 = vmatprep.subr.mxu0 0.0
      %6624 = vmatpush1.msra.mxu0 0.0
      %6625 = vmatprep.subr.mxu0 0.0
      %6626 = vmatpush1.msra.mxu0 0.0
      %6627 = vmatprep.subr.mxu0 0.0
      %6628 = vmatpush1.msra.mxu0 0.0
      %6629 = vmatprep.subr.mxu0 0.0
      %6630 = vmatpush1.msra.mxu0 0.0
      %6631 = vmatprep.mubr.f32.mxu0 0.0
      %6632 = vmatmul.mubr.f32.gmra.mrb[0].mxu0 %v4495
      %v6633 = vpop.f32.mrb[0].mxu0
      %v6634 = vadd.f32 0.0, %v6633
      %v6635 = vpop.f32.mrb[0].mxu0
      %6636 = vmatprep.mubr.f32.mxu0 0.0
      %6637 = vmatmul.mubr.f32.gmra.mrb[0].mxu0 %v4497
      %v6638 = vpop.f32.mrb[0].mxu0
      %v6639 = vadd.f32 0.0, %v6638
      %v6640 = vpop.f32.mrb[0].mxu0
      %6641 = vmatprep.mubr.f32.mxu0 0.0
      %6642 = vmatmul.mubr.f32.gmra.mrb[0].mxu0 %v4499
      %v6643 = vpop.f32.mrb[0].mxu0
      %v6644 = vadd.f32 0.0, %v6643
      %v6645 = vpop.f32.mrb[0].mxu0
      %6646 = vmatprep.mubr.f32.mxu0 0.0
      %6647 = vmatmul.mubr.f32.gmra.mrb[0].mxu0 %v4501
      %v6648 = vpop.f32.mrb[0].mxu0
      %v6649 = vadd.f32 0.0, %v6648
      %v6650 = vpop.f32.mrb[0].mxu0
      %6651 = vmatprep.mubr.f32.mxu0 0.0
      %6652 = vmatmul.mubr.f32.gmra.mrb[0].mxu0 %v4503
      %v6653 = vpop.f32.mrb[0].mxu0
      %v6654 = vadd.f32 0.0, %v6653
      %v6655 = vpop.f32.mrb[0].mxu0
      %6656 = vmatprep.mubr.f32.mxu0 0.0
      %6657 = vmatmul.mubr.f32.gmra.mrb[0].mxu0 %v4505
      %v6658 = vpop.f32.mrb[0].mxu0
      %v6659 = vadd.f32 0.0, %v6658
      %v6660 = vpop.f32.mrb[0].mxu0
      %6661 = vmatprep.mubr.f32.mxu0 0.0
      %6662 = vmatmul.mubr.f32.gmra.mrb[0].mxu0 %v4507
      %v6663 = vpop.f32.mrb[0].mxu0
      %v6664 = vadd.f32 0.0, %v6663
      %v6665 = vpop.f32.mrb[0].mxu0
      %6666 = vmatprep.mubr.f32.mxu0 0.0
      %6667 = vmatmul.mubr.f32.gmra.mrb[0].mxu0 %v4509
      %v6668 = vpop.f32.mrb[0].mxu0
      %v6669 = vadd.f32 0.0, %v6668
      %v6670 = vpop.f32.mrb[0].mxu0
      %6671 = vmatprep.mubr.f32.mxu0 0.0
      %6672 = vmatmul.mubr.f32.gmra.mrb[0].mxu0 %v4511
      %v6673 = vpop.f32.mrb[0].mxu0
      %v6674 = vadd.f32 0.0, %v6673
      %v6675 = vpop.f32.mrb[0].mxu0
      %6676 = vmatprep.mubr.f32.mxu0 0.0
      %6677 = vmatmul.mubr.f32.gmra.mrb[0].mxu0 %v4513
      %v6678 = vpop.f32.mrb[0].mxu0
      %v6679 = vadd.f32 0.0, %v6678
      %v6680 = vpop.f32.mrb[0].mxu0
      %6681 = vmatprep.mubr.f32.mxu0 0.0
      %6682 = vmatmul.mubr.f32.gmra.mrb[0].mxu0 %v4515
      %v6683 = vpop.f32.mrb[0].mxu0
      %v6684 = vadd.f32 0.0, %v6683
      %v6685 = vpop.f32.mrb[0].mxu0
      %6686 = vmatprep.mubr.f32.mxu0 0.0
      %6687 = vmatmul.mubr.f32.gmra.mrb[0].mxu0 %v4517
      %v6688 = vpop.f32.mrb[0].mxu0
      %v6689 = vadd.f32 0.0, %v6688
      %v6690 = vpop.f32.mrb[0].mxu0
      %6691 = vmatprep.mubr.f32.mxu0 0.0
      %6692 = vmatmul.mubr.f32.gmra.mrb[0].mxu0 %v4519
      %v6693 = vpop.f32.mrb[0].mxu0
      %v6694 = vadd.f32 0.0, %v6693
      %v6695 = vpop.f32.mrb[0].mxu0
      %6696 = vmatprep.mubr.f32.mxu0 0.0
      %6697 = vmatmul.mubr.f32.gmra.mrb[0].mxu0 %v4521
      %v6698 = vpop.f32.mrb[0].mxu0
      %v6699 = vadd.f32 0.0, %v6698
      %v6700 = vpop.f32.mrb[0].mxu0
      %6701 = vmatprep.mubr.f32.mxu0 0.0
      %6702 = vmatmul.mubr.f32.gmra.mrb[0].mxu0 %v4523
      %v6703 = vpop.f32.mrb[0].mxu0
      %v6704 = vadd.f32 0.0, %v6703
      %v6705 = vpop.f32.mrb[0].mxu0
      %6706 = vmatprep.mubr.f32.mxu0 0.0
      %6707 = vmatmul.mubr.f32.gmra.mrb[0].mxu0 %v4525
      %v6708 = vpop.f32.mrb[0].mxu0
      %v6709 = vadd.f32 0.0, %v6708
      %v6710 = vpop.f32.mrb[0].mxu0
      %6711 = vmatprep.mubr.f32.mxu0 0.0
      %6712 = vmatmul.mubr.f32.gmra.mrb[0].mxu0 %v4527
      %v6713 = vpop.f32.mrb[0].mxu0
      %v6714 = vadd.f32 0.0, %v6713
      %v6715 = vpop.f32.mrb[0].mxu0
      %6716 = vmatprep.mubr.f32.mxu0 0.0
      %6717 = vmatmul.mubr.f32.gmra.mrb[0].mxu0 %v4529
      %v6718 = vpop.f32.mrb[0].mxu0
      %v6719 = vadd.f32 0.0, %v6718
      %v6720 = vpop.f32.mrb[0].mxu0
      %6721 = vmatprep.mubr.f32.mxu0 0.0
      %6722 = vmatmul.mubr.f32.gmra.mrb[0].mxu0 %v4531
      %v6723 = vpop.f32.mrb[0].mxu0
      %v6724 = vadd.f32 0.0, %v6723
      %v6725 = vpop.f32.mrb[0].mxu0
      %6726 = vmatprep.mubr.f32.mxu0 0.0
      %6727 = vmatmul.mubr.f32.gmra.mrb[0].mxu0 %v4533
      %v6728 = vpop.f32.mrb[0].mxu0
      %v6729 = vadd.f32 0.0, %v6728
      %v6730 = vpop.f32.mrb[0].mxu0
      %6731 = vmatprep.mubr.f32.mxu0 0.0
      %6732 = vmatmul.mubr.f32.gmra.mrb[0].mxu0 %v4535
      %v6733 = vpop.f32.mrb[0].mxu0
      %v6734 = vadd.f32 0.0, %v6733
      %v6735 = vpop.f32.mrb[0].mxu0
      %6736 = vmatprep.mubr.f32.mxu0 0.0
      %6737 = vmatmul.mubr.f32.gmra.mrb[0].mxu0 %v4537
      %v6738 = vpop.f32.mrb[0].mxu0
      %v6739 = vadd.f32 0.0, %v6738
      %v6740 = vpop.f32.mrb[0].mxu0
      %6741 = vmatprep.mubr.f32.mxu0 0.0
      %6742 = vmatmul.mubr.f32.gmra.mrb[0].mxu0 %v4539
      %v6743 = vpop.f32.mrb[0].mxu0
      %v6744 = vadd.f32 0.0, %v6743
      %v6745 = vpop.f32.mrb[0].mxu0
      %6746 = vmatprep.mubr.f32.mxu0 0.0
      %6747 = vmatmul.mubr.f32.gmra.mrb[0].mxu0 %v4541
      %v6748 = vpop.f32.mrb[0].mxu0
      %v6749 = vadd.f32 0.0, %v6748
      %v6750 = vpop.f32.mrb[0].mxu0
      %6751 = vmatprep.mubr.f32.mxu0 0.0
      %6752 = vmatmul.mubr.f32.gmra.mrb[0].mxu0 %v4543
      %v6753 = vpop.f32.mrb[0].mxu0
      %v6754 = vadd.f32 0.0, %v6753
      %v6755 = vpop.f32.mrb[0].mxu0
      %6756 = vmatprep.mubr.f32.mxu0 0.0
      %6757 = vmatmul.mubr.f32.gmra.mrb[0].mxu0 %v4545
      %v6758 = vpop.f32.mrb[0].mxu0
      %v6759 = vadd.f32 0.0, %v6758
      %v6760 = vpop.f32.mrb[0].mxu0
      %6761 = vmatprep.mubr.f32.mxu0 0.0
      %6762 = vmatmul.mubr.f32.gmra.mrb[0].mxu0 %v4547
      %v6763 = vpop.f32.mrb[0].mxu0
      %v6764 = vadd.f32 0.0, %v6763
      %v6765 = vpop.f32.mrb[0].mxu0
      %6766 = vmatprep.mubr.f32.mxu0 0.0
      %6767 = vmatmul.mubr.f32.gmra.mrb[0].mxu0 %v4549
      %v6768 = vpop.f32.mrb[0].mxu0
      %v6769 = vadd.f32 0.0, %v6768
      %v6770 = vpop.f32.mrb[0].mxu0
      %6771 = vmatprep.mubr.f32.mxu0 0.0
      %6772 = vmatmul.mubr.f32.gmra.mrb[0].mxu0 %v4551
      %v6773 = vpop.f32.mrb[0].mxu0
      %v6774 = vadd.f32 0.0, %v6773
      %v6775 = vpop.f32.mrb[0].mxu0
      %6776 = vmatprep.mubr.f32.mxu0 0.0
      %6777 = vmatmul.mubr.f32.gmra.mrb[0].mxu0 %v4553
      %v6778 = vpop.f32.mrb[0].mxu0
      %v6779 = vadd.f32 0.0, %v6778
      %v6780 = vpop.f32.mrb[0].mxu0
      %6781 = vmatprep.mubr.f32.mxu0 0.0
      %6782 = vmatmul.mubr.f32.gmra.mrb[0].mxu0 %v6560
      %v6783 = vpop.f32.mrb[0].mxu0
      %v6784 = vadd.f32 0.0, %v6783
      %v6785 = vpop.f32.mrb[0].mxu0
      %6786 = vmatprep.mubr.f32.mxu0 0.0
      %6787 = vmatmul.mubr.f32.gmra.mrb[0].mxu0 %v6562
      %v6788 = vpop.f32.mrb[0].mxu0
      %v6789 = vadd.f32 0.0, %v6788
      %v6790 = vpop.f32.mrb[0].mxu0
      %6791 = vdwg.mxu0
      %v6792 = vadd.f32 %v6526, %v6634
      %v6793 = vadd.f32 %v6527, %v6639
      %v6794 = vadd.f32 %v6528, %v6644
      %v6795 = vadd.f32 %v6529, %v6649
      %v6796 = vadd.f32 %v6530, %v6654
      %v6797 = vadd.f32 %v6531, %v6659
      %v6798 = vadd.f32 %v6532, %v6664
      %v6799 = vadd.f32 %v6533, %v6669
      %v6800 = vadd.f32 %v6534, %v6674
      %v6801 = vadd.f32 %v6535, %v6679
      %v6802 = vadd.f32 %v6536, %v6684
      %v6803 = vadd.f32 %v6537, %v6689
      %v6804 = vadd.f32 %v6538, %v6694
      %v6805 = vadd.f32 %v6539, %v6699
      %v6806 = vadd.f32 %v6540, %v6704
      %v6807 = vadd.f32 %v6541, %v6709
      %v6808 = vadd.f32 %v6542, %v6714
      %v6809 = vadd.f32 %v6543, %v6719
      %v6810 = vadd.f32 %v6544, %v6724
      %v6811 = vadd.f32 %v6545, %v6729
      %v6812 = vadd.f32 %v6546, %v6734
      %v6813 = vadd.f32 %v6547, %v6739
      %v6814 = vadd.f32 %v6548, %v6744
      %v6815 = vadd.f32 %v6549, %v6749
      %v6816 = vadd.f32 %v6550, %v6754
      %v6817 = vadd.f32 %v6551, %v6759
      %v6818 = vadd.f32 %v6552, %v6764
      %v6819 = vadd.f32 %v6553, %v6769
      %v6820 = vadd.f32 %v6554, %v6774
      %v6821 = vadd.f32 %v6555, %v6779
      %v6822 = vadd.f32 %v6556, %v6784
      %v6823 = vadd.f32 %v6557, %v6789
      %s6824 = scalar_lea.vmem %s3, 16
      %v6825 = vld [vmem:[%s6824] sm:$0xf]
      %v6826 = vsel %vm3878, %v6268, 0
      %v6828 = vsel %vm3878, %v6285, 0
      %v6831 = vsel %vm3959, %v6825, 0
      %6833 = vmatprep.subr.mxu0 0.0
      %6834 = vmatpush1.msra.mxu0 %v6831
      %6835 = vmatprep.subr.mxu0 0.0
      %6836 = vmatpush1.msra.mxu0 0.0
      %6837 = vmatprep.subr.mxu0 0.0
      %6838 = vmatpush1.msra.mxu0 0.0
      %6839 = vmatprep.subr.mxu0 0.0
      %6840 = vmatpush1.msra.mxu0 0.0
      %6841 = vmatprep.subr.mxu0 0.0
      %6842 = vmatpush1.msra.mxu0 0.0
      %6843 = vmatprep.subr.mxu0 0.0
      %6844 = vmatpush1.msra.mxu0 0.0
      %6845 = vmatprep.subr.mxu0 0.0
      %6846 = vmatpush1.msra.mxu0 0.0
      %6847 = vmatprep.subr.mxu0 0.0
      %6848 = vmatpush1.msra.mxu0 0.0
      %6849 = vmatprep.subr.mxu0 0.0
      %6850 = vmatpush1.msra.mxu0 0.0
      %6851 = vmatprep.subr.mxu0 0.0
      %6852 = vmatpush1.msra.mxu0 0.0
      %6853 = vmatprep.subr.mxu0 0.0
      %6854 = vmatpush1.msra.mxu0 0.0
      %6855 = vmatprep.subr.mxu0 0.0
      %6856 = vmatpush1.msra.mxu0 0.0
      %6857 = vmatprep.subr.mxu0 0.0
      %6858 = vmatpush1.msra.mxu0 0.0
      %6859 = vmatprep.subr.mxu0 0.0
      %6860 = vmatpush1.msra.mxu0 0.0
      %6861 = vmatprep.subr.mxu0 0.0
      %6862 = vmatpush1.msra.mxu0 0.0
      %6863 = vmatprep.subr.mxu0 0.0
      %6864 = vmatpush1.msra.mxu0 0.0
      %6865 = vmatprep.subr.mxu0 0.0
      %6866 = vmatpush1.msra.mxu0 0.0
      %6867 = vmatprep.subr.mxu0 0.0
      %6868 = vmatpush1.msra.mxu0 0.0
      %6869 = vmatprep.subr.mxu0 0.0
      %6870 = vmatpush1.msra.mxu0 0.0
      %6871 = vmatprep.subr.mxu0 0.0
      %6872 = vmatpush1.msra.mxu0 0.0
      %6873 = vmatprep.subr.mxu0 0.0
      %6874 = vmatpush1.msra.mxu0 0.0
      %6875 = vmatprep.subr.mxu0 0.0
      %6876 = vmatpush1.msra.mxu0 0.0
      %6877 = vmatprep.subr.mxu0 0.0
      %6878 = vmatpush1.msra.mxu0 0.0
      %6879 = vmatprep.subr.mxu0 0.0
      %6880 = vmatpush1.msra.mxu0 0.0
      %6881 = vmatprep.subr.mxu0 0.0
      %6882 = vmatpush1.msra.mxu0 0.0
      %6883 = vmatprep.subr.mxu0 0.0
      %6884 = vmatpush1.msra.mxu0 0.0
      %6885 = vmatprep.subr.mxu0 0.0
      %6886 = vmatpush1.msra.mxu0 0.0
      %6887 = vmatprep.subr.mxu0 0.0
      %6888 = vmatpush1.msra.mxu0 0.0
      %6889 = vmatprep.subr.mxu0 0.0
      %6890 = vmatpush1.msra.mxu0 0.0
      %6891 = vmatprep.subr.mxu0 0.0
      %6892 = vmatpush1.msra.mxu0 0.0
      %6893 = vmatprep.subr.mxu0 0.0
      %6894 = vmatpush1.msra.mxu0 0.0
      %6895 = vmatprep.subr.mxu0 0.0
      %6896 = vmatpush1.msra.mxu0 0.0
      %6897 = vmatprep.mubr.f32.mxu0 0.0
      %6898 = vmatmul.mubr.f32.gmra.mrb[0].mxu0 %v4817
      %v6899 = vpop.f32.mrb[0].mxu0
      %v6900 = vadd.f32 0.0, %v6899
      %v6901 = vpop.f32.mrb[0].mxu0
      %6902 = vmatprep.mubr.f32.mxu0 0.0
      %6903 = vmatmul.mubr.f32.gmra.mrb[0].mxu0 %v4819
      %v6904 = vpop.f32.mrb[0].mxu0
      %v6905 = vadd.f32 0.0, %v6904
      %v6906 = vpop.f32.mrb[0].mxu0
      %6907 = vmatprep.mubr.f32.mxu0 0.0
      %6908 = vmatmul.mubr.f32.gmra.mrb[0].mxu0 %v4821
      %v6909 = vpop.f32.mrb[0].mxu0
      %v6910 = vadd.f32 0.0, %v6909
      %v6911 = vpop.f32.mrb[0].mxu0
      %6912 = vmatprep.mubr.f32.mxu0 0.0
      %6913 = vmatmul.mubr.f32.gmra.mrb[0].mxu0 %v4823
      %v6914 = vpop.f32.mrb[0].mxu0
      %v6915 = vadd.f32 0.0, %v6914
      %v6916 = vpop.f32.mrb[0].mxu0
      %6917 = vmatprep.mubr.f32.mxu0 0.0
      %6918 = vmatmul.mubr.f32.gmra.mrb[0].mxu0 %v4825
      %v6919 = vpop.f32.mrb[0].mxu0
      %v6920 = vadd.f32 0.0, %v6919
      %v6921 = vpop.f32.mrb[0].mxu0
      %6922 = vmatprep.mubr.f32.mxu0 0.0
      %6923 = vmatmul.mubr.f32.gmra.mrb[0].mxu0 %v4827
      %v6924 = vpop.f32.mrb[0].mxu0
      %v6925 = vadd.f32 0.0, %v6924
      %v6926 = vpop.f32.mrb[0].mxu0
      %6927 = vmatprep.mubr.f32.mxu0 0.0
      %6928 = vmatmul.mubr.f32.gmra.mrb[0].mxu0 %v4829
      %v6929 = vpop.f32.mrb[0].mxu0
      %v6930 = vadd.f32 0.0, %v6929
      %v6931 = vpop.f32.mrb[0].mxu0
      %6932 = vmatprep.mubr.f32.mxu0 0.0
      %6933 = vmatmul.mubr.f32.gmra.mrb[0].mxu0 %v4831
      %v6934 = vpop.f32.mrb[0].mxu0
      %v6935 = vadd.f32 0.0, %v6934
      %v6936 = vpop.f32.mrb[0].mxu0
      %6937 = vmatprep.mubr.f32.mxu0 0.0
      %6938 = vmatmul.mubr.f32.gmra.mrb[0].mxu0 %v4833
      %v6939 = vpop.f32.mrb[0].mxu0
      %v6940 = vadd.f32 0.0, %v6939
      %v6941 = vpop.f32.mrb[0].mxu0
      %6942 = vmatprep.mubr.f32.mxu0 0.0
      %6943 = vmatmul.mubr.f32.gmra.mrb[0].mxu0 %v4835
      %v6944 = vpop.f32.mrb[0].mxu0
      %v6945 = vadd.f32 0.0, %v6944
      %v6946 = vpop.f32.mrb[0].mxu0
      %6947 = vmatprep.mubr.f32.mxu0 0.0
      %6948 = vmatmul.mubr.f32.gmra.mrb[0].mxu0 %v4837
      %v6949 = vpop.f32.mrb[0].mxu0
      %v6950 = vadd.f32 0.0, %v6949
      %v6951 = vpop.f32.mrb[0].mxu0
      %6952 = vmatprep.mubr.f32.mxu0 0.0
      %6953 = vmatmul.mubr.f32.gmra.mrb[0].mxu0 %v4839
      %v6954 = vpop.f32.mrb[0].mxu0
      %v6955 = vadd.f32 0.0, %v6954
      %v6956 = vpop.f32.mrb[0].mxu0
      %6957 = vmatprep.mubr.f32.mxu0 0.0
      %6958 = vmatmul.mubr.f32.gmra.mrb[0].mxu0 %v4841
      %v6959 = vpop.f32.mrb[0].mxu0
      %v6960 = vadd.f32 0.0, %v6959
      %v6961 = vpop.f32.mrb[0].mxu0
      %6962 = vmatprep.mubr.f32.mxu0 0.0
      %6963 = vmatmul.mubr.f32.gmra.mrb[0].mxu0 %v4843
      %v6964 = vpop.f32.mrb[0].mxu0
      %v6965 = vadd.f32 0.0, %v6964
      %v6966 = vpop.f32.mrb[0].mxu0
      %6967 = vmatprep.mubr.f32.mxu0 0.0
      %6968 = vmatmul.mubr.f32.gmra.mrb[0].mxu0 %v4845
      %v6969 = vpop.f32.mrb[0].mxu0
      %v6970 = vadd.f32 0.0, %v6969
      %v6971 = vpop.f32.mrb[0].mxu0
      %6972 = vmatprep.mubr.f32.mxu0 0.0
      %6973 = vmatmul.mubr.f32.gmra.mrb[0].mxu0 %v4847
      %v6974 = vpop.f32.mrb[0].mxu0
      %v6975 = vadd.f32 0.0, %v6974
      %v6976 = vpop.f32.mrb[0].mxu0
      %6977 = vmatprep.mubr.f32.mxu0 0.0
      %6978 = vmatmul.mubr.f32.gmra.mrb[0].mxu0 %v4849
      %v6979 = vpop.f32.mrb[0].mxu0
      %v6980 = vadd.f32 0.0, %v6979
      %v6981 = vpop.f32.mrb[0].mxu0
      %6982 = vmatprep.mubr.f32.mxu0 0.0
      %6983 = vmatmul.mubr.f32.gmra.mrb[0].mxu0 %v4851
      %v6984 = vpop.f32.mrb[0].mxu0
      %v6985 = vadd.f32 0.0, %v6984
      %v6986 = vpop.f32.mrb[0].mxu0
      %6987 = vmatprep.mubr.f32.mxu0 0.0
      %6988 = vmatmul.mubr.f32.gmra.mrb[0].mxu0 %v4853
      %v6989 = vpop.f32.mrb[0].mxu0
      %v6990 = vadd.f32 0.0, %v6989
      %v6991 = vpop.f32.mrb[0].mxu0
      %6992 = vmatprep.mubr.f32.mxu0 0.0
      %6993 = vmatmul.mubr.f32.gmra.mrb[0].mxu0 %v4855
      %v6994 = vpop.f32.mrb[0].mxu0
      %v6995 = vadd.f32 0.0, %v6994
      %v6996 = vpop.f32.mrb[0].mxu0
      %6997 = vmatprep.mubr.f32.mxu0 0.0
      %6998 = vmatmul.mubr.f32.gmra.mrb[0].mxu0 %v4857
      %v6999 = vpop.f32.mrb[0].mxu0
      %v7000 = vadd.f32 0.0, %v6999
      %v7001 = vpop.f32.mrb[0].mxu0
      %7002 = vmatprep.mubr.f32.mxu0 0.0
      %7003 = vmatmul.mubr.f32.gmra.mrb[0].mxu0 %v4859
      %v7004 = vpop.f32.mrb[0].mxu0
      %v7005 = vadd.f32 0.0, %v7004
      %v7006 = vpop.f32.mrb[0].mxu0
      %7007 = vmatprep.mubr.f32.mxu0 0.0
      %7008 = vmatmul.mubr.f32.gmra.mrb[0].mxu0 %v4861
      %v7009 = vpop.f32.mrb[0].mxu0
      %v7010 = vadd.f32 0.0, %v7009
      %v7011 = vpop.f32.mrb[0].mxu0
      %7012 = vmatprep.mubr.f32.mxu0 0.0
      %7013 = vmatmul.mubr.f32.gmra.mrb[0].mxu0 %v4863
      %v7014 = vpop.f32.mrb[0].mxu0
      %v7015 = vadd.f32 0.0, %v7014
      %v7016 = vpop.f32.mrb[0].mxu0
      %7017 = vmatprep.mubr.f32.mxu0 0.0
      %7018 = vmatmul.mubr.f32.gmra.mrb[0].mxu0 %v4865
      %v7019 = vpop.f32.mrb[0].mxu0
      %v7020 = vadd.f32 0.0, %v7019
      %v7021 = vpop.f32.mrb[0].mxu0
      %7022 = vmatprep.mubr.f32.mxu0 0.0
      %7023 = vmatmul.mubr.f32.gmra.mrb[0].mxu0 %v4867
      %v7024 = vpop.f32.mrb[0].mxu0
      %v7025 = vadd.f32 0.0, %v7024
      %v7026 = vpop.f32.mrb[0].mxu0
      %7027 = vmatprep.mubr.f32.mxu0 0.0
      %7028 = vmatmul.mubr.f32.gmra.mrb[0].mxu0 %v4869
      %v7029 = vpop.f32.mrb[0].mxu0
      %v7030 = vadd.f32 0.0, %v7029
      %v7031 = vpop.f32.mrb[0].mxu0
      %7032 = vmatprep.mubr.f32.mxu0 0.0
      %7033 = vmatmul.mubr.f32.gmra.mrb[0].mxu0 %v4871
      %v7034 = vpop.f32.mrb[0].mxu0
      %v7035 = vadd.f32 0.0, %v7034
      %v7036 = vpop.f32.mrb[0].mxu0
      %7037 = vmatprep.mubr.f32.mxu0 0.0
      %7038 = vmatmul.mubr.f32.gmra.mrb[0].mxu0 %v4873
      %v7039 = vpop.f32.mrb[0].mxu0
      %v7040 = vadd.f32 0.0, %v7039
      %v7041 = vpop.f32.mrb[0].mxu0
      %7042 = vmatprep.mubr.f32.mxu0 0.0
      %7043 = vmatmul.mubr.f32.gmra.mrb[0].mxu0 %v4875
      %v7044 = vpop.f32.mrb[0].mxu0
      %v7045 = vadd.f32 0.0, %v7044
      %v7046 = vpop.f32.mrb[0].mxu0
      %7047 = vmatprep.mubr.f32.mxu0 0.0
      %7048 = vmatmul.mubr.f32.gmra.mrb[0].mxu0 %v6826
      %v7049 = vpop.f32.mrb[0].mxu0
      %v7050 = vadd.f32 0.0, %v7049
      %v7051 = vpop.f32.mrb[0].mxu0
      %7052 = vmatprep.mubr.f32.mxu0 0.0
      %7053 = vmatmul.mubr.f32.gmra.mrb[0].mxu0 %v6828
      %v7054 = vpop.f32.mrb[0].mxu0
      %v7055 = vadd.f32 0.0, %v7054
      %v7056 = vpop.f32.mrb[0].mxu0
      %7057 = vdwg.mxu0
      %v7058 = vadd.f32 %v6792, %v6900
      %v7059 = vadd.f32 %v6793, %v6905
      %v7060 = vadd.f32 %v6794, %v6910
      %v7061 = vadd.f32 %v6795, %v6915
      %v7062 = vadd.f32 %v6796, %v6920
      %v7063 = vadd.f32 %v6797, %v6925
      %v7064 = vadd.f32 %v6798, %v6930
      %v7065 = vadd.f32 %v6799, %v6935
      %v7066 = vadd.f32 %v6800, %v6940
      %v7067 = vadd.f32 %v6801, %v6945
      %v7068 = vadd.f32 %v6802, %v6950
      %v7069 = vadd.f32 %v6803, %v6955
      %v7070 = vadd.f32 %v6804, %v6960
      %v7071 = vadd.f32 %v6805, %v6965
      %v7072 = vadd.f32 %v6806, %v6970
      %v7073 = vadd.f32 %v6807, %v6975
      %v7074 = vadd.f32 %v6808, %v6980
      %v7075 = vadd.f32 %v6809, %v6985
      %v7076 = vadd.f32 %v6810, %v6990
      %v7077 = vadd.f32 %v6811, %v6995
      %v7078 = vadd.f32 %v6812, %v7000
      %v7079 = vadd.f32 %v6813, %v7005
      %v7080 = vadd.f32 %v6814, %v7010
      %v7081 = vadd.f32 %v6815, %v7015
      %v7082 = vadd.f32 %v6816, %v7020
      %v7083 = vadd.f32 %v6817, %v7025
      %v7084 = vadd.f32 %v6818, %v7030
      %v7085 = vadd.f32 %v6819, %v7035
      %v7086 = vadd.f32 %v6820, %v7040
      %v7087 = vadd.f32 %v6821, %v7045
      %v7088 = vadd.f32 %v6822, %v7050
      %v7089 = vadd.f32 %v6823, %v7055
      %v7090 = vrot.slane %v337, 1
      %v7091 = vrot.slane %v338, 1
      %v7092 = vsel %vm468, %v7090, %v7091
      %v7094 = vsel %vm468, %v7091, 0.0
      %s7095 = scalar_lea.vmem %s2, 20
      %v7096 = vld [vmem:[%s7095] sm:$0xf]
      %v7097 = vsel %vm3878, %v7092, 0
      %v7100 = vsel %vm3878, %v7094, 0
      %v7103 = vsel %vm3959, %v7096, 0
      %7105 = vmatprep.subr.mxu0 0.0
      %7106 = vmatpush1.msra.mxu0 %v7103
      %7107 = vmatprep.subr.mxu0 0.0
      %7108 = vmatpush1.msra.mxu0 0.0
      %7109 = vmatprep.subr.mxu0 0.0
      %7110 = vmatpush1.msra.mxu0 0.0
      %7111 = vmatprep.subr.mxu0 0.0
      %7112 = vmatpush1.msra.mxu0 0.0
      %7113 = vmatprep.subr.mxu0 0.0
      %7114 = vmatpush1.msra.mxu0 0.0
      %7115 = vmatprep.subr.mxu0 0.0
      %7116 = vmatpush1.msra.mxu0 0.0
      %7117 = vmatprep.subr.mxu0 0.0
      %7118 = vmatpush1.msra.mxu0 0.0
      %7119 = vmatprep.subr.mxu0 0.0
      %7120 = vmatpush1.msra.mxu0 0.0
      %7121 = vmatprep.subr.mxu0 0.0
      %7122 = vmatpush1.msra.mxu0 0.0
      %7123 = vmatprep.subr.mxu0 0.0
      %7124 = vmatpush1.msra.mxu0 0.0
      %7125 = vmatprep.subr.mxu0 0.0
      %7126 = vmatpush1.msra.mxu0 0.0
      %7127 = vmatprep.subr.mxu0 0.0
      %7128 = vmatpush1.msra.mxu0 0.0
      %7129 = vmatprep.subr.mxu0 0.0
      %7130 = vmatpush1.msra.mxu0 0.0
      %7131 = vmatprep.subr.mxu0 0.0
      %7132 = vmatpush1.msra.mxu0 0.0
      %7133 = vmatprep.subr.mxu0 0.0
      %7134 = vmatpush1.msra.mxu0 0.0
      %7135 = vmatprep.subr.mxu0 0.0
      %7136 = vmatpush1.msra.mxu0 0.0
      %7137 = vmatprep.subr.mxu0 0.0
      %7138 = vmatpush1.msra.mxu0 0.0
      %7139 = vmatprep.subr.mxu0 0.0
      %7140 = vmatpush1.msra.mxu0 0.0
      %7141 = vmatprep.subr.mxu0 0.0
      %7142 = vmatpush1.msra.mxu0 0.0
      %7143 = vmatprep.subr.mxu0 0.0
      %7144 = vmatpush1.msra.mxu0 0.0
      %7145 = vmatprep.subr.mxu0 0.0
      %7146 = vmatpush1.msra.mxu0 0.0
      %7147 = vmatprep.subr.mxu0 0.0
      %7148 = vmatpush1.msra.mxu0 0.0
      %7149 = vmatprep.subr.mxu0 0.0
      %7150 = vmatpush1.msra.mxu0 0.0
      %7151 = vmatprep.subr.mxu0 0.0
      %7152 = vmatpush1.msra.mxu0 0.0
      %7153 = vmatprep.subr.mxu0 0.0
      %7154 = vmatpush1.msra.mxu0 0.0
      %7155 = vmatprep.subr.mxu0 0.0
      %7156 = vmatpush1.msra.mxu0 0.0
      %7157 = vmatprep.subr.mxu0 0.0
      %7158 = vmatpush1.msra.mxu0 0.0
      %7159 = vmatprep.subr.mxu0 0.0
      %7160 = vmatpush1.msra.mxu0 0.0
      %7161 = vmatprep.subr.mxu0 0.0
      %7162 = vmatpush1.msra.mxu0 0.0
      %7163 = vmatprep.subr.mxu0 0.0
      %7164 = vmatpush1.msra.mxu0 0.0
      %7165 = vmatprep.subr.mxu0 0.0
      %7166 = vmatpush1.msra.mxu0 0.0
      %7167 = vmatprep.subr.mxu0 0.0
      %7168 = vmatpush1.msra.mxu0 0.0
      %7169 = vmatprep.mubr.f32.mxu0 0.0
      %7170 = vmatmul.mubr.f32.gmra.mrb[0].mxu0 %v5223
      %v7171 = vpop.f32.mrb[0].mxu0
      %v7172 = vadd.f32 0.0, %v7171
      %v7173 = vpop.f32.mrb[0].mxu0
      %7174 = vmatprep.mubr.f32.mxu0 0.0
      %7175 = vmatmul.mubr.f32.gmra.mrb[0].mxu0 %v5226
      %v7176 = vpop.f32.mrb[0].mxu0
      %v7177 = vadd.f32 0.0, %v7176
      %v7178 = vpop.f32.mrb[0].mxu0
      %7179 = vmatprep.mubr.f32.mxu0 0.0
      %7180 = vmatmul.mubr.f32.gmra.mrb[0].mxu0 %v5228
      %v7181 = vpop.f32.mrb[0].mxu0
      %v7182 = vadd.f32 0.0, %v7181
      %v7183 = vpop.f32.mrb[0].mxu0
      %7184 = vmatprep.mubr.f32.mxu0 0.0
      %7185 = vmatmul.mubr.f32.gmra.mrb[0].mxu0 %v5231
      %v7186 = vpop.f32.mrb[0].mxu0
      %v7187 = vadd.f32 0.0, %v7186
      %v7188 = vpop.f32.mrb[0].mxu0
      %7189 = vmatprep.mubr.f32.mxu0 0.0
      %7190 = vmatmul.mubr.f32.gmra.mrb[0].mxu0 %v5233
      %v7191 = vpop.f32.mrb[0].mxu0
      %v7192 = vadd.f32 0.0, %v7191
      %v7193 = vpop.f32.mrb[0].mxu0
      %7194 = vmatprep.mubr.f32.mxu0 0.0
      %7195 = vmatmul.mubr.f32.gmra.mrb[0].mxu0 %v5236
      %v7196 = vpop.f32.mrb[0].mxu0
      %v7197 = vadd.f32 0.0, %v7196
      %v7198 = vpop.f32.mrb[0].mxu0
      %7199 = vmatprep.mubr.f32.mxu0 0.0
      %7200 = vmatmul.mubr.f32.gmra.mrb[0].mxu0 %v5238
      %v7201 = vpop.f32.mrb[0].mxu0
      %v7202 = vadd.f32 0.0, %v7201
      %v7203 = vpop.f32.mrb[0].mxu0
      %7204 = vmatprep.mubr.f32.mxu0 0.0
      %7205 = vmatmul.mubr.f32.gmra.mrb[0].mxu0 %v5241
      %v7206 = vpop.f32.mrb[0].mxu0
      %v7207 = vadd.f32 0.0, %v7206
      %v7208 = vpop.f32.mrb[0].mxu0
      %7209 = vmatprep.mubr.f32.mxu0 0.0
      %7210 = vmatmul.mubr.f32.gmra.mrb[0].mxu0 %v5243
      %v7211 = vpop.f32.mrb[0].mxu0
      %v7212 = vadd.f32 0.0, %v7211
      %v7213 = vpop.f32.mrb[0].mxu0
      %7214 = vmatprep.mubr.f32.mxu0 0.0
      %7215 = vmatmul.mubr.f32.gmra.mrb[0].mxu0 %v5246
      %v7216 = vpop.f32.mrb[0].mxu0
      %v7217 = vadd.f32 0.0, %v7216
      %v7218 = vpop.f32.mrb[0].mxu0
      %7219 = vmatprep.mubr.f32.mxu0 0.0
      %7220 = vmatmul.mubr.f32.gmra.mrb[0].mxu0 %v5248
      %v7221 = vpop.f32.mrb[0].mxu0
      %v7222 = vadd.f32 0.0, %v7221
      %v7223 = vpop.f32.mrb[0].mxu0
      %7224 = vmatprep.mubr.f32.mxu0 0.0
      %7225 = vmatmul.mubr.f32.gmra.mrb[0].mxu0 %v5251
      %v7226 = vpop.f32.mrb[0].mxu0
      %v7227 = vadd.f32 0.0, %v7226
      %v7228 = vpop.f32.mrb[0].mxu0
      %7229 = vmatprep.mubr.f32.mxu0 0.0
      %7230 = vmatmul.mubr.f32.gmra.mrb[0].mxu0 %v5253
      %v7231 = vpop.f32.mrb[0].mxu0
      %v7232 = vadd.f32 0.0, %v7231
      %v7233 = vpop.f32.mrb[0].mxu0
      %7234 = vmatprep.mubr.f32.mxu0 0.0
      %7235 = vmatmul.mubr.f32.gmra.mrb[0].mxu0 %v5256
      %v7236 = vpop.f32.mrb[0].mxu0
      %v7237 = vadd.f32 0.0, %v7236
      %v7238 = vpop.f32.mrb[0].mxu0
      %7239 = vmatprep.mubr.f32.mxu0 0.0
      %7240 = vmatmul.mubr.f32.gmra.mrb[0].mxu0 %v5258
      %v7241 = vpop.f32.mrb[0].mxu0
      %v7242 = vadd.f32 0.0, %v7241
      %v7243 = vpop.f32.mrb[0].mxu0
      %7244 = vmatprep.mubr.f32.mxu0 0.0
      %7245 = vmatmul.mubr.f32.gmra.mrb[0].mxu0 %v5261
      %v7246 = vpop.f32.mrb[0].mxu0
      %v7247 = vadd.f32 0.0, %v7246
      %v7248 = vpop.f32.mrb[0].mxu0
      %7249 = vmatprep.mubr.f32.mxu0 0.0
      %7250 = vmatmul.mubr.f32.gmra.mrb[0].mxu0 %v5263
      %v7251 = vpop.f32.mrb[0].mxu0
      %v7252 = vadd.f32 0.0, %v7251
      %v7253 = vpop.f32.mrb[0].mxu0
      %7254 = vmatprep.mubr.f32.mxu0 0.0
      %7255 = vmatmul.mubr.f32.gmra.mrb[0].mxu0 %v5266
      %v7256 = vpop.f32.mrb[0].mxu0
      %v7257 = vadd.f32 0.0, %v7256
      %v7258 = vpop.f32.mrb[0].mxu0
      %7259 = vmatprep.mubr.f32.mxu0 0.0
      %7260 = vmatmul.mubr.f32.gmra.mrb[0].mxu0 %v5268
      %v7261 = vpop.f32.mrb[0].mxu0
      %v7262 = vadd.f32 0.0, %v7261
      %v7263 = vpop.f32.mrb[0].mxu0
      %7264 = vmatprep.mubr.f32.mxu0 0.0
      %7265 = vmatmul.mubr.f32.gmra.mrb[0].mxu0 %v5271
      %v7266 = vpop.f32.mrb[0].mxu0
      %v7267 = vadd.f32 0.0, %v7266
      %v7268 = vpop.f32.mrb[0].mxu0
      %7269 = vmatprep.mubr.f32.mxu0 0.0
      %7270 = vmatmul.mubr.f32.gmra.mrb[0].mxu0 %v5273
      %v7271 = vpop.f32.mrb[0].mxu0
      %v7272 = vadd.f32 0.0, %v7271
      %v7273 = vpop.f32.mrb[0].mxu0
      %7274 = vmatprep.mubr.f32.mxu0 0.0
      %7275 = vmatmul.mubr.f32.gmra.mrb[0].mxu0 %v5276
      %v7276 = vpop.f32.mrb[0].mxu0
      %v7277 = vadd.f32 0.0, %v7276
      %v7278 = vpop.f32.mrb[0].mxu0
      %7279 = vmatprep.mubr.f32.mxu0 0.0
      %7280 = vmatmul.mubr.f32.gmra.mrb[0].mxu0 %v5278
      %v7281 = vpop.f32.mrb[0].mxu0
      %v7282 = vadd.f32 0.0, %v7281
      %v7283 = vpop.f32.mrb[0].mxu0
      %7284 = vmatprep.mubr.f32.mxu0 0.0
      %7285 = vmatmul.mubr.f32.gmra.mrb[0].mxu0 %v5281
      %v7286 = vpop.f32.mrb[0].mxu0
      %v7287 = vadd.f32 0.0, %v7286
      %v7288 = vpop.f32.mrb[0].mxu0
      %7289 = vmatprep.mubr.f32.mxu0 0.0
      %7290 = vmatmul.mubr.f32.gmra.mrb[0].mxu0 %v5283
      %v7291 = vpop.f32.mrb[0].mxu0
      %v7292 = vadd.f32 0.0, %v7291
      %v7293 = vpop.f32.mrb[0].mxu0
      %7294 = vmatprep.mubr.f32.mxu0 0.0
      %7295 = vmatmul.mubr.f32.gmra.mrb[0].mxu0 %v5286
      %v7296 = vpop.f32.mrb[0].mxu0
      %v7297 = vadd.f32 0.0, %v7296
      %v7298 = vpop.f32.mrb[0].mxu0
      %7299 = vmatprep.mubr.f32.mxu0 0.0
      %7300 = vmatmul.mubr.f32.gmra.mrb[0].mxu0 %v5288
      %v7301 = vpop.f32.mrb[0].mxu0
      %v7302 = vadd.f32 0.0, %v7301
      %v7303 = vpop.f32.mrb[0].mxu0
      %7304 = vmatprep.mubr.f32.mxu0 0.0
      %7305 = vmatmul.mubr.f32.gmra.mrb[0].mxu0 %v5291
      %v7306 = vpop.f32.mrb[0].mxu0
      %v7307 = vadd.f32 0.0, %v7306
      %v7308 = vpop.f32.mrb[0].mxu0
      %7309 = vmatprep.mubr.f32.mxu0 0.0
      %7310 = vmatmul.mubr.f32.gmra.mrb[0].mxu0 %v5293
      %v7311 = vpop.f32.mrb[0].mxu0
      %v7312 = vadd.f32 0.0, %v7311
      %v7313 = vpop.f32.mrb[0].mxu0
      %7314 = vmatprep.mubr.f32.mxu0 0.0
      %7315 = vmatmul.mubr.f32.gmra.mrb[0].mxu0 %v5296
      %v7316 = vpop.f32.mrb[0].mxu0
      %v7317 = vadd.f32 0.0, %v7316
      %v7318 = vpop.f32.mrb[0].mxu0
      %7319 = vmatprep.mubr.f32.mxu0 0.0
      %7320 = vmatmul.mubr.f32.gmra.mrb[0].mxu0 %v7097
      %v7321 = vpop.f32.mrb[0].mxu0
      %v7322 = vadd.f32 0.0, %v7321
      %v7323 = vpop.f32.mrb[0].mxu0
      %7324 = vmatprep.mubr.f32.mxu0 0.0
      %7325 = vmatmul.mubr.f32.gmra.mrb[0].mxu0 %v7100
      %v7326 = vpop.f32.mrb[0].mxu0
      %v7327 = vadd.f32 0.0, %v7326
      %v7328 = vpop.f32.mrb[0].mxu0
      %7329 = vdwg.mxu0
      %v7330 = vadd.f32 %v7058, %v7172
      %v7331 = vadd.f32 %v7059, %v7177
      %v7332 = vadd.f32 %v7060, %v7182
      %v7333 = vadd.f32 %v7061, %v7187
      %v7334 = vadd.f32 %v7062, %v7192
      %v7335 = vadd.f32 %v7063, %v7197
      %v7336 = vadd.f32 %v7064, %v7202
      %v7337 = vadd.f32 %v7065, %v7207
      %v7338 = vadd.f32 %v7066, %v7212
      %v7339 = vadd.f32 %v7067, %v7217
      %v7340 = vadd.f32 %v7068, %v7222
      %v7341 = vadd.f32 %v7069, %v7227
      %v7342 = vadd.f32 %v7070, %v7232
      %v7343 = vadd.f32 %v7071, %v7237
      %v7344 = vadd.f32 %v7072, %v7242
      %v7345 = vadd.f32 %v7073, %v7247
      %v7346 = vadd.f32 %v7074, %v7252
      %v7347 = vadd.f32 %v7075, %v7257
      %v7348 = vadd.f32 %v7076, %v7262
      %v7349 = vadd.f32 %v7077, %v7267
      %v7350 = vadd.f32 %v7078, %v7272
      %v7351 = vadd.f32 %v7079, %v7277
      %v7352 = vadd.f32 %v7080, %v7282
      %v7353 = vadd.f32 %v7081, %v7287
      %v7354 = vadd.f32 %v7082, %v7292
      %v7355 = vadd.f32 %v7083, %v7297
      %v7356 = vadd.f32 %v7084, %v7302
      %v7357 = vadd.f32 %v7085, %v7307
      %v7358 = vadd.f32 %v7086, %v7312
      %v7359 = vadd.f32 %v7087, %v7317
      %v7360 = vadd.f32 %v7088, %v7322
      %v7361 = vadd.f32 %v7089, %v7327
      %v7362 = vrot.slane %v6268, 1
      %v7363 = vrot.slane %v6285, 1
      %v7364 = vsel %vm468, %v7362, %v7363
      %v7366 = vsel %vm468, %v7363, 0.0
      %s7367 = scalar_lea.vmem %s3, 20
      %v7368 = vld [vmem:[%s7367] sm:$0xf]
      %v7369 = vsel %vm3878, %v7364, 0
      %v7372 = vsel %vm3878, %v7366, 0
      %v7375 = vsel %vm3959, %v7368, 0
      %7377 = vmatprep.subr.mxu0 0.0
      %7378 = vmatpush1.msra.mxu0 %v7375
      %7379 = vmatprep.subr.mxu0 0.0
      %7380 = vmatpush1.msra.mxu0 0.0
      %7381 = vmatprep.subr.mxu0 0.0
      %7382 = vmatpush1.msra.mxu0 0.0
      %7383 = vmatprep.subr.mxu0 0.0
      %7384 = vmatpush1.msra.mxu0 0.0
      %7385 = vmatprep.subr.mxu0 0.0
      %7386 = vmatpush1.msra.mxu0 0.0
      %7387 = vmatprep.subr.mxu0 0.0
      %7388 = vmatpush1.msra.mxu0 0.0
      %7389 = vmatprep.subr.mxu0 0.0
      %7390 = vmatpush1.msra.mxu0 0.0
      %7391 = vmatprep.subr.mxu0 0.0
      %7392 = vmatpush1.msra.mxu0 0.0
      %7393 = vmatprep.subr.mxu0 0.0
      %7394 = vmatpush1.msra.mxu0 0.0
      %7395 = vmatprep.subr.mxu0 0.0
      %7396 = vmatpush1.msra.mxu0 0.0
      %7397 = vmatprep.subr.mxu0 0.0
      %7398 = vmatpush1.msra.mxu0 0.0
      %7399 = vmatprep.subr.mxu0 0.0
      %7400 = vmatpush1.msra.mxu0 0.0
      %7401 = vmatprep.subr.mxu0 0.0
      %7402 = vmatpush1.msra.mxu0 0.0
      %7403 = vmatprep.subr.mxu0 0.0
      %7404 = vmatpush1.msra.mxu0 0.0
      %7405 = vmatprep.subr.mxu0 0.0
      %7406 = vmatpush1.msra.mxu0 0.0
      %7407 = vmatprep.subr.mxu0 0.0
      %7408 = vmatpush1.msra.mxu0 0.0
      %7409 = vmatprep.subr.mxu0 0.0
      %7410 = vmatpush1.msra.mxu0 0.0
      %7411 = vmatprep.subr.mxu0 0.0
      %7412 = vmatpush1.msra.mxu0 0.0
      %7413 = vmatprep.subr.mxu0 0.0
      %7414 = vmatpush1.msra.mxu0 0.0
      %7415 = vmatprep.subr.mxu0 0.0
      %7416 = vmatpush1.msra.mxu0 0.0
      %7417 = vmatprep.subr.mxu0 0.0
      %7418 = vmatpush1.msra.mxu0 0.0
      %7419 = vmatprep.subr.mxu0 0.0
      %7420 = vmatpush1.msra.mxu0 0.0
      %7421 = vmatprep.subr.mxu0 0.0
      %7422 = vmatpush1.msra.mxu0 0.0
      %7423 = vmatprep.subr.mxu0 0.0
      %7424 = vmatpush1.msra.mxu0 0.0
      %7425 = vmatprep.subr.mxu0 0.0
      %7426 = vmatpush1.msra.mxu0 0.0
      %7427 = vmatprep.subr.mxu0 0.0
      %7428 = vmatpush1.msra.mxu0 0.0
      %7429 = vmatprep.subr.mxu0 0.0
      %7430 = vmatpush1.msra.mxu0 0.0
      %7431 = vmatprep.subr.mxu0 0.0
      %7432 = vmatpush1.msra.mxu0 0.0
      %7433 = vmatprep.subr.mxu0 0.0
      %7434 = vmatpush1.msra.mxu0 0.0
      %7435 = vmatprep.subr.mxu0 0.0
      %7436 = vmatpush1.msra.mxu0 0.0
      %7437 = vmatprep.subr.mxu0 0.0
      %7438 = vmatpush1.msra.mxu0 0.0
      %7439 = vmatprep.subr.mxu0 0.0
      %7440 = vmatpush1.msra.mxu0 0.0
      %7441 = vmatprep.mubr.f32.mxu0 0.0
      %7442 = vmatmul.mubr.f32.gmra.mrb[0].mxu0 %v5635
      %v7443 = vpop.f32.mrb[0].mxu0
      %v7444 = vadd.f32 0.0, %v7443
      %v7445 = vpop.f32.mrb[0].mxu0
      %7446 = vmatprep.mubr.f32.mxu0 0.0
      %7447 = vmatmul.mubr.f32.gmra.mrb[0].mxu0 %v5638
      %v7448 = vpop.f32.mrb[0].mxu0
      %v7449 = vadd.f32 0.0, %v7448
      %v7450 = vpop.f32.mrb[0].mxu0
      %7451 = vmatprep.mubr.f32.mxu0 0.0
      %7452 = vmatmul.mubr.f32.gmra.mrb[0].mxu0 %v5640
      %v7453 = vpop.f32.mrb[0].mxu0
      %v7454 = vadd.f32 0.0, %v7453
      %v7455 = vpop.f32.mrb[0].mxu0
      %7456 = vmatprep.mubr.f32.mxu0 0.0
      %7457 = vmatmul.mubr.f32.gmra.mrb[0].mxu0 %v5643
      %v7458 = vpop.f32.mrb[0].mxu0
      %v7459 = vadd.f32 0.0, %v7458
      %v7460 = vpop.f32.mrb[0].mxu0
      %7461 = vmatprep.mubr.f32.mxu0 0.0
      %7462 = vmatmul.mubr.f32.gmra.mrb[0].mxu0 %v5645
      %v7463 = vpop.f32.mrb[0].mxu0
      %v7464 = vadd.f32 0.0, %v7463
      %v7465 = vpop.f32.mrb[0].mxu0
      %7466 = vmatprep.mubr.f32.mxu0 0.0
      %7467 = vmatmul.mubr.f32.gmra.mrb[0].mxu0 %v5648
      %v7468 = vpop.f32.mrb[0].mxu0
      %v7469 = vadd.f32 0.0, %v7468
      %v7470 = vpop.f32.mrb[0].mxu0
      %7471 = vmatprep.mubr.f32.mxu0 0.0
      %7472 = vmatmul.mubr.f32.gmra.mrb[0].mxu0 %v5650
      %v7473 = vpop.f32.mrb[0].mxu0
      %v7474 = vadd.f32 0.0, %v7473
      %v7475 = vpop.f32.mrb[0].mxu0
      %7476 = vmatprep.mubr.f32.mxu0 0.0
      %7477 = vmatmul.mubr.f32.gmra.mrb[0].mxu0 %v5653
      %v7478 = vpop.f32.mrb[0].mxu0
      %v7479 = vadd.f32 0.0, %v7478
      %v7480 = vpop.f32.mrb[0].mxu0
      %7481 = vmatprep.mubr.f32.mxu0 0.0
      %7482 = vmatmul.mubr.f32.gmra.mrb[0].mxu0 %v5655
      %v7483 = vpop.f32.mrb[0].mxu0
      %v7484 = vadd.f32 0.0, %v7483
      %v7485 = vpop.f32.mrb[0].mxu0
      %7486 = vmatprep.mubr.f32.mxu0 0.0
      %7487 = vmatmul.mubr.f32.gmra.mrb[0].mxu0 %v5658
      %v7488 = vpop.f32.mrb[0].mxu0
      %v7489 = vadd.f32 0.0, %v7488
      %v7490 = vpop.f32.mrb[0].mxu0
      %7491 = vmatprep.mubr.f32.mxu0 0.0
      %7492 = vmatmul.mubr.f32.gmra.mrb[0].mxu0 %v5660
      %v7493 = vpop.f32.mrb[0].mxu0
      %v7494 = vadd.f32 0.0, %v7493
      %v7495 = vpop.f32.mrb[0].mxu0
      %7496 = vmatprep.mubr.f32.mxu0 0.0
      %7497 = vmatmul.mubr.f32.gmra.mrb[0].mxu0 %v5663
      %v7498 = vpop.f32.mrb[0].mxu0
      %v7499 = vadd.f32 0.0, %v7498
      %v7500 = vpop.f32.mrb[0].mxu0
      %7501 = vmatprep.mubr.f32.mxu0 0.0
      %7502 = vmatmul.mubr.f32.gmra.mrb[0].mxu0 %v5665
      %v7503 = vpop.f32.mrb[0].mxu0
      %v7504 = vadd.f32 0.0, %v7503
      %v7505 = vpop.f32.mrb[0].mxu0
      %7506 = vmatprep.mubr.f32.mxu0 0.0
      %7507 = vmatmul.mubr.f32.gmra.mrb[0].mxu0 %v5668
      %v7508 = vpop.f32.mrb[0].mxu0
      %v7509 = vadd.f32 0.0, %v7508
      %v7510 = vpop.f32.mrb[0].mxu0
      %7511 = vmatprep.mubr.f32.mxu0 0.0
      %7512 = vmatmul.mubr.f32.gmra.mrb[0].mxu0 %v5670
      %v7513 = vpop.f32.mrb[0].mxu0
      %v7514 = vadd.f32 0.0, %v7513
      %v7515 = vpop.f32.mrb[0].mxu0
      %7516 = vmatprep.mubr.f32.mxu0 0.0
      %7517 = vmatmul.mubr.f32.gmra.mrb[0].mxu0 %v5673
      %v7518 = vpop.f32.mrb[0].mxu0
      %v7519 = vadd.f32 0.0, %v7518
      %v7520 = vpop.f32.mrb[0].mxu0
      %7521 = vmatprep.mubr.f32.mxu0 0.0
      %7522 = vmatmul.mubr.f32.gmra.mrb[0].mxu0 %v5675
      %v7523 = vpop.f32.mrb[0].mxu0
      %v7524 = vadd.f32 0.0, %v7523
      %v7525 = vpop.f32.mrb[0].mxu0
      %7526 = vmatprep.mubr.f32.mxu0 0.0
      %7527 = vmatmul.mubr.f32.gmra.mrb[0].mxu0 %v5678
      %v7528 = vpop.f32.mrb[0].mxu0
      %v7529 = vadd.f32 0.0, %v7528
      %v7530 = vpop.f32.mrb[0].mxu0
      %7531 = vmatprep.mubr.f32.mxu0 0.0
      %7532 = vmatmul.mubr.f32.gmra.mrb[0].mxu0 %v5680
      %v7533 = vpop.f32.mrb[0].mxu0
      %v7534 = vadd.f32 0.0, %v7533
      %v7535 = vpop.f32.mrb[0].mxu0
      %7536 = vmatprep.mubr.f32.mxu0 0.0
      %7537 = vmatmul.mubr.f32.gmra.mrb[0].mxu0 %v5683
      %v7538 = vpop.f32.mrb[0].mxu0
      %v7539 = vadd.f32 0.0, %v7538
      %v7540 = vpop.f32.mrb[0].mxu0
      %7541 = vmatprep.mubr.f32.mxu0 0.0
      %7542 = vmatmul.mubr.f32.gmra.mrb[0].mxu0 %v5685
      %v7543 = vpop.f32.mrb[0].mxu0
      %v7544 = vadd.f32 0.0, %v7543
      %v7545 = vpop.f32.mrb[0].mxu0
      %7546 = vmatprep.mubr.f32.mxu0 0.0
      %7547 = vmatmul.mubr.f32.gmra.mrb[0].mxu0 %v5688
      %v7548 = vpop.f32.mrb[0].mxu0
      %v7549 = vadd.f32 0.0, %v7548
      %v7550 = vpop.f32.mrb[0].mxu0
      %7551 = vmatprep.mubr.f32.mxu0 0.0
      %7552 = vmatmul.mubr.f32.gmra.mrb[0].mxu0 %v5690
      %v7553 = vpop.f32.mrb[0].mxu0
      %v7554 = vadd.f32 0.0, %v7553
      %v7555 = vpop.f32.mrb[0].mxu0
      %7556 = vmatprep.mubr.f32.mxu0 0.0
      %7557 = vmatmul.mubr.f32.gmra.mrb[0].mxu0 %v5693
      %v7558 = vpop.f32.mrb[0].mxu0
      %v7559 = vadd.f32 0.0, %v7558
      %v7560 = vpop.f32.mrb[0].mxu0
      %7561 = vmatprep.mubr.f32.mxu0 0.0
      %7562 = vmatmul.mubr.f32.gmra.mrb[0].mxu0 %v5695
      %v7563 = vpop.f32.mrb[0].mxu0
      %v7564 = vadd.f32 0.0, %v7563
      %v7565 = vpop.f32.mrb[0].mxu0
      %7566 = vmatprep.mubr.f32.mxu0 0.0
      %7567 = vmatmul.mubr.f32.gmra.mrb[0].mxu0 %v5698
      %v7568 = vpop.f32.mrb[0].mxu0
      %v7569 = vadd.f32 0.0, %v7568
      %v7570 = vpop.f32.mrb[0].mxu0
      %7571 = vmatprep.mubr.f32.mxu0 0.0
      %7572 = vmatmul.mubr.f32.gmra.mrb[0].mxu0 %v5700
      %v7573 = vpop.f32.mrb[0].mxu0
      %v7574 = vadd.f32 0.0, %v7573
      %v7575 = vpop.f32.mrb[0].mxu0
      %7576 = vmatprep.mubr.f32.mxu0 0.0
      %7577 = vmatmul.mubr.f32.gmra.mrb[0].mxu0 %v5703
      %v7578 = vpop.f32.mrb[0].mxu0
      %v7579 = vadd.f32 0.0, %v7578
      %v7580 = vpop.f32.mrb[0].mxu0
      %7581 = vmatprep.mubr.f32.mxu0 0.0
      %7582 = vmatmul.mubr.f32.gmra.mrb[0].mxu0 %v5705
      %v7583 = vpop.f32.mrb[0].mxu0
      %v7584 = vadd.f32 0.0, %v7583
      %v7585 = vpop.f32.mrb[0].mxu0
      %7586 = vmatprep.mubr.f32.mxu0 0.0
      %7587 = vmatmul.mubr.f32.gmra.mrb[0].mxu0 %v5708
      %v7588 = vpop.f32.mrb[0].mxu0
      %v7589 = vadd.f32 0.0, %v7588
      %v7590 = vpop.f32.mrb[0].mxu0
      %7591 = vmatprep.mubr.f32.mxu0 0.0
      %7592 = vmatmul.mubr.f32.gmra.mrb[0].mxu0 %v7369
      %v7593 = vpop.f32.mrb[0].mxu0
      %v7594 = vadd.f32 0.0, %v7593
      %v7595 = vpop.f32.mrb[0].mxu0
      %7596 = vmatprep.mubr.f32.mxu0 0.0
      %7597 = vmatmul.mubr.f32.gmra.mrb[0].mxu0 %v7372
      %v7598 = vpop.f32.mrb[0].mxu0
      %v7599 = vadd.f32 0.0, %v7598
      %v7600 = vpop.f32.mrb[0].mxu0
      %7601 = vdwg.mxu0
      %v7602 = vadd.f32 %v7330, %v7444
      %v7603 = vadd.f32 %v7331, %v7449
      %v7604 = vadd.f32 %v7332, %v7454
      %v7605 = vadd.f32 %v7333, %v7459
      %v7606 = vadd.f32 %v7334, %v7464
      %v7607 = vadd.f32 %v7335, %v7469
      %v7608 = vadd.f32 %v7336, %v7474
      %v7609 = vadd.f32 %v7337, %v7479
      %v7610 = vadd.f32 %v7338, %v7484
      %v7611 = vadd.f32 %v7339, %v7489
      %v7612 = vadd.f32 %v7340, %v7494
      %v7613 = vadd.f32 %v7341, %v7499
      %v7614 = vadd.f32 %v7342, %v7504
      %v7615 = vadd.f32 %v7343, %v7509
      %v7616 = vadd.f32 %v7344, %v7514
      %v7617 = vadd.f32 %v7345, %v7519
      %v7618 = vadd.f32 %v7346, %v7524
      %v7619 = vadd.f32 %v7347, %v7529
      %v7620 = vadd.f32 %v7348, %v7534
      %v7621 = vadd.f32 %v7349, %v7539
      %v7622 = vadd.f32 %v7350, %v7544
      %v7623 = vadd.f32 %v7351, %v7549
      %v7624 = vadd.f32 %v7352, %v7554
      %v7625 = vadd.f32 %v7353, %v7559
      %v7626 = vadd.f32 %v7354, %v7564
      %v7627 = vadd.f32 %v7355, %v7569
      %v7628 = vadd.f32 %v7356, %v7574
      %v7629 = vadd.f32 %v7357, %v7579
      %v7630 = vadd.f32 %v7358, %v7584
      %v7631 = vadd.f32 %v7359, %v7589
      %v7632 = vadd.f32 %v7360, %v7594
      %v7633 = vadd.f32 %v7361, %v7599
      %s7634 = scalar_lea.vmem %s2, 24
      %v7635 = vld [vmem:[%s7634] sm:$0xf]
      %v7637 = vsel %vm3959, %v7635, 0
      %7639 = vmatprep.subr.mxu0 0.0
      %7640 = vmatpush1.msra.mxu0 %v7637
      %7641 = vmatprep.subr.mxu0 0.0
      %7642 = vmatpush1.msra.mxu0 0.0
      %7643 = vmatprep.subr.mxu0 0.0
      %7644 = vmatpush1.msra.mxu0 0.0
      %7645 = vmatprep.subr.mxu0 0.0
      %7646 = vmatpush1.msra.mxu0 0.0
      %7647 = vmatprep.subr.mxu0 0.0
      %7648 = vmatpush1.msra.mxu0 0.0
      %7649 = vmatprep.subr.mxu0 0.0
      %7650 = vmatpush1.msra.mxu0 0.0
      %7651 = vmatprep.subr.mxu0 0.0
      %7652 = vmatpush1.msra.mxu0 0.0
      %7653 = vmatprep.subr.mxu0 0.0
      %7654 = vmatpush1.msra.mxu0 0.0
      %7655 = vmatprep.subr.mxu0 0.0
      %7656 = vmatpush1.msra.mxu0 0.0
      %7657 = vmatprep.subr.mxu0 0.0
      %7658 = vmatpush1.msra.mxu0 0.0
      %7659 = vmatprep.subr.mxu0 0.0
      %7660 = vmatpush1.msra.mxu0 0.0
      %7661 = vmatprep.subr.mxu0 0.0
      %7662 = vmatpush1.msra.mxu0 0.0
      %7663 = vmatprep.subr.mxu0 0.0
      %7664 = vmatpush1.msra.mxu0 0.0
      %7665 = vmatprep.subr.mxu0 0.0
      %7666 = vmatpush1.msra.mxu0 0.0
      %7667 = vmatprep.subr.mxu0 0.0
      %7668 = vmatpush1.msra.mxu0 0.0
      %7669 = vmatprep.subr.mxu0 0.0
      %7670 = vmatpush1.msra.mxu0 0.0
      %7671 = vmatprep.subr.mxu0 0.0
      %7672 = vmatpush1.msra.mxu0 0.0
      %7673 = vmatprep.subr.mxu0 0.0
      %7674 = vmatpush1.msra.mxu0 0.0
      %7675 = vmatprep.subr.mxu0 0.0
      %7676 = vmatpush1.msra.mxu0 0.0
      %7677 = vmatprep.subr.mxu0 0.0
      %7678 = vmatpush1.msra.mxu0 0.0
      %7679 = vmatprep.subr.mxu0 0.0
      %7680 = vmatpush1.msra.mxu0 0.0
      %7681 = vmatprep.subr.mxu0 0.0
      %7682 = vmatpush1.msra.mxu0 0.0
      %7683 = vmatprep.subr.mxu0 0.0
      %7684 = vmatpush1.msra.mxu0 0.0
      %7685 = vmatprep.subr.mxu0 0.0
      %7686 = vmatpush1.msra.mxu0 0.0
      %7687 = vmatprep.subr.mxu0 0.0
      %7688 = vmatpush1.msra.mxu0 0.0
      %7689 = vmatprep.subr.mxu0 0.0
      %7690 = vmatpush1.msra.mxu0 0.0
      %7691 = vmatprep.subr.mxu0 0.0
      %7692 = vmatpush1.msra.mxu0 0.0
      %7693 = vmatprep.subr.mxu0 0.0
      %7694 = vmatpush1.msra.mxu0 0.0
      %7695 = vmatprep.subr.mxu0 0.0
      %7696 = vmatpush1.msra.mxu0 0.0
      %7697 = vmatprep.subr.mxu0 0.0
      %7698 = vmatpush1.msra.mxu0 0.0
      %7699 = vmatprep.subr.mxu0 0.0
      %7700 = vmatpush1.msra.mxu0 0.0
      %7701 = vmatprep.subr.mxu0 0.0
      %7702 = vmatpush1.msra.mxu0 0.0
      %7703 = vmatprep.mubr.f32.mxu0 0.0
      %7704 = vmatmul.mubr.f32.gmra.mrb[0].mxu0 %v4194
      %v7705 = vpop.f32.mrb[0].mxu0
      %v7706 = vadd.f32 0.0, %v7705
      %v7707 = vpop.f32.mrb[0].mxu0
      %7708 = vmatprep.mubr.f32.mxu0 0.0
      %7709 = vmatmul.mubr.f32.gmra.mrb[0].mxu0 %v4196
      %v7710 = vpop.f32.mrb[0].mxu0
      %v7711 = vadd.f32 0.0, %v7710
      %v7712 = vpop.f32.mrb[0].mxu0
      %7713 = vmatprep.mubr.f32.mxu0 0.0
      %7714 = vmatmul.mubr.f32.gmra.mrb[0].mxu0 %v4199
      %v7715 = vpop.f32.mrb[0].mxu0
      %v7716 = vadd.f32 0.0, %v7715
      %v7717 = vpop.f32.mrb[0].mxu0
      %7718 = vmatprep.mubr.f32.mxu0 0.0
      %7719 = vmatmul.mubr.f32.gmra.mrb[0].mxu0 %v4201
      %v7720 = vpop.f32.mrb[0].mxu0
      %v7721 = vadd.f32 0.0, %v7720
      %v7722 = vpop.f32.mrb[0].mxu0
      %7723 = vmatprep.mubr.f32.mxu0 0.0
      %7724 = vmatmul.mubr.f32.gmra.mrb[0].mxu0 %v4204
      %v7725 = vpop.f32.mrb[0].mxu0
      %v7726 = vadd.f32 0.0, %v7725
      %v7727 = vpop.f32.mrb[0].mxu0
      %7728 = vmatprep.mubr.f32.mxu0 0.0
      %7729 = vmatmul.mubr.f32.gmra.mrb[0].mxu0 %v4206
      %v7730 = vpop.f32.mrb[0].mxu0
      %v7731 = vadd.f32 0.0, %v7730
      %v7732 = vpop.f32.mrb[0].mxu0
      %7733 = vmatprep.mubr.f32.mxu0 0.0
      %7734 = vmatmul.mubr.f32.gmra.mrb[0].mxu0 %v4209
      %v7735 = vpop.f32.mrb[0].mxu0
      %v7736 = vadd.f32 0.0, %v7735
      %v7737 = vpop.f32.mrb[0].mxu0
      %7738 = vmatprep.mubr.f32.mxu0 0.0
      %7739 = vmatmul.mubr.f32.gmra.mrb[0].mxu0 %v4211
      %v7740 = vpop.f32.mrb[0].mxu0
      %v7741 = vadd.f32 0.0, %v7740
      %v7742 = vpop.f32.mrb[0].mxu0
      %7743 = vmatprep.mubr.f32.mxu0 0.0
      %7744 = vmatmul.mubr.f32.gmra.mrb[0].mxu0 %v4214
      %v7745 = vpop.f32.mrb[0].mxu0
      %v7746 = vadd.f32 0.0, %v7745
      %v7747 = vpop.f32.mrb[0].mxu0
      %7748 = vmatprep.mubr.f32.mxu0 0.0
      %7749 = vmatmul.mubr.f32.gmra.mrb[0].mxu0 %v4216
      %v7750 = vpop.f32.mrb[0].mxu0
      %v7751 = vadd.f32 0.0, %v7750
      %v7752 = vpop.f32.mrb[0].mxu0
      %7753 = vmatprep.mubr.f32.mxu0 0.0
      %7754 = vmatmul.mubr.f32.gmra.mrb[0].mxu0 %v4219
      %v7755 = vpop.f32.mrb[0].mxu0
      %v7756 = vadd.f32 0.0, %v7755
      %v7757 = vpop.f32.mrb[0].mxu0
      %7758 = vmatprep.mubr.f32.mxu0 0.0
      %7759 = vmatmul.mubr.f32.gmra.mrb[0].mxu0 %v4221
      %v7760 = vpop.f32.mrb[0].mxu0
      %v7761 = vadd.f32 0.0, %v7760
      %v7762 = vpop.f32.mrb[0].mxu0
      %7763 = vmatprep.mubr.f32.mxu0 0.0
      %7764 = vmatmul.mubr.f32.gmra.mrb[0].mxu0 %v4224
      %v7765 = vpop.f32.mrb[0].mxu0
      %v7766 = vadd.f32 0.0, %v7765
      %v7767 = vpop.f32.mrb[0].mxu0
      %7768 = vmatprep.mubr.f32.mxu0 0.0
      %7769 = vmatmul.mubr.f32.gmra.mrb[0].mxu0 %v4226
      %v7770 = vpop.f32.mrb[0].mxu0
      %v7771 = vadd.f32 0.0, %v7770
      %v7772 = vpop.f32.mrb[0].mxu0
      %7773 = vmatprep.mubr.f32.mxu0 0.0
      %7774 = vmatmul.mubr.f32.gmra.mrb[0].mxu0 %v4229
      %v7775 = vpop.f32.mrb[0].mxu0
      %v7776 = vadd.f32 0.0, %v7775
      %v7777 = vpop.f32.mrb[0].mxu0
      %7778 = vmatprep.mubr.f32.mxu0 0.0
      %7779 = vmatmul.mubr.f32.gmra.mrb[0].mxu0 %v4231
      %v7780 = vpop.f32.mrb[0].mxu0
      %v7781 = vadd.f32 0.0, %v7780
      %v7782 = vpop.f32.mrb[0].mxu0
      %7783 = vmatprep.mubr.f32.mxu0 0.0
      %7784 = vmatmul.mubr.f32.gmra.mrb[0].mxu0 %v4234
      %v7785 = vpop.f32.mrb[0].mxu0
      %v7786 = vadd.f32 0.0, %v7785
      %v7787 = vpop.f32.mrb[0].mxu0
      %7788 = vmatprep.mubr.f32.mxu0 0.0
      %7789 = vmatmul.mubr.f32.gmra.mrb[0].mxu0 %v4236
      %v7790 = vpop.f32.mrb[0].mxu0
      %v7791 = vadd.f32 0.0, %v7790
      %v7792 = vpop.f32.mrb[0].mxu0
      %7793 = vmatprep.mubr.f32.mxu0 0.0
      %7794 = vmatmul.mubr.f32.gmra.mrb[0].mxu0 %v4239
      %v7795 = vpop.f32.mrb[0].mxu0
      %v7796 = vadd.f32 0.0, %v7795
      %v7797 = vpop.f32.mrb[0].mxu0
      %7798 = vmatprep.mubr.f32.mxu0 0.0
      %7799 = vmatmul.mubr.f32.gmra.mrb[0].mxu0 %v4241
      %v7800 = vpop.f32.mrb[0].mxu0
      %v7801 = vadd.f32 0.0, %v7800
      %v7802 = vpop.f32.mrb[0].mxu0
      %7803 = vmatprep.mubr.f32.mxu0 0.0
      %7804 = vmatmul.mubr.f32.gmra.mrb[0].mxu0 %v4244
      %v7805 = vpop.f32.mrb[0].mxu0
      %v7806 = vadd.f32 0.0, %v7805
      %v7807 = vpop.f32.mrb[0].mxu0
      %7808 = vmatprep.mubr.f32.mxu0 0.0
      %7809 = vmatmul.mubr.f32.gmra.mrb[0].mxu0 %v4246
      %v7810 = vpop.f32.mrb[0].mxu0
      %v7811 = vadd.f32 0.0, %v7810
      %v7812 = vpop.f32.mrb[0].mxu0
      %7813 = vmatprep.mubr.f32.mxu0 0.0
      %7814 = vmatmul.mubr.f32.gmra.mrb[0].mxu0 %v4249
      %v7815 = vpop.f32.mrb[0].mxu0
      %v7816 = vadd.f32 0.0, %v7815
      %v7817 = vpop.f32.mrb[0].mxu0
      %7818 = vmatprep.mubr.f32.mxu0 0.0
      %7819 = vmatmul.mubr.f32.gmra.mrb[0].mxu0 %v4251
      %v7820 = vpop.f32.mrb[0].mxu0
      %v7821 = vadd.f32 0.0, %v7820
      %v7822 = vpop.f32.mrb[0].mxu0
      %7823 = vmatprep.mubr.f32.mxu0 0.0
      %7824 = vmatmul.mubr.f32.gmra.mrb[0].mxu0 %v4254
      %v7825 = vpop.f32.mrb[0].mxu0
      %v7826 = vadd.f32 0.0, %v7825
      %v7827 = vpop.f32.mrb[0].mxu0
      %7828 = vmatprep.mubr.f32.mxu0 0.0
      %7829 = vmatmul.mubr.f32.gmra.mrb[0].mxu0 %v4256
      %v7830 = vpop.f32.mrb[0].mxu0
      %v7831 = vadd.f32 0.0, %v7830
      %v7832 = vpop.f32.mrb[0].mxu0
      %7833 = vmatprep.mubr.f32.mxu0 0.0
      %7834 = vmatmul.mubr.f32.gmra.mrb[0].mxu0 %v4259
      %v7835 = vpop.f32.mrb[0].mxu0
      %v7836 = vadd.f32 0.0, %v7835
      %v7837 = vpop.f32.mrb[0].mxu0
      %7838 = vmatprep.mubr.f32.mxu0 0.0
      %7839 = vmatmul.mubr.f32.gmra.mrb[0].mxu0 %v4261
      %v7840 = vpop.f32.mrb[0].mxu0
      %v7841 = vadd.f32 0.0, %v7840
      %v7842 = vpop.f32.mrb[0].mxu0
      %7843 = vmatprep.mubr.f32.mxu0 0.0
      %7844 = vmatmul.mubr.f32.gmra.mrb[0].mxu0 %v5980
      %v7845 = vpop.f32.mrb[0].mxu0
      %v7846 = vadd.f32 0.0, %v7845
      %v7847 = vpop.f32.mrb[0].mxu0
      %7848 = vmatprep.mubr.f32.mxu0 0.0
      %7849 = vmatmul.mubr.f32.gmra.mrb[0].mxu0 %v5982
      %v7850 = vpop.f32.mrb[0].mxu0
      %v7851 = vadd.f32 0.0, %v7850
      %v7852 = vpop.f32.mrb[0].mxu0
      %7853 = vmatprep.mubr.f32.mxu0 0.0
      %7854 = vmatmul.mubr.f32.gmra.mrb[0].mxu0 %v3880
      %v7855 = vpop.f32.mrb[0].mxu0
      %v7856 = vadd.f32 0.0, %v7855
      %v7857 = vpop.f32.mrb[0].mxu0
      %7858 = vmatprep.mubr.f32.mxu0 0.0
      %7859 = vmatmul.mubr.f32.gmra.mrb[0].mxu0 %v3882
      %v7860 = vpop.f32.mrb[0].mxu0
      %v7861 = vadd.f32 0.0, %v7860
      %v7862 = vpop.f32.mrb[0].mxu0
      %7863 = vdwg.mxu0
      %v7864 = vadd.f32 %v7602, %v7706
      %v7865 = vadd.f32 %v7603, %v7711
      %v7866 = vadd.f32 %v7604, %v7716
      %v7867 = vadd.f32 %v7605, %v7721
      %v7868 = vadd.f32 %v7606, %v7726
      %v7869 = vadd.f32 %v7607, %v7731
      %v7870 = vadd.f32 %v7608, %v7736
      %v7871 = vadd.f32 %v7609, %v7741
      %v7872 = vadd.f32 %v7610, %v7746
      %v7873 = vadd.f32 %v7611, %v7751
      %v7874 = vadd.f32 %v7612, %v7756
      %v7875 = vadd.f32 %v7613, %v7761
      %v7876 = vadd.f32 %v7614, %v7766
      %v7877 = vadd.f32 %v7615, %v7771
      %v7878 = vadd.f32 %v7616, %v7776
      %v7879 = vadd.f32 %v7617, %v7781
      %v7880 = vadd.f32 %v7618, %v7786
      %v7881 = vadd.f32 %v7619, %v7791
      %v7882 = vadd.f32 %v7620, %v7796
      %v7883 = vadd.f32 %v7621, %v7801
      %v7884 = vadd.f32 %v7622, %v7806
      %v7885 = vadd.f32 %v7623, %v7811
      %v7886 = vadd.f32 %v7624, %v7816
      %v7887 = vadd.f32 %v7625, %v7821
      %v7888 = vadd.f32 %v7626, %v7826
      %v7889 = vadd.f32 %v7627, %v7831
      %v7890 = vadd.f32 %v7628, %v7836
      %v7891 = vadd.f32 %v7629, %v7841
      %v7892 = vadd.f32 %v7630, %v7846
      %v7893 = vadd.f32 %v7631, %v7851
      %v7894 = vadd.f32 %v7632, %v7856
      %v7895 = vadd.f32 %v7633, %v7861
      %v7896 = vcombine.low 0.0, 0.0
      %v7898 = vunpack.c.l.s4 1983009808
      %v7899 = vunpack.c.0.s8 %v7898
      %v7900 = vlaneseq
      %v7901 = vshrl.u32 %v7900, 7
      %v7902 = vsub.s32 %v7899, %v7901
      %v7903 = vrot.slane %v7896, %v7902
      %v7904 = vcombine.low %v7903, %v7903
      %v7905 = vrot.slane %v7904, 7
      %v7906 = vsel %vm419, %v7905, %v7905
      %v7908 = vsel %vm419, 0.0, %v7905
      %s7909 = scalar_lea.vmem %s3, 24
      %v7910 = vld [vmem:[%s7909] sm:$0xf]
      %v7912 = vsel %vm3878, %v7908, 0
      %v7914 = vsel %vm3878, %v7906, 0
      %v7917 = vsel %vm3959, %v7910, 0
      %7919 = vmatprep.subr.mxu0 0.0
      %7920 = vmatpush1.msra.mxu0 %v7917
      %7921 = vmatprep.subr.mxu0 0.0
      %7922 = vmatpush1.msra.mxu0 0.0
      %7923 = vmatprep.subr.mxu0 0.0
      %7924 = vmatpush1.msra.mxu0 0.0
      %7925 = vmatprep.subr.mxu0 0.0
      %7926 = vmatpush1.msra.mxu0 0.0
      %7927 = vmatprep.subr.mxu0 0.0
      %7928 = vmatpush1.msra.mxu0 0.0
      %7929 = vmatprep.subr.mxu0 0.0
      %7930 = vmatpush1.msra.mxu0 0.0
      %7931 = vmatprep.subr.mxu0 0.0
      %7932 = vmatpush1.msra.mxu0 0.0
      %7933 = vmatprep.subr.mxu0 0.0
      %7934 = vmatpush1.msra.mxu0 0.0
      %7935 = vmatprep.subr.mxu0 0.0
      %7936 = vmatpush1.msra.mxu0 0.0
      %7937 = vmatprep.subr.mxu0 0.0
      %7938 = vmatpush1.msra.mxu0 0.0
      %7939 = vmatprep.subr.mxu0 0.0
      %7940 = vmatpush1.msra.mxu0 0.0
      %7941 = vmatprep.subr.mxu0 0.0
      %7942 = vmatpush1.msra.mxu0 0.0
      %7943 = vmatprep.subr.mxu0 0.0
      %7944 = vmatpush1.msra.mxu0 0.0
      %7945 = vmatprep.subr.mxu0 0.0
      %7946 = vmatpush1.msra.mxu0 0.0
      %7947 = vmatprep.subr.mxu0 0.0
      %7948 = vmatpush1.msra.mxu0 0.0
      %7949 = vmatprep.subr.mxu0 0.0
      %7950 = vmatpush1.msra.mxu0 0.0
      %7951 = vmatprep.subr.mxu0 0.0
      %7952 = vmatpush1.msra.mxu0 0.0
      %7953 = vmatprep.subr.mxu0 0.0
      %7954 = vmatpush1.msra.mxu0 0.0
      %7955 = vmatprep.subr.mxu0 0.0
      %7956 = vmatpush1.msra.mxu0 0.0
      %7957 = vmatprep.subr.mxu0 0.0
      %7958 = vmatpush1.msra.mxu0 0.0
      %7959 = vmatprep.subr.mxu0 0.0
      %7960 = vmatpush1.msra.mxu0 0.0
      %7961 = vmatprep.subr.mxu0 0.0
      %7962 = vmatpush1.msra.mxu0 0.0
      %7963 = vmatprep.subr.mxu0 0.0
      %7964 = vmatpush1.msra.mxu0 0.0
      %7965 = vmatprep.subr.mxu0 0.0
      %7966 = vmatpush1.msra.mxu0 0.0
      %7967 = vmatprep.subr.mxu0 0.0
      %7968 = vmatpush1.msra.mxu0 0.0
      %7969 = vmatprep.subr.mxu0 0.0
      %7970 = vmatpush1.msra.mxu0 0.0
      %7971 = vmatprep.subr.mxu0 0.0
      %7972 = vmatpush1.msra.mxu0 0.0
      %7973 = vmatprep.subr.mxu0 0.0
      %7974 = vmatpush1.msra.mxu0 0.0
      %7975 = vmatprep.subr.mxu0 0.0
      %7976 = vmatpush1.msra.mxu0 0.0
      %7977 = vmatprep.subr.mxu0 0.0
      %7978 = vmatpush1.msra.mxu0 0.0
      %7979 = vmatprep.subr.mxu0 0.0
      %7980 = vmatpush1.msra.mxu0 0.0
      %7981 = vmatprep.subr.mxu0 0.0
      %7982 = vmatpush1.msra.mxu0 0.0
      %7983 = vmatprep.mubr.f32.mxu0 0.0
      %7984 = vmatmul.mubr.f32.gmra.mrb[0].mxu0 %v3890
      %v7985 = vpop.f32.mrb[0].mxu0
      %v7986 = vadd.f32 0.0, %v7985
      %v7987 = vpop.f32.mrb[0].mxu0
      %7988 = vmatprep.mubr.f32.mxu0 0.0
      %7989 = vmatmul.mubr.f32.gmra.mrb[0].mxu0 %v3892
      %v7990 = vpop.f32.mrb[0].mxu0
      %v7991 = vadd.f32 0.0, %v7990
      %v7992 = vpop.f32.mrb[0].mxu0
      %7993 = vmatprep.mubr.f32.mxu0 0.0
      %7994 = vmatmul.mubr.f32.gmra.mrb[0].mxu0 %v3895
      %v7995 = vpop.f32.mrb[0].mxu0
      %v7996 = vadd.f32 0.0, %v7995
      %v7997 = vpop.f32.mrb[0].mxu0
      %7998 = vmatprep.mubr.f32.mxu0 0.0
      %7999 = vmatmul.mubr.f32.gmra.mrb[0].mxu0 %v3897
      %v8000 = vpop.f32.mrb[0].mxu0
      %v8001 = vadd.f32 0.0, %v8000
      %v8002 = vpop.f32.mrb[0].mxu0
      %8003 = vmatprep.mubr.f32.mxu0 0.0
      %8004 = vmatmul.mubr.f32.gmra.mrb[0].mxu0 %v3900
      %v8005 = vpop.f32.mrb[0].mxu0
      %v8006 = vadd.f32 0.0, %v8005
      %v8007 = vpop.f32.mrb[0].mxu0
      %8008 = vmatprep.mubr.f32.mxu0 0.0
      %8009 = vmatmul.mubr.f32.gmra.mrb[0].mxu0 %v3902
      %v8010 = vpop.f32.mrb[0].mxu0
      %v8011 = vadd.f32 0.0, %v8010
      %v8012 = vpop.f32.mrb[0].mxu0
      %8013 = vmatprep.mubr.f32.mxu0 0.0
      %8014 = vmatmul.mubr.f32.gmra.mrb[0].mxu0 %v3905
      %v8015 = vpop.f32.mrb[0].mxu0
      %v8016 = vadd.f32 0.0, %v8015
      %v8017 = vpop.f32.mrb[0].mxu0
      %8018 = vmatprep.mubr.f32.mxu0 0.0
      %8019 = vmatmul.mubr.f32.gmra.mrb[0].mxu0 %v3907
      %v8020 = vpop.f32.mrb[0].mxu0
      %v8021 = vadd.f32 0.0, %v8020
      %v8022 = vpop.f32.mrb[0].mxu0
      %8023 = vmatprep.mubr.f32.mxu0 0.0
      %8024 = vmatmul.mubr.f32.gmra.mrb[0].mxu0 %v3910
      %v8025 = vpop.f32.mrb[0].mxu0
      %v8026 = vadd.f32 0.0, %v8025
      %v8027 = vpop.f32.mrb[0].mxu0
      %8028 = vmatprep.mubr.f32.mxu0 0.0
      %8029 = vmatmul.mubr.f32.gmra.mrb[0].mxu0 %v3912
      %v8030 = vpop.f32.mrb[0].mxu0
      %v8031 = vadd.f32 0.0, %v8030
      %v8032 = vpop.f32.mrb[0].mxu0
      %8033 = vmatprep.mubr.f32.mxu0 0.0
      %8034 = vmatmul.mubr.f32.gmra.mrb[0].mxu0 %v3915
      %v8035 = vpop.f32.mrb[0].mxu0
      %v8036 = vadd.f32 0.0, %v8035
      %v8037 = vpop.f32.mrb[0].mxu0
      %8038 = vmatprep.mubr.f32.mxu0 0.0
      %8039 = vmatmul.mubr.f32.gmra.mrb[0].mxu0 %v3917
      %v8040 = vpop.f32.mrb[0].mxu0
      %v8041 = vadd.f32 0.0, %v8040
      %v8042 = vpop.f32.mrb[0].mxu0
      %8043 = vmatprep.mubr.f32.mxu0 0.0
      %8044 = vmatmul.mubr.f32.gmra.mrb[0].mxu0 %v3920
      %v8045 = vpop.f32.mrb[0].mxu0
      %v8046 = vadd.f32 0.0, %v8045
      %v8047 = vpop.f32.mrb[0].mxu0
      %8048 = vmatprep.mubr.f32.mxu0 0.0
      %8049 = vmatmul.mubr.f32.gmra.mrb[0].mxu0 %v3922
      %v8050 = vpop.f32.mrb[0].mxu0
      %v8051 = vadd.f32 0.0, %v8050
      %v8052 = vpop.f32.mrb[0].mxu0
      %8053 = vmatprep.mubr.f32.mxu0 0.0
      %8054 = vmatmul.mubr.f32.gmra.mrb[0].mxu0 %v3925
      %v8055 = vpop.f32.mrb[0].mxu0
      %v8056 = vadd.f32 0.0, %v8055
      %v8057 = vpop.f32.mrb[0].mxu0
      %8058 = vmatprep.mubr.f32.mxu0 0.0
      %8059 = vmatmul.mubr.f32.gmra.mrb[0].mxu0 %v3927
      %v8060 = vpop.f32.mrb[0].mxu0
      %v8061 = vadd.f32 0.0, %v8060
      %v8062 = vpop.f32.mrb[0].mxu0
      %8063 = vmatprep.mubr.f32.mxu0 0.0
      %8064 = vmatmul.mubr.f32.gmra.mrb[0].mxu0 %v3930
      %v8065 = vpop.f32.mrb[0].mxu0
      %v8066 = vadd.f32 0.0, %v8065
      %v8067 = vpop.f32.mrb[0].mxu0
      %8068 = vmatprep.mubr.f32.mxu0 0.0
      %8069 = vmatmul.mubr.f32.gmra.mrb[0].mxu0 %v3932
      %v8070 = vpop.f32.mrb[0].mxu0
      %v8071 = vadd.f32 0.0, %v8070
      %v8072 = vpop.f32.mrb[0].mxu0
      %8073 = vmatprep.mubr.f32.mxu0 0.0
      %8074 = vmatmul.mubr.f32.gmra.mrb[0].mxu0 %v3935
      %v8075 = vpop.f32.mrb[0].mxu0
      %v8076 = vadd.f32 0.0, %v8075
      %v8077 = vpop.f32.mrb[0].mxu0
      %8078 = vmatprep.mubr.f32.mxu0 0.0
      %8079 = vmatmul.mubr.f32.gmra.mrb[0].mxu0 %v3937
      %v8080 = vpop.f32.mrb[0].mxu0
      %v8081 = vadd.f32 0.0, %v8080
      %v8082 = vpop.f32.mrb[0].mxu0
      %8083 = vmatprep.mubr.f32.mxu0 0.0
      %8084 = vmatmul.mubr.f32.gmra.mrb[0].mxu0 %v3940
      %v8085 = vpop.f32.mrb[0].mxu0
      %v8086 = vadd.f32 0.0, %v8085
      %v8087 = vpop.f32.mrb[0].mxu0
      %8088 = vmatprep.mubr.f32.mxu0 0.0
      %8089 = vmatmul.mubr.f32.gmra.mrb[0].mxu0 %v3942
      %v8090 = vpop.f32.mrb[0].mxu0
      %v8091 = vadd.f32 0.0, %v8090
      %v8092 = vpop.f32.mrb[0].mxu0
      %8093 = vmatprep.mubr.f32.mxu0 0.0
      %8094 = vmatmul.mubr.f32.gmra.mrb[0].mxu0 %v3945
      %v8095 = vpop.f32.mrb[0].mxu0
      %v8096 = vadd.f32 0.0, %v8095
      %v8097 = vpop.f32.mrb[0].mxu0
      %8098 = vmatprep.mubr.f32.mxu0 0.0
      %8099 = vmatmul.mubr.f32.gmra.mrb[0].mxu0 %v3947
      %v8100 = vpop.f32.mrb[0].mxu0
      %v8101 = vadd.f32 0.0, %v8100
      %v8102 = vpop.f32.mrb[0].mxu0
      %8103 = vmatprep.mubr.f32.mxu0 0.0
      %8104 = vmatmul.mubr.f32.gmra.mrb[0].mxu0 %v3950
      %v8105 = vpop.f32.mrb[0].mxu0
      %v8106 = vadd.f32 0.0, %v8105
      %v8107 = vpop.f32.mrb[0].mxu0
      %8108 = vmatprep.mubr.f32.mxu0 0.0
      %8109 = vmatmul.mubr.f32.gmra.mrb[0].mxu0 %v3952
      %v8110 = vpop.f32.mrb[0].mxu0
      %v8111 = vadd.f32 0.0, %v8110
      %v8112 = vpop.f32.mrb[0].mxu0
      %8113 = vmatprep.mubr.f32.mxu0 0.0
      %8114 = vmatmul.mubr.f32.gmra.mrb[0].mxu0 %v3955
      %v8115 = vpop.f32.mrb[0].mxu0
      %v8116 = vadd.f32 0.0, %v8115
      %v8117 = vpop.f32.mrb[0].mxu0
      %8118 = vmatprep.mubr.f32.mxu0 0.0
      %8119 = vmatmul.mubr.f32.gmra.mrb[0].mxu0 %v3957
      %v8120 = vpop.f32.mrb[0].mxu0
      %v8121 = vadd.f32 0.0, %v8120
      %v8122 = vpop.f32.mrb[0].mxu0
      %8123 = vmatprep.mubr.f32.mxu0 0.0
      %8124 = vmatmul.mubr.f32.gmra.mrb[0].mxu0 %v6294
      %v8125 = vpop.f32.mrb[0].mxu0
      %v8126 = vadd.f32 0.0, %v8125
      %v8127 = vpop.f32.mrb[0].mxu0
      %8128 = vmatprep.mubr.f32.mxu0 0.0
      %8129 = vmatmul.mubr.f32.gmra.mrb[0].mxu0 %v6296
      %v8130 = vpop.f32.mrb[0].mxu0
      %v8131 = vadd.f32 0.0, %v8130
      %v8132 = vpop.f32.mrb[0].mxu0
      %8133 = vmatprep.mubr.f32.mxu0 0.0
      %8134 = vmatmul.mubr.f32.gmra.mrb[0].mxu0 %v7912
      %v8135 = vpop.f32.mrb[0].mxu0
      %v8136 = vadd.f32 0.0, %v8135
      %v8137 = vpop.f32.mrb[0].mxu0
      %8138 = vmatprep.mubr.f32.mxu0 0.0
      %8139 = vmatmul.mubr.f32.gmra.mrb[0].mxu0 %v7914
      %v8140 = vpop.f32.mrb[0].mxu0
      %v8141 = vadd.f32 0.0, %v8140
      %v8142 = vpop.f32.mrb[0].mxu0
      %8143 = vdwg.mxu0
      %v8144 = vadd.f32 %v7864, %v7986
      %v8145 = vadd.f32 %v7865, %v7991
      %v8146 = vadd.f32 %v7866, %v7996
      %v8147 = vadd.f32 %v7867, %v8001
      %v8148 = vadd.f32 %v7868, %v8006
      %v8149 = vadd.f32 %v7869, %v8011
      %v8150 = vadd.f32 %v7870, %v8016
      %v8151 = vadd.f32 %v7871, %v8021
      %v8152 = vadd.f32 %v7872, %v8026
      %v8153 = vadd.f32 %v7873, %v8031
      %v8154 = vadd.f32 %v7874, %v8036
      %v8155 = vadd.f32 %v7875, %v8041
      %v8156 = vadd.f32 %v7876, %v8046
      %v8157 = vadd.f32 %v7877, %v8051
      %v8158 = vadd.f32 %v7878, %v8056
      %v8159 = vadd.f32 %v7879, %v8061
      %v8160 = vadd.f32 %v7880, %v8066
      %v8161 = vadd.f32 %v7881, %v8071
      %v8162 = vadd.f32 %v7882, %v8076
      %v8163 = vadd.f32 %v7883, %v8081
      %v8164 = vadd.f32 %v7884, %v8086
      %v8165 = vadd.f32 %v7885, %v8091
      %v8166 = vadd.f32 %v7886, %v8096
      %v8167 = vadd.f32 %v7887, %v8101
      %v8168 = vadd.f32 %v7888, %v8106
      %v8169 = vadd.f32 %v7889, %v8111
      %v8170 = vadd.f32 %v7890, %v8116
      %v8171 = vadd.f32 %v7891, %v8121
      %v8172 = vadd.f32 %v7892, %v8126
      %v8173 = vadd.f32 %v7893, %v8131
      %v8174 = vadd.f32 %v7894, %v8136
      %v8175 = vadd.f32 %v7895, %v8141
      %s8176 = scalar_lea.vmem %s2, 28
      %v8177 = vld [vmem:[%s8176] sm:$0xf]
      %v8179 = vsel %vm3959, %v8177, 0
      %8181 = vmatprep.subr.mxu0 0.0
      %8182 = vmatpush1.msra.mxu0 %v8179
      %8183 = vmatprep.subr.mxu0 0.0
      %8184 = vmatpush1.msra.mxu0 0.0
      %8185 = vmatprep.subr.mxu0 0.0
      %8186 = vmatpush1.msra.mxu0 0.0
      %8187 = vmatprep.subr.mxu0 0.0
      %8188 = vmatpush1.msra.mxu0 0.0
      %8189 = vmatprep.subr.mxu0 0.0
      %8190 = vmatpush1.msra.mxu0 0.0
      %8191 = vmatprep.subr.mxu0 0.0
      %8192 = vmatpush1.msra.mxu0 0.0
      %8193 = vmatprep.subr.mxu0 0.0
      %8194 = vmatpush1.msra.mxu0 0.0
      %8195 = vmatprep.subr.mxu0 0.0
      %8196 = vmatpush1.msra.mxu0 0.0
      %8197 = vmatprep.subr.mxu0 0.0
      %8198 = vmatpush1.msra.mxu0 0.0
      %8199 = vmatprep.subr.mxu0 0.0
      %8200 = vmatpush1.msra.mxu0 0.0
      %8201 = vmatprep.subr.mxu0 0.0
      %8202 = vmatpush1.msra.mxu0 0.0
      %8203 = vmatprep.subr.mxu0 0.0
      %8204 = vmatpush1.msra.mxu0 0.0
      %8205 = vmatprep.subr.mxu0 0.0
      %8206 = vmatpush1.msra.mxu0 0.0
      %8207 = vmatprep.subr.mxu0 0.0
      %8208 = vmatpush1.msra.mxu0 0.0
      %8209 = vmatprep.subr.mxu0 0.0
      %8210 = vmatpush1.msra.mxu0 0.0
      %8211 = vmatprep.subr.mxu0 0.0
      %8212 = vmatpush1.msra.mxu0 0.0
      %8213 = vmatprep.subr.mxu0 0.0
      %8214 = vmatpush1.msra.mxu0 0.0
      %8215 = vmatprep.subr.mxu0 0.0
      %8216 = vmatpush1.msra.mxu0 0.0
      %8217 = vmatprep.subr.mxu0 0.0
      %8218 = vmatpush1.msra.mxu0 0.0
      %8219 = vmatprep.subr.mxu0 0.0
      %8220 = vmatpush1.msra.mxu0 0.0
      %8221 = vmatprep.subr.mxu0 0.0
      %8222 = vmatpush1.msra.mxu0 0.0
      %8223 = vmatprep.subr.mxu0 0.0
      %8224 = vmatpush1.msra.mxu0 0.0
      %8225 = vmatprep.subr.mxu0 0.0
      %8226 = vmatpush1.msra.mxu0 0.0
      %8227 = vmatprep.subr.mxu0 0.0
      %8228 = vmatpush1.msra.mxu0 0.0
      %8229 = vmatprep.subr.mxu0 0.0
      %8230 = vmatpush1.msra.mxu0 0.0
      %8231 = vmatprep.subr.mxu0 0.0
      %8232 = vmatpush1.msra.mxu0 0.0
      %8233 = vmatprep.subr.mxu0 0.0
      %8234 = vmatpush1.msra.mxu0 0.0
      %8235 = vmatprep.subr.mxu0 0.0
      %8236 = vmatpush1.msra.mxu0 0.0
      %8237 = vmatprep.subr.mxu0 0.0
      %8238 = vmatpush1.msra.mxu0 0.0
      %8239 = vmatprep.subr.mxu0 0.0
      %8240 = vmatpush1.msra.mxu0 0.0
      %8241 = vmatprep.subr.mxu0 0.0
      %8242 = vmatpush1.msra.mxu0 0.0
      %8243 = vmatprep.subr.mxu0 0.0
      %8244 = vmatpush1.msra.mxu0 0.0
      %8245 = vmatprep.mubr.f32.mxu0 0.0
      %8246 = vmatmul.mubr.f32.gmra.mrb[0].mxu0 %v4499
      %v8247 = vpop.f32.mrb[0].mxu0
      %v8248 = vadd.f32 0.0, %v8247
      %v8249 = vpop.f32.mrb[0].mxu0
      %8250 = vmatprep.mubr.f32.mxu0 0.0
      %8251 = vmatmul.mubr.f32.gmra.mrb[0].mxu0 %v4501
      %v8252 = vpop.f32.mrb[0].mxu0
      %v8253 = vadd.f32 0.0, %v8252
      %v8254 = vpop.f32.mrb[0].mxu0
      %8255 = vmatprep.mubr.f32.mxu0 0.0
      %8256 = vmatmul.mubr.f32.gmra.mrb[0].mxu0 %v4503
      %v8257 = vpop.f32.mrb[0].mxu0
      %v8258 = vadd.f32 0.0, %v8257
      %v8259 = vpop.f32.mrb[0].mxu0
      %8260 = vmatprep.mubr.f32.mxu0 0.0
      %8261 = vmatmul.mubr.f32.gmra.mrb[0].mxu0 %v4505
      %v8262 = vpop.f32.mrb[0].mxu0
      %v8263 = vadd.f32 0.0, %v8262
      %v8264 = vpop.f32.mrb[0].mxu0
      %8265 = vmatprep.mubr.f32.mxu0 0.0
      %8266 = vmatmul.mubr.f32.gmra.mrb[0].mxu0 %v4507
      %v8267 = vpop.f32.mrb[0].mxu0
      %v8268 = vadd.f32 0.0, %v8267
      %v8269 = vpop.f32.mrb[0].mxu0
      %8270 = vmatprep.mubr.f32.mxu0 0.0
      %8271 = vmatmul.mubr.f32.gmra.mrb[0].mxu0 %v4509
      %v8272 = vpop.f32.mrb[0].mxu0
      %v8273 = vadd.f32 0.0, %v8272
      %v8274 = vpop.f32.mrb[0].mxu0
      %8275 = vmatprep.mubr.f32.mxu0 0.0
      %8276 = vmatmul.mubr.f32.gmra.mrb[0].mxu0 %v4511
      %v8277 = vpop.f32.mrb[0].mxu0
      %v8278 = vadd.f32 0.0, %v8277
      %v8279 = vpop.f32.mrb[0].mxu0
      %8280 = vmatprep.mubr.f32.mxu0 0.0
      %8281 = vmatmul.mubr.f32.gmra.mrb[0].mxu0 %v4513
      %v8282 = vpop.f32.mrb[0].mxu0
      %v8283 = vadd.f32 0.0, %v8282
      %v8284 = vpop.f32.mrb[0].mxu0
      %8285 = vmatprep.mubr.f32.mxu0 0.0
      %8286 = vmatmul.mubr.f32.gmra.mrb[0].mxu0 %v4515
      %v8287 = vpop.f32.mrb[0].mxu0
      %v8288 = vadd.f32 0.0, %v8287
      %v8289 = vpop.f32.mrb[0].mxu0
      %8290 = vmatprep.mubr.f32.mxu0 0.0
      %8291 = vmatmul.mubr.f32.gmra.mrb[0].mxu0 %v4517
      %v8292 = vpop.f32.mrb[0].mxu0
      %v8293 = vadd.f32 0.0, %v8292
      %v8294 = vpop.f32.mrb[0].mxu0
      %8295 = vmatprep.mubr.f32.mxu0 0.0
      %8296 = vmatmul.mubr.f32.gmra.mrb[0].mxu0 %v4519
      %v8297 = vpop.f32.mrb[0].mxu0
      %v8298 = vadd.f32 0.0, %v8297
      %v8299 = vpop.f32.mrb[0].mxu0
      %8300 = vmatprep.mubr.f32.mxu0 0.0
      %8301 = vmatmul.mubr.f32.gmra.mrb[0].mxu0 %v4521
      %v8302 = vpop.f32.mrb[0].mxu0
      %v8303 = vadd.f32 0.0, %v8302
      %v8304 = vpop.f32.mrb[0].mxu0
      %8305 = vmatprep.mubr.f32.mxu0 0.0
      %8306 = vmatmul.mubr.f32.gmra.mrb[0].mxu0 %v4523
      %v8307 = vpop.f32.mrb[0].mxu0
      %v8308 = vadd.f32 0.0, %v8307
      %v8309 = vpop.f32.mrb[0].mxu0
      %8310 = vmatprep.mubr.f32.mxu0 0.0
      %8311 = vmatmul.mubr.f32.gmra.mrb[0].mxu0 %v4525
      %v8312 = vpop.f32.mrb[0].mxu0
      %v8313 = vadd.f32 0.0, %v8312
      %v8314 = vpop.f32.mrb[0].mxu0
      %8315 = vmatprep.mubr.f32.mxu0 0.0
      %8316 = vmatmul.mubr.f32.gmra.mrb[0].mxu0 %v4527
      %v8317 = vpop.f32.mrb[0].mxu0
      %v8318 = vadd.f32 0.0, %v8317
      %v8319 = vpop.f32.mrb[0].mxu0
      %8320 = vmatprep.mubr.f32.mxu0 0.0
      %8321 = vmatmul.mubr.f32.gmra.mrb[0].mxu0 %v4529
      %v8322 = vpop.f32.mrb[0].mxu0
      %v8323 = vadd.f32 0.0, %v8322
      %v8324 = vpop.f32.mrb[0].mxu0
      %8325 = vmatprep.mubr.f32.mxu0 0.0
      %8326 = vmatmul.mubr.f32.gmra.mrb[0].mxu0 %v4531
      %v8327 = vpop.f32.mrb[0].mxu0
      %v8328 = vadd.f32 0.0, %v8327
      %v8329 = vpop.f32.mrb[0].mxu0
      %8330 = vmatprep.mubr.f32.mxu0 0.0
      %8331 = vmatmul.mubr.f32.gmra.mrb[0].mxu0 %v4533
      %v8332 = vpop.f32.mrb[0].mxu0
      %v8333 = vadd.f32 0.0, %v8332
      %v8334 = vpop.f32.mrb[0].mxu0
      %8335 = vmatprep.mubr.f32.mxu0 0.0
      %8336 = vmatmul.mubr.f32.gmra.mrb[0].mxu0 %v4535
      %v8337 = vpop.f32.mrb[0].mxu0
      %v8338 = vadd.f32 0.0, %v8337
      %v8339 = vpop.f32.mrb[0].mxu0
      %8340 = vmatprep.mubr.f32.mxu0 0.0
      %8341 = vmatmul.mubr.f32.gmra.mrb[0].mxu0 %v4537
      %v8342 = vpop.f32.mrb[0].mxu0
      %v8343 = vadd.f32 0.0, %v8342
      %v8344 = vpop.f32.mrb[0].mxu0
      %8345 = vmatprep.mubr.f32.mxu0 0.0
      %8346 = vmatmul.mubr.f32.gmra.mrb[0].mxu0 %v4539
      %v8347 = vpop.f32.mrb[0].mxu0
      %v8348 = vadd.f32 0.0, %v8347
      %v8349 = vpop.f32.mrb[0].mxu0
      %8350 = vmatprep.mubr.f32.mxu0 0.0
      %8351 = vmatmul.mubr.f32.gmra.mrb[0].mxu0 %v4541
      %v8352 = vpop.f32.mrb[0].mxu0
      %v8353 = vadd.f32 0.0, %v8352
      %v8354 = vpop.f32.mrb[0].mxu0
      %8355 = vmatprep.mubr.f32.mxu0 0.0
      %8356 = vmatmul.mubr.f32.gmra.mrb[0].mxu0 %v4543
      %v8357 = vpop.f32.mrb[0].mxu0
      %v8358 = vadd.f32 0.0, %v8357
      %v8359 = vpop.f32.mrb[0].mxu0
      %8360 = vmatprep.mubr.f32.mxu0 0.0
      %8361 = vmatmul.mubr.f32.gmra.mrb[0].mxu0 %v4545
      %v8362 = vpop.f32.mrb[0].mxu0
      %v8363 = vadd.f32 0.0, %v8362
      %v8364 = vpop.f32.mrb[0].mxu0
      %8365 = vmatprep.mubr.f32.mxu0 0.0
      %8366 = vmatmul.mubr.f32.gmra.mrb[0].mxu0 %v4547
      %v8367 = vpop.f32.mrb[0].mxu0
      %v8368 = vadd.f32 0.0, %v8367
      %v8369 = vpop.f32.mrb[0].mxu0
      %8370 = vmatprep.mubr.f32.mxu0 0.0
      %8371 = vmatmul.mubr.f32.gmra.mrb[0].mxu0 %v4549
      %v8372 = vpop.f32.mrb[0].mxu0
      %v8373 = vadd.f32 0.0, %v8372
      %v8374 = vpop.f32.mrb[0].mxu0
      %8375 = vmatprep.mubr.f32.mxu0 0.0
      %8376 = vmatmul.mubr.f32.gmra.mrb[0].mxu0 %v4551
      %v8377 = vpop.f32.mrb[0].mxu0
      %v8378 = vadd.f32 0.0, %v8377
      %v8379 = vpop.f32.mrb[0].mxu0
      %8380 = vmatprep.mubr.f32.mxu0 0.0
      %8381 = vmatmul.mubr.f32.gmra.mrb[0].mxu0 %v4553
      %v8382 = vpop.f32.mrb[0].mxu0
      %v8383 = vadd.f32 0.0, %v8382
      %v8384 = vpop.f32.mrb[0].mxu0
      %8385 = vmatprep.mubr.f32.mxu0 0.0
      %8386 = vmatmul.mubr.f32.gmra.mrb[0].mxu0 %v6560
      %v8387 = vpop.f32.mrb[0].mxu0
      %v8388 = vadd.f32 0.0, %v8387
      %v8389 = vpop.f32.mrb[0].mxu0
      %8390 = vmatprep.mubr.f32.mxu0 0.0
      %8391 = vmatmul.mubr.f32.gmra.mrb[0].mxu0 %v6562
      %v8392 = vpop.f32.mrb[0].mxu0
      %v8393 = vadd.f32 0.0, %v8392
      %v8394 = vpop.f32.mrb[0].mxu0
      %8395 = vmatprep.mubr.f32.mxu0 0.0
      %8396 = vmatmul.mubr.f32.gmra.mrb[0].mxu0 %v4493
      %v8397 = vpop.f32.mrb[0].mxu0
      %v8398 = vadd.f32 0.0, %v8397
      %v8399 = vpop.f32.mrb[0].mxu0
      %8400 = vmatprep.mubr.f32.mxu0 0.0
      %8401 = vmatmul.mubr.f32.gmra.mrb[0].mxu0 %v4493
      %v8402 = vpop.f32.mrb[0].mxu0
      %v8403 = vadd.f32 0.0, %v8402
      %v8404 = vpop.f32.mrb[0].mxu0
      %8405 = vdwg.mxu0
      %v8406 = vadd.f32 %v8144, %v8248
      %v8407 = vadd.f32 %v8145, %v8253
      %v8408 = vadd.f32 %v8146, %v8258
      %v8409 = vadd.f32 %v8147, %v8263
      %v8410 = vadd.f32 %v8148, %v8268
      %v8411 = vadd.f32 %v8149, %v8273
      %v8412 = vadd.f32 %v8150, %v8278
      %v8413 = vadd.f32 %v8151, %v8283
      %v8414 = vadd.f32 %v8152, %v8288
      %v8415 = vadd.f32 %v8153, %v8293
      %v8416 = vadd.f32 %v8154, %v8298
      %v8417 = vadd.f32 %v8155, %v8303
      %v8418 = vadd.f32 %v8156, %v8308
      %v8419 = vadd.f32 %v8157, %v8313
      %v8420 = vadd.f32 %v8158, %v8318
      %v8421 = vadd.f32 %v8159, %v8323
      %v8422 = vadd.f32 %v8160, %v8328
      %v8423 = vadd.f32 %v8161, %v8333
      %v8424 = vadd.f32 %v8162, %v8338
      %v8425 = vadd.f32 %v8163, %v8343
      %v8426 = vadd.f32 %v8164, %v8348
      %v8427 = vadd.f32 %v8165, %v8353
      %v8428 = vadd.f32 %v8166, %v8358
      %v8429 = vadd.f32 %v8167, %v8363
      %v8430 = vadd.f32 %v8168, %v8368
      %v8431 = vadd.f32 %v8169, %v8373
      %v8432 = vadd.f32 %v8170, %v8378
      %v8433 = vadd.f32 %v8171, %v8383
      %v8434 = vadd.f32 %v8172, %v8388
      %v8435 = vadd.f32 %v8173, %v8393
      %v8436 = vadd.f32 %v8174, %v8398
      %v8437 = vadd.f32 %v8175, %v8403
      %s8438 = scalar_lea.vmem %s3, 28
      %v8439 = vld [vmem:[%s8438] sm:$0xf]
      %v8440 = vsel %vm3878, %v7904, 0
      %v8443 = vsel %vm3959, %v8439, 0
      %8445 = vmatprep.subr.mxu0 0.0
      %8446 = vmatpush1.msra.mxu0 %v8443
      %8447 = vmatprep.subr.mxu0 0.0
      %8448 = vmatpush1.msra.mxu0 0.0
      %8449 = vmatprep.subr.mxu0 0.0
      %8450 = vmatpush1.msra.mxu0 0.0
      %8451 = vmatprep.subr.mxu0 0.0
      %8452 = vmatpush1.msra.mxu0 0.0
      %8453 = vmatprep.subr.mxu0 0.0
      %8454 = vmatpush1.msra.mxu0 0.0
      %8455 = vmatprep.subr.mxu0 0.0
      %8456 = vmatpush1.msra.mxu0 0.0
      %8457 = vmatprep.subr.mxu0 0.0
      %8458 = vmatpush1.msra.mxu0 0.0
      %8459 = vmatprep.subr.mxu0 0.0
      %8460 = vmatpush1.msra.mxu0 0.0
      %8461 = vmatprep.subr.mxu0 0.0
      %8462 = vmatpush1.msra.mxu0 0.0
      %8463 = vmatprep.subr.mxu0 0.0
      %8464 = vmatpush1.msra.mxu0 0.0
      %8465 = vmatprep.subr.mxu0 0.0
      %8466 = vmatpush1.msra.mxu0 0.0
      %8467 = vmatprep.subr.mxu0 0.0
      %8468 = vmatpush1.msra.mxu0 0.0
      %8469 = vmatprep.subr.mxu0 0.0
      %8470 = vmatpush1.msra.mxu0 0.0
      %8471 = vmatprep.subr.mxu0 0.0
      %8472 = vmatpush1.msra.mxu0 0.0
      %8473 = vmatprep.subr.mxu0 0.0
      %8474 = vmatpush1.msra.mxu0 0.0
      %8475 = vmatprep.subr.mxu0 0.0
      %8476 = vmatpush1.msra.mxu0 0.0
      %8477 = vmatprep.subr.mxu0 0.0
      %8478 = vmatpush1.msra.mxu0 0.0
      %8479 = vmatprep.subr.mxu0 0.0
      %8480 = vmatpush1.msra.mxu0 0.0
      %8481 = vmatprep.subr.mxu0 0.0
      %8482 = vmatpush1.msra.mxu0 0.0
      %8483 = vmatprep.subr.mxu0 0.0
      %8484 = vmatpush1.msra.mxu0 0.0
      %8485 = vmatprep.subr.mxu0 0.0
      %8486 = vmatpush1.msra.mxu0 0.0
      %8487 = vmatprep.subr.mxu0 0.0
      %8488 = vmatpush1.msra.mxu0 0.0
      %8489 = vmatprep.subr.mxu0 0.0
      %8490 = vmatpush1.msra.mxu0 0.0
      %8491 = vmatprep.subr.mxu0 0.0
      %8492 = vmatpush1.msra.mxu0 0.0
      %8493 = vmatprep.subr.mxu0 0.0
      %8494 = vmatpush1.msra.mxu0 0.0
      %8495 = vmatprep.subr.mxu0 0.0
      %8496 = vmatpush1.msra.mxu0 0.0
      %8497 = vmatprep.subr.mxu0 0.0
      %8498 = vmatpush1.msra.mxu0 0.0
      %8499 = vmatprep.subr.mxu0 0.0
      %8500 = vmatpush1.msra.mxu0 0.0
      %8501 = vmatprep.subr.mxu0 0.0
      %8502 = vmatpush1.msra.mxu0 0.0
      %8503 = vmatprep.subr.mxu0 0.0
      %8504 = vmatpush1.msra.mxu0 0.0
      %8505 = vmatprep.subr.mxu0 0.0
      %8506 = vmatpush1.msra.mxu0 0.0
      %8507 = vmatprep.subr.mxu0 0.0
      %8508 = vmatpush1.msra.mxu0 0.0
      %8509 = vmatprep.mubr.f32.mxu0 0.0
      %8510 = vmatmul.mubr.f32.gmra.mrb[0].mxu0 %v4821
      %v8511 = vpop.f32.mrb[0].mxu0
      %v8512 = vadd.f32 0.0, %v8511
      %v8513 = vpop.f32.mrb[0].mxu0
      %8514 = vmatprep.mubr.f32.mxu0 0.0
      %8515 = vmatmul.mubr.f32.gmra.mrb[0].mxu0 %v4823
      %v8516 = vpop.f32.mrb[0].mxu0
      %v8517 = vadd.f32 0.0, %v8516
      %v8518 = vpop.f32.mrb[0].mxu0
      %8519 = vmatprep.mubr.f32.mxu0 0.0
      %8520 = vmatmul.mubr.f32.gmra.mrb[0].mxu0 %v4825
      %v8521 = vpop.f32.mrb[0].mxu0
      %v8522 = vadd.f32 0.0, %v8521
      %v8523 = vpop.f32.mrb[0].mxu0
      %8524 = vmatprep.mubr.f32.mxu0 0.0
      %8525 = vmatmul.mubr.f32.gmra.mrb[0].mxu0 %v4827
      %v8526 = vpop.f32.mrb[0].mxu0
      %v8527 = vadd.f32 0.0, %v8526
      %v8528 = vpop.f32.mrb[0].mxu0
      %8529 = vmatprep.mubr.f32.mxu0 0.0
      %8530 = vmatmul.mubr.f32.gmra.mrb[0].mxu0 %v4829
      %v8531 = vpop.f32.mrb[0].mxu0
      %v8532 = vadd.f32 0.0, %v8531
      %v8533 = vpop.f32.mrb[0].mxu0
      %8534 = vmatprep.mubr.f32.mxu0 0.0
      %8535 = vmatmul.mubr.f32.gmra.mrb[0].mxu0 %v4831
      %v8536 = vpop.f32.mrb[0].mxu0
      %v8537 = vadd.f32 0.0, %v8536
      %v8538 = vpop.f32.mrb[0].mxu0
      %8539 = vmatprep.mubr.f32.mxu0 0.0
      %8540 = vmatmul.mubr.f32.gmra.mrb[0].mxu0 %v4833
      %v8541 = vpop.f32.mrb[0].mxu0
      %v8542 = vadd.f32 0.0, %v8541
      %v8543 = vpop.f32.mrb[0].mxu0
      %8544 = vmatprep.mubr.f32.mxu0 0.0
      %8545 = vmatmul.mubr.f32.gmra.mrb[0].mxu0 %v4835
      %v8546 = vpop.f32.mrb[0].mxu0
      %v8547 = vadd.f32 0.0, %v8546
      %v8548 = vpop.f32.mrb[0].mxu0
      %8549 = vmatprep.mubr.f32.mxu0 0.0
      %8550 = vmatmul.mubr.f32.gmra.mrb[0].mxu0 %v4837
      %v8551 = vpop.f32.mrb[0].mxu0
      %v8552 = vadd.f32 0.0, %v8551
      %v8553 = vpop.f32.mrb[0].mxu0
      %8554 = vmatprep.mubr.f32.mxu0 0.0
      %8555 = vmatmul.mubr.f32.gmra.mrb[0].mxu0 %v4839
      %v8556 = vpop.f32.mrb[0].mxu0
      %v8557 = vadd.f32 0.0, %v8556
      %v8558 = vpop.f32.mrb[0].mxu0
      %8559 = vmatprep.mubr.f32.mxu0 0.0
      %8560 = vmatmul.mubr.f32.gmra.mrb[0].mxu0 %v4841
      %v8561 = vpop.f32.mrb[0].mxu0
      %v8562 = vadd.f32 0.0, %v8561
      %v8563 = vpop.f32.mrb[0].mxu0
      %8564 = vmatprep.mubr.f32.mxu0 0.0
      %8565 = vmatmul.mubr.f32.gmra.mrb[0].mxu0 %v4843
      %v8566 = vpop.f32.mrb[0].mxu0
      %v8567 = vadd.f32 0.0, %v8566
      %v8568 = vpop.f32.mrb[0].mxu0
      %8569 = vmatprep.mubr.f32.mxu0 0.0
      %8570 = vmatmul.mubr.f32.gmra.mrb[0].mxu0 %v4845
      %v8571 = vpop.f32.mrb[0].mxu0
      %v8572 = vadd.f32 0.0, %v8571
      %v8573 = vpop.f32.mrb[0].mxu0
      %8574 = vmatprep.mubr.f32.mxu0 0.0
      %8575 = vmatmul.mubr.f32.gmra.mrb[0].mxu0 %v4847
      %v8576 = vpop.f32.mrb[0].mxu0
      %v8577 = vadd.f32 0.0, %v8576
      %v8578 = vpop.f32.mrb[0].mxu0
      %8579 = vmatprep.mubr.f32.mxu0 0.0
      %8580 = vmatmul.mubr.f32.gmra.mrb[0].mxu0 %v4849
      %v8581 = vpop.f32.mrb[0].mxu0
      %v8582 = vadd.f32 0.0, %v8581
      %v8583 = vpop.f32.mrb[0].mxu0
      %8584 = vmatprep.mubr.f32.mxu0 0.0
      %8585 = vmatmul.mubr.f32.gmra.mrb[0].mxu0 %v4851
      %v8586 = vpop.f32.mrb[0].mxu0
      %v8587 = vadd.f32 0.0, %v8586
      %v8588 = vpop.f32.mrb[0].mxu0
      %8589 = vmatprep.mubr.f32.mxu0 0.0
      %8590 = vmatmul.mubr.f32.gmra.mrb[0].mxu0 %v4853
      %v8591 = vpop.f32.mrb[0].mxu0
      %v8592 = vadd.f32 0.0, %v8591
      %v8593 = vpop.f32.mrb[0].mxu0
      %8594 = vmatprep.mubr.f32.mxu0 0.0
      %8595 = vmatmul.mubr.f32.gmra.mrb[0].mxu0 %v4855
      %v8596 = vpop.f32.mrb[0].mxu0
      %v8597 = vadd.f32 0.0, %v8596
      %v8598 = vpop.f32.mrb[0].mxu0
      %8599 = vmatprep.mubr.f32.mxu0 0.0
      %8600 = vmatmul.mubr.f32.gmra.mrb[0].mxu0 %v4857
      %v8601 = vpop.f32.mrb[0].mxu0
      %v8602 = vadd.f32 0.0, %v8601
      %v8603 = vpop.f32.mrb[0].mxu0
      %8604 = vmatprep.mubr.f32.mxu0 0.0
      %8605 = vmatmul.mubr.f32.gmra.mrb[0].mxu0 %v4859
      %v8606 = vpop.f32.mrb[0].mxu0
      %v8607 = vadd.f32 0.0, %v8606
      %v8608 = vpop.f32.mrb[0].mxu0
      %8609 = vmatprep.mubr.f32.mxu0 0.0
      %8610 = vmatmul.mubr.f32.gmra.mrb[0].mxu0 %v4861
      %v8611 = vpop.f32.mrb[0].mxu0
      %v8612 = vadd.f32 0.0, %v8611
      %v8613 = vpop.f32.mrb[0].mxu0
      %8614 = vmatprep.mubr.f32.mxu0 0.0
      %8615 = vmatmul.mubr.f32.gmra.mrb[0].mxu0 %v4863
      %v8616 = vpop.f32.mrb[0].mxu0
      %v8617 = vadd.f32 0.0, %v8616
      %v8618 = vpop.f32.mrb[0].mxu0
      %8619 = vmatprep.mubr.f32.mxu0 0.0
      %8620 = vmatmul.mubr.f32.gmra.mrb[0].mxu0 %v4865
      %v8621 = vpop.f32.mrb[0].mxu0
      %v8622 = vadd.f32 0.0, %v8621
      %v8623 = vpop.f32.mrb[0].mxu0
      %8624 = vmatprep.mubr.f32.mxu0 0.0
      %8625 = vmatmul.mubr.f32.gmra.mrb[0].mxu0 %v4867
      %v8626 = vpop.f32.mrb[0].mxu0
      %v8627 = vadd.f32 0.0, %v8626
      %v8628 = vpop.f32.mrb[0].mxu0
      %8629 = vmatprep.mubr.f32.mxu0 0.0
      %8630 = vmatmul.mubr.f32.gmra.mrb[0].mxu0 %v4869
      %v8631 = vpop.f32.mrb[0].mxu0
      %v8632 = vadd.f32 0.0, %v8631
      %v8633 = vpop.f32.mrb[0].mxu0
      %8634 = vmatprep.mubr.f32.mxu0 0.0
      %8635 = vmatmul.mubr.f32.gmra.mrb[0].mxu0 %v4871
      %v8636 = vpop.f32.mrb[0].mxu0
      %v8637 = vadd.f32 0.0, %v8636
      %v8638 = vpop.f32.mrb[0].mxu0
      %8639 = vmatprep.mubr.f32.mxu0 0.0
      %8640 = vmatmul.mubr.f32.gmra.mrb[0].mxu0 %v4873
      %v8641 = vpop.f32.mrb[0].mxu0
      %v8642 = vadd.f32 0.0, %v8641
      %v8643 = vpop.f32.mrb[0].mxu0
      %8644 = vmatprep.mubr.f32.mxu0 0.0
      %8645 = vmatmul.mubr.f32.gmra.mrb[0].mxu0 %v4875
      %v8646 = vpop.f32.mrb[0].mxu0
      %v8647 = vadd.f32 0.0, %v8646
      %v8648 = vpop.f32.mrb[0].mxu0
      %8649 = vmatprep.mubr.f32.mxu0 0.0
      %8650 = vmatmul.mubr.f32.gmra.mrb[0].mxu0 %v6826
      %v8651 = vpop.f32.mrb[0].mxu0
      %v8652 = vadd.f32 0.0, %v8651
      %v8653 = vpop.f32.mrb[0].mxu0
      %8654 = vmatprep.mubr.f32.mxu0 0.0
      %8655 = vmatmul.mubr.f32.gmra.mrb[0].mxu0 %v6828
      %v8656 = vpop.f32.mrb[0].mxu0
      %v8657 = vadd.f32 0.0, %v8656
      %v8658 = vpop.f32.mrb[0].mxu0
      %8659 = vmatprep.mubr.f32.mxu0 0.0
      %8660 = vmatmul.mubr.f32.gmra.mrb[0].mxu0 %v8440
      %v8661 = vpop.f32.mrb[0].mxu0
      %v8662 = vadd.f32 0.0, %v8661
      %v8663 = vpop.f32.mrb[0].mxu0
      %8664 = vmatprep.mubr.f32.mxu0 0.0
      %8665 = vmatmul.mubr.f32.gmra.mrb[0].mxu0 %v8440
      %v8666 = vpop.f32.mrb[0].mxu0
      %v8667 = vadd.f32 0.0, %v8666
      %v8668 = vpop.f32.mrb[0].mxu0
      %8669 = vdwg.mxu0
      %v8670 = vadd.f32 %v8406, %v8512
      %v8671 = vadd.f32 %v8407, %v8517
      %v8672 = vadd.f32 %v8408, %v8522
      %v8673 = vadd.f32 %v8409, %v8527
      %v8674 = vadd.f32 %v8410, %v8532
      %v8675 = vadd.f32 %v8411, %v8537
      %v8676 = vadd.f32 %v8412, %v8542
      %v8677 = vadd.f32 %v8413, %v8547
      %v8678 = vadd.f32 %v8414, %v8552
      %v8679 = vadd.f32 %v8415, %v8557
      %v8680 = vadd.f32 %v8416, %v8562
      %v8681 = vadd.f32 %v8417, %v8567
      %v8682 = vadd.f32 %v8418, %v8572
      %v8683 = vadd.f32 %v8419, %v8577
      %v8684 = vadd.f32 %v8420, %v8582
      %v8685 = vadd.f32 %v8421, %v8587
      %v8686 = vadd.f32 %v8422, %v8592
      %v8687 = vadd.f32 %v8423, %v8597
      %v8688 = vadd.f32 %v8424, %v8602
      %v8689 = vadd.f32 %v8425, %v8607
      %v8690 = vadd.f32 %v8426, %v8612
      %v8691 = vadd.f32 %v8427, %v8617
      %v8692 = vadd.f32 %v8428, %v8622
      %v8693 = vadd.f32 %v8429, %v8627
      %v8694 = vadd.f32 %v8430, %v8632
      %v8695 = vadd.f32 %v8431, %v8637
      %v8696 = vadd.f32 %v8432, %v8642
      %v8697 = vadd.f32 %v8433, %v8647
      %v8698 = vadd.f32 %v8434, %v8652
      %v8699 = vadd.f32 %v8435, %v8657
      %v8700 = vadd.f32 %v8436, %v8662
      %v8701 = vadd.f32 %v8437, %v8667
      %s8702 = scalar_lea.vmem %s2, 32
      %v8703 = vld [vmem:[%s8702] sm:$0xf]
      %v8705 = vsel %vm3959, %v8703, 0
      %8707 = vmatprep.subr.mxu0 0.0
      %8708 = vmatpush1.msra.mxu0 %v8705
      %8709 = vmatprep.subr.mxu0 0.0
      %8710 = vmatpush1.msra.mxu0 0.0
      %8711 = vmatprep.subr.mxu0 0.0
      %8712 = vmatpush1.msra.mxu0 0.0
      %8713 = vmatprep.subr.mxu0 0.0
      %8714 = vmatpush1.msra.mxu0 0.0
      %8715 = vmatprep.subr.mxu0 0.0
      %8716 = vmatpush1.msra.mxu0 0.0
      %8717 = vmatprep.subr.mxu0 0.0
      %8718 = vmatpush1.msra.mxu0 0.0
      %8719 = vmatprep.subr.mxu0 0.0
      %8720 = vmatpush1.msra.mxu0 0.0
      %8721 = vmatprep.subr.mxu0 0.0
      %8722 = vmatpush1.msra.mxu0 0.0
      %8723 = vmatprep.subr.mxu0 0.0
      %8724 = vmatpush1.msra.mxu0 0.0
      %8725 = vmatprep.subr.mxu0 0.0
      %8726 = vmatpush1.msra.mxu0 0.0
      %8727 = vmatprep.subr.mxu0 0.0
      %8728 = vmatpush1.msra.mxu0 0.0
      %8729 = vmatprep.subr.mxu0 0.0
      %8730 = vmatpush1.msra.mxu0 0.0
      %8731 = vmatprep.subr.mxu0 0.0
      %8732 = vmatpush1.msra.mxu0 0.0
      %8733 = vmatprep.subr.mxu0 0.0
      %8734 = vmatpush1.msra.mxu0 0.0
      %8735 = vmatprep.subr.mxu0 0.0
      %8736 = vmatpush1.msra.mxu0 0.0
      %8737 = vmatprep.subr.mxu0 0.0
      %8738 = vmatpush1.msra.mxu0 0.0
      %8739 = vmatprep.subr.mxu0 0.0
      %8740 = vmatpush1.msra.mxu0 0.0
      %8741 = vmatprep.subr.mxu0 0.0
      %8742 = vmatpush1.msra.mxu0 0.0
      %8743 = vmatprep.subr.mxu0 0.0
      %8744 = vmatpush1.msra.mxu0 0.0
      %8745 = vmatprep.subr.mxu0 0.0
      %8746 = vmatpush1.msra.mxu0 0.0
      %8747 = vmatprep.subr.mxu0 0.0
      %8748 = vmatpush1.msra.mxu0 0.0
      %8749 = vmatprep.subr.mxu0 0.0
      %8750 = vmatpush1.msra.mxu0 0.0
      %8751 = vmatprep.subr.mxu0 0.0
      %8752 = vmatpush1.msra.mxu0 0.0
      %8753 = vmatprep.subr.mxu0 0.0
      %8754 = vmatpush1.msra.mxu0 0.0
      %8755 = vmatprep.subr.mxu0 0.0
      %8756 = vmatpush1.msra.mxu0 0.0
      %8757 = vmatprep.subr.mxu0 0.0
      %8758 = vmatpush1.msra.mxu0 0.0
      %8759 = vmatprep.subr.mxu0 0.0
      %8760 = vmatpush1.msra.mxu0 0.0
      %8761 = vmatprep.subr.mxu0 0.0
      %8762 = vmatpush1.msra.mxu0 0.0
      %8763 = vmatprep.subr.mxu0 0.0
      %8764 = vmatpush1.msra.mxu0 0.0
      %8765 = vmatprep.subr.mxu0 0.0
      %8766 = vmatpush1.msra.mxu0 0.0
      %8767 = vmatprep.subr.mxu0 0.0
      %8768 = vmatpush1.msra.mxu0 0.0
      %8769 = vmatprep.subr.mxu0 0.0
      %8770 = vmatpush1.msra.mxu0 0.0
      %8771 = vmatprep.mubr.f32.mxu0 0.0
      %8772 = vmatmul.mubr.f32.gmra.mrb[0].mxu0 %v5228
      %v8773 = vpop.f32.mrb[0].mxu0
      %v8774 = vadd.f32 0.0, %v8773
      %v8775 = vpop.f32.mrb[0].mxu0
      %8776 = vmatprep.mubr.f32.mxu0 0.0
      %8777 = vmatmul.mubr.f32.gmra.mrb[0].mxu0 %v5231
      %v8778 = vpop.f32.mrb[0].mxu0
      %v8779 = vadd.f32 0.0, %v8778
      %v8780 = vpop.f32.mrb[0].mxu0
      %8781 = vmatprep.mubr.f32.mxu0 0.0
      %8782 = vmatmul.mubr.f32.gmra.mrb[0].mxu0 %v5233
      %v8783 = vpop.f32.mrb[0].mxu0
      %v8784 = vadd.f32 0.0, %v8783
      %v8785 = vpop.f32.mrb[0].mxu0
      %8786 = vmatprep.mubr.f32.mxu0 0.0
      %8787 = vmatmul.mubr.f32.gmra.mrb[0].mxu0 %v5236
      %v8788 = vpop.f32.mrb[0].mxu0
      %v8789 = vadd.f32 0.0, %v8788
      %v8790 = vpop.f32.mrb[0].mxu0
      %8791 = vmatprep.mubr.f32.mxu0 0.0
      %8792 = vmatmul.mubr.f32.gmra.mrb[0].mxu0 %v5238
      %v8793 = vpop.f32.mrb[0].mxu0
      %v8794 = vadd.f32 0.0, %v8793
      %v8795 = vpop.f32.mrb[0].mxu0
      %8796 = vmatprep.mubr.f32.mxu0 0.0
      %8797 = vmatmul.mubr.f32.gmra.mrb[0].mxu0 %v5241
      %v8798 = vpop.f32.mrb[0].mxu0
      %v8799 = vadd.f32 0.0, %v8798
      %v8800 = vpop.f32.mrb[0].mxu0
      %8801 = vmatprep.mubr.f32.mxu0 0.0
      %8802 = vmatmul.mubr.f32.gmra.mrb[0].mxu0 %v5243
      %v8803 = vpop.f32.mrb[0].mxu0
      %v8804 = vadd.f32 0.0, %v8803
      %v8805 = vpop.f32.mrb[0].mxu0
      %8806 = vmatprep.mubr.f32.mxu0 0.0
      %8807 = vmatmul.mubr.f32.gmra.mrb[0].mxu0 %v5246
      %v8808 = vpop.f32.mrb[0].mxu0
      %v8809 = vadd.f32 0.0, %v8808
      %v8810 = vpop.f32.mrb[0].mxu0
      %8811 = vmatprep.mubr.f32.mxu0 0.0
      %8812 = vmatmul.mubr.f32.gmra.mrb[0].mxu0 %v5248
      %v8813 = vpop.f32.mrb[0].mxu0
      %v8814 = vadd.f32 0.0, %v8813
      %v8815 = vpop.f32.mrb[0].mxu0
      %8816 = vmatprep.mubr.f32.mxu0 0.0
      %8817 = vmatmul.mubr.f32.gmra.mrb[0].mxu0 %v5251
      %v8818 = vpop.f32.mrb[0].mxu0
      %v8819 = vadd.f32 0.0, %v8818
      %v8820 = vpop.f32.mrb[0].mxu0
      %8821 = vmatprep.mubr.f32.mxu0 0.0
      %8822 = vmatmul.mubr.f32.gmra.mrb[0].mxu0 %v5253
      %v8823 = vpop.f32.mrb[0].mxu0
      %v8824 = vadd.f32 0.0, %v8823
      %v8825 = vpop.f32.mrb[0].mxu0
      %8826 = vmatprep.mubr.f32.mxu0 0.0
      %8827 = vmatmul.mubr.f32.gmra.mrb[0].mxu0 %v5256
      %v8828 = vpop.f32.mrb[0].mxu0
      %v8829 = vadd.f32 0.0, %v8828
      %v8830 = vpop.f32.mrb[0].mxu0
      %8831 = vmatprep.mubr.f32.mxu0 0.0
      %8832 = vmatmul.mubr.f32.gmra.mrb[0].mxu0 %v5258
      %v8833 = vpop.f32.mrb[0].mxu0
      %v8834 = vadd.f32 0.0, %v8833
      %v8835 = vpop.f32.mrb[0].mxu0
      %8836 = vmatprep.mubr.f32.mxu0 0.0
      %8837 = vmatmul.mubr.f32.gmra.mrb[0].mxu0 %v5261
      %v8838 = vpop.f32.mrb[0].mxu0
      %v8839 = vadd.f32 0.0, %v8838
      %v8840 = vpop.f32.mrb[0].mxu0
      %8841 = vmatprep.mubr.f32.mxu0 0.0
      %8842 = vmatmul.mubr.f32.gmra.mrb[0].mxu0 %v5263
      %v8843 = vpop.f32.mrb[0].mxu0
      %v8844 = vadd.f32 0.0, %v8843
      %v8845 = vpop.f32.mrb[0].mxu0
      %8846 = vmatprep.mubr.f32.mxu0 0.0
      %8847 = vmatmul.mubr.f32.gmra.mrb[0].mxu0 %v5266
      %v8848 = vpop.f32.mrb[0].mxu0
      %v8849 = vadd.f32 0.0, %v8848
      %v8850 = vpop.f32.mrb[0].mxu0
      %8851 = vmatprep.mubr.f32.mxu0 0.0
      %8852 = vmatmul.mubr.f32.gmra.mrb[0].mxu0 %v5268
      %v8853 = vpop.f32.mrb[0].mxu0
      %v8854 = vadd.f32 0.0, %v8853
      %v8855 = vpop.f32.mrb[0].mxu0
      %8856 = vmatprep.mubr.f32.mxu0 0.0
      %8857 = vmatmul.mubr.f32.gmra.mrb[0].mxu0 %v5271
      %v8858 = vpop.f32.mrb[0].mxu0
      %v8859 = vadd.f32 0.0, %v8858
      %v8860 = vpop.f32.mrb[0].mxu0
      %8861 = vmatprep.mubr.f32.mxu0 0.0
      %8862 = vmatmul.mubr.f32.gmra.mrb[0].mxu0 %v5273
      %v8863 = vpop.f32.mrb[0].mxu0
      %v8864 = vadd.f32 0.0, %v8863
      %v8865 = vpop.f32.mrb[0].mxu0
      %8866 = vmatprep.mubr.f32.mxu0 0.0
      %8867 = vmatmul.mubr.f32.gmra.mrb[0].mxu0 %v5276
      %v8868 = vpop.f32.mrb[0].mxu0
      %v8869 = vadd.f32 0.0, %v8868
      %v8870 = vpop.f32.mrb[0].mxu0
      %8871 = vmatprep.mubr.f32.mxu0 0.0
      %8872 = vmatmul.mubr.f32.gmra.mrb[0].mxu0 %v5278
      %v8873 = vpop.f32.mrb[0].mxu0
      %v8874 = vadd.f32 0.0, %v8873
      %v8875 = vpop.f32.mrb[0].mxu0
      %8876 = vmatprep.mubr.f32.mxu0 0.0
      %8877 = vmatmul.mubr.f32.gmra.mrb[0].mxu0 %v5281
      %v8878 = vpop.f32.mrb[0].mxu0
      %v8879 = vadd.f32 0.0, %v8878
      %v8880 = vpop.f32.mrb[0].mxu0
      %8881 = vmatprep.mubr.f32.mxu0 0.0
      %8882 = vmatmul.mubr.f32.gmra.mrb[0].mxu0 %v5283
      %v8883 = vpop.f32.mrb[0].mxu0
      %v8884 = vadd.f32 0.0, %v8883
      %v8885 = vpop.f32.mrb[0].mxu0
      %8886 = vmatprep.mubr.f32.mxu0 0.0
      %8887 = vmatmul.mubr.f32.gmra.mrb[0].mxu0 %v5286
      %v8888 = vpop.f32.mrb[0].mxu0
      %v8889 = vadd.f32 0.0, %v8888
      %v8890 = vpop.f32.mrb[0].mxu0
      %8891 = vmatprep.mubr.f32.mxu0 0.0
      %8892 = vmatmul.mubr.f32.gmra.mrb[0].mxu0 %v5288
      %v8893 = vpop.f32.mrb[0].mxu0
      %v8894 = vadd.f32 0.0, %v8893
      %v8895 = vpop.f32.mrb[0].mxu0
      %8896 = vmatprep.mubr.f32.mxu0 0.0
      %8897 = vmatmul.mubr.f32.gmra.mrb[0].mxu0 %v5291
      %v8898 = vpop.f32.mrb[0].mxu0
      %v8899 = vadd.f32 0.0, %v8898
      %v8900 = vpop.f32.mrb[0].mxu0
      %8901 = vmatprep.mubr.f32.mxu0 0.0
      %8902 = vmatmul.mubr.f32.gmra.mrb[0].mxu0 %v5293
      %v8903 = vpop.f32.mrb[0].mxu0
      %v8904 = vadd.f32 0.0, %v8903
      %v8905 = vpop.f32.mrb[0].mxu0
      %8906 = vmatprep.mubr.f32.mxu0 0.0
      %8907 = vmatmul.mubr.f32.gmra.mrb[0].mxu0 %v5296
      %v8908 = vpop.f32.mrb[0].mxu0
      %v8909 = vadd.f32 0.0, %v8908
      %v8910 = vpop.f32.mrb[0].mxu0
      %8911 = vmatprep.mubr.f32.mxu0 0.0
      %8912 = vmatmul.mubr.f32.gmra.mrb[0].mxu0 %v7097
      %v8913 = vpop.f32.mrb[0].mxu0
      %v8914 = vadd.f32 0.0, %v8913
      %v8915 = vpop.f32.mrb[0].mxu0
      %8916 = vmatprep.mubr.f32.mxu0 0.0
      %8917 = vmatmul.mubr.f32.gmra.mrb[0].mxu0 %v7100
      %v8918 = vpop.f32.mrb[0].mxu0
      %v8919 = vadd.f32 0.0, %v8918
      %v8920 = vpop.f32.mrb[0].mxu0
      %8921 = vmatprep.mubr.f32.mxu0 0.0
      %8922 = vmatmul.mubr.f32.gmra.mrb[0].mxu0 %v5218
      %v8923 = vpop.f32.mrb[0].mxu0
      %v8924 = vadd.f32 0.0, %v8923
      %v8925 = vpop.f32.mrb[0].mxu0
      %8926 = vmatprep.mubr.f32.mxu0 0.0
      %8927 = vmatmul.mubr.f32.gmra.mrb[0].mxu0 %v5221
      %v8928 = vpop.f32.mrb[0].mxu0
      %v8929 = vadd.f32 0.0, %v8928
      %v8930 = vpop.f32.mrb[0].mxu0
      %8931 = vdwg.mxu0
      %v8932 = vadd.f32 %v8670, %v8774
      %v8933 = vadd.f32 %v8671, %v8779
      %v8934 = vadd.f32 %v8672, %v8784
      %v8935 = vadd.f32 %v8673, %v8789
      %v8936 = vadd.f32 %v8674, %v8794
      %v8937 = vadd.f32 %v8675, %v8799
      %v8938 = vadd.f32 %v8676, %v8804
      %v8939 = vadd.f32 %v8677, %v8809
      %v8940 = vadd.f32 %v8678, %v8814
      %v8941 = vadd.f32 %v8679, %v8819
      %v8942 = vadd.f32 %v8680, %v8824
      %v8943 = vadd.f32 %v8681, %v8829
      %v8944 = vadd.f32 %v8682, %v8834
      %v8945 = vadd.f32 %v8683, %v8839
      %v8946 = vadd.f32 %v8684, %v8844
      %v8947 = vadd.f32 %v8685, %v8849
      %v8948 = vadd.f32 %v8686, %v8854
      %v8949 = vadd.f32 %v8687, %v8859
      %v8950 = vadd.f32 %v8688, %v8864
      %v8951 = vadd.f32 %v8689, %v8869
      %v8952 = vadd.f32 %v8690, %v8874
      %v8953 = vadd.f32 %v8691, %v8879
      %v8954 = vadd.f32 %v8692, %v8884
      %v8955 = vadd.f32 %v8693, %v8889
      %v8956 = vadd.f32 %v8694, %v8894
      %v8957 = vadd.f32 %v8695, %v8899
      %v8958 = vadd.f32 %v8696, %v8904
      %v8959 = vadd.f32 %v8697, %v8909
      %v8960 = vadd.f32 %v8698, %v8914
      %v8961 = vadd.f32 %v8699, %v8919
      %v8962 = vadd.f32 %v8700, %v8924
      %v8963 = vadd.f32 %v8701, %v8929
      %v8964 = vrot.slane %v7904, 1
      %v8965 = vsel %vm468, %v8964, %v8964
      %v8967 = vsel %vm468, %v8964, 0.0
      %s8968 = scalar_lea.vmem %s3, 32
      %v8969 = vld [vmem:[%s8968] sm:$0xf]
      %v8970 = vsel %vm3878, %v8965, 0
      %v8973 = vsel %vm3878, %v8967, 0
      %v8976 = vsel %vm3959, %v8969, 0
      %8978 = vmatprep.subr.mxu0 0.0
      %8979 = vmatpush1.msra.mxu0 %v8976
      %8980 = vmatprep.subr.mxu0 0.0
      %8981 = vmatpush1.msra.mxu0 0.0
      %8982 = vmatprep.subr.mxu0 0.0
      %8983 = vmatpush1.msra.mxu0 0.0
      %8984 = vmatprep.subr.mxu0 0.0
      %8985 = vmatpush1.msra.mxu0 0.0
      %8986 = vmatprep.subr.mxu0 0.0
      %8987 = vmatpush1.msra.mxu0 0.0
      %8988 = vmatprep.subr.mxu0 0.0
      %8989 = vmatpush1.msra.mxu0 0.0
      %8990 = vmatprep.subr.mxu0 0.0
      %8991 = vmatpush1.msra.mxu0 0.0
      %8992 = vmatprep.subr.mxu0 0.0
      %8993 = vmatpush1.msra.mxu0 0.0
      %8994 = vmatprep.subr.mxu0 0.0
      %8995 = vmatpush1.msra.mxu0 0.0
      %8996 = vmatprep.subr.mxu0 0.0
      %8997 = vmatpush1.msra.mxu0 0.0
      %8998 = vmatprep.subr.mxu0 0.0
      %8999 = vmatpush1.msra.mxu0 0.0
      %9000 = vmatprep.subr.mxu0 0.0
      %9001 = vmatpush1.msra.mxu0 0.0
      %9002 = vmatprep.subr.mxu0 0.0
      %9003 = vmatpush1.msra.mxu0 0.0
      %9004 = vmatprep.subr.mxu0 0.0
      %9005 = vmatpush1.msra.mxu0 0.0
      %9006 = vmatprep.subr.mxu0 0.0
      %9007 = vmatpush1.msra.mxu0 0.0
      %9008 = vmatprep.subr.mxu0 0.0
      %9009 = vmatpush1.msra.mxu0 0.0
      %9010 = vmatprep.subr.mxu0 0.0
      %9011 = vmatpush1.msra.mxu0 0.0
      %9012 = vmatprep.subr.mxu0 0.0
      %9013 = vmatpush1.msra.mxu0 0.0
      %9014 = vmatprep.subr.mxu0 0.0
      %9015 = vmatpush1.msra.mxu0 0.0
      %9016 = vmatprep.subr.mxu0 0.0
      %9017 = vmatpush1.msra.mxu0 0.0
      %9018 = vmatprep.subr.mxu0 0.0
      %9019 = vmatpush1.msra.mxu0 0.0
      %9020 = vmatprep.subr.mxu0 0.0
      %9021 = vmatpush1.msra.mxu0 0.0
      %9022 = vmatprep.subr.mxu0 0.0
      %9023 = vmatpush1.msra.mxu0 0.0
      %9024 = vmatprep.subr.mxu0 0.0
      %9025 = vmatpush1.msra.mxu0 0.0
      %9026 = vmatprep.subr.mxu0 0.0
      %9027 = vmatpush1.msra.mxu0 0.0
      %9028 = vmatprep.subr.mxu0 0.0
      %9029 = vmatpush1.msra.mxu0 0.0
      %9030 = vmatprep.subr.mxu0 0.0
      %9031 = vmatpush1.msra.mxu0 0.0
      %9032 = vmatprep.subr.mxu0 0.0
      %9033 = vmatpush1.msra.mxu0 0.0
      %9034 = vmatprep.subr.mxu0 0.0
      %9035 = vmatpush1.msra.mxu0 0.0
      %9036 = vmatprep.subr.mxu0 0.0
      %9037 = vmatpush1.msra.mxu0 0.0
      %9038 = vmatprep.subr.mxu0 0.0
      %9039 = vmatpush1.msra.mxu0 0.0
      %9040 = vmatprep.subr.mxu0 0.0
      %9041 = vmatpush1.msra.mxu0 0.0
      %9042 = vmatprep.mubr.f32.mxu0 0.0
      %9043 = vmatmul.mubr.f32.gmra.mrb[0].mxu0 %v5640
      %v9044 = vpop.f32.mrb[0].mxu0
      %v9045 = vadd.f32 0.0, %v9044
      %v9046 = vpop.f32.mrb[0].mxu0
      %9047 = vmatprep.mubr.f32.mxu0 0.0
      %9048 = vmatmul.mubr.f32.gmra.mrb[0].mxu0 %v5643
      %v9049 = vpop.f32.mrb[0].mxu0
      %v9050 = vadd.f32 0.0, %v9049
      %v9051 = vpop.f32.mrb[0].mxu0
      %9052 = vmatprep.mubr.f32.mxu0 0.0
      %9053 = vmatmul.mubr.f32.gmra.mrb[0].mxu0 %v5645
      %v9054 = vpop.f32.mrb[0].mxu0
      %v9055 = vadd.f32 0.0, %v9054
      %v9056 = vpop.f32.mrb[0].mxu0
      %9057 = vmatprep.mubr.f32.mxu0 0.0
      %9058 = vmatmul.mubr.f32.gmra.mrb[0].mxu0 %v5648
      %v9059 = vpop.f32.mrb[0].mxu0
      %v9060 = vadd.f32 0.0, %v9059
      %v9061 = vpop.f32.mrb[0].mxu0
      %9062 = vmatprep.mubr.f32.mxu0 0.0
      %9063 = vmatmul.mubr.f32.gmra.mrb[0].mxu0 %v5650
      %v9064 = vpop.f32.mrb[0].mxu0
      %v9065 = vadd.f32 0.0, %v9064
      %v9066 = vpop.f32.mrb[0].mxu0
      %9067 = vmatprep.mubr.f32.mxu0 0.0
      %9068 = vmatmul.mubr.f32.gmra.mrb[0].mxu0 %v5653
      %v9069 = vpop.f32.mrb[0].mxu0
      %v9070 = vadd.f32 0.0, %v9069
      %v9071 = vpop.f32.mrb[0].mxu0
      %9072 = vmatprep.mubr.f32.mxu0 0.0
      %9073 = vmatmul.mubr.f32.gmra.mrb[0].mxu0 %v5655
      %v9074 = vpop.f32.mrb[0].mxu0
      %v9075 = vadd.f32 0.0, %v9074
      %v9076 = vpop.f32.mrb[0].mxu0
      %9077 = vmatprep.mubr.f32.mxu0 0.0
      %9078 = vmatmul.mubr.f32.gmra.mrb[0].mxu0 %v5658
      %v9079 = vpop.f32.mrb[0].mxu0
      %v9080 = vadd.f32 0.0, %v9079
      %v9081 = vpop.f32.mrb[0].mxu0
      %9082 = vmatprep.mubr.f32.mxu0 0.0
      %9083 = vmatmul.mubr.f32.gmra.mrb[0].mxu0 %v5660
      %v9084 = vpop.f32.mrb[0].mxu0
      %v9085 = vadd.f32 0.0, %v9084
      %v9086 = vpop.f32.mrb[0].mxu0
      %9087 = vmatprep.mubr.f32.mxu0 0.0
      %9088 = vmatmul.mubr.f32.gmra.mrb[0].mxu0 %v5663
      %v9089 = vpop.f32.mrb[0].mxu0
      %v9090 = vadd.f32 0.0, %v9089
      %v9091 = vpop.f32.mrb[0].mxu0
      %9092 = vmatprep.mubr.f32.mxu0 0.0
      %9093 = vmatmul.mubr.f32.gmra.mrb[0].mxu0 %v5665
      %v9094 = vpop.f32.mrb[0].mxu0
      %v9095 = vadd.f32 0.0, %v9094
      %v9096 = vpop.f32.mrb[0].mxu0
      %9097 = vmatprep.mubr.f32.mxu0 0.0
      %9098 = vmatmul.mubr.f32.gmra.mrb[0].mxu0 %v5668
      %v9099 = vpop.f32.mrb[0].mxu0
      %v9100 = vadd.f32 0.0, %v9099
      %v9101 = vpop.f32.mrb[0].mxu0
      %9102 = vmatprep.mubr.f32.mxu0 0.0
      %9103 = vmatmul.mubr.f32.gmra.mrb[0].mxu0 %v5670
      %v9104 = vpop.f32.mrb[0].mxu0
      %v9105 = vadd.f32 0.0, %v9104
      %v9106 = vpop.f32.mrb[0].mxu0
      %9107 = vmatprep.mubr.f32.mxu0 0.0
      %9108 = vmatmul.mubr.f32.gmra.mrb[0].mxu0 %v5673
      %v9109 = vpop.f32.mrb[0].mxu0
      %v9110 = vadd.f32 0.0, %v9109
      %v9111 = vpop.f32.mrb[0].mxu0
      %9112 = vmatprep.mubr.f32.mxu0 0.0
      %9113 = vmatmul.mubr.f32.gmra.mrb[0].mxu0 %v5675
      %v9114 = vpop.f32.mrb[0].mxu0
      %v9115 = vadd.f32 0.0, %v9114
      %v9116 = vpop.f32.mrb[0].mxu0
      %9117 = vmatprep.mubr.f32.mxu0 0.0
      %9118 = vmatmul.mubr.f32.gmra.mrb[0].mxu0 %v5678
      %v9119 = vpop.f32.mrb[0].mxu0
      %v9120 = vadd.f32 0.0, %v9119
      %v9121 = vpop.f32.mrb[0].mxu0
      %9122 = vmatprep.mubr.f32.mxu0 0.0
      %9123 = vmatmul.mubr.f32.gmra.mrb[0].mxu0 %v5680
      %v9124 = vpop.f32.mrb[0].mxu0
      %v9125 = vadd.f32 0.0, %v9124
      %v9126 = vpop.f32.mrb[0].mxu0
      %9127 = vmatprep.mubr.f32.mxu0 0.0
      %9128 = vmatmul.mubr.f32.gmra.mrb[0].mxu0 %v5683
      %v9129 = vpop.f32.mrb[0].mxu0
      %v9130 = vadd.f32 0.0, %v9129
      %v9131 = vpop.f32.mrb[0].mxu0
      %9132 = vmatprep.mubr.f32.mxu0 0.0
      %9133 = vmatmul.mubr.f32.gmra.mrb[0].mxu0 %v5685
      %v9134 = vpop.f32.mrb[0].mxu0
      %v9135 = vadd.f32 0.0, %v9134
      %v9136 = vpop.f32.mrb[0].mxu0
      %9137 = vmatprep.mubr.f32.mxu0 0.0
      %9138 = vmatmul.mubr.f32.gmra.mrb[0].mxu0 %v5688
      %v9139 = vpop.f32.mrb[0].mxu0
      %v9140 = vadd.f32 0.0, %v9139
      %v9141 = vpop.f32.mrb[0].mxu0
      %9142 = vmatprep.mubr.f32.mxu0 0.0
      %9143 = vmatmul.mubr.f32.gmra.mrb[0].mxu0 %v5690
      %v9144 = vpop.f32.mrb[0].mxu0
      %v9145 = vadd.f32 0.0, %v9144
      %v9146 = vpop.f32.mrb[0].mxu0
      %9147 = vmatprep.mubr.f32.mxu0 0.0
      %9148 = vmatmul.mubr.f32.gmra.mrb[0].mxu0 %v5693
      %v9149 = vpop.f32.mrb[0].mxu0
      %v9150 = vadd.f32 0.0, %v9149
      %v9151 = vpop.f32.mrb[0].mxu0
      %9152 = vmatprep.mubr.f32.mxu0 0.0
      %9153 = vmatmul.mubr.f32.gmra.mrb[0].mxu0 %v5695
      %v9154 = vpop.f32.mrb[0].mxu0
      %v9155 = vadd.f32 0.0, %v9154
      %v9156 = vpop.f32.mrb[0].mxu0
      %9157 = vmatprep.mubr.f32.mxu0 0.0
      %9158 = vmatmul.mubr.f32.gmra.mrb[0].mxu0 %v5698
      %v9159 = vpop.f32.mrb[0].mxu0
      %v9160 = vadd.f32 0.0, %v9159
      %v9161 = vpop.f32.mrb[0].mxu0
      %9162 = vmatprep.mubr.f32.mxu0 0.0
      %9163 = vmatmul.mubr.f32.gmra.mrb[0].mxu0 %v5700
      %v9164 = vpop.f32.mrb[0].mxu0
      %v9165 = vadd.f32 0.0, %v9164
      %v9166 = vpop.f32.mrb[0].mxu0
      %9167 = vmatprep.mubr.f32.mxu0 0.0
      %9168 = vmatmul.mubr.f32.gmra.mrb[0].mxu0 %v5703
      %v9169 = vpop.f32.mrb[0].mxu0
      %v9170 = vadd.f32 0.0, %v9169
      %v9171 = vpop.f32.mrb[0].mxu0
      %9172 = vmatprep.mubr.f32.mxu0 0.0
      %9173 = vmatmul.mubr.f32.gmra.mrb[0].mxu0 %v5705
      %v9174 = vpop.f32.mrb[0].mxu0
      %v9175 = vadd.f32 0.0, %v9174
      %v9176 = vpop.f32.mrb[0].mxu0
      %9177 = vmatprep.mubr.f32.mxu0 0.0
      %9178 = vmatmul.mubr.f32.gmra.mrb[0].mxu0 %v5708
      %v9179 = vpop.f32.mrb[0].mxu0
      %v9180 = vadd.f32 0.0, %v9179
      %v9181 = vpop.f32.mrb[0].mxu0
      %9182 = vmatprep.mubr.f32.mxu0 0.0
      %9183 = vmatmul.mubr.f32.gmra.mrb[0].mxu0 %v7369
      %v9184 = vpop.f32.mrb[0].mxu0
      %v9185 = vadd.f32 0.0, %v9184
      %v9186 = vpop.f32.mrb[0].mxu0
      %9187 = vmatprep.mubr.f32.mxu0 0.0
      %9188 = vmatmul.mubr.f32.gmra.mrb[0].mxu0 %v7372
      %v9189 = vpop.f32.mrb[0].mxu0
      %v9190 = vadd.f32 0.0, %v9189
      %v9191 = vpop.f32.mrb[0].mxu0
      %9192 = vmatprep.mubr.f32.mxu0 0.0
      %9193 = vmatmul.mubr.f32.gmra.mrb[0].mxu0 %v8970
      %v9194 = vpop.f32.mrb[0].mxu0
      %v9195 = vadd.f32 0.0, %v9194
      %v9196 = vpop.f32.mrb[0].mxu0
      %9197 = vmatprep.mubr.f32.mxu0 0.0
      %9198 = vmatmul.mubr.f32.gmra.mrb[0].mxu0 %v8973
      %v9199 = vpop.f32.mrb[0].mxu0
      %v9200 = vadd.f32 0.0, %v9199
      %v9201 = vpop.f32.mrb[0].mxu0
      %9202 = vdwg.mxu0
      %v9203 = vadd.f32 %v8932, %v9045
      %v9204 = vadd.f32 %v8933, %v9050
      %v9205 = vadd.f32 %v8934, %v9055
      %v9206 = vadd.f32 %v8935, %v9060
      %v9207 = vadd.f32 %v8936, %v9065
      %v9208 = vadd.f32 %v8937, %v9070
      %v9209 = vadd.f32 %v8938, %v9075
      %v9210 = vadd.f32 %v8939, %v9080
      %v9211 = vadd.f32 %v8940, %v9085
      %v9212 = vadd.f32 %v8941, %v9090
      %v9213 = vadd.f32 %v8942, %v9095
      %v9214 = vadd.f32 %v8943, %v9100
      %v9215 = vadd.f32 %v8944, %v9105
      %v9216 = vadd.f32 %v8945, %v9110
      %v9217 = vadd.f32 %v8946, %v9115
      %v9218 = vadd.f32 %v8947, %v9120
      %v9219 = vadd.f32 %v8948, %v9125
      %v9220 = vadd.f32 %v8949, %v9130
      %v9221 = vadd.f32 %v8950, %v9135
      %v9222 = vadd.f32 %v8951, %v9140
      %v9223 = vadd.f32 %v8952, %v9145
      %v9224 = vadd.f32 %v8953, %v9150
      %v9225 = vadd.f32 %v8954, %v9155
      %v9226 = vadd.f32 %v8955, %v9160
      %v9227 = vadd.f32 %v8956, %v9165
      %v9228 = vadd.f32 %v8957, %v9170
      %v9229 = vadd.f32 %v8958, %v9175
      %v9230 = vadd.f32 %v8959, %v9180
      %v9231 = vadd.f32 %v8960, %v9185
      %v9232 = vadd.f32 %v8961, %v9190
      %v9233 = vadd.f32 %v8962, %v9195
      %v9234 = vadd.f32 %v8963, %v9200
      %v9235 = vld [vmem:[%s4] sm:$0x1]
      %v9237 = vlaneseq
      %v9238 = vshrl.u32 %v9237, 7
      %v9239 = vsub.s32 0, %v9238
      %v9240 = vrot.slane %v9235, %v9239
      %v9242 = vadd.f32 %v9203, %v9240
      %v9243 = vadd.f32 %v9204, %v9240
      %v9244 = vadd.f32 %v9205, %v9240
      %v9245 = vadd.f32 %v9206, %v9240
      %v9246 = vadd.f32 %v9207, %v9240
      %v9247 = vadd.f32 %v9208, %v9240
      %v9248 = vadd.f32 %v9209, %v9240
      %v9249 = vadd.f32 %v9210, %v9240
      %v9250 = vadd.f32 %v9211, %v9240
      %v9251 = vadd.f32 %v9212, %v9240
      %v9252 = vadd.f32 %v9213, %v9240
      %v9253 = vadd.f32 %v9214, %v9240
      %v9254 = vadd.f32 %v9215, %v9240
      %v9255 = vadd.f32 %v9216, %v9240
      %v9256 = vadd.f32 %v9217, %v9240
      %v9257 = vadd.f32 %v9218, %v9240
      %v9258 = vadd.f32 %v9219, %v9240
      %v9259 = vadd.f32 %v9220, %v9240
      %v9260 = vadd.f32 %v9221, %v9240
      %v9261 = vadd.f32 %v9222, %v9240
      %v9262 = vadd.f32 %v9223, %v9240
      %v9263 = vadd.f32 %v9224, %v9240
      %v9264 = vadd.f32 %v9225, %v9240
      %v9265 = vadd.f32 %v9226, %v9240
      %v9266 = vadd.f32 %v9227, %v9240
      %v9267 = vadd.f32 %v9228, %v9240
      %v9268 = vadd.f32 %v9229, %v9240
      %v9269 = vadd.f32 %v9230, %v9240
      %v9270 = vadd.f32 %v9231, %v9240
      %v9271 = vadd.f32 %v9232, %v9240
      %v9272 = vadd.f32 %v9233, %v9240
      %v9273 = vadd.f32 %v9234, %v9240
      %v9274 = vmax.f32 %v9242, 0.0
      %v9275 = vmax.f32 %v9243, 0.0
      %v9276 = vmax.f32 %v9244, 0.0
      %v9277 = vmax.f32 %v9245, 0.0
      %v9278 = vmax.f32 %v9246, 0.0
      %v9279 = vmax.f32 %v9247, 0.0
      %v9280 = vmax.f32 %v9248, 0.0
      %v9281 = vmax.f32 %v9249, 0.0
      %v9282 = vmax.f32 %v9250, 0.0
      %v9283 = vmax.f32 %v9251, 0.0
      %v9284 = vmax.f32 %v9252, 0.0
      %v9285 = vmax.f32 %v9253, 0.0
      %v9286 = vmax.f32 %v9254, 0.0
      %v9287 = vmax.f32 %v9255, 0.0
      %v9288 = vmax.f32 %v9256, 0.0
      %v9289 = vmax.f32 %v9257, 0.0
      %v9290 = vmax.f32 %v9258, 0.0
      %v9291 = vmax.f32 %v9259, 0.0
      %v9292 = vmax.f32 %v9260, 0.0
      %v9293 = vmax.f32 %v9261, 0.0
      %v9294 = vmax.f32 %v9262, 0.0
      %v9295 = vmax.f32 %v9263, 0.0
      %v9296 = vmax.f32 %v9264, 0.0
      %v9297 = vmax.f32 %v9265, 0.0
      %v9298 = vmax.f32 %v9266, 0.0
      %v9299 = vmax.f32 %v9267, 0.0
      %v9300 = vmax.f32 %v9268, 0.0
      %v9301 = vmax.f32 %v9269, 0.0
      %v9302 = vmax.f32 %v9270, 0.0
      %v9303 = vmax.f32 %v9271, 0.0
      %v9304 = vmax.f32 %v9272, 0.0
      %v9305 = vmax.f32 %v9273, 0.0
      %v9336 = vrot.slane %v9274, 7
      %v9337 = vrot.slane %v9275, 7
      %v9338 = vsel %vm419, %v9336, %v9337
      %v9339 = vrot.slane %v9276, 7
      %v9340 = vrot.slane %v9277, 7
      %v9341 = vsel %vm419, %v9339, %v9340
      %v9342 = vrot.slane %v9278, 7
      %v9343 = vrot.slane %v9279, 7
      %v9344 = vsel %vm419, %v9342, %v9343
      %v9345 = vrot.slane %v9280, 7
      %v9346 = vrot.slane %v9281, 7
      %v9347 = vsel %vm419, %v9345, %v9346
      %v9348 = vrot.slane %v9282, 7
      %v9349 = vrot.slane %v9283, 7
      %v9350 = vsel %vm419, %v9348, %v9349
      %v9351 = vrot.slane %v9284, 7
      %v9352 = vrot.slane %v9285, 7
      %v9353 = vsel %vm419, %v9351, %v9352
      %v9354 = vrot.slane %v9286, 7
      %v9355 = vrot.slane %v9287, 7
      %v9356 = vsel %vm419, %v9354, %v9355
      %v9357 = vrot.slane %v9288, 7
      %v9358 = vrot.slane %v9289, 7
      %v9359 = vsel %vm419, %v9357, %v9358
      %v9360 = vrot.slane %v9290, 7
      %v9361 = vrot.slane %v9291, 7
      %v9362 = vsel %vm419, %v9360, %v9361
      %v9363 = vrot.slane %v9292, 7
      %v9364 = vrot.slane %v9293, 7
      %v9365 = vsel %vm419, %v9363, %v9364
      %v9366 = vrot.slane %v9294, 7
      %v9367 = vrot.slane %v9295, 7
      %v9368 = vsel %vm419, %v9366, %v9367
      %v9369 = vrot.slane %v9296, 7
      %v9370 = vrot.slane %v9297, 7
      %v9371 = vsel %vm419, %v9369, %v9370
      %v9372 = vrot.slane %v9298, 7
      %v9373 = vrot.slane %v9299, 7
      %v9374 = vsel %vm419, %v9372, %v9373
      %v9375 = vrot.slane %v9300, 7
      %v9376 = vrot.slane %v9301, 7
      %v9377 = vsel %vm419, %v9375, %v9376
      %v9378 = vrot.slane %v9302, 7
      %v9379 = vrot.slane %v9303, 7
      %v9380 = vsel %vm419, %v9378, %v9379
      %v9396 = vsel %vm419, 0.0, %v9336
      %v9397 = vsel %vm419, 0.0, %v9339
      %v9398 = vsel %vm419, 0.0, %v9342
      %v9399 = vsel %vm419, 0.0, %v9345
      %v9400 = vsel %vm419, 0.0, %v9348
      %v9401 = vsel %vm419, 0.0, %v9351
      %v9402 = vsel %vm419, 0.0, %v9354
      %v9403 = vsel %vm419, 0.0, %v9357
      %v9404 = vsel %vm419, 0.0, %v9360
      %v9405 = vsel %vm419, 0.0, %v9363
      %v9406 = vsel %vm419, 0.0, %v9366
      %v9407 = vsel %vm419, 0.0, %v9369
      %v9408 = vsel %vm419, 0.0, %v9372
      %v9409 = vsel %vm419, 0.0, %v9375
      %v9410 = vsel %vm419, 0.0, %v9378
      %v9411 = vld [vmem:[%s5] sm:$0xff]
      %s9412 = scalar_lea.vmem %s5, 8
      %v9413 = vld [vmem:[%s9412] sm:$0xff]
      %vm9414 = vcmask 64512
      %v9415 = vsel %vm9414, 0.0, 0
      %v9417 = vsel %vm9414, %v9274, 0
      %v9419 = vsel %vm9414, %v9275, 0
      %v9421 = vsel %vm9414, %v9276, 0
      %v9423 = vsel %vm9414, %v9277, 0
      %v9425 = vsel %vm9414, %v9278, 0
      %v9427 = vsel %vm9414, %v9279, 0
      %v9429 = vsel %vm9414, %v9280, 0
      %v9431 = vsel %vm9414, %v9281, 0
      %v9433 = vsel %vm9414, %v9282, 0
      %v9435 = vsel %vm9414, %v9283, 0
      %v9437 = vsel %vm9414, %v9284, 0
      %v9439 = vsel %vm9414, %v9285, 0
      %v9441 = vsel %vm9414, %v9286, 0
      %v9443 = vsel %vm9414, %v9287, 0
      %v9445 = vsel %vm9414, %v9288, 0
      %v9447 = vsel %vm9414, %v9289, 0
      %v9449 = vsel %vm9414, %v9290, 0
      %v9451 = vsel %vm9414, %v9291, 0
      %v9453 = vsel %vm9414, %v9292, 0
      %v9455 = vsel %vm9414, %v9293, 0
      %v9457 = vsel %vm9414, %v9294, 0
      %v9459 = vsel %vm9414, %v9295, 0
      %v9461 = vsel %vm9414, %v9296, 0
      %v9463 = vsel %vm9414, %v9297, 0
      %v9465 = vsel %vm9414, %v9298, 0
      %v9467 = vsel %vm9414, %v9299, 0
      %v9469 = vsel %vm9414, %v9300, 0
      %v9471 = vsel %vm9414, %v9301, 0
      %v9473 = vsel %vm9414, %v9302, 0
      %v9475 = vsel %vm9414, %v9303, 0
      %9477 = vmatprep.subr.mxu0 0.0
      %9478 = vmatpush1.msra.mxu0 %v9413
      %9479 = vmatprep.subr.mxu0 0.0
      %9480 = vmatpush1.msra.mxu0 0.0
      %9481 = vmatprep.subr.mxu0 0.0
      %9482 = vmatpush1.msra.mxu0 0.0
      %9483 = vmatprep.subr.mxu0 0.0
      %9484 = vmatpush1.msra.mxu0 0.0
      %9485 = vmatprep.subr.mxu0 0.0
      %9486 = vmatpush1.msra.mxu0 0.0
      %9487 = vmatprep.subr.mxu0 0.0
      %9488 = vmatpush1.msra.mxu0 0.0
      %9489 = vmatprep.subr.mxu0 0.0
      %9490 = vmatpush1.msra.mxu0 0.0
      %9491 = vmatprep.subr.mxu0 0.0
      %9492 = vmatpush1.msra.mxu0 0.0
      %9493 = vmatprep.subr.mxu0 0.0
      %9494 = vmatpush1.msra.mxu0 0.0
      %9495 = vmatprep.subr.mxu0 0.0
      %9496 = vmatpush1.msra.mxu0 0.0
      %9497 = vmatprep.subr.mxu0 0.0
      %9498 = vmatpush1.msra.mxu0 0.0
      %9499 = vmatprep.subr.mxu0 0.0
      %9500 = vmatpush1.msra.mxu0 0.0
      %9501 = vmatprep.subr.mxu0 0.0
      %9502 = vmatpush1.msra.mxu0 0.0
      %9503 = vmatprep.subr.mxu0 0.0
      %9504 = vmatpush1.msra.mxu0 0.0
      %9505 = vmatprep.subr.mxu0 0.0
      %9506 = vmatpush1.msra.mxu0 0.0
      %9507 = vmatprep.subr.mxu0 0.0
      %9508 = vmatpush1.msra.mxu0 0.0
      %9509 = vmatprep.subr.mxu0 0.0
      %9510 = vmatpush1.msra.mxu0 0.0
      %9511 = vmatprep.subr.mxu0 0.0
      %9512 = vmatpush1.msra.mxu0 0.0
      %9513 = vmatprep.subr.mxu0 0.0
      %9514 = vmatpush1.msra.mxu0 0.0
      %9515 = vmatprep.subr.mxu0 0.0
      %9516 = vmatpush1.msra.mxu0 0.0
      %9517 = vmatprep.subr.mxu0 0.0
      %9518 = vmatpush1.msra.mxu0 0.0
      %9519 = vmatprep.subr.mxu0 0.0
      %9520 = vmatpush1.msra.mxu0 0.0
      %9521 = vmatprep.subr.mxu0 0.0
      %9522 = vmatpush1.msra.mxu0 0.0
      %9523 = vmatprep.subr.mxu0 0.0
      %9524 = vmatpush1.msra.mxu0 0.0
      %9525 = vmatprep.subr.mxu0 0.0
      %9526 = vmatpush1.msra.mxu0 0.0
      %9527 = vmatprep.subr.mxu0 0.0
      %9528 = vmatpush1.msra.mxu0 0.0
      %9529 = vmatprep.subr.mxu0 0.0
      %9530 = vmatpush1.msra.mxu0 0.0
      %9531 = vmatprep.subr.mxu0 0.0
      %9532 = vmatpush1.msra.mxu0 0.0
      %9533 = vmatprep.subr.mxu0 0.0
      %9534 = vmatpush1.msra.mxu0 0.0
      %9535 = vmatprep.subr.mxu0 0.0
      %9536 = vmatpush1.msra.mxu0 0.0
      %9537 = vmatprep.subr.mxu0 0.0
      %9538 = vmatpush1.msra.mxu0 0.0
      %9539 = vmatprep.subr.mxu0 0.0
      %9540 = vmatpush1.msra.mxu0 0.0
      %9541 = vmatprep.mubr.f32.mxu0 0.0
      %9542 = vmatmul.mubr.f32.gmra.mrb[0].mxu0 %v9415
      %v9543 = vpop.f32.mrb[0].mxu0
      %v9544 = vadd.f32 0.0, %v9543
      %v9545 = vpop.f32.mrb[0].mxu0
      %9546 = vmatprep.mubr.f32.mxu0 0.0
      %9547 = vmatmul.mubr.f32.gmra.mrb[0].mxu0 %v9415
      %v9548 = vpop.f32.mrb[0].mxu0
      %v9549 = vadd.f32 0.0, %v9548
      %v9550 = vpop.f32.mrb[0].mxu0
      %9551 = vmatprep.mubr.f32.mxu0 0.0
      %9552 = vmatmul.mubr.f32.gmra.mrb[0].mxu0 %v9417
      %v9553 = vpop.f32.mrb[0].mxu0
      %v9554 = vadd.f32 0.0, %v9553
      %v9555 = vpop.f32.mrb[0].mxu0
      %9556 = vmatprep.mubr.f32.mxu0 0.0
      %9557 = vmatmul.mubr.f32.gmra.mrb[0].mxu0 %v9419
      %v9558 = vpop.f32.mrb[0].mxu0
      %v9559 = vadd.f32 0.0, %v9558
      %v9560 = vpop.f32.mrb[0].mxu0
      %9561 = vmatprep.mubr.f32.mxu0 0.0
      %9562 = vmatmul.mubr.f32.gmra.mrb[0].mxu0 %v9421
      %v9563 = vpop.f32.mrb[0].mxu0
      %v9564 = vadd.f32 0.0, %v9563
      %v9565 = vpop.f32.mrb[0].mxu0
      %9566 = vmatprep.mubr.f32.mxu0 0.0
      %9567 = vmatmul.mubr.f32.gmra.mrb[0].mxu0 %v9423
      %v9568 = vpop.f32.mrb[0].mxu0
      %v9569 = vadd.f32 0.0, %v9568
      %v9570 = vpop.f32.mrb[0].mxu0
      %9571 = vmatprep.mubr.f32.mxu0 0.0
      %9572 = vmatmul.mubr.f32.gmra.mrb[0].mxu0 %v9425
      %v9573 = vpop.f32.mrb[0].mxu0
      %v9574 = vadd.f32 0.0, %v9573
      %v9575 = vpop.f32.mrb[0].mxu0
      %9576 = vmatprep.mubr.f32.mxu0 0.0
      %9577 = vmatmul.mubr.f32.gmra.mrb[0].mxu0 %v9427
      %v9578 = vpop.f32.mrb[0].mxu0
      %v9579 = vadd.f32 0.0, %v9578
      %v9580 = vpop.f32.mrb[0].mxu0
      %9581 = vmatprep.mubr.f32.mxu0 0.0
      %9582 = vmatmul.mubr.f32.gmra.mrb[0].mxu0 %v9429
      %v9583 = vpop.f32.mrb[0].mxu0
      %v9584 = vadd.f32 0.0, %v9583
      %v9585 = vpop.f32.mrb[0].mxu0
      %9586 = vmatprep.mubr.f32.mxu0 0.0
      %9587 = vmatmul.mubr.f32.gmra.mrb[0].mxu0 %v9431
      %v9588 = vpop.f32.mrb[0].mxu0
      %v9589 = vadd.f32 0.0, %v9588
      %v9590 = vpop.f32.mrb[0].mxu0
      %9591 = vmatprep.mubr.f32.mxu0 0.0
      %9592 = vmatmul.mubr.f32.gmra.mrb[0].mxu0 %v9433
      %v9593 = vpop.f32.mrb[0].mxu0
      %v9594 = vadd.f32 0.0, %v9593
      %v9595 = vpop.f32.mrb[0].mxu0
      %9596 = vmatprep.mubr.f32.mxu0 0.0
      %9597 = vmatmul.mubr.f32.gmra.mrb[0].mxu0 %v9435
      %v9598 = vpop.f32.mrb[0].mxu0
      %v9599 = vadd.f32 0.0, %v9598
      %v9600 = vpop.f32.mrb[0].mxu0
      %9601 = vmatprep.mubr.f32.mxu0 0.0
      %9602 = vmatmul.mubr.f32.gmra.mrb[0].mxu0 %v9437
      %v9603 = vpop.f32.mrb[0].mxu0
      %v9604 = vadd.f32 0.0, %v9603
      %v9605 = vpop.f32.mrb[0].mxu0
      %9606 = vmatprep.mubr.f32.mxu0 0.0
      %9607 = vmatmul.mubr.f32.gmra.mrb[0].mxu0 %v9439
      %v9608 = vpop.f32.mrb[0].mxu0
      %v9609 = vadd.f32 0.0, %v9608
      %v9610 = vpop.f32.mrb[0].mxu0
      %9611 = vmatprep.mubr.f32.mxu0 0.0
      %9612 = vmatmul.mubr.f32.gmra.mrb[0].mxu0 %v9441
      %v9613 = vpop.f32.mrb[0].mxu0
      %v9614 = vadd.f32 0.0, %v9613
      %v9615 = vpop.f32.mrb[0].mxu0
      %9616 = vmatprep.mubr.f32.mxu0 0.0
      %9617 = vmatmul.mubr.f32.gmra.mrb[0].mxu0 %v9443
      %v9618 = vpop.f32.mrb[0].mxu0
      %v9619 = vadd.f32 0.0, %v9618
      %v9620 = vpop.f32.mrb[0].mxu0
      %9621 = vmatprep.mubr.f32.mxu0 0.0
      %9622 = vmatmul.mubr.f32.gmra.mrb[0].mxu0 %v9445
      %v9623 = vpop.f32.mrb[0].mxu0
      %v9624 = vadd.f32 0.0, %v9623
      %v9625 = vpop.f32.mrb[0].mxu0
      %9626 = vmatprep.mubr.f32.mxu0 0.0
      %9627 = vmatmul.mubr.f32.gmra.mrb[0].mxu0 %v9447
      %v9628 = vpop.f32.mrb[0].mxu0
      %v9629 = vadd.f32 0.0, %v9628
      %v9630 = vpop.f32.mrb[0].mxu0
      %9631 = vmatprep.mubr.f32.mxu0 0.0
      %9632 = vmatmul.mubr.f32.gmra.mrb[0].mxu0 %v9449
      %v9633 = vpop.f32.mrb[0].mxu0
      %v9634 = vadd.f32 0.0, %v9633
      %v9635 = vpop.f32.mrb[0].mxu0
      %9636 = vmatprep.mubr.f32.mxu0 0.0
      %9637 = vmatmul.mubr.f32.gmra.mrb[0].mxu0 %v9451
      %v9638 = vpop.f32.mrb[0].mxu0
      %v9639 = vadd.f32 0.0, %v9638
      %v9640 = vpop.f32.mrb[0].mxu0
      %9641 = vmatprep.mubr.f32.mxu0 0.0
      %9642 = vmatmul.mubr.f32.gmra.mrb[0].mxu0 %v9453
      %v9643 = vpop.f32.mrb[0].mxu0
      %v9644 = vadd.f32 0.0, %v9643
      %v9645 = vpop.f32.mrb[0].mxu0
      %9646 = vmatprep.mubr.f32.mxu0 0.0
      %9647 = vmatmul.mubr.f32.gmra.mrb[0].mxu0 %v9455
      %v9648 = vpop.f32.mrb[0].mxu0
      %v9649 = vadd.f32 0.0, %v9648
      %v9650 = vpop.f32.mrb[0].mxu0
      %9651 = vmatprep.mubr.f32.mxu0 0.0
      %9652 = vmatmul.mubr.f32.gmra.mrb[0].mxu0 %v9457
      %v9653 = vpop.f32.mrb[0].mxu0
      %v9654 = vadd.f32 0.0, %v9653
      %v9655 = vpop.f32.mrb[0].mxu0
      %9656 = vmatprep.mubr.f32.mxu0 0.0
      %9657 = vmatmul.mubr.f32.gmra.mrb[0].mxu0 %v9459
      %v9658 = vpop.f32.mrb[0].mxu0
      %v9659 = vadd.f32 0.0, %v9658
      %v9660 = vpop.f32.mrb[0].mxu0
      %9661 = vmatprep.mubr.f32.mxu0 0.0
      %9662 = vmatmul.mubr.f32.gmra.mrb[0].mxu0 %v9461
      %v9663 = vpop.f32.mrb[0].mxu0
      %v9664 = vadd.f32 0.0, %v9663
      %v9665 = vpop.f32.mrb[0].mxu0
      %9666 = vmatprep.mubr.f32.mxu0 0.0
      %9667 = vmatmul.mubr.f32.gmra.mrb[0].mxu0 %v9463
      %v9668 = vpop.f32.mrb[0].mxu0
      %v9669 = vadd.f32 0.0, %v9668
      %v9670 = vpop.f32.mrb[0].mxu0
      %9671 = vmatprep.mubr.f32.mxu0 0.0
      %9672 = vmatmul.mubr.f32.gmra.mrb[0].mxu0 %v9465
      %v9673 = vpop.f32.mrb[0].mxu0
      %v9674 = vadd.f32 0.0, %v9673
      %v9675 = vpop.f32.mrb[0].mxu0
      %9676 = vmatprep.mubr.f32.mxu0 0.0
      %9677 = vmatmul.mubr.f32.gmra.mrb[0].mxu0 %v9467
      %v9678 = vpop.f32.mrb[0].mxu0
      %v9679 = vadd.f32 0.0, %v9678
      %v9680 = vpop.f32.mrb[0].mxu0
      %9681 = vmatprep.mubr.f32.mxu0 0.0
      %9682 = vmatmul.mubr.f32.gmra.mrb[0].mxu0 %v9469
      %v9683 = vpop.f32.mrb[0].mxu0
      %v9684 = vadd.f32 0.0, %v9683
      %v9685 = vpop.f32.mrb[0].mxu0
      %9686 = vmatprep.mubr.f32.mxu0 0.0
      %9687 = vmatmul.mubr.f32.gmra.mrb[0].mxu0 %v9471
      %v9688 = vpop.f32.mrb[0].mxu0
      %v9689 = vadd.f32 0.0, %v9688
      %v9690 = vpop.f32.mrb[0].mxu0
      %9691 = vmatprep.mubr.f32.mxu0 0.0
      %9692 = vmatmul.mubr.f32.gmra.mrb[0].mxu0 %v9473
      %v9693 = vpop.f32.mrb[0].mxu0
      %v9694 = vadd.f32 0.0, %v9693
      %v9695 = vpop.f32.mrb[0].mxu0
      %9696 = vmatprep.mubr.f32.mxu0 0.0
      %9697 = vmatmul.mubr.f32.gmra.mrb[0].mxu0 %v9475
      %v9698 = vpop.f32.mrb[0].mxu0
      %v9699 = vadd.f32 0.0, %v9698
      %v9700 = vpop.f32.mrb[0].mxu0
      %9701 = vdwg.mxu0
      %v9702 = vsel %vm9414, %v3155, 0
      %v9704 = vsel %vm9414, %v3093, 0
      %v9707 = vsel %vm9414, %v9396, 0
      %v9709 = vsel %vm9414, %v9338, 0
      %v9712 = vsel %vm9414, %v9397, 0
      %v9714 = vsel %vm9414, %v9341, 0
      %v9717 = vsel %vm9414, %v9398, 0
      %v9719 = vsel %vm9414, %v9344, 0
      %v9722 = vsel %vm9414, %v9399, 0
      %v9724 = vsel %vm9414, %v9347, 0
      %v9727 = vsel %vm9414, %v9400, 0
      %v9729 = vsel %vm9414, %v9350, 0
      %v9732 = vsel %vm9414, %v9401, 0
      %v9734 = vsel %vm9414, %v9353, 0
      %v9737 = vsel %vm9414, %v9402, 0
      %v9739 = vsel %vm9414, %v9356, 0
      %v9742 = vsel %vm9414, %v9403, 0
      %v9744 = vsel %vm9414, %v9359, 0
      %v9747 = vsel %vm9414, %v9404, 0
      %v9749 = vsel %vm9414, %v9362, 0
      %v9752 = vsel %vm9414, %v9405, 0
      %v9754 = vsel %vm9414, %v9365, 0
      %v9757 = vsel %vm9414, %v9406, 0
      %v9759 = vsel %vm9414, %v9368, 0
      %v9762 = vsel %vm9414, %v9407, 0
      %v9764 = vsel %vm9414, %v9371, 0
      %v9767 = vsel %vm9414, %v9408, 0
      %v9769 = vsel %vm9414, %v9374, 0
      %v9772 = vsel %vm9414, %v9409, 0
      %v9774 = vsel %vm9414, %v9377, 0
      %v9777 = vsel %vm9414, %v9410, 0
      %v9779 = vsel %vm9414, %v9380, 0
      %9781 = vmatprep.subr.mxu0 0.0
      %9782 = vmatpush1.msra.mxu0 %v9411
      %9783 = vmatprep.subr.mxu0 0.0
      %9784 = vmatpush1.msra.mxu0 0.0
      %9785 = vmatprep.subr.mxu0 0.0
      %9786 = vmatpush1.msra.mxu0 0.0
      %9787 = vmatprep.subr.mxu0 0.0
      %9788 = vmatpush1.msra.mxu0 0.0
      %9789 = vmatprep.subr.mxu0 0.0
      %9790 = vmatpush1.msra.mxu0 0.0
      %9791 = vmatprep.subr.mxu0 0.0
      %9792 = vmatpush1.msra.mxu0 0.0
      %9793 = vmatprep.subr.mxu0 0.0
      %9794 = vmatpush1.msra.mxu0 0.0
      %9795 = vmatprep.subr.mxu0 0.0
      %9796 = vmatpush1.msra.mxu0 0.0
      %9797 = vmatprep.subr.mxu0 0.0
      %9798 = vmatpush1.msra.mxu0 0.0
      %9799 = vmatprep.subr.mxu0 0.0
      %9800 = vmatpush1.msra.mxu0 0.0
      %9801 = vmatprep.subr.mxu0 0.0
      %9802 = vmatpush1.msra.mxu0 0.0
      %9803 = vmatprep.subr.mxu0 0.0
      %9804 = vmatpush1.msra.mxu0 0.0
      %9805 = vmatprep.subr.mxu0 0.0
      %9806 = vmatpush1.msra.mxu0 0.0
      %9807 = vmatprep.subr.mxu0 0.0
      %9808 = vmatpush1.msra.mxu0 0.0
      %9809 = vmatprep.subr.mxu0 0.0
      %9810 = vmatpush1.msra.mxu0 0.0
      %9811 = vmatprep.subr.mxu0 0.0
      %9812 = vmatpush1.msra.mxu0 0.0
      %9813 = vmatprep.subr.mxu0 0.0
      %9814 = vmatpush1.msra.mxu0 0.0
      %9815 = vmatprep.subr.mxu0 0.0
      %9816 = vmatpush1.msra.mxu0 0.0
      %9817 = vmatprep.subr.mxu0 0.0
      %9818 = vmatpush1.msra.mxu0 0.0
      %9819 = vmatprep.subr.mxu0 0.0
      %9820 = vmatpush1.msra.mxu0 0.0
      %9821 = vmatprep.subr.mxu0 0.0
      %9822 = vmatpush1.msra.mxu0 0.0
      %9823 = vmatprep.subr.mxu0 0.0
      %9824 = vmatpush1.msra.mxu0 0.0
      %9825 = vmatprep.subr.mxu0 0.0
      %9826 = vmatpush1.msra.mxu0 0.0
      %9827 = vmatprep.subr.mxu0 0.0
      %9828 = vmatpush1.msra.mxu0 0.0
      %9829 = vmatprep.subr.mxu0 0.0
      %9830 = vmatpush1.msra.mxu0 0.0
      %9831 = vmatprep.subr.mxu0 0.0
      %9832 = vmatpush1.msra.mxu0 0.0
      %9833 = vmatprep.subr.mxu0 0.0
      %9834 = vmatpush1.msra.mxu0 0.0
      %9835 = vmatprep.subr.mxu0 0.0
      %9836 = vmatpush1.msra.mxu0 0.0
      %9837 = vmatprep.subr.mxu0 0.0
      %9838 = vmatpush1.msra.mxu0 0.0
      %9839 = vmatprep.subr.mxu0 0.0
      %9840 = vmatpush1.msra.mxu0 0.0
      %9841 = vmatprep.subr.mxu0 0.0
      %9842 = vmatpush1.msra.mxu0 0.0
      %9843 = vmatprep.subr.mxu0 0.0
      %9844 = vmatpush1.msra.mxu0 0.0
      %9845 = vmatprep.mubr.f32.mxu0 0.0
      %9846 = vmatmul.mubr.f32.gmra.mrb[0].mxu0 %v9702
      %v9847 = vpop.f32.mrb[0].mxu0
      %v9848 = vadd.f32 %v9544, %v9847
      %v9849 = vpop.f32.mrb[0].mxu0
      %9850 = vmatprep.mubr.f32.mxu0 0.0
      %9851 = vmatmul.mubr.f32.gmra.mrb[0].mxu0 %v9704
      %v9852 = vpop.f32.mrb[0].mxu0
      %v9853 = vadd.f32 %v9549, %v9852
      %v9854 = vpop.f32.mrb[0].mxu0
      %9855 = vmatprep.mubr.f32.mxu0 0.0
      %9856 = vmatmul.mubr.f32.gmra.mrb[0].mxu0 %v9707
      %v9857 = vpop.f32.mrb[0].mxu0
      %v9858 = vadd.f32 %v9554, %v9857
      %v9859 = vpop.f32.mrb[0].mxu0
      %9860 = vmatprep.mubr.f32.mxu0 0.0
      %9861 = vmatmul.mubr.f32.gmra.mrb[0].mxu0 %v9709
      %v9862 = vpop.f32.mrb[0].mxu0
      %v9863 = vadd.f32 %v9559, %v9862
      %v9864 = vpop.f32.mrb[0].mxu0
      %9865 = vmatprep.mubr.f32.mxu0 0.0
      %9866 = vmatmul.mubr.f32.gmra.mrb[0].mxu0 %v9712
      %v9867 = vpop.f32.mrb[0].mxu0
      %v9868 = vadd.f32 %v9564, %v9867
      %v9869 = vpop.f32.mrb[0].mxu0
      %9870 = vmatprep.mubr.f32.mxu0 0.0
      %9871 = vmatmul.mubr.f32.gmra.mrb[0].mxu0 %v9714
      %v9872 = vpop.f32.mrb[0].mxu0
      %v9873 = vadd.f32 %v9569, %v9872
      %v9874 = vpop.f32.mrb[0].mxu0
      %9875 = vmatprep.mubr.f32.mxu0 0.0
      %9876 = vmatmul.mubr.f32.gmra.mrb[0].mxu0 %v9717
      %v9877 = vpop.f32.mrb[0].mxu0
      %v9878 = vadd.f32 %v9574, %v9877
      %v9879 = vpop.f32.mrb[0].mxu0
      %9880 = vmatprep.mubr.f32.mxu0 0.0
      %9881 = vmatmul.mubr.f32.gmra.mrb[0].mxu0 %v9719
      %v9882 = vpop.f32.mrb[0].mxu0
      %v9883 = vadd.f32 %v9579, %v9882
      %v9884 = vpop.f32.mrb[0].mxu0
      %9885 = vmatprep.mubr.f32.mxu0 0.0
      %9886 = vmatmul.mubr.f32.gmra.mrb[0].mxu0 %v9722
      %v9887 = vpop.f32.mrb[0].mxu0
      %v9888 = vadd.f32 %v9584, %v9887
      %v9889 = vpop.f32.mrb[0].mxu0
      %9890 = vmatprep.mubr.f32.mxu0 0.0
      %9891 = vmatmul.mubr.f32.gmra.mrb[0].mxu0 %v9724
      %v9892 = vpop.f32.mrb[0].mxu0
      %v9893 = vadd.f32 %v9589, %v9892
      %v9894 = vpop.f32.mrb[0].mxu0
      %9895 = vmatprep.mubr.f32.mxu0 0.0
      %9896 = vmatmul.mubr.f32.gmra.mrb[0].mxu0 %v9727
      %v9897 = vpop.f32.mrb[0].mxu0
      %v9898 = vadd.f32 %v9594, %v9897
      %v9899 = vpop.f32.mrb[0].mxu0
      %9900 = vmatprep.mubr.f32.mxu0 0.0
      %9901 = vmatmul.mubr.f32.gmra.mrb[0].mxu0 %v9729
      %v9902 = vpop.f32.mrb[0].mxu0
      %v9903 = vadd.f32 %v9599, %v9902
      %v9904 = vpop.f32.mrb[0].mxu0
      %9905 = vmatprep.mubr.f32.mxu0 0.0
      %9906 = vmatmul.mubr.f32.gmra.mrb[0].mxu0 %v9732
      %v9907 = vpop.f32.mrb[0].mxu0
      %v9908 = vadd.f32 %v9604, %v9907
      %v9909 = vpop.f32.mrb[0].mxu0
      %9910 = vmatprep.mubr.f32.mxu0 0.0
      %9911 = vmatmul.mubr.f32.gmra.mrb[0].mxu0 %v9734
      %v9912 = vpop.f32.mrb[0].mxu0
      %v9913 = vadd.f32 %v9609, %v9912
      %v9914 = vpop.f32.mrb[0].mxu0
      %9915 = vmatprep.mubr.f32.mxu0 0.0
      %9916 = vmatmul.mubr.f32.gmra.mrb[0].mxu0 %v9737
      %v9917 = vpop.f32.mrb[0].mxu0
      %v9918 = vadd.f32 %v9614, %v9917
      %v9919 = vpop.f32.mrb[0].mxu0
      %9920 = vmatprep.mubr.f32.mxu0 0.0
      %9921 = vmatmul.mubr.f32.gmra.mrb[0].mxu0 %v9739
      %v9922 = vpop.f32.mrb[0].mxu0
      %v9923 = vadd.f32 %v9619, %v9922
      %v9924 = vpop.f32.mrb[0].mxu0
      %9925 = vmatprep.mubr.f32.mxu0 0.0
      %9926 = vmatmul.mubr.f32.gmra.mrb[0].mxu0 %v9742
      %v9927 = vpop.f32.mrb[0].mxu0
      %v9928 = vadd.f32 %v9624, %v9927
      %v9929 = vpop.f32.mrb[0].mxu0
      %9930 = vmatprep.mubr.f32.mxu0 0.0
      %9931 = vmatmul.mubr.f32.gmra.mrb[0].mxu0 %v9744
      %v9932 = vpop.f32.mrb[0].mxu0
      %v9933 = vadd.f32 %v9629, %v9932
      %v9934 = vpop.f32.mrb[0].mxu0
      %9935 = vmatprep.mubr.f32.mxu0 0.0
      %9936 = vmatmul.mubr.f32.gmra.mrb[0].mxu0 %v9747
      %v9937 = vpop.f32.mrb[0].mxu0
      %v9938 = vadd.f32 %v9634, %v9937
      %v9939 = vpop.f32.mrb[0].mxu0
      %9940 = vmatprep.mubr.f32.mxu0 0.0
      %9941 = vmatmul.mubr.f32.gmra.mrb[0].mxu0 %v9749
      %v9942 = vpop.f32.mrb[0].mxu0
      %v9943 = vadd.f32 %v9639, %v9942
      %v9944 = vpop.f32.mrb[0].mxu0
      %9945 = vmatprep.mubr.f32.mxu0 0.0
      %9946 = vmatmul.mubr.f32.gmra.mrb[0].mxu0 %v9752
      %v9947 = vpop.f32.mrb[0].mxu0
      %v9948 = vadd.f32 %v9644, %v9947
      %v9949 = vpop.f32.mrb[0].mxu0
      %9950 = vmatprep.mubr.f32.mxu0 0.0
      %9951 = vmatmul.mubr.f32.gmra.mrb[0].mxu0 %v9754
      %v9952 = vpop.f32.mrb[0].mxu0
      %v9953 = vadd.f32 %v9649, %v9952
      %v9954 = vpop.f32.mrb[0].mxu0
      %9955 = vmatprep.mubr.f32.mxu0 0.0
      %9956 = vmatmul.mubr.f32.gmra.mrb[0].mxu0 %v9757
      %v9957 = vpop.f32.mrb[0].mxu0
      %v9958 = vadd.f32 %v9654, %v9957
      %v9959 = vpop.f32.mrb[0].mxu0
      %9960 = vmatprep.mubr.f32.mxu0 0.0
      %9961 = vmatmul.mubr.f32.gmra.mrb[0].mxu0 %v9759
      %v9962 = vpop.f32.mrb[0].mxu0
      %v9963 = vadd.f32 %v9659, %v9962
      %v9964 = vpop.f32.mrb[0].mxu0
      %9965 = vmatprep.mubr.f32.mxu0 0.0
      %9966 = vmatmul.mubr.f32.gmra.mrb[0].mxu0 %v9762
      %v9967 = vpop.f32.mrb[0].mxu0
      %v9968 = vadd.f32 %v9664, %v9967
      %v9969 = vpop.f32.mrb[0].mxu0
      %9970 = vmatprep.mubr.f32.mxu0 0.0
      %9971 = vmatmul.mubr.f32.gmra.mrb[0].mxu0 %v9764
      %v9972 = vpop.f32.mrb[0].mxu0
      %v9973 = vadd.f32 %v9669, %v9972
      %v9974 = vpop.f32.mrb[0].mxu0
      %9975 = vmatprep.mubr.f32.mxu0 0.0
      %9976 = vmatmul.mubr.f32.gmra.mrb[0].mxu0 %v9767
      %v9977 = vpop.f32.mrb[0].mxu0
      %v9978 = vadd.f32 %v9674, %v9977
      %v9979 = vpop.f32.mrb[0].mxu0
      %9980 = vmatprep.mubr.f32.mxu0 0.0
      %9981 = vmatmul.mubr.f32.gmra.mrb[0].mxu0 %v9769
      %v9982 = vpop.f32.mrb[0].mxu0
      %v9983 = vadd.f32 %v9679, %v9982
      %v9984 = vpop.f32.mrb[0].mxu0
      %9985 = vmatprep.mubr.f32.mxu0 0.0
      %9986 = vmatmul.mubr.f32.gmra.mrb[0].mxu0 %v9772
      %v9987 = vpop.f32.mrb[0].mxu0
      %v9988 = vadd.f32 %v9684, %v9987
      %v9989 = vpop.f32.mrb[0].mxu0
      %9990 = vmatprep.mubr.f32.mxu0 0.0
      %9991 = vmatmul.mubr.f32.gmra.mrb[0].mxu0 %v9774
      %v9992 = vpop.f32.mrb[0].mxu0
      %v9993 = vadd.f32 %v9689, %v9992
      %v9994 = vpop.f32.mrb[0].mxu0
      %9995 = vmatprep.mubr.f32.mxu0 0.0
      %9996 = vmatmul.mubr.f32.gmra.mrb[0].mxu0 %v9777
      %v9997 = vpop.f32.mrb[0].mxu0
      %v9998 = vadd.f32 %v9694, %v9997
      %v9999 = vpop.f32.mrb[0].mxu0
      %10000 = vmatprep.mubr.f32.mxu0 0.0
      %10001 = vmatmul.mubr.f32.gmra.mrb[0].mxu0 %v9779
      %v10002 = vpop.f32.mrb[0].mxu0
      %v10003 = vadd.f32 %v9699, %v10002
      %v10004 = vpop.f32.mrb[0].mxu0
      %10005 = vdwg.mxu0
      %v10006 = vrot.slane %v9274, 1
      %v10007 = vrot.slane %v9275, 1
      %v10008 = vsel %vm468, %v10006, %v10007
      %v10009 = vrot.slane %v9276, 1
      %v10010 = vrot.slane %v9277, 1
      %v10011 = vsel %vm468, %v10009, %v10010
      %v10012 = vrot.slane %v9278, 1
      %v10013 = vrot.slane %v9279, 1
      %v10014 = vsel %vm468, %v10012, %v10013
      %v10015 = vrot.slane %v9280, 1
      %v10016 = vrot.slane %v9281, 1
      %v10017 = vsel %vm468, %v10015, %v10016
      %v10018 = vrot.slane %v9282, 1
      %v10019 = vrot.slane %v9283, 1
      %v10020 = vsel %vm468, %v10018, %v10019
      %v10021 = vrot.slane %v9284, 1
      %v10022 = vrot.slane %v9285, 1
      %v10023 = vsel %vm468, %v10021, %v10022
      %v10024 = vrot.slane %v9286, 1
      %v10025 = vrot.slane %v9287, 1
      %v10026 = vsel %vm468, %v10024, %v10025
      %v10027 = vrot.slane %v9288, 1
      %v10028 = vrot.slane %v9289, 1
      %v10029 = vsel %vm468, %v10027, %v10028
      %v10030 = vrot.slane %v9290, 1
      %v10031 = vrot.slane %v9291, 1
      %v10032 = vsel %vm468, %v10030, %v10031
      %v10033 = vrot.slane %v9292, 1
      %v10034 = vrot.slane %v9293, 1
      %v10035 = vsel %vm468, %v10033, %v10034
      %v10036 = vrot.slane %v9294, 1
      %v10037 = vrot.slane %v9295, 1
      %v10038 = vsel %vm468, %v10036, %v10037
      %v10039 = vrot.slane %v9296, 1
      %v10040 = vrot.slane %v9297, 1
      %v10041 = vsel %vm468, %v10039, %v10040
      %v10042 = vrot.slane %v9298, 1
      %v10043 = vrot.slane %v9299, 1
      %v10044 = vsel %vm468, %v10042, %v10043
      %v10045 = vrot.slane %v9300, 1
      %v10046 = vrot.slane %v9301, 1
      %v10047 = vsel %vm468, %v10045, %v10046
      %v10048 = vrot.slane %v9302, 1
      %v10049 = vrot.slane %v9303, 1
      %v10050 = vsel %vm468, %v10048, %v10049
      %v10066 = vsel %vm468, %v10007, 0.0
      %v10067 = vsel %vm468, %v10010, 0.0
      %v10068 = vsel %vm468, %v10013, 0.0
      %v10069 = vsel %vm468, %v10016, 0.0
      %v10070 = vsel %vm468, %v10019, 0.0
      %v10071 = vsel %vm468, %v10022, 0.0
      %v10072 = vsel %vm468, %v10025, 0.0
      %v10073 = vsel %vm468, %v10028, 0.0
      %v10074 = vsel %vm468, %v10031, 0.0
      %v10075 = vsel %vm468, %v10034, 0.0
      %v10076 = vsel %vm468, %v10037, 0.0
      %v10077 = vsel %vm468, %v10040, 0.0
      %v10078 = vsel %vm468, %v10043, 0.0
      %v10079 = vsel %vm468, %v10046, 0.0
      %v10080 = vsel %vm468, %v10049, 0.0
      %s10081 = scalar_lea.vmem %s5, 16
      %v10082 = vld [vmem:[%s10081] sm:$0xff]
      %v10083 = vsel %vm9414, %v5138, 0
      %v10085 = vsel %vm9414, %v5200, 0
      %v10087 = vsel %vm9414, %v10008, 0
      %v10090 = vsel %vm9414, %v10066, 0
      %v10092 = vsel %vm9414, %v10011, 0
      %v10095 = vsel %vm9414, %v10067, 0
      %v10097 = vsel %vm9414, %v10014, 0
      %v10100 = vsel %vm9414, %v10068, 0
      %v10102 = vsel %vm9414, %v10017, 0
      %v10105 = vsel %vm9414, %v10069, 0
      %v10107 = vsel %vm9414, %v10020, 0
      %v10110 = vsel %vm9414, %v10070, 0
      %v10112 = vsel %vm9414, %v10023, 0
      %v10115 = vsel %vm9414, %v10071, 0
      %v10117 = vsel %vm9414, %v10026, 0
      %v10120 = vsel %vm9414, %v10072, 0
      %v10122 = vsel %vm9414, %v10029, 0
      %v10125 = vsel %vm9414, %v10073, 0
      %v10127 = vsel %vm9414, %v10032, 0
      %v10130 = vsel %vm9414, %v10074, 0
      %v10132 = vsel %vm9414, %v10035, 0
      %v10135 = vsel %vm9414, %v10075, 0
      %v10137 = vsel %vm9414, %v10038, 0
      %v10140 = vsel %vm9414, %v10076, 0
      %v10142 = vsel %vm9414, %v10041, 0
      %v10145 = vsel %vm9414, %v10077, 0
      %v10147 = vsel %vm9414, %v10044, 0
      %v10150 = vsel %vm9414, %v10078, 0
      %v10152 = vsel %vm9414, %v10047, 0
      %v10155 = vsel %vm9414, %v10079, 0
      %v10157 = vsel %vm9414, %v10050, 0
      %v10160 = vsel %vm9414, %v10080, 0
      %10162 = vmatprep.subr.mxu0 0.0
      %10163 = vmatpush1.msra.mxu0 %v10082
      %10164 = vmatprep.subr.mxu0 0.0
      %10165 = vmatpush1.msra.mxu0 0.0
      %10166 = vmatprep.subr.mxu0 0.0
      %10167 = vmatpush1.msra.mxu0 0.0
      %10168 = vmatprep.subr.mxu0 0.0
      %10169 = vmatpush1.msra.mxu0 0.0
      %10170 = vmatprep.subr.mxu0 0.0
      %10171 = vmatpush1.msra.mxu0 0.0
      %10172 = vmatprep.subr.mxu0 0.0
      %10173 = vmatpush1.msra.mxu0 0.0
      %10174 = vmatprep.subr.mxu0 0.0
      %10175 = vmatpush1.msra.mxu0 0.0
      %10176 = vmatprep.subr.mxu0 0.0
      %10177 = vmatpush1.msra.mxu0 0.0
      %10178 = vmatprep.subr.mxu0 0.0
      %10179 = vmatpush1.msra.mxu0 0.0
      %10180 = vmatprep.subr.mxu0 0.0
      %10181 = vmatpush1.msra.mxu0 0.0
      %10182 = vmatprep.subr.mxu0 0.0
      %10183 = vmatpush1.msra.mxu0 0.0
      %10184 = vmatprep.subr.mxu0 0.0
      %10185 = vmatpush1.msra.mxu0 0.0
      %10186 = vmatprep.subr.mxu0 0.0
      %10187 = vmatpush1.msra.mxu0 0.0
      %10188 = vmatprep.subr.mxu0 0.0
      %10189 = vmatpush1.msra.mxu0 0.0
      %10190 = vmatprep.subr.mxu0 0.0
      %10191 = vmatpush1.msra.mxu0 0.0
      %10192 = vmatprep.subr.mxu0 0.0
      %10193 = vmatpush1.msra.mxu0 0.0
      %10194 = vmatprep.subr.mxu0 0.0
      %10195 = vmatpush1.msra.mxu0 0.0
      %10196 = vmatprep.subr.mxu0 0.0
      %10197 = vmatpush1.msra.mxu0 0.0
      %10198 = vmatprep.subr.mxu0 0.0
      %10199 = vmatpush1.msra.mxu0 0.0
      %10200 = vmatprep.subr.mxu0 0.0
      %10201 = vmatpush1.msra.mxu0 0.0
      %10202 = vmatprep.subr.mxu0 0.0
      %10203 = vmatpush1.msra.mxu0 0.0
      %10204 = vmatprep.subr.mxu0 0.0
      %10205 = vmatpush1.msra.mxu0 0.0
      %10206 = vmatprep.subr.mxu0 0.0
      %10207 = vmatpush1.msra.mxu0 0.0
      %10208 = vmatprep.subr.mxu0 0.0
      %10209 = vmatpush1.msra.mxu0 0.0
      %10210 = vmatprep.subr.mxu0 0.0
      %10211 = vmatpush1.msra.mxu0 0.0
      %10212 = vmatprep.subr.mxu0 0.0
      %10213 = vmatpush1.msra.mxu0 0.0
      %10214 = vmatprep.subr.mxu0 0.0
      %10215 = vmatpush1.msra.mxu0 0.0
      %10216 = vmatprep.subr.mxu0 0.0
      %10217 = vmatpush1.msra.mxu0 0.0
      %10218 = vmatprep.subr.mxu0 0.0
      %10219 = vmatpush1.msra.mxu0 0.0
      %10220 = vmatprep.subr.mxu0 0.0
      %10221 = vmatpush1.msra.mxu0 0.0
      %10222 = vmatprep.subr.mxu0 0.0
      %10223 = vmatpush1.msra.mxu0 0.0
      %10224 = vmatprep.subr.mxu0 0.0
      %10225 = vmatpush1.msra.mxu0 0.0
      %10226 = vmatprep.mubr.f32.mxu0 0.0
      %10227 = vmatmul.mubr.f32.gmra.mrb[0].mxu0 %v10083
      %v10228 = vpop.f32.mrb[0].mxu0
      %v10229 = vadd.f32 0.0, %v10228
      %v10230 = vpop.f32.mrb[0].mxu0
      %10231 = vmatprep.mubr.f32.mxu0 0.0
      %10232 = vmatmul.mubr.f32.gmra.mrb[0].mxu0 %v10085
      %v10233 = vpop.f32.mrb[0].mxu0
      %v10234 = vadd.f32 0.0, %v10233
      %v10235 = vpop.f32.mrb[0].mxu0
      %10236 = vmatprep.mubr.f32.mxu0 0.0
      %10237 = vmatmul.mubr.f32.gmra.mrb[0].mxu0 %v10087
      %v10238 = vpop.f32.mrb[0].mxu0
      %v10239 = vadd.f32 0.0, %v10238
      %v10240 = vpop.f32.mrb[0].mxu0
      %10241 = vmatprep.mubr.f32.mxu0 0.0
      %10242 = vmatmul.mubr.f32.gmra.mrb[0].mxu0 %v10090
      %v10243 = vpop.f32.mrb[0].mxu0
      %v10244 = vadd.f32 0.0, %v10243
      %v10245 = vpop.f32.mrb[0].mxu0
      %10246 = vmatprep.mubr.f32.mxu0 0.0
      %10247 = vmatmul.mubr.f32.gmra.mrb[0].mxu0 %v10092
      %v10248 = vpop.f32.mrb[0].mxu0
      %v10249 = vadd.f32 0.0, %v10248
      %v10250 = vpop.f32.mrb[0].mxu0
      %10251 = vmatprep.mubr.f32.mxu0 0.0
      %10252 = vmatmul.mubr.f32.gmra.mrb[0].mxu0 %v10095
      %v10253 = vpop.f32.mrb[0].mxu0
      %v10254 = vadd.f32 0.0, %v10253
      %v10255 = vpop.f32.mrb[0].mxu0
      %10256 = vmatprep.mubr.f32.mxu0 0.0
      %10257 = vmatmul.mubr.f32.gmra.mrb[0].mxu0 %v10097
      %v10258 = vpop.f32.mrb[0].mxu0
      %v10259 = vadd.f32 0.0, %v10258
      %v10260 = vpop.f32.mrb[0].mxu0
      %10261 = vmatprep.mubr.f32.mxu0 0.0
      %10262 = vmatmul.mubr.f32.gmra.mrb[0].mxu0 %v10100
      %v10263 = vpop.f32.mrb[0].mxu0
      %v10264 = vadd.f32 0.0, %v10263
      %v10265 = vpop.f32.mrb[0].mxu0
      %10266 = vmatprep.mubr.f32.mxu0 0.0
      %10267 = vmatmul.mubr.f32.gmra.mrb[0].mxu0 %v10102
      %v10268 = vpop.f32.mrb[0].mxu0
      %v10269 = vadd.f32 0.0, %v10268
      %v10270 = vpop.f32.mrb[0].mxu0
      %10271 = vmatprep.mubr.f32.mxu0 0.0
      %10272 = vmatmul.mubr.f32.gmra.mrb[0].mxu0 %v10105
      %v10273 = vpop.f32.mrb[0].mxu0
      %v10274 = vadd.f32 0.0, %v10273
      %v10275 = vpop.f32.mrb[0].mxu0
      %10276 = vmatprep.mubr.f32.mxu0 0.0
      %10277 = vmatmul.mubr.f32.gmra.mrb[0].mxu0 %v10107
      %v10278 = vpop.f32.mrb[0].mxu0
      %v10279 = vadd.f32 0.0, %v10278
      %v10280 = vpop.f32.mrb[0].mxu0
      %10281 = vmatprep.mubr.f32.mxu0 0.0
      %10282 = vmatmul.mubr.f32.gmra.mrb[0].mxu0 %v10110
      %v10283 = vpop.f32.mrb[0].mxu0
      %v10284 = vadd.f32 0.0, %v10283
      %v10285 = vpop.f32.mrb[0].mxu0
      %10286 = vmatprep.mubr.f32.mxu0 0.0
      %10287 = vmatmul.mubr.f32.gmra.mrb[0].mxu0 %v10112
      %v10288 = vpop.f32.mrb[0].mxu0
      %v10289 = vadd.f32 0.0, %v10288
      %v10290 = vpop.f32.mrb[0].mxu0
      %10291 = vmatprep.mubr.f32.mxu0 0.0
      %10292 = vmatmul.mubr.f32.gmra.mrb[0].mxu0 %v10115
      %v10293 = vpop.f32.mrb[0].mxu0
      %v10294 = vadd.f32 0.0, %v10293
      %v10295 = vpop.f32.mrb[0].mxu0
      %10296 = vmatprep.mubr.f32.mxu0 0.0
      %10297 = vmatmul.mubr.f32.gmra.mrb[0].mxu0 %v10117
      %v10298 = vpop.f32.mrb[0].mxu0
      %v10299 = vadd.f32 0.0, %v10298
      %v10300 = vpop.f32.mrb[0].mxu0
      %10301 = vmatprep.mubr.f32.mxu0 0.0
      %10302 = vmatmul.mubr.f32.gmra.mrb[0].mxu0 %v10120
      %v10303 = vpop.f32.mrb[0].mxu0
      %v10304 = vadd.f32 0.0, %v10303
      %v10305 = vpop.f32.mrb[0].mxu0
      %10306 = vmatprep.mubr.f32.mxu0 0.0
      %10307 = vmatmul.mubr.f32.gmra.mrb[0].mxu0 %v10122
      %v10308 = vpop.f32.mrb[0].mxu0
      %v10309 = vadd.f32 0.0, %v10308
      %v10310 = vpop.f32.mrb[0].mxu0
      %10311 = vmatprep.mubr.f32.mxu0 0.0
      %10312 = vmatmul.mubr.f32.gmra.mrb[0].mxu0 %v10125
      %v10313 = vpop.f32.mrb[0].mxu0
      %v10314 = vadd.f32 0.0, %v10313
      %v10315 = vpop.f32.mrb[0].mxu0
      %10316 = vmatprep.mubr.f32.mxu0 0.0
      %10317 = vmatmul.mubr.f32.gmra.mrb[0].mxu0 %v10127
      %v10318 = vpop.f32.mrb[0].mxu0
      %v10319 = vadd.f32 0.0, %v10318
      %v10320 = vpop.f32.mrb[0].mxu0
      %10321 = vmatprep.mubr.f32.mxu0 0.0
      %10322 = vmatmul.mubr.f32.gmra.mrb[0].mxu0 %v10130
      %v10323 = vpop.f32.mrb[0].mxu0
      %v10324 = vadd.f32 0.0, %v10323
      %v10325 = vpop.f32.mrb[0].mxu0
      %10326 = vmatprep.mubr.f32.mxu0 0.0
      %10327 = vmatmul.mubr.f32.gmra.mrb[0].mxu0 %v10132
      %v10328 = vpop.f32.mrb[0].mxu0
      %v10329 = vadd.f32 0.0, %v10328
      %v10330 = vpop.f32.mrb[0].mxu0
      %10331 = vmatprep.mubr.f32.mxu0 0.0
      %10332 = vmatmul.mubr.f32.gmra.mrb[0].mxu0 %v10135
      %v10333 = vpop.f32.mrb[0].mxu0
      %v10334 = vadd.f32 0.0, %v10333
      %v10335 = vpop.f32.mrb[0].mxu0
      %10336 = vmatprep.mubr.f32.mxu0 0.0
      %10337 = vmatmul.mubr.f32.gmra.mrb[0].mxu0 %v10137
      %v10338 = vpop.f32.mrb[0].mxu0
      %v10339 = vadd.f32 0.0, %v10338
      %v10340 = vpop.f32.mrb[0].mxu0
      %10341 = vmatprep.mubr.f32.mxu0 0.0
      %10342 = vmatmul.mubr.f32.gmra.mrb[0].mxu0 %v10140
      %v10343 = vpop.f32.mrb[0].mxu0
      %v10344 = vadd.f32 0.0, %v10343
      %v10345 = vpop.f32.mrb[0].mxu0
      %10346 = vmatprep.mubr.f32.mxu0 0.0
      %10347 = vmatmul.mubr.f32.gmra.mrb[0].mxu0 %v10142
      %v10348 = vpop.f32.mrb[0].mxu0
      %v10349 = vadd.f32 0.0, %v10348
      %v10350 = vpop.f32.mrb[0].mxu0
      %10351 = vmatprep.mubr.f32.mxu0 0.0
      %10352 = vmatmul.mubr.f32.gmra.mrb[0].mxu0 %v10145
      %v10353 = vpop.f32.mrb[0].mxu0
      %v10354 = vadd.f32 0.0, %v10353
      %v10355 = vpop.f32.mrb[0].mxu0
      %10356 = vmatprep.mubr.f32.mxu0 0.0
      %10357 = vmatmul.mubr.f32.gmra.mrb[0].mxu0 %v10147
      %v10358 = vpop.f32.mrb[0].mxu0
      %v10359 = vadd.f32 0.0, %v10358
      %v10360 = vpop.f32.mrb[0].mxu0
      %10361 = vmatprep.mubr.f32.mxu0 0.0
      %10362 = vmatmul.mubr.f32.gmra.mrb[0].mxu0 %v10150
      %v10363 = vpop.f32.mrb[0].mxu0
      %v10364 = vadd.f32 0.0, %v10363
      %v10365 = vpop.f32.mrb[0].mxu0
      %10366 = vmatprep.mubr.f32.mxu0 0.0
      %10367 = vmatmul.mubr.f32.gmra.mrb[0].mxu0 %v10152
      %v10368 = vpop.f32.mrb[0].mxu0
      %v10369 = vadd.f32 0.0, %v10368
      %v10370 = vpop.f32.mrb[0].mxu0
      %10371 = vmatprep.mubr.f32.mxu0 0.0
      %10372 = vmatmul.mubr.f32.gmra.mrb[0].mxu0 %v10155
      %v10373 = vpop.f32.mrb[0].mxu0
      %v10374 = vadd.f32 0.0, %v10373
      %v10375 = vpop.f32.mrb[0].mxu0
      %10376 = vmatprep.mubr.f32.mxu0 0.0
      %10377 = vmatmul.mubr.f32.gmra.mrb[0].mxu0 %v10157
      %v10378 = vpop.f32.mrb[0].mxu0
      %v10379 = vadd.f32 0.0, %v10378
      %v10380 = vpop.f32.mrb[0].mxu0
      %10381 = vmatprep.mubr.f32.mxu0 0.0
      %10382 = vmatmul.mubr.f32.gmra.mrb[0].mxu0 %v10160
      %v10383 = vpop.f32.mrb[0].mxu0
      %v10384 = vadd.f32 0.0, %v10383
      %v10385 = vpop.f32.mrb[0].mxu0
      %10386 = vdwg.mxu0
      %v10387 = vadd.f32 %v9848, %v10229
      %v10388 = vadd.f32 %v9853, %v10234
      %v10389 = vadd.f32 %v9858, %v10239
      %v10390 = vadd.f32 %v9863, %v10244
      %v10391 = vadd.f32 %v9868, %v10249
      %v10392 = vadd.f32 %v9873, %v10254
      %v10393 = vadd.f32 %v9878, %v10259
      %v10394 = vadd.f32 %v9883, %v10264
      %v10395 = vadd.f32 %v9888, %v10269
      %v10396 = vadd.f32 %v9893, %v10274
      %v10397 = vadd.f32 %v9898, %v10279
      %v10398 = vadd.f32 %v9903, %v10284
      %v10399 = vadd.f32 %v9908, %v10289
      %v10400 = vadd.f32 %v9913, %v10294
      %v10401 = vadd.f32 %v9918, %v10299
      %v10402 = vadd.f32 %v9923, %v10304
      %v10403 = vadd.f32 %v9928, %v10309
      %v10404 = vadd.f32 %v9933, %v10314
      %v10405 = vadd.f32 %v9938, %v10319
      %v10406 = vadd.f32 %v9943, %v10324
      %v10407 = vadd.f32 %v9948, %v10329
      %v10408 = vadd.f32 %v9953, %v10334
      %v10409 = vadd.f32 %v9958, %v10339
      %v10410 = vadd.f32 %v9963, %v10344
      %v10411 = vadd.f32 %v9968, %v10349
      %v10412 = vadd.f32 %v9973, %v10354
      %v10413 = vadd.f32 %v9978, %v10359
      %v10414 = vadd.f32 %v9983, %v10364
      %v10415 = vadd.f32 %v9988, %v10369
      %v10416 = vadd.f32 %v9993, %v10374
      %v10417 = vadd.f32 %v9998, %v10379
      %v10418 = vadd.f32 %v10003, %v10384
      %v10421 = vrot.slane %v9304, 7
      %v10422 = vrot.slane %v9305, 7
      %v10423 = vsel %vm419, %v10421, %v10422
      %v10425 = vsel %vm419, 0.0, %v10421
      %s10426 = scalar_lea.vmem %s5, 24
      %v10427 = vld [vmem:[%s10426] sm:$0xff]
      %v10429 = vsel %vm9414, %v10425, 0
      %v10431 = vsel %vm9414, %v10423, 0
      %10433 = vmatprep.subr.mxu0 0.0
      %10434 = vmatpush1.msra.mxu0 %v10427
      %10435 = vmatprep.subr.mxu0 0.0
      %10436 = vmatpush1.msra.mxu0 0.0
      %10437 = vmatprep.subr.mxu0 0.0
      %10438 = vmatpush1.msra.mxu0 0.0
      %10439 = vmatprep.subr.mxu0 0.0
      %10440 = vmatpush1.msra.mxu0 0.0
      %10441 = vmatprep.subr.mxu0 0.0
      %10442 = vmatpush1.msra.mxu0 0.0
      %10443 = vmatprep.subr.mxu0 0.0
      %10444 = vmatpush1.msra.mxu0 0.0
      %10445 = vmatprep.subr.mxu0 0.0
      %10446 = vmatpush1.msra.mxu0 0.0
      %10447 = vmatprep.subr.mxu0 0.0
      %10448 = vmatpush1.msra.mxu0 0.0
      %10449 = vmatprep.subr.mxu0 0.0
      %10450 = vmatpush1.msra.mxu0 0.0
      %10451 = vmatprep.subr.mxu0 0.0
      %10452 = vmatpush1.msra.mxu0 0.0
      %10453 = vmatprep.subr.mxu0 0.0
      %10454 = vmatpush1.msra.mxu0 0.0
      %10455 = vmatprep.subr.mxu0 0.0
      %10456 = vmatpush1.msra.mxu0 0.0
      %10457 = vmatprep.subr.mxu0 0.0
      %10458 = vmatpush1.msra.mxu0 0.0
      %10459 = vmatprep.subr.mxu0 0.0
      %10460 = vmatpush1.msra.mxu0 0.0
      %10461 = vmatprep.subr.mxu0 0.0
      %10462 = vmatpush1.msra.mxu0 0.0
      %10463 = vmatprep.subr.mxu0 0.0
      %10464 = vmatpush1.msra.mxu0 0.0
      %10465 = vmatprep.subr.mxu0 0.0
      %10466 = vmatpush1.msra.mxu0 0.0
      %10467 = vmatprep.subr.mxu0 0.0
      %10468 = vmatpush1.msra.mxu0 0.0
      %10469 = vmatprep.subr.mxu0 0.0
      %10470 = vmatpush1.msra.mxu0 0.0
      %10471 = vmatprep.subr.mxu0 0.0
      %10472 = vmatpush1.msra.mxu0 0.0
      %10473 = vmatprep.subr.mxu0 0.0
      %10474 = vmatpush1.msra.mxu0 0.0
      %10475 = vmatprep.subr.mxu0 0.0
      %10476 = vmatpush1.msra.mxu0 0.0
      %10477 = vmatprep.subr.mxu0 0.0
      %10478 = vmatpush1.msra.mxu0 0.0
      %10479 = vmatprep.subr.mxu0 0.0
      %10480 = vmatpush1.msra.mxu0 0.0
      %10481 = vmatprep.subr.mxu0 0.0
      %10482 = vmatpush1.msra.mxu0 0.0
      %10483 = vmatprep.subr.mxu0 0.0
      %10484 = vmatpush1.msra.mxu0 0.0
      %10485 = vmatprep.subr.mxu0 0.0
      %10486 = vmatpush1.msra.mxu0 0.0
      %10487 = vmatprep.subr.mxu0 0.0
      %10488 = vmatpush1.msra.mxu0 0.0
      %10489 = vmatprep.subr.mxu0 0.0
      %10490 = vmatpush1.msra.mxu0 0.0
      %10491 = vmatprep.subr.mxu0 0.0
      %10492 = vmatpush1.msra.mxu0 0.0
      %10493 = vmatprep.subr.mxu0 0.0
      %10494 = vmatpush1.msra.mxu0 0.0
      %10495 = vmatprep.subr.mxu0 0.0
      %10496 = vmatpush1.msra.mxu0 0.0
      %10497 = vmatprep.mubr.f32.mxu0 0.0
      %10498 = vmatmul.mubr.f32.gmra.mrb[0].mxu0 %v9707
      %v10499 = vpop.f32.mrb[0].mxu0
      %v10500 = vadd.f32 0.0, %v10499
      %v10501 = vpop.f32.mrb[0].mxu0
      %10502 = vmatprep.mubr.f32.mxu0 0.0
      %10503 = vmatmul.mubr.f32.gmra.mrb[0].mxu0 %v9709
      %v10504 = vpop.f32.mrb[0].mxu0
      %v10505 = vadd.f32 0.0, %v10504
      %v10506 = vpop.f32.mrb[0].mxu0
      %10507 = vmatprep.mubr.f32.mxu0 0.0
      %10508 = vmatmul.mubr.f32.gmra.mrb[0].mxu0 %v9712
      %v10509 = vpop.f32.mrb[0].mxu0
      %v10510 = vadd.f32 0.0, %v10509
      %v10511 = vpop.f32.mrb[0].mxu0
      %10512 = vmatprep.mubr.f32.mxu0 0.0
      %10513 = vmatmul.mubr.f32.gmra.mrb[0].mxu0 %v9714
      %v10514 = vpop.f32.mrb[0].mxu0
      %v10515 = vadd.f32 0.0, %v10514
      %v10516 = vpop.f32.mrb[0].mxu0
      %10517 = vmatprep.mubr.f32.mxu0 0.0
      %10518 = vmatmul.mubr.f32.gmra.mrb[0].mxu0 %v9717
      %v10519 = vpop.f32.mrb[0].mxu0
      %v10520 = vadd.f32 0.0, %v10519
      %v10521 = vpop.f32.mrb[0].mxu0
      %10522 = vmatprep.mubr.f32.mxu0 0.0
      %10523 = vmatmul.mubr.f32.gmra.mrb[0].mxu0 %v9719
      %v10524 = vpop.f32.mrb[0].mxu0
      %v10525 = vadd.f32 0.0, %v10524
      %v10526 = vpop.f32.mrb[0].mxu0
      %10527 = vmatprep.mubr.f32.mxu0 0.0
      %10528 = vmatmul.mubr.f32.gmra.mrb[0].mxu0 %v9722
      %v10529 = vpop.f32.mrb[0].mxu0
      %v10530 = vadd.f32 0.0, %v10529
      %v10531 = vpop.f32.mrb[0].mxu0
      %10532 = vmatprep.mubr.f32.mxu0 0.0
      %10533 = vmatmul.mubr.f32.gmra.mrb[0].mxu0 %v9724
      %v10534 = vpop.f32.mrb[0].mxu0
      %v10535 = vadd.f32 0.0, %v10534
      %v10536 = vpop.f32.mrb[0].mxu0
      %10537 = vmatprep.mubr.f32.mxu0 0.0
      %10538 = vmatmul.mubr.f32.gmra.mrb[0].mxu0 %v9727
      %v10539 = vpop.f32.mrb[0].mxu0
      %v10540 = vadd.f32 0.0, %v10539
      %v10541 = vpop.f32.mrb[0].mxu0
      %10542 = vmatprep.mubr.f32.mxu0 0.0
      %10543 = vmatmul.mubr.f32.gmra.mrb[0].mxu0 %v9729
      %v10544 = vpop.f32.mrb[0].mxu0
      %v10545 = vadd.f32 0.0, %v10544
      %v10546 = vpop.f32.mrb[0].mxu0
      %10547 = vmatprep.mubr.f32.mxu0 0.0
      %10548 = vmatmul.mubr.f32.gmra.mrb[0].mxu0 %v9732
      %v10549 = vpop.f32.mrb[0].mxu0
      %v10550 = vadd.f32 0.0, %v10549
      %v10551 = vpop.f32.mrb[0].mxu0
      %10552 = vmatprep.mubr.f32.mxu0 0.0
      %10553 = vmatmul.mubr.f32.gmra.mrb[0].mxu0 %v9734
      %v10554 = vpop.f32.mrb[0].mxu0
      %v10555 = vadd.f32 0.0, %v10554
      %v10556 = vpop.f32.mrb[0].mxu0
      %10557 = vmatprep.mubr.f32.mxu0 0.0
      %10558 = vmatmul.mubr.f32.gmra.mrb[0].mxu0 %v9737
      %v10559 = vpop.f32.mrb[0].mxu0
      %v10560 = vadd.f32 0.0, %v10559
      %v10561 = vpop.f32.mrb[0].mxu0
      %10562 = vmatprep.mubr.f32.mxu0 0.0
      %10563 = vmatmul.mubr.f32.gmra.mrb[0].mxu0 %v9739
      %v10564 = vpop.f32.mrb[0].mxu0
      %v10565 = vadd.f32 0.0, %v10564
      %v10566 = vpop.f32.mrb[0].mxu0
      %10567 = vmatprep.mubr.f32.mxu0 0.0
      %10568 = vmatmul.mubr.f32.gmra.mrb[0].mxu0 %v9742
      %v10569 = vpop.f32.mrb[0].mxu0
      %v10570 = vadd.f32 0.0, %v10569
      %v10571 = vpop.f32.mrb[0].mxu0
      %10572 = vmatprep.mubr.f32.mxu0 0.0
      %10573 = vmatmul.mubr.f32.gmra.mrb[0].mxu0 %v9744
      %v10574 = vpop.f32.mrb[0].mxu0
      %v10575 = vadd.f32 0.0, %v10574
      %v10576 = vpop.f32.mrb[0].mxu0
      %10577 = vmatprep.mubr.f32.mxu0 0.0
      %10578 = vmatmul.mubr.f32.gmra.mrb[0].mxu0 %v9747
      %v10579 = vpop.f32.mrb[0].mxu0
      %v10580 = vadd.f32 0.0, %v10579
      %v10581 = vpop.f32.mrb[0].mxu0
      %10582 = vmatprep.mubr.f32.mxu0 0.0
      %10583 = vmatmul.mubr.f32.gmra.mrb[0].mxu0 %v9749
      %v10584 = vpop.f32.mrb[0].mxu0
      %v10585 = vadd.f32 0.0, %v10584
      %v10586 = vpop.f32.mrb[0].mxu0
      %10587 = vmatprep.mubr.f32.mxu0 0.0
      %10588 = vmatmul.mubr.f32.gmra.mrb[0].mxu0 %v9752
      %v10589 = vpop.f32.mrb[0].mxu0
      %v10590 = vadd.f32 0.0, %v10589
      %v10591 = vpop.f32.mrb[0].mxu0
      %10592 = vmatprep.mubr.f32.mxu0 0.0
      %10593 = vmatmul.mubr.f32.gmra.mrb[0].mxu0 %v9754
      %v10594 = vpop.f32.mrb[0].mxu0
      %v10595 = vadd.f32 0.0, %v10594
      %v10596 = vpop.f32.mrb[0].mxu0
      %10597 = vmatprep.mubr.f32.mxu0 0.0
      %10598 = vmatmul.mubr.f32.gmra.mrb[0].mxu0 %v9757
      %v10599 = vpop.f32.mrb[0].mxu0
      %v10600 = vadd.f32 0.0, %v10599
      %v10601 = vpop.f32.mrb[0].mxu0
      %10602 = vmatprep.mubr.f32.mxu0 0.0
      %10603 = vmatmul.mubr.f32.gmra.mrb[0].mxu0 %v9759
      %v10604 = vpop.f32.mrb[0].mxu0
      %v10605 = vadd.f32 0.0, %v10604
      %v10606 = vpop.f32.mrb[0].mxu0
      %10607 = vmatprep.mubr.f32.mxu0 0.0
      %10608 = vmatmul.mubr.f32.gmra.mrb[0].mxu0 %v9762
      %v10609 = vpop.f32.mrb[0].mxu0
      %v10610 = vadd.f32 0.0, %v10609
      %v10611 = vpop.f32.mrb[0].mxu0
      %10612 = vmatprep.mubr.f32.mxu0 0.0
      %10613 = vmatmul.mubr.f32.gmra.mrb[0].mxu0 %v9764
      %v10614 = vpop.f32.mrb[0].mxu0
      %v10615 = vadd.f32 0.0, %v10614
      %v10616 = vpop.f32.mrb[0].mxu0
      %10617 = vmatprep.mubr.f32.mxu0 0.0
      %10618 = vmatmul.mubr.f32.gmra.mrb[0].mxu0 %v9767
      %v10619 = vpop.f32.mrb[0].mxu0
      %v10620 = vadd.f32 0.0, %v10619
      %v10621 = vpop.f32.mrb[0].mxu0
      %10622 = vmatprep.mubr.f32.mxu0 0.0
      %10623 = vmatmul.mubr.f32.gmra.mrb[0].mxu0 %v9769
      %v10624 = vpop.f32.mrb[0].mxu0
      %v10625 = vadd.f32 0.0, %v10624
      %v10626 = vpop.f32.mrb[0].mxu0
      %10627 = vmatprep.mubr.f32.mxu0 0.0
      %10628 = vmatmul.mubr.f32.gmra.mrb[0].mxu0 %v9772
      %v10629 = vpop.f32.mrb[0].mxu0
      %v10630 = vadd.f32 0.0, %v10629
      %v10631 = vpop.f32.mrb[0].mxu0
      %10632 = vmatprep.mubr.f32.mxu0 0.0
      %10633 = vmatmul.mubr.f32.gmra.mrb[0].mxu0 %v9774
      %v10634 = vpop.f32.mrb[0].mxu0
      %v10635 = vadd.f32 0.0, %v10634
      %v10636 = vpop.f32.mrb[0].mxu0
      %10637 = vmatprep.mubr.f32.mxu0 0.0
      %10638 = vmatmul.mubr.f32.gmra.mrb[0].mxu0 %v9777
      %v10639 = vpop.f32.mrb[0].mxu0
      %v10640 = vadd.f32 0.0, %v10639
      %v10641 = vpop.f32.mrb[0].mxu0
      %10642 = vmatprep.mubr.f32.mxu0 0.0
      %10643 = vmatmul.mubr.f32.gmra.mrb[0].mxu0 %v9779
      %v10644 = vpop.f32.mrb[0].mxu0
      %v10645 = vadd.f32 0.0, %v10644
      %v10646 = vpop.f32.mrb[0].mxu0
      %10647 = vmatprep.mubr.f32.mxu0 0.0
      %10648 = vmatmul.mubr.f32.gmra.mrb[0].mxu0 %v10429
      %v10649 = vpop.f32.mrb[0].mxu0
      %v10650 = vadd.f32 0.0, %v10649
      %v10651 = vpop.f32.mrb[0].mxu0
      %10652 = vmatprep.mubr.f32.mxu0 0.0
      %10653 = vmatmul.mubr.f32.gmra.mrb[0].mxu0 %v10431
      %v10654 = vpop.f32.mrb[0].mxu0
      %v10655 = vadd.f32 0.0, %v10654
      %v10656 = vpop.f32.mrb[0].mxu0
      %10657 = vdwg.mxu0
      %v10658 = vadd.f32 %v10387, %v10500
      %v10659 = vadd.f32 %v10388, %v10505
      %v10660 = vadd.f32 %v10389, %v10510
      %v10661 = vadd.f32 %v10390, %v10515
      %v10662 = vadd.f32 %v10391, %v10520
      %v10663 = vadd.f32 %v10392, %v10525
      %v10664 = vadd.f32 %v10393, %v10530
      %v10665 = vadd.f32 %v10394, %v10535
      %v10666 = vadd.f32 %v10395, %v10540
      %v10667 = vadd.f32 %v10396, %v10545
      %v10668 = vadd.f32 %v10397, %v10550
      %v10669 = vadd.f32 %v10398, %v10555
      %v10670 = vadd.f32 %v10399, %v10560
      %v10671 = vadd.f32 %v10400, %v10565
      %v10672 = vadd.f32 %v10401, %v10570
      %v10673 = vadd.f32 %v10402, %v10575
      %v10674 = vadd.f32 %v10403, %v10580
      %v10675 = vadd.f32 %v10404, %v10585
      %v10676 = vadd.f32 %v10405, %v10590
      %v10677 = vadd.f32 %v10406, %v10595
      %v10678 = vadd.f32 %v10407, %v10600
      %v10679 = vadd.f32 %v10408, %v10605
      %v10680 = vadd.f32 %v10409, %v10610
      %v10681 = vadd.f32 %v10410, %v10615
      %v10682 = vadd.f32 %v10411, %v10620
      %v10683 = vadd.f32 %v10412, %v10625
      %v10684 = vadd.f32 %v10413, %v10630
      %v10685 = vadd.f32 %v10414, %v10635
      %v10686 = vadd.f32 %v10415, %v10640
      %v10687 = vadd.f32 %v10416, %v10645
      %v10688 = vadd.f32 %v10417, %v10650
      %v10689 = vadd.f32 %v10418, %v10655
      %s10690 = scalar_lea.vmem %s5, 32
      %v10691 = vld [vmem:[%s10690] sm:$0xff]
      %v10692 = vsel %vm9414, %v9304, 0
      %v10694 = vsel %vm9414, %v9305, 0
      %10696 = vmatprep.subr.mxu0 0.0
      %10697 = vmatpush1.msra.mxu0 %v10691
      %10698 = vmatprep.subr.mxu0 0.0
      %10699 = vmatpush1.msra.mxu0 0.0
      %10700 = vmatprep.subr.mxu0 0.0
      %10701 = vmatpush1.msra.mxu0 0.0
      %10702 = vmatprep.subr.mxu0 0.0
      %10703 = vmatpush1.msra.mxu0 0.0
      %10704 = vmatprep.subr.mxu0 0.0
      %10705 = vmatpush1.msra.mxu0 0.0
      %10706 = vmatprep.subr.mxu0 0.0
      %10707 = vmatpush1.msra.mxu0 0.0
      %10708 = vmatprep.subr.mxu0 0.0
      %10709 = vmatpush1.msra.mxu0 0.0
      %10710 = vmatprep.subr.mxu0 0.0
      %10711 = vmatpush1.msra.mxu0 0.0
      %10712 = vmatprep.subr.mxu0 0.0
      %10713 = vmatpush1.msra.mxu0 0.0
      %10714 = vmatprep.subr.mxu0 0.0
      %10715 = vmatpush1.msra.mxu0 0.0
      %10716 = vmatprep.subr.mxu0 0.0
      %10717 = vmatpush1.msra.mxu0 0.0
      %10718 = vmatprep.subr.mxu0 0.0
      %10719 = vmatpush1.msra.mxu0 0.0
      %10720 = vmatprep.subr.mxu0 0.0
      %10721 = vmatpush1.msra.mxu0 0.0
      %10722 = vmatprep.subr.mxu0 0.0
      %10723 = vmatpush1.msra.mxu0 0.0
      %10724 = vmatprep.subr.mxu0 0.0
      %10725 = vmatpush1.msra.mxu0 0.0
      %10726 = vmatprep.subr.mxu0 0.0
      %10727 = vmatpush1.msra.mxu0 0.0
      %10728 = vmatprep.subr.mxu0 0.0
      %10729 = vmatpush1.msra.mxu0 0.0
      %10730 = vmatprep.subr.mxu0 0.0
      %10731 = vmatpush1.msra.mxu0 0.0
      %10732 = vmatprep.subr.mxu0 0.0
      %10733 = vmatpush1.msra.mxu0 0.0
      %10734 = vmatprep.subr.mxu0 0.0
      %10735 = vmatpush1.msra.mxu0 0.0
      %10736 = vmatprep.subr.mxu0 0.0
      %10737 = vmatpush1.msra.mxu0 0.0
      %10738 = vmatprep.subr.mxu0 0.0
      %10739 = vmatpush1.msra.mxu0 0.0
      %10740 = vmatprep.subr.mxu0 0.0
      %10741 = vmatpush1.msra.mxu0 0.0
      %10742 = vmatprep.subr.mxu0 0.0
      %10743 = vmatpush1.msra.mxu0 0.0
      %10744 = vmatprep.subr.mxu0 0.0
      %10745 = vmatpush1.msra.mxu0 0.0
      %10746 = vmatprep.subr.mxu0 0.0
      %10747 = vmatpush1.msra.mxu0 0.0
      %10748 = vmatprep.subr.mxu0 0.0
      %10749 = vmatpush1.msra.mxu0 0.0
      %10750 = vmatprep.subr.mxu0 0.0
      %10751 = vmatpush1.msra.mxu0 0.0
      %10752 = vmatprep.subr.mxu0 0.0
      %10753 = vmatpush1.msra.mxu0 0.0
      %10754 = vmatprep.subr.mxu0 0.0
      %10755 = vmatpush1.msra.mxu0 0.0
      %10756 = vmatprep.subr.mxu0 0.0
      %10757 = vmatpush1.msra.mxu0 0.0
      %10758 = vmatprep.subr.mxu0 0.0
      %10759 = vmatpush1.msra.mxu0 0.0
      %10760 = vmatprep.mubr.f32.mxu0 0.0
      %10761 = vmatmul.mubr.f32.gmra.mrb[0].mxu0 %v9417
      %v10762 = vpop.f32.mrb[0].mxu0
      %v10763 = vadd.f32 0.0, %v10762
      %v10764 = vpop.f32.mrb[0].mxu0
      %10765 = vmatprep.mubr.f32.mxu0 0.0
      %10766 = vmatmul.mubr.f32.gmra.mrb[0].mxu0 %v9419
      %v10767 = vpop.f32.mrb[0].mxu0
      %v10768 = vadd.f32 0.0, %v10767
      %v10769 = vpop.f32.mrb[0].mxu0
      %10770 = vmatprep.mubr.f32.mxu0 0.0
      %10771 = vmatmul.mubr.f32.gmra.mrb[0].mxu0 %v9421
      %v10772 = vpop.f32.mrb[0].mxu0
      %v10773 = vadd.f32 0.0, %v10772
      %v10774 = vpop.f32.mrb[0].mxu0
      %10775 = vmatprep.mubr.f32.mxu0 0.0
      %10776 = vmatmul.mubr.f32.gmra.mrb[0].mxu0 %v9423
      %v10777 = vpop.f32.mrb[0].mxu0
      %v10778 = vadd.f32 0.0, %v10777
      %v10779 = vpop.f32.mrb[0].mxu0
      %10780 = vmatprep.mubr.f32.mxu0 0.0
      %10781 = vmatmul.mubr.f32.gmra.mrb[0].mxu0 %v9425
      %v10782 = vpop.f32.mrb[0].mxu0
      %v10783 = vadd.f32 0.0, %v10782
      %v10784 = vpop.f32.mrb[0].mxu0
      %10785 = vmatprep.mubr.f32.mxu0 0.0
      %10786 = vmatmul.mubr.f32.gmra.mrb[0].mxu0 %v9427
      %v10787 = vpop.f32.mrb[0].mxu0
      %v10788 = vadd.f32 0.0, %v10787
      %v10789 = vpop.f32.mrb[0].mxu0
      %10790 = vmatprep.mubr.f32.mxu0 0.0
      %10791 = vmatmul.mubr.f32.gmra.mrb[0].mxu0 %v9429
      %v10792 = vpop.f32.mrb[0].mxu0
      %v10793 = vadd.f32 0.0, %v10792
      %v10794 = vpop.f32.mrb[0].mxu0
      %10795 = vmatprep.mubr.f32.mxu0 0.0
      %10796 = vmatmul.mubr.f32.gmra.mrb[0].mxu0 %v9431
      %v10797 = vpop.f32.mrb[0].mxu0
      %v10798 = vadd.f32 0.0, %v10797
      %v10799 = vpop.f32.mrb[0].mxu0
      %10800 = vmatprep.mubr.f32.mxu0 0.0
      %10801 = vmatmul.mubr.f32.gmra.mrb[0].mxu0 %v9433
      %v10802 = vpop.f32.mrb[0].mxu0
      %v10803 = vadd.f32 0.0, %v10802
      %v10804 = vpop.f32.mrb[0].mxu0
      %10805 = vmatprep.mubr.f32.mxu0 0.0
      %10806 = vmatmul.mubr.f32.gmra.mrb[0].mxu0 %v9435
      %v10807 = vpop.f32.mrb[0].mxu0
      %v10808 = vadd.f32 0.0, %v10807
      %v10809 = vpop.f32.mrb[0].mxu0
      %10810 = vmatprep.mubr.f32.mxu0 0.0
      %10811 = vmatmul.mubr.f32.gmra.mrb[0].mxu0 %v9437
      %v10812 = vpop.f32.mrb[0].mxu0
      %v10813 = vadd.f32 0.0, %v10812
      %v10814 = vpop.f32.mrb[0].mxu0
      %10815 = vmatprep.mubr.f32.mxu0 0.0
      %10816 = vmatmul.mubr.f32.gmra.mrb[0].mxu0 %v9439
      %v10817 = vpop.f32.mrb[0].mxu0
      %v10818 = vadd.f32 0.0, %v10817
      %v10819 = vpop.f32.mrb[0].mxu0
      %10820 = vmatprep.mubr.f32.mxu0 0.0
      %10821 = vmatmul.mubr.f32.gmra.mrb[0].mxu0 %v9441
      %v10822 = vpop.f32.mrb[0].mxu0
      %v10823 = vadd.f32 0.0, %v10822
      %v10824 = vpop.f32.mrb[0].mxu0
      %10825 = vmatprep.mubr.f32.mxu0 0.0
      %10826 = vmatmul.mubr.f32.gmra.mrb[0].mxu0 %v9443
      %v10827 = vpop.f32.mrb[0].mxu0
      %v10828 = vadd.f32 0.0, %v10827
      %v10829 = vpop.f32.mrb[0].mxu0
      %10830 = vmatprep.mubr.f32.mxu0 0.0
      %10831 = vmatmul.mubr.f32.gmra.mrb[0].mxu0 %v9445
      %v10832 = vpop.f32.mrb[0].mxu0
      %v10833 = vadd.f32 0.0, %v10832
      %v10834 = vpop.f32.mrb[0].mxu0
      %10835 = vmatprep.mubr.f32.mxu0 0.0
      %10836 = vmatmul.mubr.f32.gmra.mrb[0].mxu0 %v9447
      %v10837 = vpop.f32.mrb[0].mxu0
      %v10838 = vadd.f32 0.0, %v10837
      %v10839 = vpop.f32.mrb[0].mxu0
      %10840 = vmatprep.mubr.f32.mxu0 0.0
      %10841 = vmatmul.mubr.f32.gmra.mrb[0].mxu0 %v9449
      %v10842 = vpop.f32.mrb[0].mxu0
      %v10843 = vadd.f32 0.0, %v10842
      %v10844 = vpop.f32.mrb[0].mxu0
      %10845 = vmatprep.mubr.f32.mxu0 0.0
      %10846 = vmatmul.mubr.f32.gmra.mrb[0].mxu0 %v9451
      %v10847 = vpop.f32.mrb[0].mxu0
      %v10848 = vadd.f32 0.0, %v10847
      %v10849 = vpop.f32.mrb[0].mxu0
      %10850 = vmatprep.mubr.f32.mxu0 0.0
      %10851 = vmatmul.mubr.f32.gmra.mrb[0].mxu0 %v9453
      %v10852 = vpop.f32.mrb[0].mxu0
      %v10853 = vadd.f32 0.0, %v10852
      %v10854 = vpop.f32.mrb[0].mxu0
      %10855 = vmatprep.mubr.f32.mxu0 0.0
      %10856 = vmatmul.mubr.f32.gmra.mrb[0].mxu0 %v9455
      %v10857 = vpop.f32.mrb[0].mxu0
      %v10858 = vadd.f32 0.0, %v10857
      %v10859 = vpop.f32.mrb[0].mxu0
      %10860 = vmatprep.mubr.f32.mxu0 0.0
      %10861 = vmatmul.mubr.f32.gmra.mrb[0].mxu0 %v9457
      %v10862 = vpop.f32.mrb[0].mxu0
      %v10863 = vadd.f32 0.0, %v10862
      %v10864 = vpop.f32.mrb[0].mxu0
      %10865 = vmatprep.mubr.f32.mxu0 0.0
      %10866 = vmatmul.mubr.f32.gmra.mrb[0].mxu0 %v9459
      %v10867 = vpop.f32.mrb[0].mxu0
      %v10868 = vadd.f32 0.0, %v10867
      %v10869 = vpop.f32.mrb[0].mxu0
      %10870 = vmatprep.mubr.f32.mxu0 0.0
      %10871 = vmatmul.mubr.f32.gmra.mrb[0].mxu0 %v9461
      %v10872 = vpop.f32.mrb[0].mxu0
      %v10873 = vadd.f32 0.0, %v10872
      %v10874 = vpop.f32.mrb[0].mxu0
      %10875 = vmatprep.mubr.f32.mxu0 0.0
      %10876 = vmatmul.mubr.f32.gmra.mrb[0].mxu0 %v9463
      %v10877 = vpop.f32.mrb[0].mxu0
      %v10878 = vadd.f32 0.0, %v10877
      %v10879 = vpop.f32.mrb[0].mxu0
      %10880 = vmatprep.mubr.f32.mxu0 0.0
      %10881 = vmatmul.mubr.f32.gmra.mrb[0].mxu0 %v9465
      %v10882 = vpop.f32.mrb[0].mxu0
      %v10883 = vadd.f32 0.0, %v10882
      %v10884 = vpop.f32.mrb[0].mxu0
      %10885 = vmatprep.mubr.f32.mxu0 0.0
      %10886 = vmatmul.mubr.f32.gmra.mrb[0].mxu0 %v9467
      %v10887 = vpop.f32.mrb[0].mxu0
      %v10888 = vadd.f32 0.0, %v10887
      %v10889 = vpop.f32.mrb[0].mxu0
      %10890 = vmatprep.mubr.f32.mxu0 0.0
      %10891 = vmatmul.mubr.f32.gmra.mrb[0].mxu0 %v9469
      %v10892 = vpop.f32.mrb[0].mxu0
      %v10893 = vadd.f32 0.0, %v10892
      %v10894 = vpop.f32.mrb[0].mxu0
      %10895 = vmatprep.mubr.f32.mxu0 0.0
      %10896 = vmatmul.mubr.f32.gmra.mrb[0].mxu0 %v9471
      %v10897 = vpop.f32.mrb[0].mxu0
      %v10898 = vadd.f32 0.0, %v10897
      %v10899 = vpop.f32.mrb[0].mxu0
      %10900 = vmatprep.mubr.f32.mxu0 0.0
      %10901 = vmatmul.mubr.f32.gmra.mrb[0].mxu0 %v9473
      %v10902 = vpop.f32.mrb[0].mxu0
      %v10903 = vadd.f32 0.0, %v10902
      %v10904 = vpop.f32.mrb[0].mxu0
      %10905 = vmatprep.mubr.f32.mxu0 0.0
      %10906 = vmatmul.mubr.f32.gmra.mrb[0].mxu0 %v9475
      %v10907 = vpop.f32.mrb[0].mxu0
      %v10908 = vadd.f32 0.0, %v10907
      %v10909 = vpop.f32.mrb[0].mxu0
      %10910 = vmatprep.mubr.f32.mxu0 0.0
      %10911 = vmatmul.mubr.f32.gmra.mrb[0].mxu0 %v10692
      %v10912 = vpop.f32.mrb[0].mxu0
      %v10913 = vadd.f32 0.0, %v10912
      %v10914 = vpop.f32.mrb[0].mxu0
      %10915 = vmatprep.mubr.f32.mxu0 0.0
      %10916 = vmatmul.mubr.f32.gmra.mrb[0].mxu0 %v10694
      %v10917 = vpop.f32.mrb[0].mxu0
      %v10918 = vadd.f32 0.0, %v10917
      %v10919 = vpop.f32.mrb[0].mxu0
      %10920 = vdwg.mxu0
      %v10921 = vadd.f32 %v10658, %v10763
      %v10922 = vadd.f32 %v10659, %v10768
      %v10923 = vadd.f32 %v10660, %v10773
      %v10924 = vadd.f32 %v10661, %v10778
      %v10925 = vadd.f32 %v10662, %v10783
      %v10926 = vadd.f32 %v10663, %v10788
      %v10927 = vadd.f32 %v10664, %v10793
      %v10928 = vadd.f32 %v10665, %v10798
      %v10929 = vadd.f32 %v10666, %v10803
      %v10930 = vadd.f32 %v10667, %v10808
      %v10931 = vadd.f32 %v10668, %v10813
      %v10932 = vadd.f32 %v10669, %v10818
      %v10933 = vadd.f32 %v10670, %v10823
      %v10934 = vadd.f32 %v10671, %v10828
      %v10935 = vadd.f32 %v10672, %v10833
      %v10936 = vadd.f32 %v10673, %v10838
      %v10937 = vadd.f32 %v10674, %v10843
      %v10938 = vadd.f32 %v10675, %v10848
      %v10939 = vadd.f32 %v10676, %v10853
      %v10940 = vadd.f32 %v10677, %v10858
      %v10941 = vadd.f32 %v10678, %v10863
      %v10942 = vadd.f32 %v10679, %v10868
      %v10943 = vadd.f32 %v10680, %v10873
      %v10944 = vadd.f32 %v10681, %v10878
      %v10945 = vadd.f32 %v10682, %v10883
      %v10946 = vadd.f32 %v10683, %v10888
      %v10947 = vadd.f32 %v10684, %v10893
      %v10948 = vadd.f32 %v10685, %v10898
      %v10949 = vadd.f32 %v10686, %v10903
      %v10950 = vadd.f32 %v10687, %v10908
      %v10951 = vadd.f32 %v10688, %v10913
      %v10952 = vadd.f32 %v10689, %v10918
      %v10953 = vrot.slane %v9304, 1
      %v10954 = vrot.slane %v9305, 1
      %v10955 = vsel %vm468, %v10953, %v10954
      %v10957 = vsel %vm468, %v10954, 0.0
      %s10958 = scalar_lea.vmem %s5, 40
      %v10959 = vld [vmem:[%s10958] sm:$0xff]
      %v10960 = vsel %vm9414, %v10955, 0
      %v10963 = vsel %vm9414, %v10957, 0
      %10965 = vmatprep.subr.mxu0 0.0
      %10966 = vmatpush1.msra.mxu0 %v10959
      %10967 = vmatprep.subr.mxu0 0.0
      %10968 = vmatpush1.msra.mxu0 0.0
      %10969 = vmatprep.subr.mxu0 0.0
      %10970 = vmatpush1.msra.mxu0 0.0
      %10971 = vmatprep.subr.mxu0 0.0
      %10972 = vmatpush1.msra.mxu0 0.0
      %10973 = vmatprep.subr.mxu0 0.0
      %10974 = vmatpush1.msra.mxu0 0.0
      %10975 = vmatprep.subr.mxu0 0.0
      %10976 = vmatpush1.msra.mxu0 0.0
      %10977 = vmatprep.subr.mxu0 0.0
      %10978 = vmatpush1.msra.mxu0 0.0
      %10979 = vmatprep.subr.mxu0 0.0
      %10980 = vmatpush1.msra.mxu0 0.0
      %10981 = vmatprep.subr.mxu0 0.0
      %10982 = vmatpush1.msra.mxu0 0.0
      %10983 = vmatprep.subr.mxu0 0.0
      %10984 = vmatpush1.msra.mxu0 0.0
      %10985 = vmatprep.subr.mxu0 0.0
      %10986 = vmatpush1.msra.mxu0 0.0
      %10987 = vmatprep.subr.mxu0 0.0
      %10988 = vmatpush1.msra.mxu0 0.0
      %10989 = vmatprep.subr.mxu0 0.0
      %10990 = vmatpush1.msra.mxu0 0.0
      %10991 = vmatprep.subr.mxu0 0.0
      %10992 = vmatpush1.msra.mxu0 0.0
      %10993 = vmatprep.subr.mxu0 0.0
      %10994 = vmatpush1.msra.mxu0 0.0
      %10995 = vmatprep.subr.mxu0 0.0
      %10996 = vmatpush1.msra.mxu0 0.0
      %10997 = vmatprep.subr.mxu0 0.0
      %10998 = vmatpush1.msra.mxu0 0.0
      %10999 = vmatprep.subr.mxu0 0.0
      %11000 = vmatpush1.msra.mxu0 0.0
      %11001 = vmatprep.subr.mxu0 0.0
      %11002 = vmatpush1.msra.mxu0 0.0
      %11003 = vmatprep.subr.mxu0 0.0
      %11004 = vmatpush1.msra.mxu0 0.0
      %11005 = vmatprep.subr.mxu0 0.0
      %11006 = vmatpush1.msra.mxu0 0.0
      %11007 = vmatprep.subr.mxu0 0.0
      %11008 = vmatpush1.msra.mxu0 0.0
      %11009 = vmatprep.subr.mxu0 0.0
      %11010 = vmatpush1.msra.mxu0 0.0
      %11011 = vmatprep.subr.mxu0 0.0
      %11012 = vmatpush1.msra.mxu0 0.0
      %11013 = vmatprep.subr.mxu0 0.0
      %11014 = vmatpush1.msra.mxu0 0.0
      %11015 = vmatprep.subr.mxu0 0.0
      %11016 = vmatpush1.msra.mxu0 0.0
      %11017 = vmatprep.subr.mxu0 0.0
      %11018 = vmatpush1.msra.mxu0 0.0
      %11019 = vmatprep.subr.mxu0 0.0
      %11020 = vmatpush1.msra.mxu0 0.0
      %11021 = vmatprep.subr.mxu0 0.0
      %11022 = vmatpush1.msra.mxu0 0.0
      %11023 = vmatprep.subr.mxu0 0.0
      %11024 = vmatpush1.msra.mxu0 0.0
      %11025 = vmatprep.subr.mxu0 0.0
      %11026 = vmatpush1.msra.mxu0 0.0
      %11027 = vmatprep.subr.mxu0 0.0
      %11028 = vmatpush1.msra.mxu0 0.0
      %11029 = vmatprep.mubr.f32.mxu0 0.0
      %11030 = vmatmul.mubr.f32.gmra.mrb[0].mxu0 %v10087
      %v11031 = vpop.f32.mrb[0].mxu0
      %v11032 = vadd.f32 0.0, %v11031
      %v11033 = vpop.f32.mrb[0].mxu0
      %11034 = vmatprep.mubr.f32.mxu0 0.0
      %11035 = vmatmul.mubr.f32.gmra.mrb[0].mxu0 %v10090
      %v11036 = vpop.f32.mrb[0].mxu0
      %v11037 = vadd.f32 0.0, %v11036
      %v11038 = vpop.f32.mrb[0].mxu0
      %11039 = vmatprep.mubr.f32.mxu0 0.0
      %11040 = vmatmul.mubr.f32.gmra.mrb[0].mxu0 %v10092
      %v11041 = vpop.f32.mrb[0].mxu0
      %v11042 = vadd.f32 0.0, %v11041
      %v11043 = vpop.f32.mrb[0].mxu0
      %11044 = vmatprep.mubr.f32.mxu0 0.0
      %11045 = vmatmul.mubr.f32.gmra.mrb[0].mxu0 %v10095
      %v11046 = vpop.f32.mrb[0].mxu0
      %v11047 = vadd.f32 0.0, %v11046
      %v11048 = vpop.f32.mrb[0].mxu0
      %11049 = vmatprep.mubr.f32.mxu0 0.0
      %11050 = vmatmul.mubr.f32.gmra.mrb[0].mxu0 %v10097
      %v11051 = vpop.f32.mrb[0].mxu0
      %v11052 = vadd.f32 0.0, %v11051
      %v11053 = vpop.f32.mrb[0].mxu0
      %11054 = vmatprep.mubr.f32.mxu0 0.0
      %11055 = vmatmul.mubr.f32.gmra.mrb[0].mxu0 %v10100
      %v11056 = vpop.f32.mrb[0].mxu0
      %v11057 = vadd.f32 0.0, %v11056
      %v11058 = vpop.f32.mrb[0].mxu0
      %11059 = vmatprep.mubr.f32.mxu0 0.0
      %11060 = vmatmul.mubr.f32.gmra.mrb[0].mxu0 %v10102
      %v11061 = vpop.f32.mrb[0].mxu0
      %v11062 = vadd.f32 0.0, %v11061
      %v11063 = vpop.f32.mrb[0].mxu0
      %11064 = vmatprep.mubr.f32.mxu0 0.0
      %11065 = vmatmul.mubr.f32.gmra.mrb[0].mxu0 %v10105
      %v11066 = vpop.f32.mrb[0].mxu0
      %v11067 = vadd.f32 0.0, %v11066
      %v11068 = vpop.f32.mrb[0].mxu0
      %11069 = vmatprep.mubr.f32.mxu0 0.0
      %11070 = vmatmul.mubr.f32.gmra.mrb[0].mxu0 %v10107
      %v11071 = vpop.f32.mrb[0].mxu0
      %v11072 = vadd.f32 0.0, %v11071
      %v11073 = vpop.f32.mrb[0].mxu0
      %11074 = vmatprep.mubr.f32.mxu0 0.0
      %11075 = vmatmul.mubr.f32.gmra.mrb[0].mxu0 %v10110
      %v11076 = vpop.f32.mrb[0].mxu0
      %v11077 = vadd.f32 0.0, %v11076
      %v11078 = vpop.f32.mrb[0].mxu0
      %11079 = vmatprep.mubr.f32.mxu0 0.0
      %11080 = vmatmul.mubr.f32.gmra.mrb[0].mxu0 %v10112
      %v11081 = vpop.f32.mrb[0].mxu0
      %v11082 = vadd.f32 0.0, %v11081
      %v11083 = vpop.f32.mrb[0].mxu0
      %11084 = vmatprep.mubr.f32.mxu0 0.0
      %11085 = vmatmul.mubr.f32.gmra.mrb[0].mxu0 %v10115
      %v11086 = vpop.f32.mrb[0].mxu0
      %v11087 = vadd.f32 0.0, %v11086
      %v11088 = vpop.f32.mrb[0].mxu0
      %11089 = vmatprep.mubr.f32.mxu0 0.0
      %11090 = vmatmul.mubr.f32.gmra.mrb[0].mxu0 %v10117
      %v11091 = vpop.f32.mrb[0].mxu0
      %v11092 = vadd.f32 0.0, %v11091
      %v11093 = vpop.f32.mrb[0].mxu0
      %11094 = vmatprep.mubr.f32.mxu0 0.0
      %11095 = vmatmul.mubr.f32.gmra.mrb[0].mxu0 %v10120
      %v11096 = vpop.f32.mrb[0].mxu0
      %v11097 = vadd.f32 0.0, %v11096
      %v11098 = vpop.f32.mrb[0].mxu0
      %11099 = vmatprep.mubr.f32.mxu0 0.0
      %11100 = vmatmul.mubr.f32.gmra.mrb[0].mxu0 %v10122
      %v11101 = vpop.f32.mrb[0].mxu0
      %v11102 = vadd.f32 0.0, %v11101
      %v11103 = vpop.f32.mrb[0].mxu0
      %11104 = vmatprep.mubr.f32.mxu0 0.0
      %11105 = vmatmul.mubr.f32.gmra.mrb[0].mxu0 %v10125
      %v11106 = vpop.f32.mrb[0].mxu0
      %v11107 = vadd.f32 0.0, %v11106
      %v11108 = vpop.f32.mrb[0].mxu0
      %11109 = vmatprep.mubr.f32.mxu0 0.0
      %11110 = vmatmul.mubr.f32.gmra.mrb[0].mxu0 %v10127
      %v11111 = vpop.f32.mrb[0].mxu0
      %v11112 = vadd.f32 0.0, %v11111
      %v11113 = vpop.f32.mrb[0].mxu0
      %11114 = vmatprep.mubr.f32.mxu0 0.0
      %11115 = vmatmul.mubr.f32.gmra.mrb[0].mxu0 %v10130
      %v11116 = vpop.f32.mrb[0].mxu0
      %v11117 = vadd.f32 0.0, %v11116
      %v11118 = vpop.f32.mrb[0].mxu0
      %11119 = vmatprep.mubr.f32.mxu0 0.0
      %11120 = vmatmul.mubr.f32.gmra.mrb[0].mxu0 %v10132
      %v11121 = vpop.f32.mrb[0].mxu0
      %v11122 = vadd.f32 0.0, %v11121
      %v11123 = vpop.f32.mrb[0].mxu0
      %11124 = vmatprep.mubr.f32.mxu0 0.0
      %11125 = vmatmul.mubr.f32.gmra.mrb[0].mxu0 %v10135
      %v11126 = vpop.f32.mrb[0].mxu0
      %v11127 = vadd.f32 0.0, %v11126
      %v11128 = vpop.f32.mrb[0].mxu0
      %11129 = vmatprep.mubr.f32.mxu0 0.0
      %11130 = vmatmul.mubr.f32.gmra.mrb[0].mxu0 %v10137
      %v11131 = vpop.f32.mrb[0].mxu0
      %v11132 = vadd.f32 0.0, %v11131
      %v11133 = vpop.f32.mrb[0].mxu0
      %11134 = vmatprep.mubr.f32.mxu0 0.0
      %11135 = vmatmul.mubr.f32.gmra.mrb[0].mxu0 %v10140
      %v11136 = vpop.f32.mrb[0].mxu0
      %v11137 = vadd.f32 0.0, %v11136
      %v11138 = vpop.f32.mrb[0].mxu0
      %11139 = vmatprep.mubr.f32.mxu0 0.0
      %11140 = vmatmul.mubr.f32.gmra.mrb[0].mxu0 %v10142
      %v11141 = vpop.f32.mrb[0].mxu0
      %v11142 = vadd.f32 0.0, %v11141
      %v11143 = vpop.f32.mrb[0].mxu0
      %11144 = vmatprep.mubr.f32.mxu0 0.0
      %11145 = vmatmul.mubr.f32.gmra.mrb[0].mxu0 %v10145
      %v11146 = vpop.f32.mrb[0].mxu0
      %v11147 = vadd.f32 0.0, %v11146
      %v11148 = vpop.f32.mrb[0].mxu0
      %11149 = vmatprep.mubr.f32.mxu0 0.0
      %11150 = vmatmul.mubr.f32.gmra.mrb[0].mxu0 %v10147
      %v11151 = vpop.f32.mrb[0].mxu0
      %v11152 = vadd.f32 0.0, %v11151
      %v11153 = vpop.f32.mrb[0].mxu0
      %11154 = vmatprep.mubr.f32.mxu0 0.0
      %11155 = vmatmul.mubr.f32.gmra.mrb[0].mxu0 %v10150
      %v11156 = vpop.f32.mrb[0].mxu0
      %v11157 = vadd.f32 0.0, %v11156
      %v11158 = vpop.f32.mrb[0].mxu0
      %11159 = vmatprep.mubr.f32.mxu0 0.0
      %11160 = vmatmul.mubr.f32.gmra.mrb[0].mxu0 %v10152
      %v11161 = vpop.f32.mrb[0].mxu0
      %v11162 = vadd.f32 0.0, %v11161
      %v11163 = vpop.f32.mrb[0].mxu0
      %11164 = vmatprep.mubr.f32.mxu0 0.0
      %11165 = vmatmul.mubr.f32.gmra.mrb[0].mxu0 %v10155
      %v11166 = vpop.f32.mrb[0].mxu0
      %v11167 = vadd.f32 0.0, %v11166
      %v11168 = vpop.f32.mrb[0].mxu0
      %11169 = vmatprep.mubr.f32.mxu0 0.0
      %11170 = vmatmul.mubr.f32.gmra.mrb[0].mxu0 %v10157
      %v11171 = vpop.f32.mrb[0].mxu0
      %v11172 = vadd.f32 0.0, %v11171
      %v11173 = vpop.f32.mrb[0].mxu0
      %11174 = vmatprep.mubr.f32.mxu0 0.0
      %11175 = vmatmul.mubr.f32.gmra.mrb[0].mxu0 %v10160
      %v11176 = vpop.f32.mrb[0].mxu0
      %v11177 = vadd.f32 0.0, %v11176
      %v11178 = vpop.f32.mrb[0].mxu0
      %11179 = vmatprep.mubr.f32.mxu0 0.0
      %11180 = vmatmul.mubr.f32.gmra.mrb[0].mxu0 %v10960
      %v11181 = vpop.f32.mrb[0].mxu0
      %v11182 = vadd.f32 0.0, %v11181
      %v11183 = vpop.f32.mrb[0].mxu0
      %11184 = vmatprep.mubr.f32.mxu0 0.0
      %11185 = vmatmul.mubr.f32.gmra.mrb[0].mxu0 %v10963
      %v11186 = vpop.f32.mrb[0].mxu0
      %v11187 = vadd.f32 0.0, %v11186
      %v11188 = vpop.f32.mrb[0].mxu0
      %11189 = vdwg.mxu0
      %v11190 = vadd.f32 %v10921, %v11032
      %v11191 = vadd.f32 %v10922, %v11037
      %v11192 = vadd.f32 %v10923, %v11042
      %v11193 = vadd.f32 %v10924, %v11047
      %v11194 = vadd.f32 %v10925, %v11052
      %v11195 = vadd.f32 %v10926, %v11057
      %v11196 = vadd.f32 %v10927, %v11062
      %v11197 = vadd.f32 %v10928, %v11067
      %v11198 = vadd.f32 %v10929, %v11072
      %v11199 = vadd.f32 %v10930, %v11077
      %v11200 = vadd.f32 %v10931, %v11082
      %v11201 = vadd.f32 %v10932, %v11087
      %v11202 = vadd.f32 %v10933, %v11092
      %v11203 = vadd.f32 %v10934, %v11097
      %v11204 = vadd.f32 %v10935, %v11102
      %v11205 = vadd.f32 %v10936, %v11107
      %v11206 = vadd.f32 %v10937, %v11112
      %v11207 = vadd.f32 %v10938, %v11117
      %v11208 = vadd.f32 %v10939, %v11122
      %v11209 = vadd.f32 %v10940, %v11127
      %v11210 = vadd.f32 %v10941, %v11132
      %v11211 = vadd.f32 %v10942, %v11137
      %v11212 = vadd.f32 %v10943, %v11142
      %v11213 = vadd.f32 %v10944, %v11147
      %v11214 = vadd.f32 %v10945, %v11152
      %v11215 = vadd.f32 %v10946, %v11157
      %v11216 = vadd.f32 %v10947, %v11162
      %v11217 = vadd.f32 %v10948, %v11167
      %v11218 = vadd.f32 %v10949, %v11172
      %v11219 = vadd.f32 %v10950, %v11177
      %v11220 = vadd.f32 %v10951, %v11182
      %v11221 = vadd.f32 %v10952, %v11187
      %s11222 = scalar_lea.vmem %s5, 48
      %v11223 = vld [vmem:[%s11222] sm:$0xff]
      %11224 = vmatprep.subr.mxu0 0.0
      %11225 = vmatpush1.msra.mxu0 %v11223
      %11226 = vmatprep.subr.mxu0 0.0
      %11227 = vmatpush1.msra.mxu0 0.0
      %11228 = vmatprep.subr.mxu0 0.0
      %11229 = vmatpush1.msra.mxu0 0.0
      %11230 = vmatprep.subr.mxu0 0.0
      %11231 = vmatpush1.msra.mxu0 0.0
      %11232 = vmatprep.subr.mxu0 0.0
      %11233 = vmatpush1.msra.mxu0 0.0
      %11234 = vmatprep.subr.mxu0 0.0
      %11235 = vmatpush1.msra.mxu0 0.0
      %11236 = vmatprep.subr.mxu0 0.0
      %11237 = vmatpush1.msra.mxu0 0.0
      %11238 = vmatprep.subr.mxu0 0.0
      %11239 = vmatpush1.msra.mxu0 0.0
      %11240 = vmatprep.subr.mxu0 0.0
      %11241 = vmatpush1.msra.mxu0 0.0
      %11242 = vmatprep.subr.mxu0 0.0
      %11243 = vmatpush1.msra.mxu0 0.0
      %11244 = vmatprep.subr.mxu0 0.0
      %11245 = vmatpush1.msra.mxu0 0.0
      %11246 = vmatprep.subr.mxu0 0.0
      %11247 = vmatpush1.msra.mxu0 0.0
      %11248 = vmatprep.subr.mxu0 0.0
      %11249 = vmatpush1.msra.mxu0 0.0
      %11250 = vmatprep.subr.mxu0 0.0
      %11251 = vmatpush1.msra.mxu0 0.0
      %11252 = vmatprep.subr.mxu0 0.0
      %11253 = vmatpush1.msra.mxu0 0.0
      %11254 = vmatprep.subr.mxu0 0.0
      %11255 = vmatpush1.msra.mxu0 0.0
      %11256 = vmatprep.subr.mxu0 0.0
      %11257 = vmatpush1.msra.mxu0 0.0
      %11258 = vmatprep.subr.mxu0 0.0
      %11259 = vmatpush1.msra.mxu0 0.0
      %11260 = vmatprep.subr.mxu0 0.0
      %11261 = vmatpush1.msra.mxu0 0.0
      %11262 = vmatprep.subr.mxu0 0.0
      %11263 = vmatpush1.msra.mxu0 0.0
      %11264 = vmatprep.subr.mxu0 0.0
      %11265 = vmatpush1.msra.mxu0 0.0
      %11266 = vmatprep.subr.mxu0 0.0
      %11267 = vmatpush1.msra.mxu0 0.0
      %11268 = vmatprep.subr.mxu0 0.0
      %11269 = vmatpush1.msra.mxu0 0.0
      %11270 = vmatprep.subr.mxu0 0.0
      %11271 = vmatpush1.msra.mxu0 0.0
      %11272 = vmatprep.subr.mxu0 0.0
      %11273 = vmatpush1.msra.mxu0 0.0
      %11274 = vmatprep.subr.mxu0 0.0
      %11275 = vmatpush1.msra.mxu0 0.0
      %11276 = vmatprep.subr.mxu0 0.0
      %11277 = vmatpush1.msra.mxu0 0.0
      %11278 = vmatprep.subr.mxu0 0.0
      %11279 = vmatpush1.msra.mxu0 0.0
      %11280 = vmatprep.subr.mxu0 0.0
      %11281 = vmatpush1.msra.mxu0 0.0
      %11282 = vmatprep.subr.mxu0 0.0
      %11283 = vmatpush1.msra.mxu0 0.0
      %11284 = vmatprep.subr.mxu0 0.0
      %11285 = vmatpush1.msra.mxu0 0.0
      %11286 = vmatprep.subr.mxu0 0.0
      %11287 = vmatpush1.msra.mxu0 0.0
      %11288 = vmatprep.mubr.f32.mxu0 0.0
      %11289 = vmatmul.mubr.f32.gmra.mrb[0].mxu0 %v9712
      %v11290 = vpop.f32.mrb[0].mxu0
      %v11291 = vadd.f32 0.0, %v11290
      %v11292 = vpop.f32.mrb[0].mxu0
      %11293 = vmatprep.mubr.f32.mxu0 0.0
      %11294 = vmatmul.mubr.f32.gmra.mrb[0].mxu0 %v9714
      %v11295 = vpop.f32.mrb[0].mxu0
      %v11296 = vadd.f32 0.0, %v11295
      %v11297 = vpop.f32.mrb[0].mxu0
      %11298 = vmatprep.mubr.f32.mxu0 0.0
      %11299 = vmatmul.mubr.f32.gmra.mrb[0].mxu0 %v9717
      %v11300 = vpop.f32.mrb[0].mxu0
      %v11301 = vadd.f32 0.0, %v11300
      %v11302 = vpop.f32.mrb[0].mxu0
      %11303 = vmatprep.mubr.f32.mxu0 0.0
      %11304 = vmatmul.mubr.f32.gmra.mrb[0].mxu0 %v9719
      %v11305 = vpop.f32.mrb[0].mxu0
      %v11306 = vadd.f32 0.0, %v11305
      %v11307 = vpop.f32.mrb[0].mxu0
      %11308 = vmatprep.mubr.f32.mxu0 0.0
      %11309 = vmatmul.mubr.f32.gmra.mrb[0].mxu0 %v9722
      %v11310 = vpop.f32.mrb[0].mxu0
      %v11311 = vadd.f32 0.0, %v11310
      %v11312 = vpop.f32.mrb[0].mxu0
      %11313 = vmatprep.mubr.f32.mxu0 0.0
      %11314 = vmatmul.mubr.f32.gmra.mrb[0].mxu0 %v9724
      %v11315 = vpop.f32.mrb[0].mxu0
      %v11316 = vadd.f32 0.0, %v11315
      %v11317 = vpop.f32.mrb[0].mxu0
      %11318 = vmatprep.mubr.f32.mxu0 0.0
      %11319 = vmatmul.mubr.f32.gmra.mrb[0].mxu0 %v9727
      %v11320 = vpop.f32.mrb[0].mxu0
      %v11321 = vadd.f32 0.0, %v11320
      %v11322 = vpop.f32.mrb[0].mxu0
      %11323 = vmatprep.mubr.f32.mxu0 0.0
      %11324 = vmatmul.mubr.f32.gmra.mrb[0].mxu0 %v9729
      %v11325 = vpop.f32.mrb[0].mxu0
      %v11326 = vadd.f32 0.0, %v11325
      %v11327 = vpop.f32.mrb[0].mxu0
      %11328 = vmatprep.mubr.f32.mxu0 0.0
      %11329 = vmatmul.mubr.f32.gmra.mrb[0].mxu0 %v9732
      %v11330 = vpop.f32.mrb[0].mxu0
      %v11331 = vadd.f32 0.0, %v11330
      %v11332 = vpop.f32.mrb[0].mxu0
      %11333 = vmatprep.mubr.f32.mxu0 0.0
      %11334 = vmatmul.mubr.f32.gmra.mrb[0].mxu0 %v9734
      %v11335 = vpop.f32.mrb[0].mxu0
      %v11336 = vadd.f32 0.0, %v11335
      %v11337 = vpop.f32.mrb[0].mxu0
      %11338 = vmatprep.mubr.f32.mxu0 0.0
      %11339 = vmatmul.mubr.f32.gmra.mrb[0].mxu0 %v9737
      %v11340 = vpop.f32.mrb[0].mxu0
      %v11341 = vadd.f32 0.0, %v11340
      %v11342 = vpop.f32.mrb[0].mxu0
      %11343 = vmatprep.mubr.f32.mxu0 0.0
      %11344 = vmatmul.mubr.f32.gmra.mrb[0].mxu0 %v9739
      %v11345 = vpop.f32.mrb[0].mxu0
      %v11346 = vadd.f32 0.0, %v11345
      %v11347 = vpop.f32.mrb[0].mxu0
      %11348 = vmatprep.mubr.f32.mxu0 0.0
      %11349 = vmatmul.mubr.f32.gmra.mrb[0].mxu0 %v9742
      %v11350 = vpop.f32.mrb[0].mxu0
      %v11351 = vadd.f32 0.0, %v11350
      %v11352 = vpop.f32.mrb[0].mxu0
      %11353 = vmatprep.mubr.f32.mxu0 0.0
      %11354 = vmatmul.mubr.f32.gmra.mrb[0].mxu0 %v9744
      %v11355 = vpop.f32.mrb[0].mxu0
      %v11356 = vadd.f32 0.0, %v11355
      %v11357 = vpop.f32.mrb[0].mxu0
      %11358 = vmatprep.mubr.f32.mxu0 0.0
      %11359 = vmatmul.mubr.f32.gmra.mrb[0].mxu0 %v9747
      %v11360 = vpop.f32.mrb[0].mxu0
      %v11361 = vadd.f32 0.0, %v11360
      %v11362 = vpop.f32.mrb[0].mxu0
      %11363 = vmatprep.mubr.f32.mxu0 0.0
      %11364 = vmatmul.mubr.f32.gmra.mrb[0].mxu0 %v9749
      %v11365 = vpop.f32.mrb[0].mxu0
      %v11366 = vadd.f32 0.0, %v11365
      %v11367 = vpop.f32.mrb[0].mxu0
      %11368 = vmatprep.mubr.f32.mxu0 0.0
      %11369 = vmatmul.mubr.f32.gmra.mrb[0].mxu0 %v9752
      %v11370 = vpop.f32.mrb[0].mxu0
      %v11371 = vadd.f32 0.0, %v11370
      %v11372 = vpop.f32.mrb[0].mxu0
      %11373 = vmatprep.mubr.f32.mxu0 0.0
      %11374 = vmatmul.mubr.f32.gmra.mrb[0].mxu0 %v9754
      %v11375 = vpop.f32.mrb[0].mxu0
      %v11376 = vadd.f32 0.0, %v11375
      %v11377 = vpop.f32.mrb[0].mxu0
      %11378 = vmatprep.mubr.f32.mxu0 0.0
      %11379 = vmatmul.mubr.f32.gmra.mrb[0].mxu0 %v9757
      %v11380 = vpop.f32.mrb[0].mxu0
      %v11381 = vadd.f32 0.0, %v11380
      %v11382 = vpop.f32.mrb[0].mxu0
      %11383 = vmatprep.mubr.f32.mxu0 0.0
      %11384 = vmatmul.mubr.f32.gmra.mrb[0].mxu0 %v9759
      %v11385 = vpop.f32.mrb[0].mxu0
      %v11386 = vadd.f32 0.0, %v11385
      %v11387 = vpop.f32.mrb[0].mxu0
      %11388 = vmatprep.mubr.f32.mxu0 0.0
      %11389 = vmatmul.mubr.f32.gmra.mrb[0].mxu0 %v9762
      %v11390 = vpop.f32.mrb[0].mxu0
      %v11391 = vadd.f32 0.0, %v11390
      %v11392 = vpop.f32.mrb[0].mxu0
      %11393 = vmatprep.mubr.f32.mxu0 0.0
      %11394 = vmatmul.mubr.f32.gmra.mrb[0].mxu0 %v9764
      %v11395 = vpop.f32.mrb[0].mxu0
      %v11396 = vadd.f32 0.0, %v11395
      %v11397 = vpop.f32.mrb[0].mxu0
      %11398 = vmatprep.mubr.f32.mxu0 0.0
      %11399 = vmatmul.mubr.f32.gmra.mrb[0].mxu0 %v9767
      %v11400 = vpop.f32.mrb[0].mxu0
      %v11401 = vadd.f32 0.0, %v11400
      %v11402 = vpop.f32.mrb[0].mxu0
      %11403 = vmatprep.mubr.f32.mxu0 0.0
      %11404 = vmatmul.mubr.f32.gmra.mrb[0].mxu0 %v9769
      %v11405 = vpop.f32.mrb[0].mxu0
      %v11406 = vadd.f32 0.0, %v11405
      %v11407 = vpop.f32.mrb[0].mxu0
      %11408 = vmatprep.mubr.f32.mxu0 0.0
      %11409 = vmatmul.mubr.f32.gmra.mrb[0].mxu0 %v9772
      %v11410 = vpop.f32.mrb[0].mxu0
      %v11411 = vadd.f32 0.0, %v11410
      %v11412 = vpop.f32.mrb[0].mxu0
      %11413 = vmatprep.mubr.f32.mxu0 0.0
      %11414 = vmatmul.mubr.f32.gmra.mrb[0].mxu0 %v9774
      %v11415 = vpop.f32.mrb[0].mxu0
      %v11416 = vadd.f32 0.0, %v11415
      %v11417 = vpop.f32.mrb[0].mxu0
      %11418 = vmatprep.mubr.f32.mxu0 0.0
      %11419 = vmatmul.mubr.f32.gmra.mrb[0].mxu0 %v9777
      %v11420 = vpop.f32.mrb[0].mxu0
      %v11421 = vadd.f32 0.0, %v11420
      %v11422 = vpop.f32.mrb[0].mxu0
      %11423 = vmatprep.mubr.f32.mxu0 0.0
      %11424 = vmatmul.mubr.f32.gmra.mrb[0].mxu0 %v9779
      %v11425 = vpop.f32.mrb[0].mxu0
      %v11426 = vadd.f32 0.0, %v11425
      %v11427 = vpop.f32.mrb[0].mxu0
      %11428 = vmatprep.mubr.f32.mxu0 0.0
      %11429 = vmatmul.mubr.f32.gmra.mrb[0].mxu0 %v10429
      %v11430 = vpop.f32.mrb[0].mxu0
      %v11431 = vadd.f32 0.0, %v11430
      %v11432 = vpop.f32.mrb[0].mxu0
      %11433 = vmatprep.mubr.f32.mxu0 0.0
      %11434 = vmatmul.mubr.f32.gmra.mrb[0].mxu0 %v10431
      %v11435 = vpop.f32.mrb[0].mxu0
      %v11436 = vadd.f32 0.0, %v11435
      %v11437 = vpop.f32.mrb[0].mxu0
      %11438 = vmatprep.mubr.f32.mxu0 0.0
      %11439 = vmatmul.mubr.f32.gmra.mrb[0].mxu0 %v9702
      %v11440 = vpop.f32.mrb[0].mxu0
      %v11441 = vadd.f32 0.0, %v11440
      %v11442 = vpop.f32.mrb[0].mxu0
      %11443 = vmatprep.mubr.f32.mxu0 0.0
      %11444 = vmatmul.mubr.f32.gmra.mrb[0].mxu0 %v9704
      %v11445 = vpop.f32.mrb[0].mxu0
      %v11446 = vadd.f32 0.0, %v11445
      %v11447 = vpop.f32.mrb[0].mxu0
      %11448 = vdwg.mxu0
      %v11449 = vadd.f32 %v11190, %v11291
      %v11450 = vadd.f32 %v11191, %v11296
      %v11451 = vadd.f32 %v11192, %v11301
      %v11452 = vadd.f32 %v11193, %v11306
      %v11453 = vadd.f32 %v11194, %v11311
      %v11454 = vadd.f32 %v11195, %v11316
      %v11455 = vadd.f32 %v11196, %v11321
      %v11456 = vadd.f32 %v11197, %v11326
      %v11457 = vadd.f32 %v11198, %v11331
      %v11458 = vadd.f32 %v11199, %v11336
      %v11459 = vadd.f32 %v11200, %v11341
      %v11460 = vadd.f32 %v11201, %v11346
      %v11461 = vadd.f32 %v11202, %v11351
      %v11462 = vadd.f32 %v11203, %v11356
      %v11463 = vadd.f32 %v11204, %v11361
      %v11464 = vadd.f32 %v11205, %v11366
      %v11465 = vadd.f32 %v11206, %v11371
      %v11466 = vadd.f32 %v11207, %v11376
      %v11467 = vadd.f32 %v11208, %v11381
      %v11468 = vadd.f32 %v11209, %v11386
      %v11469 = vadd.f32 %v11210, %v11391
      %v11470 = vadd.f32 %v11211, %v11396
      %v11471 = vadd.f32 %v11212, %v11401
      %v11472 = vadd.f32 %v11213, %v11406
      %v11473 = vadd.f32 %v11214, %v11411
      %v11474 = vadd.f32 %v11215, %v11416
      %v11475 = vadd.f32 %v11216, %v11421
      %v11476 = vadd.f32 %v11217, %v11426
      %v11477 = vadd.f32 %v11218, %v11431
      %v11478 = vadd.f32 %v11219, %v11436
      %v11479 = vadd.f32 %v11220, %v11441
      %v11480 = vadd.f32 %v11221, %v11446
      %s11481 = scalar_lea.vmem %s5, 56
      %v11482 = vld [vmem:[%s11481] sm:$0xff]
      %11483 = vmatprep.subr.mxu0 0.0
      %11484 = vmatpush1.msra.mxu0 %v11482
      %11485 = vmatprep.subr.mxu0 0.0
      %11486 = vmatpush1.msra.mxu0 0.0
      %11487 = vmatprep.subr.mxu0 0.0
      %11488 = vmatpush1.msra.mxu0 0.0
      %11489 = vmatprep.subr.mxu0 0.0
      %11490 = vmatpush1.msra.mxu0 0.0
      %11491 = vmatprep.subr.mxu0 0.0
      %11492 = vmatpush1.msra.mxu0 0.0
      %11493 = vmatprep.subr.mxu0 0.0
      %11494 = vmatpush1.msra.mxu0 0.0
      %11495 = vmatprep.subr.mxu0 0.0
      %11496 = vmatpush1.msra.mxu0 0.0
      %11497 = vmatprep.subr.mxu0 0.0
      %11498 = vmatpush1.msra.mxu0 0.0
      %11499 = vmatprep.subr.mxu0 0.0
      %11500 = vmatpush1.msra.mxu0 0.0
      %11501 = vmatprep.subr.mxu0 0.0
      %11502 = vmatpush1.msra.mxu0 0.0
      %11503 = vmatprep.subr.mxu0 0.0
      %11504 = vmatpush1.msra.mxu0 0.0
      %11505 = vmatprep.subr.mxu0 0.0
      %11506 = vmatpush1.msra.mxu0 0.0
      %11507 = vmatprep.subr.mxu0 0.0
      %11508 = vmatpush1.msra.mxu0 0.0
      %11509 = vmatprep.subr.mxu0 0.0
      %11510 = vmatpush1.msra.mxu0 0.0
      %11511 = vmatprep.subr.mxu0 0.0
      %11512 = vmatpush1.msra.mxu0 0.0
      %11513 = vmatprep.subr.mxu0 0.0
      %11514 = vmatpush1.msra.mxu0 0.0
      %11515 = vmatprep.subr.mxu0 0.0
      %11516 = vmatpush1.msra.mxu0 0.0
      %11517 = vmatprep.subr.mxu0 0.0
      %11518 = vmatpush1.msra.mxu0 0.0
      %11519 = vmatprep.subr.mxu0 0.0
      %11520 = vmatpush1.msra.mxu0 0.0
      %11521 = vmatprep.subr.mxu0 0.0
      %11522 = vmatpush1.msra.mxu0 0.0
      %11523 = vmatprep.subr.mxu0 0.0
      %11524 = vmatpush1.msra.mxu0 0.0
      %11525 = vmatprep.subr.mxu0 0.0
      %11526 = vmatpush1.msra.mxu0 0.0
      %11527 = vmatprep.subr.mxu0 0.0
      %11528 = vmatpush1.msra.mxu0 0.0
      %11529 = vmatprep.subr.mxu0 0.0
      %11530 = vmatpush1.msra.mxu0 0.0
      %11531 = vmatprep.subr.mxu0 0.0
      %11532 = vmatpush1.msra.mxu0 0.0
      %11533 = vmatprep.subr.mxu0 0.0
      %11534 = vmatpush1.msra.mxu0 0.0
      %11535 = vmatprep.subr.mxu0 0.0
      %11536 = vmatpush1.msra.mxu0 0.0
      %11537 = vmatprep.subr.mxu0 0.0
      %11538 = vmatpush1.msra.mxu0 0.0
      %11539 = vmatprep.subr.mxu0 0.0
      %11540 = vmatpush1.msra.mxu0 0.0
      %11541 = vmatprep.subr.mxu0 0.0
      %11542 = vmatpush1.msra.mxu0 0.0
      %11543 = vmatprep.subr.mxu0 0.0
      %11544 = vmatpush1.msra.mxu0 0.0
      %11545 = vmatprep.subr.mxu0 0.0
      %11546 = vmatpush1.msra.mxu0 0.0
      %11547 = vmatprep.mubr.f32.mxu0 0.0
      %11548 = vmatmul.mubr.f32.gmra.mrb[0].mxu0 %v9421
      %v11549 = vpop.f32.mrb[0].mxu0
      %v11550 = vadd.f32 0.0, %v11549
      %v11551 = vpop.f32.mrb[0].mxu0
      %11552 = vmatprep.mubr.f32.mxu0 0.0
      %11553 = vmatmul.mubr.f32.gmra.mrb[0].mxu0 %v9423
      %v11554 = vpop.f32.mrb[0].mxu0
      %v11555 = vadd.f32 0.0, %v11554
      %v11556 = vpop.f32.mrb[0].mxu0
      %11557 = vmatprep.mubr.f32.mxu0 0.0
      %11558 = vmatmul.mubr.f32.gmra.mrb[0].mxu0 %v9425
      %v11559 = vpop.f32.mrb[0].mxu0
      %v11560 = vadd.f32 0.0, %v11559
      %v11561 = vpop.f32.mrb[0].mxu0
      %11562 = vmatprep.mubr.f32.mxu0 0.0
      %11563 = vmatmul.mubr.f32.gmra.mrb[0].mxu0 %v9427
      %v11564 = vpop.f32.mrb[0].mxu0
      %v11565 = vadd.f32 0.0, %v11564
      %v11566 = vpop.f32.mrb[0].mxu0
      %11567 = vmatprep.mubr.f32.mxu0 0.0
      %11568 = vmatmul.mubr.f32.gmra.mrb[0].mxu0 %v9429
      %v11569 = vpop.f32.mrb[0].mxu0
      %v11570 = vadd.f32 0.0, %v11569
      %v11571 = vpop.f32.mrb[0].mxu0
      %11572 = vmatprep.mubr.f32.mxu0 0.0
      %11573 = vmatmul.mubr.f32.gmra.mrb[0].mxu0 %v9431
      %v11574 = vpop.f32.mrb[0].mxu0
      %v11575 = vadd.f32 0.0, %v11574
      %v11576 = vpop.f32.mrb[0].mxu0
      %11577 = vmatprep.mubr.f32.mxu0 0.0
      %11578 = vmatmul.mubr.f32.gmra.mrb[0].mxu0 %v9433
      %v11579 = vpop.f32.mrb[0].mxu0
      %v11580 = vadd.f32 0.0, %v11579
      %v11581 = vpop.f32.mrb[0].mxu0
      %11582 = vmatprep.mubr.f32.mxu0 0.0
      %11583 = vmatmul.mubr.f32.gmra.mrb[0].mxu0 %v9435
      %v11584 = vpop.f32.mrb[0].mxu0
      %v11585 = vadd.f32 0.0, %v11584
      %v11586 = vpop.f32.mrb[0].mxu0
      %11587 = vmatprep.mubr.f32.mxu0 0.0
      %11588 = vmatmul.mubr.f32.gmra.mrb[0].mxu0 %v9437
      %v11589 = vpop.f32.mrb[0].mxu0
      %v11590 = vadd.f32 0.0, %v11589
      %v11591 = vpop.f32.mrb[0].mxu0
      %11592 = vmatprep.mubr.f32.mxu0 0.0
      %11593 = vmatmul.mubr.f32.gmra.mrb[0].mxu0 %v9439
      %v11594 = vpop.f32.mrb[0].mxu0
      %v11595 = vadd.f32 0.0, %v11594
      %v11596 = vpop.f32.mrb[0].mxu0
      %11597 = vmatprep.mubr.f32.mxu0 0.0
      %11598 = vmatmul.mubr.f32.gmra.mrb[0].mxu0 %v9441
      %v11599 = vpop.f32.mrb[0].mxu0
      %v11600 = vadd.f32 0.0, %v11599
      %v11601 = vpop.f32.mrb[0].mxu0
      %11602 = vmatprep.mubr.f32.mxu0 0.0
      %11603 = vmatmul.mubr.f32.gmra.mrb[0].mxu0 %v9443
      %v11604 = vpop.f32.mrb[0].mxu0
      %v11605 = vadd.f32 0.0, %v11604
      %v11606 = vpop.f32.mrb[0].mxu0
      %11607 = vmatprep.mubr.f32.mxu0 0.0
      %11608 = vmatmul.mubr.f32.gmra.mrb[0].mxu0 %v9445
      %v11609 = vpop.f32.mrb[0].mxu0
      %v11610 = vadd.f32 0.0, %v11609
      %v11611 = vpop.f32.mrb[0].mxu0
      %11612 = vmatprep.mubr.f32.mxu0 0.0
      %11613 = vmatmul.mubr.f32.gmra.mrb[0].mxu0 %v9447
      %v11614 = vpop.f32.mrb[0].mxu0
      %v11615 = vadd.f32 0.0, %v11614
      %v11616 = vpop.f32.mrb[0].mxu0
      %11617 = vmatprep.mubr.f32.mxu0 0.0
      %11618 = vmatmul.mubr.f32.gmra.mrb[0].mxu0 %v9449
      %v11619 = vpop.f32.mrb[0].mxu0
      %v11620 = vadd.f32 0.0, %v11619
      %v11621 = vpop.f32.mrb[0].mxu0
      %11622 = vmatprep.mubr.f32.mxu0 0.0
      %11623 = vmatmul.mubr.f32.gmra.mrb[0].mxu0 %v9451
      %v11624 = vpop.f32.mrb[0].mxu0
      %v11625 = vadd.f32 0.0, %v11624
      %v11626 = vpop.f32.mrb[0].mxu0
      %11627 = vmatprep.mubr.f32.mxu0 0.0
      %11628 = vmatmul.mubr.f32.gmra.mrb[0].mxu0 %v9453
      %v11629 = vpop.f32.mrb[0].mxu0
      %v11630 = vadd.f32 0.0, %v11629
      %v11631 = vpop.f32.mrb[0].mxu0
      %11632 = vmatprep.mubr.f32.mxu0 0.0
      %11633 = vmatmul.mubr.f32.gmra.mrb[0].mxu0 %v9455
      %v11634 = vpop.f32.mrb[0].mxu0
      %v11635 = vadd.f32 0.0, %v11634
      %v11636 = vpop.f32.mrb[0].mxu0
      %11637 = vmatprep.mubr.f32.mxu0 0.0
      %11638 = vmatmul.mubr.f32.gmra.mrb[0].mxu0 %v9457
      %v11639 = vpop.f32.mrb[0].mxu0
      %v11640 = vadd.f32 0.0, %v11639
      %v11641 = vpop.f32.mrb[0].mxu0
      %11642 = vmatprep.mubr.f32.mxu0 0.0
      %11643 = vmatmul.mubr.f32.gmra.mrb[0].mxu0 %v9459
      %v11644 = vpop.f32.mrb[0].mxu0
      %v11645 = vadd.f32 0.0, %v11644
      %v11646 = vpop.f32.mrb[0].mxu0
      %11647 = vmatprep.mubr.f32.mxu0 0.0
      %11648 = vmatmul.mubr.f32.gmra.mrb[0].mxu0 %v9461
      %v11649 = vpop.f32.mrb[0].mxu0
      %v11650 = vadd.f32 0.0, %v11649
      %v11651 = vpop.f32.mrb[0].mxu0
      %11652 = vmatprep.mubr.f32.mxu0 0.0
      %11653 = vmatmul.mubr.f32.gmra.mrb[0].mxu0 %v9463
      %v11654 = vpop.f32.mrb[0].mxu0
      %v11655 = vadd.f32 0.0, %v11654
      %v11656 = vpop.f32.mrb[0].mxu0
      %11657 = vmatprep.mubr.f32.mxu0 0.0
      %11658 = vmatmul.mubr.f32.gmra.mrb[0].mxu0 %v9465
      %v11659 = vpop.f32.mrb[0].mxu0
      %v11660 = vadd.f32 0.0, %v11659
      %v11661 = vpop.f32.mrb[0].mxu0
      %11662 = vmatprep.mubr.f32.mxu0 0.0
      %11663 = vmatmul.mubr.f32.gmra.mrb[0].mxu0 %v9467
      %v11664 = vpop.f32.mrb[0].mxu0
      %v11665 = vadd.f32 0.0, %v11664
      %v11666 = vpop.f32.mrb[0].mxu0
      %11667 = vmatprep.mubr.f32.mxu0 0.0
      %11668 = vmatmul.mubr.f32.gmra.mrb[0].mxu0 %v9469
      %v11669 = vpop.f32.mrb[0].mxu0
      %v11670 = vadd.f32 0.0, %v11669
      %v11671 = vpop.f32.mrb[0].mxu0
      %11672 = vmatprep.mubr.f32.mxu0 0.0
      %11673 = vmatmul.mubr.f32.gmra.mrb[0].mxu0 %v9471
      %v11674 = vpop.f32.mrb[0].mxu0
      %v11675 = vadd.f32 0.0, %v11674
      %v11676 = vpop.f32.mrb[0].mxu0
      %11677 = vmatprep.mubr.f32.mxu0 0.0
      %11678 = vmatmul.mubr.f32.gmra.mrb[0].mxu0 %v9473
      %v11679 = vpop.f32.mrb[0].mxu0
      %v11680 = vadd.f32 0.0, %v11679
      %v11681 = vpop.f32.mrb[0].mxu0
      %11682 = vmatprep.mubr.f32.mxu0 0.0
      %11683 = vmatmul.mubr.f32.gmra.mrb[0].mxu0 %v9475
      %v11684 = vpop.f32.mrb[0].mxu0
      %v11685 = vadd.f32 0.0, %v11684
      %v11686 = vpop.f32.mrb[0].mxu0
      %11687 = vmatprep.mubr.f32.mxu0 0.0
      %11688 = vmatmul.mubr.f32.gmra.mrb[0].mxu0 %v10692
      %v11689 = vpop.f32.mrb[0].mxu0
      %v11690 = vadd.f32 0.0, %v11689
      %v11691 = vpop.f32.mrb[0].mxu0
      %11692 = vmatprep.mubr.f32.mxu0 0.0
      %11693 = vmatmul.mubr.f32.gmra.mrb[0].mxu0 %v10694
      %v11694 = vpop.f32.mrb[0].mxu0
      %v11695 = vadd.f32 0.0, %v11694
      %v11696 = vpop.f32.mrb[0].mxu0
      %11697 = vmatprep.mubr.f32.mxu0 0.0
      %11698 = vmatmul.mubr.f32.gmra.mrb[0].mxu0 %v9415
      %v11699 = vpop.f32.mrb[0].mxu0
      %v11700 = vadd.f32 0.0, %v11699
      %v11701 = vpop.f32.mrb[0].mxu0
      %11702 = vmatprep.mubr.f32.mxu0 0.0
      %11703 = vmatmul.mubr.f32.gmra.mrb[0].mxu0 %v9415
      %v11704 = vpop.f32.mrb[0].mxu0
      %v11705 = vadd.f32 0.0, %v11704
      %v11706 = vpop.f32.mrb[0].mxu0
      %11707 = vdwg.mxu0
      %v11708 = vadd.f32 %v11449, %v11550
      %v11709 = vadd.f32 %v11450, %v11555
      %v11710 = vadd.f32 %v11451, %v11560
      %v11711 = vadd.f32 %v11452, %v11565
      %v11712 = vadd.f32 %v11453, %v11570
      %v11713 = vadd.f32 %v11454, %v11575
      %v11714 = vadd.f32 %v11455, %v11580
      %v11715 = vadd.f32 %v11456, %v11585
      %v11716 = vadd.f32 %v11457, %v11590
      %v11717 = vadd.f32 %v11458, %v11595
      %v11718 = vadd.f32 %v11459, %v11600
      %v11719 = vadd.f32 %v11460, %v11605
      %v11720 = vadd.f32 %v11461, %v11610
      %v11721 = vadd.f32 %v11462, %v11615
      %v11722 = vadd.f32 %v11463, %v11620
      %v11723 = vadd.f32 %v11464, %v11625
      %v11724 = vadd.f32 %v11465, %v11630
      %v11725 = vadd.f32 %v11466, %v11635
      %v11726 = vadd.f32 %v11467, %v11640
      %v11727 = vadd.f32 %v11468, %v11645
      %v11728 = vadd.f32 %v11469, %v11650
      %v11729 = vadd.f32 %v11470, %v11655
      %v11730 = vadd.f32 %v11471, %v11660
      %v11731 = vadd.f32 %v11472, %v11665
      %v11732 = vadd.f32 %v11473, %v11670
      %v11733 = vadd.f32 %v11474, %v11675
      %v11734 = vadd.f32 %v11475, %v11680
      %v11735 = vadd.f32 %v11476, %v11685
      %v11736 = vadd.f32 %v11477, %v11690
      %v11737 = vadd.f32 %v11478, %v11695
      %v11738 = vadd.f32 %v11479, %v11700
      %v11739 = vadd.f32 %v11480, %v11705
      %s11740 = scalar_lea.vmem %s5, 64
      %v11741 = vld [vmem:[%s11740] sm:$0xff]
      %11742 = vmatprep.subr.mxu0 0.0
      %11743 = vmatpush1.msra.mxu0 %v11741
      %11744 = vmatprep.subr.mxu0 0.0
      %11745 = vmatpush1.msra.mxu0 0.0
      %11746 = vmatprep.subr.mxu0 0.0
      %11747 = vmatpush1.msra.mxu0 0.0
      %11748 = vmatprep.subr.mxu0 0.0
      %11749 = vmatpush1.msra.mxu0 0.0
      %11750 = vmatprep.subr.mxu0 0.0
      %11751 = vmatpush1.msra.mxu0 0.0
      %11752 = vmatprep.subr.mxu0 0.0
      %11753 = vmatpush1.msra.mxu0 0.0
      %11754 = vmatprep.subr.mxu0 0.0
      %11755 = vmatpush1.msra.mxu0 0.0
      %11756 = vmatprep.subr.mxu0 0.0
      %11757 = vmatpush1.msra.mxu0 0.0
      %11758 = vmatprep.subr.mxu0 0.0
      %11759 = vmatpush1.msra.mxu0 0.0
      %11760 = vmatprep.subr.mxu0 0.0
      %11761 = vmatpush1.msra.mxu0 0.0
      %11762 = vmatprep.subr.mxu0 0.0
      %11763 = vmatpush1.msra.mxu0 0.0
      %11764 = vmatprep.subr.mxu0 0.0
      %11765 = vmatpush1.msra.mxu0 0.0
      %11766 = vmatprep.subr.mxu0 0.0
      %11767 = vmatpush1.msra.mxu0 0.0
      %11768 = vmatprep.subr.mxu0 0.0
      %11769 = vmatpush1.msra.mxu0 0.0
      %11770 = vmatprep.subr.mxu0 0.0
      %11771 = vmatpush1.msra.mxu0 0.0
      %11772 = vmatprep.subr.mxu0 0.0
      %11773 = vmatpush1.msra.mxu0 0.0
      %11774 = vmatprep.subr.mxu0 0.0
      %11775 = vmatpush1.msra.mxu0 0.0
      %11776 = vmatprep.subr.mxu0 0.0
      %11777 = vmatpush1.msra.mxu0 0.0
      %11778 = vmatprep.subr.mxu0 0.0
      %11779 = vmatpush1.msra.mxu0 0.0
      %11780 = vmatprep.subr.mxu0 0.0
      %11781 = vmatpush1.msra.mxu0 0.0
      %11782 = vmatprep.subr.mxu0 0.0
      %11783 = vmatpush1.msra.mxu0 0.0
      %11784 = vmatprep.subr.mxu0 0.0
      %11785 = vmatpush1.msra.mxu0 0.0
      %11786 = vmatprep.subr.mxu0 0.0
      %11787 = vmatpush1.msra.mxu0 0.0
      %11788 = vmatprep.subr.mxu0 0.0
      %11789 = vmatpush1.msra.mxu0 0.0
      %11790 = vmatprep.subr.mxu0 0.0
      %11791 = vmatpush1.msra.mxu0 0.0
      %11792 = vmatprep.subr.mxu0 0.0
      %11793 = vmatpush1.msra.mxu0 0.0
      %11794 = vmatprep.subr.mxu0 0.0
      %11795 = vmatpush1.msra.mxu0 0.0
      %11796 = vmatprep.subr.mxu0 0.0
      %11797 = vmatpush1.msra.mxu0 0.0
      %11798 = vmatprep.subr.mxu0 0.0
      %11799 = vmatpush1.msra.mxu0 0.0
      %11800 = vmatprep.subr.mxu0 0.0
      %11801 = vmatpush1.msra.mxu0 0.0
      %11802 = vmatprep.subr.mxu0 0.0
      %11803 = vmatpush1.msra.mxu0 0.0
      %11804 = vmatprep.subr.mxu0 0.0
      %11805 = vmatpush1.msra.mxu0 0.0
      %11806 = vmatprep.mubr.f32.mxu0 0.0
      %11807 = vmatmul.mubr.f32.gmra.mrb[0].mxu0 %v10092
      %v11808 = vpop.f32.mrb[0].mxu0
      %v11809 = vadd.f32 0.0, %v11808
      %v11810 = vpop.f32.mrb[0].mxu0
      %11811 = vmatprep.mubr.f32.mxu0 0.0
      %11812 = vmatmul.mubr.f32.gmra.mrb[0].mxu0 %v10095
      %v11813 = vpop.f32.mrb[0].mxu0
      %v11814 = vadd.f32 0.0, %v11813
      %v11815 = vpop.f32.mrb[0].mxu0
      %11816 = vmatprep.mubr.f32.mxu0 0.0
      %11817 = vmatmul.mubr.f32.gmra.mrb[0].mxu0 %v10097
      %v11818 = vpop.f32.mrb[0].mxu0
      %v11819 = vadd.f32 0.0, %v11818
      %v11820 = vpop.f32.mrb[0].mxu0
      %11821 = vmatprep.mubr.f32.mxu0 0.0
      %11822 = vmatmul.mubr.f32.gmra.mrb[0].mxu0 %v10100
      %v11823 = vpop.f32.mrb[0].mxu0
      %v11824 = vadd.f32 0.0, %v11823
      %v11825 = vpop.f32.mrb[0].mxu0
      %11826 = vmatprep.mubr.f32.mxu0 0.0
      %11827 = vmatmul.mubr.f32.gmra.mrb[0].mxu0 %v10102
      %v11828 = vpop.f32.mrb[0].mxu0
      %v11829 = vadd.f32 0.0, %v11828
      %v11830 = vpop.f32.mrb[0].mxu0
      %11831 = vmatprep.mubr.f32.mxu0 0.0
      %11832 = vmatmul.mubr.f32.gmra.mrb[0].mxu0 %v10105
      %v11833 = vpop.f32.mrb[0].mxu0
      %v11834 = vadd.f32 0.0, %v11833
      %v11835 = vpop.f32.mrb[0].mxu0
      %11836 = vmatprep.mubr.f32.mxu0 0.0
      %11837 = vmatmul.mubr.f32.gmra.mrb[0].mxu0 %v10107
      %v11838 = vpop.f32.mrb[0].mxu0
      %v11839 = vadd.f32 0.0, %v11838
      %v11840 = vpop.f32.mrb[0].mxu0
      %11841 = vmatprep.mubr.f32.mxu0 0.0
      %11842 = vmatmul.mubr.f32.gmra.mrb[0].mxu0 %v10110
      %v11843 = vpop.f32.mrb[0].mxu0
      %v11844 = vadd.f32 0.0, %v11843
      %v11845 = vpop.f32.mrb[0].mxu0
      %11846 = vmatprep.mubr.f32.mxu0 0.0
      %11847 = vmatmul.mubr.f32.gmra.mrb[0].mxu0 %v10112
      %v11848 = vpop.f32.mrb[0].mxu0
      %v11849 = vadd.f32 0.0, %v11848
      %v11850 = vpop.f32.mrb[0].mxu0
      %11851 = vmatprep.mubr.f32.mxu0 0.0
      %11852 = vmatmul.mubr.f32.gmra.mrb[0].mxu0 %v10115
      %v11853 = vpop.f32.mrb[0].mxu0
      %v11854 = vadd.f32 0.0, %v11853
      %v11855 = vpop.f32.mrb[0].mxu0
      %11856 = vmatprep.mubr.f32.mxu0 0.0
      %11857 = vmatmul.mubr.f32.gmra.mrb[0].mxu0 %v10117
      %v11858 = vpop.f32.mrb[0].mxu0
      %v11859 = vadd.f32 0.0, %v11858
      %v11860 = vpop.f32.mrb[0].mxu0
      %11861 = vmatprep.mubr.f32.mxu0 0.0
      %11862 = vmatmul.mubr.f32.gmra.mrb[0].mxu0 %v10120
      %v11863 = vpop.f32.mrb[0].mxu0
      %v11864 = vadd.f32 0.0, %v11863
      %v11865 = vpop.f32.mrb[0].mxu0
      %11866 = vmatprep.mubr.f32.mxu0 0.0
      %11867 = vmatmul.mubr.f32.gmra.mrb[0].mxu0 %v10122
      %v11868 = vpop.f32.mrb[0].mxu0
      %v11869 = vadd.f32 0.0, %v11868
      %v11870 = vpop.f32.mrb[0].mxu0
      %11871 = vmatprep.mubr.f32.mxu0 0.0
      %11872 = vmatmul.mubr.f32.gmra.mrb[0].mxu0 %v10125
      %v11873 = vpop.f32.mrb[0].mxu0
      %v11874 = vadd.f32 0.0, %v11873
      %v11875 = vpop.f32.mrb[0].mxu0
      %11876 = vmatprep.mubr.f32.mxu0 0.0
      %11877 = vmatmul.mubr.f32.gmra.mrb[0].mxu0 %v10127
      %v11878 = vpop.f32.mrb[0].mxu0
      %v11879 = vadd.f32 0.0, %v11878
      %v11880 = vpop.f32.mrb[0].mxu0
      %11881 = vmatprep.mubr.f32.mxu0 0.0
      %11882 = vmatmul.mubr.f32.gmra.mrb[0].mxu0 %v10130
      %v11883 = vpop.f32.mrb[0].mxu0
      %v11884 = vadd.f32 0.0, %v11883
      %v11885 = vpop.f32.mrb[0].mxu0
      %11886 = vmatprep.mubr.f32.mxu0 0.0
      %11887 = vmatmul.mubr.f32.gmra.mrb[0].mxu0 %v10132
      %v11888 = vpop.f32.mrb[0].mxu0
      %v11889 = vadd.f32 0.0, %v11888
      %v11890 = vpop.f32.mrb[0].mxu0
      %11891 = vmatprep.mubr.f32.mxu0 0.0
      %11892 = vmatmul.mubr.f32.gmra.mrb[0].mxu0 %v10135
      %v11893 = vpop.f32.mrb[0].mxu0
      %v11894 = vadd.f32 0.0, %v11893
      %v11895 = vpop.f32.mrb[0].mxu0
      %11896 = vmatprep.mubr.f32.mxu0 0.0
      %11897 = vmatmul.mubr.f32.gmra.mrb[0].mxu0 %v10137
      %v11898 = vpop.f32.mrb[0].mxu0
      %v11899 = vadd.f32 0.0, %v11898
      %v11900 = vpop.f32.mrb[0].mxu0
      %11901 = vmatprep.mubr.f32.mxu0 0.0
      %11902 = vmatmul.mubr.f32.gmra.mrb[0].mxu0 %v10140
      %v11903 = vpop.f32.mrb[0].mxu0
      %v11904 = vadd.f32 0.0, %v11903
      %v11905 = vpop.f32.mrb[0].mxu0
      %11906 = vmatprep.mubr.f32.mxu0 0.0
      %11907 = vmatmul.mubr.f32.gmra.mrb[0].mxu0 %v10142
      %v11908 = vpop.f32.mrb[0].mxu0
      %v11909 = vadd.f32 0.0, %v11908
      %v11910 = vpop.f32.mrb[0].mxu0
      %11911 = vmatprep.mubr.f32.mxu0 0.0
      %11912 = vmatmul.mubr.f32.gmra.mrb[0].mxu0 %v10145
      %v11913 = vpop.f32.mrb[0].mxu0
      %v11914 = vadd.f32 0.0, %v11913
      %v11915 = vpop.f32.mrb[0].mxu0
      %11916 = vmatprep.mubr.f32.mxu0 0.0
      %11917 = vmatmul.mubr.f32.gmra.mrb[0].mxu0 %v10147
      %v11918 = vpop.f32.mrb[0].mxu0
      %v11919 = vadd.f32 0.0, %v11918
      %v11920 = vpop.f32.mrb[0].mxu0
      %11921 = vmatprep.mubr.f32.mxu0 0.0
      %11922 = vmatmul.mubr.f32.gmra.mrb[0].mxu0 %v10150
      %v11923 = vpop.f32.mrb[0].mxu0
      %v11924 = vadd.f32 0.0, %v11923
      %v11925 = vpop.f32.mrb[0].mxu0
      %11926 = vmatprep.mubr.f32.mxu0 0.0
      %11927 = vmatmul.mubr.f32.gmra.mrb[0].mxu0 %v10152
      %v11928 = vpop.f32.mrb[0].mxu0
      %v11929 = vadd.f32 0.0, %v11928
      %v11930 = vpop.f32.mrb[0].mxu0
      %11931 = vmatprep.mubr.f32.mxu0 0.0
      %11932 = vmatmul.mubr.f32.gmra.mrb[0].mxu0 %v10155
      %v11933 = vpop.f32.mrb[0].mxu0
      %v11934 = vadd.f32 0.0, %v11933
      %v11935 = vpop.f32.mrb[0].mxu0
      %11936 = vmatprep.mubr.f32.mxu0 0.0
      %11937 = vmatmul.mubr.f32.gmra.mrb[0].mxu0 %v10157
      %v11938 = vpop.f32.mrb[0].mxu0
      %v11939 = vadd.f32 0.0, %v11938
      %v11940 = vpop.f32.mrb[0].mxu0
      %11941 = vmatprep.mubr.f32.mxu0 0.0
      %11942 = vmatmul.mubr.f32.gmra.mrb[0].mxu0 %v10160
      %v11943 = vpop.f32.mrb[0].mxu0
      %v11944 = vadd.f32 0.0, %v11943
      %v11945 = vpop.f32.mrb[0].mxu0
      %11946 = vmatprep.mubr.f32.mxu0 0.0
      %11947 = vmatmul.mubr.f32.gmra.mrb[0].mxu0 %v10960
      %v11948 = vpop.f32.mrb[0].mxu0
      %v11949 = vadd.f32 0.0, %v11948
      %v11950 = vpop.f32.mrb[0].mxu0
      %11951 = vmatprep.mubr.f32.mxu0 0.0
      %11952 = vmatmul.mubr.f32.gmra.mrb[0].mxu0 %v10963
      %v11953 = vpop.f32.mrb[0].mxu0
      %v11954 = vadd.f32 0.0, %v11953
      %v11955 = vpop.f32.mrb[0].mxu0
      %11956 = vmatprep.mubr.f32.mxu0 0.0
      %11957 = vmatmul.mubr.f32.gmra.mrb[0].mxu0 %v10083
      %v11958 = vpop.f32.mrb[0].mxu0
      %v11959 = vadd.f32 0.0, %v11958
      %v11960 = vpop.f32.mrb[0].mxu0
      %11961 = vmatprep.mubr.f32.mxu0 0.0
      %11962 = vmatmul.mubr.f32.gmra.mrb[0].mxu0 %v10085
      %v11963 = vpop.f32.mrb[0].mxu0
      %v11964 = vadd.f32 0.0, %v11963
      %v11965 = vpop.f32.mrb[0].mxu0
      %11966 = vdwg.mxu0
      %v11967 = vadd.f32 %v11708, %v11809
      %v11968 = vadd.f32 %v11709, %v11814
      %v11969 = vadd.f32 %v11710, %v11819
      %v11970 = vadd.f32 %v11711, %v11824
      %v11971 = vadd.f32 %v11712, %v11829
      %v11972 = vadd.f32 %v11713, %v11834
      %v11973 = vadd.f32 %v11714, %v11839
      %v11974 = vadd.f32 %v11715, %v11844
      %v11975 = vadd.f32 %v11716, %v11849
      %v11976 = vadd.f32 %v11717, %v11854
      %v11977 = vadd.f32 %v11718, %v11859
      %v11978 = vadd.f32 %v11719, %v11864
      %v11979 = vadd.f32 %v11720, %v11869
      %v11980 = vadd.f32 %v11721, %v11874
      %v11981 = vadd.f32 %v11722, %v11879
      %v11982 = vadd.f32 %v11723, %v11884
      %v11983 = vadd.f32 %v11724, %v11889
      %v11984 = vadd.f32 %v11725, %v11894
      %v11985 = vadd.f32 %v11726, %v11899
      %v11986 = vadd.f32 %v11727, %v11904
      %v11987 = vadd.f32 %v11728, %v11909
      %v11988 = vadd.f32 %v11729, %v11914
      %v11989 = vadd.f32 %v11730, %v11919
      %v11990 = vadd.f32 %v11731, %v11924
      %v11991 = vadd.f32 %v11732, %v11929
      %v11992 = vadd.f32 %v11733, %v11934
      %v11993 = vadd.f32 %v11734, %v11939
      %v11994 = vadd.f32 %v11735, %v11944
      %v11995 = vadd.f32 %v11736, %v11949
      %v11996 = vadd.f32 %v11737, %v11954
      %v11997 = vadd.f32 %v11738, %v11959
      %v11998 = vadd.f32 %v11739, %v11964
      %v11999 = vld [vmem:[%s6] sm:$0x1]
      %v12001 = vlaneseq
      %v12002 = vshrl.u32 %v12001, 7
      %v12003 = vsub.s32 0, %v12002
      %v12004 = vrot.slane %v11999, %v12003
      %v12006 = vadd.f32 %v11967, %v12004
      %v12007 = vadd.f32 %v11968, %v12004
      %v12008 = vadd.f32 %v11969, %v12004
      %v12009 = vadd.f32 %v11970, %v12004
      %v12010 = vadd.f32 %v11971, %v12004
      %v12011 = vadd.f32 %v11972, %v12004
      %v12012 = vadd.f32 %v11973, %v12004
      %v12013 = vadd.f32 %v11974, %v12004
      %v12014 = vadd.f32 %v11975, %v12004
      %v12015 = vadd.f32 %v11976, %v12004
      %v12016 = vadd.f32 %v11977, %v12004
      %v12017 = vadd.f32 %v11978, %v12004
      %v12018 = vadd.f32 %v11979, %v12004
      %v12019 = vadd.f32 %v11980, %v12004
      %v12020 = vadd.f32 %v11981, %v12004
      %v12021 = vadd.f32 %v11982, %v12004
      %v12022 = vadd.f32 %v11983, %v12004
      %v12023 = vadd.f32 %v11984, %v12004
      %v12024 = vadd.f32 %v11985, %v12004
      %v12025 = vadd.f32 %v11986, %v12004
      %v12026 = vadd.f32 %v11987, %v12004
      %v12027 = vadd.f32 %v11988, %v12004
      %v12028 = vadd.f32 %v11989, %v12004
      %v12029 = vadd.f32 %v11990, %v12004
      %v12030 = vadd.f32 %v11991, %v12004
      %v12031 = vadd.f32 %v11992, %v12004
      %v12032 = vadd.f32 %v11993, %v12004
      %v12033 = vadd.f32 %v11994, %v12004
      %v12034 = vadd.f32 %v11995, %v12004
      %v12035 = vadd.f32 %v11996, %v12004
      %v12036 = vadd.f32 %v11997, %v12004
      %v12037 = vadd.f32 %v11998, %v12004
      %v12038 = vmax.f32 %v12006, 0.0
      %v12039 = vmax.f32 %v12007, 0.0
      %v12040 = vmax.f32 %v12008, 0.0
      %v12041 = vmax.f32 %v12009, 0.0
      %v12042 = vmax.f32 %v12010, 0.0
      %v12043 = vmax.f32 %v12011, 0.0
      %v12044 = vmax.f32 %v12012, 0.0
      %v12045 = vmax.f32 %v12013, 0.0
      %v12046 = vmax.f32 %v12014, 0.0
      %v12047 = vmax.f32 %v12015, 0.0
      %v12048 = vmax.f32 %v12016, 0.0
      %v12049 = vmax.f32 %v12017, 0.0
      %v12050 = vmax.f32 %v12018, 0.0
      %v12051 = vmax.f32 %v12019, 0.0
      %v12052 = vmax.f32 %v12020, 0.0
      %v12053 = vmax.f32 %v12021, 0.0
      %v12054 = vmax.f32 %v12022, 0.0
      %v12055 = vmax.f32 %v12023, 0.0
      %v12056 = vmax.f32 %v12024, 0.0
      %v12057 = vmax.f32 %v12025, 0.0
      %v12058 = vmax.f32 %v12026, 0.0
      %v12059 = vmax.f32 %v12027, 0.0
      %v12060 = vmax.f32 %v12028, 0.0
      %v12061 = vmax.f32 %v12029, 0.0
      %v12062 = vmax.f32 %v12030, 0.0
      %v12063 = vmax.f32 %v12031, 0.0
      %v12064 = vmax.f32 %v12032, 0.0
      %v12065 = vmax.f32 %v12033, 0.0
      %v12066 = vmax.f32 %v12034, 0.0
      %v12067 = vmax.f32 %v12035, 0.0
      %v12068 = vmax.f32 %v12036, 0.0
      %v12069 = vmax.f32 %v12037, 0.0
      %12070 = vst.msk [vmem:[%s298] sm:$0xff] %vm9414, %v12038
      %12071 = vst.msk [vmem:[%s298 + $0x8] sm:$0xff] %vm9414, %v12039
      %12072 = vst.msk [vmem:[%s298 + $0x10] sm:$0xff] %vm9414, %v12040
      %12073 = vst.msk [vmem:[%s298 + $0x18] sm:$0xff] %vm9414, %v12041
      %12074 = vst.msk [vmem:[%s298 + $0x20] sm:$0xff] %vm9414, %v12042
      %12075 = vst.msk [vmem:[%s298 + $0x28] sm:$0xff] %vm9414, %v12043
      %12076 = vst.msk [vmem:[%s298 + $0x30] sm:$0xff] %vm9414, %v12044
      %12077 = vst.msk [vmem:[%s298 + $0x38] sm:$0xff] %vm9414, %v12045
      %12078 = vst.msk [vmem:[%s298 + $0x40] sm:$0xff] %vm9414, %v12046
      %12079 = vst.msk [vmem:[%s298 + $0x48] sm:$0xff] %vm9414, %v12047
      %12080 = vst.msk [vmem:[%s298 + $0x50] sm:$0xff] %vm9414, %v12048
      %12081 = vst.msk [vmem:[%s298 + $0x58] sm:$0xff] %vm9414, %v12049
      %12082 = vst.msk [vmem:[%s298 + $0x60] sm:$0xff] %vm9414, %v12050
      %12083 = vst.msk [vmem:[%s298 + $0x68] sm:$0xff] %vm9414, %v12051
      %12084 = vst.msk [vmem:[%s298 + $0x70] sm:$0xff] %vm9414, %v12052
      %12085 = vst.msk [vmem:[%s298 + $0x78] sm:$0xff] %vm9414, %v12053
      %12086 = vst.msk [vmem:[%s298 + $0x80] sm:$0xff] %vm9414, %v12054
      %12087 = vst.msk [vmem:[%s298 + $0x88] sm:$0xff] %vm9414, %v12055
      %12088 = vst.msk [vmem:[%s298 + $0x90] sm:$0xff] %vm9414, %v12056
      %12089 = vst.msk [vmem:[%s298 + $0x98] sm:$0xff] %vm9414, %v12057
      %12090 = vst.msk [vmem:[%s298 + $0xa0] sm:$0xff] %vm9414, %v12058
      %12091 = vst.msk [vmem:[%s298 + $0xa8] sm:$0xff] %vm9414, %v12059
      %12092 = vst.msk [vmem:[%s298 + $0xb0] sm:$0xff] %vm9414, %v12060
      %12093 = vst.msk [vmem:[%s298 + $0xb8] sm:$0xff] %vm9414, %v12061
      %12094 = vst.msk [vmem:[%s298 + $0xc0] sm:$0xff] %vm9414, %v12062
      %12095 = vst.msk [vmem:[%s298 + $0xc8] sm:$0xff] %vm9414, %v12063
      %12096 = vst.msk [vmem:[%s298 + $0xd0] sm:$0xff] %vm9414, %v12064
      %12097 = vst.msk [vmem:[%s298 + $0xd8] sm:$0xff] %vm9414, %v12065
      %12098 = vst.msk [vmem:[%s298 + $0xe0] sm:$0xff] %vm9414, %v12066
      %12099 = vst.msk [vmem:[%s298 + $0xe8] sm:$0xff] %vm9414, %v12067
      %12100 = vst.msk [vmem:[%s298 + $0xf0] sm:$0xff] %vm9414, %v12068
      %12101 = vst.msk [vmem:[%s298 + $0xf8] sm:$0xff] %vm9414, %v12069
      %p12102 = scmp.lt.s32.totalorder %s18, 1
      %s12103 = scalar_select %p12102, %s18, 1
      %s12104 = smul.addr %s12103, 32
      %s12105 = smul.addr %s12104, 8
      %s12106 = scalar_lea.vmem %s7, %s12105
      // Predicated region
      $region49: #{upsampling_concat_forward.1} parent=47 // pred_check
        %p12107 = pneg %p193
      $region50: #{upsampling_concat_forward.1} parent=47 // pred_check_branch
        %12109 = sbr.rel (%p12107) target = $region52
      $region51: #{upsampling_concat_forward.1} parent=47 // pred_region
        _
      $region52: #{upsampling_concat_forward.1} parent=47 // pred_fallthru
        _
    $region48: #{upsampling_concat_forward.1} parent=5 // pred_fallthru
      _
    %p12110 = scmp.le.s32.totalorder 2, %s13
    // Predicated region
    $region53: #{upsampling_concat_forward.1} parent=5 // pred_check
      %p12111 = pneg %p12110
    $region54: #{upsampling_concat_forward.1} parent=5 // pred_check_branch
      %12113 = sbr.rel (%p12111) target = $region56
    $region55: #{upsampling_concat_forward.1} parent=5 // pred_region
      %s12114 = ssub.s32 %s13, 2
      // Predicated region
      $region57: #{upsampling_concat_forward.1} parent=55 // pred_check
        %p12115 = pneg %p199
      $region58: #{upsampling_concat_forward.1} parent=55 // pred_check_branch
        %12117 = sbr.rel (%p12115) target = $region60
      $region59: #{upsampling_concat_forward.1} parent=55 // pred_region
        %p12118 = scmp.lt.s32.totalorder %s19, 1
        %s12119 = scalar_select %p12118, %s19, 1
        %s12120 = smul.addr %s12119, 32
        %s12121 = smul.addr %s12120, 8
        %s12122 = scalar_lea.vmem %s7, %s12121
      $region60: #{upsampling_concat_forward.1} parent=55 // pred_fallthru
        _
    $region56: #{upsampling_concat_forward.1} parent=5 // pred_fallthru
      _
  $region6: #{upsampling_concat_forward.1} parent=0 // loop_footer
    %s17 = sadd.s32 1, %s13
  $region7: #{upsampling_concat_forward.1} parent=0 // loop_footer_branch
    %12 = sbr.rel target = $region3
  $region8: #{upsampling_concat_forward.1} parent=0 // loop_exit
    _

</llo_original>
